<compile_context>
chip_gen: v6e
topology: v6e:2x2x1
jax: 0.10.0
libtpu: 0.0.40
codegen_flags: <defaults>
</compile_context>

<pallas_src>
import jax
import jax.numpy as jnp
from jax.experimental import pallas as pl
from jax.experimental.pallas import tpu as pltpu

NEG_SLOPE = 0.01     # torch.nn.LeakyReLU default negative_slope
BN_EPS = 1e-5
LANE = 128           # lane width: channel dims padded to a multiple of this
SUBLANE = 8          # sublane width: stored widths padded to a multiple of this


def _round_up(x, m):
    return ((x + m - 1) // m) * m


def _vmem_capacity_bytes():
    """Per-core VMEM capacity; conservative fallback if the query is unavailable."""
    try:
        info = pltpu.get_tpu_info()
        cap = int(getattr(info, "vmem_capacity_bytes", 0) or 0)
        if cap > 0:
            return cap
    except Exception:
        pass
    return 64 * 1024 * 1024   # v7x per-TC size as the safe lower bound


def _pick_inner_row_tile(h, w, cin1p, coutp, fixed_bytes, budget_bytes):
    """Largest row tile TH dividing `h` such that the per-tile im2col patches
    (bf16), the f32 accumulator and the bf16 row-tile result fit the remaining
    VMEM budget after the resident buffers (`fixed_bytes`)."""
    for th in sorted((d for d in range(1, h + 1) if h % d == 0), reverse=True):
        var_bytes = th * w * (2 * 9 * cin1p        # patch1 scratch (bf16)
                              + 2 * 9 * coutp      # patch2 scratch (bf16)
                              + 6 * coutp)         # f32 acc + bf16 row result
        if fixed_bytes + var_bytes <= budget_bytes:
            return th
    raise ValueError(
        "UpSampleBN fused kernel does not fit in VMEM for this shape; "
        "needs the windowed-row streaming path (see TODO).")


# ------------------------------ Pallas kernel ---------------------------------
def _upsample_bn_kernel(x_ref, w1_ref, s1_ref, b1_ref, w2_ref, s2_ref, b2_ref,
                        o_ref, mid_ref, p1_ref, p2_ref):
    """Fused [conv3x3 + folded-BN + LeakyReLU] x 2 for one batch element.

    x_ref:   (1, H+2, Wp_in, Cin1p)  padded NHWC input (bf16)
    w1_ref:  (9*Cin1p, Coutp)        im2col-flattened conv1 weights (bf16)
    s1/b1:   (1, Coutp)              folded BN scale / bias for conv1 (f32)
    w2_ref:  (9*Coutp, Coutp)        im2col-flattened conv2 weights (bf16)
    s2/b2:   (1, Coutp)              folded BN scale / bias for conv2 (f32)
    o_ref:   (1, H, W, Coutp)        output (bf16), lane-dense channels
    mid_ref: (H+2, Wp_mid, Coutp)    VMEM scratch: conv1 output with 1-px halo
    p1_ref:  (TH*W, 9*Cin1p)         VMEM scratch: conv1 im2col patch
    p2_ref:  (TH*W, 9*Coutp)         VMEM scratch: conv2 im2col patch
    """
    h, w_out, coutp = o_ref.shape[1], o_ref.shape[2], o_ref.shape[3]
    cin1p = x_ref.shape[3]
    hp2, wp_mid = mid_ref.shape[0], mid_ref.shape[1]
    th = p1_ref.shape[0] // w_out
    n_tiles = h // th

    # Zero the halo ring (and width-alignment pad) of the intermediate buffer.
    # The lane-padded output channels of conv1 are exactly zero because the
    # padded columns of w1 and the padded entries of s1/b1 are zero and
    # LeakyReLU(0) == 0, so conv2's (zero) padded K rows see only zeros.
    mid_ref[0:1, :, :] = jnp.zeros((1, wp_mid, coutp), mid_ref.dtype)
    mid_ref[hp2 - 1:hp2, :, :] = jnp.zeros((1, wp_mid, coutp), mid_ref.dtype)
    mid_ref[:, 0:1, :] = jnp.zeros((hp2, 1, coutp), mid_ref.dtype)
    mid_ref[:, w_out + 1:wp_mid, :] = jnp.zeros(
        (hp2, wp_mid - w_out - 1, coutp), mid_ref.dtype)

    # ---- conv1 + BN + LeakyReLU -> mid (VMEM resident) ----
    @pl.loop(0, n_tiles)
    def _conv1(ti):
        row0 = ti * th
        # Single-pass im2col: each tap goes straight into its lane-aligned slot.
        for dh in range(3):
            for dw in range(3):
                slot = (dh * 3 + dw) * cin1p
                p1_ref[:, slot:slot + cin1p] = (
                    x_ref[0, pl.ds(row0 + dh, th), dw:dw + w_out, :]
                    .reshape(th * w_out, cin1p))
        # One wide-K MXU matmul (f32 accumulation).  Note: with Coutp == 128 the
        # 256-wide MXUs on v6e/v7x run at <=50% column utilization and the
        # kernel is ld/st-bound; keep full Coutp as N when real Cout >= 256.
        acc = jnp.dot(p1_ref[...], w1_ref[...],
                      preferred_element_type=jnp.float32)
        y = acc * s1_ref[...] + b1_ref[...]
        y = jnp.where(y >= 0.0, y, NEG_SLOPE * y)
        mid_ref[pl.ds(row0 + 1, th), 1:1 + w_out, :] = (
            y.reshape(th, w_out, coutp).astype(mid_ref.dtype))

    # ---- conv2 + BN + LeakyReLU -> output ----
    @pl.loop(0, n_tiles)
    def _conv2(ti):
        row0 = ti * th
        for dh in range(3):
            for dw in range(3):
                slot = (dh * 3 + dw) * coutp
                p2_ref[:, slot:slot + coutp] = (
                    mid_ref[pl.ds(row0 + dh, th), dw:dw + w_out, :]
                    .reshape(th * w_out, coutp))
        acc = jnp.dot(p2_ref[...], w2_ref[...],
                      preferred_element_type=jnp.float32)
        y = acc * s2_ref[...] + b2_ref[...]
        y = jnp.where(y >= 0.0, y, NEG_SLOPE * y)
        o_ref[0, pl.ds(row0, th), :, :] = (
            y.reshape(th, w_out, coutp).astype(o_ref.dtype))


def upsample_bn_fused(f_padded, w1, s1, b1, w2, s2, b2, h, w):
    """f_padded: (N, H+2, Wp_in, Cin1p) bf16; w1: (9*Cin1p, Coutp) bf16;
       w2: (9*Coutp, Coutp) bf16; scales/biases: (1, Coutp) f32.
       Returns (N, H, W, Coutp) bf16."""
    n, hp2, wp_in, cin1p = f_padded.shape
    k1, coutp = w1.shape
    k2 = w2.shape[0]
    assert k1 == 9 * cin1p and k2 == 9 * coutp
    assert cin1p % LANE == 0 and coutp % LANE == 0
    assert hp2 == h + 2 and wp_in >= w + 2
    wp_mid = _round_up(w + 2, SUBLANE)

    # Generation-aware VMEM budgeting (v7x: 64 MiB/TC, v5e/v6e: 128 MiB).
    cap = _vmem_capacity_bytes()
    vmem_limit = min((cap * 3) // 4, 112 * 1024 * 1024)
    fixed_bytes = (2 * hp2 * wp_in * cin1p * 2        # input block, 2 pipeline bufs, bf16
                   + 2 * (k1 + k2) * coutp * 2        # weights, 2 bufs each, bf16
                   + 2 * 4 * coutp * 4 * 2            # scale/bias, 2 bufs each, f32
                   + 2 * h * w * coutp * 2            # output block, 2 bufs, bf16
                   + hp2 * wp_mid * coutp * 2)        # resident intermediate, bf16
    budget = (vmem_limit * 17) // 20                  # ~85%, headroom for compiler scratch
    th = _pick_inner_row_tile(h, w, cin1p, coutp, fixed_bytes, budget)

    cost = pl.CostEstimate(
        flops=2 * n * h * w * (k1 + k2) * coutp,
        transcendentals=0,
        bytes_accessed=(f_padded.size * 2 + (k1 + k2) * coutp * 2
                        + 4 * coutp * 4 + n * h * w * coutp * 2),
    )

    return pl.pallas_call(
        _upsample_bn_kernel,
        out_shape=jax.ShapeDtypeStruct((n, h, w, coutp), jnp.bfloat16),
        grid=(n,),
        in_specs=[
            pl.BlockSpec((1, hp2, wp_in, cin1p), lambda nn: (nn, 0, 0, 0)),
            pl.BlockSpec((k1, coutp), lambda nn: (0, 0)),
            pl.BlockSpec((1, coutp), lambda nn: (0, 0)),
            pl.BlockSpec((1, coutp), lambda nn: (0, 0)),
            pl.BlockSpec((k2, coutp), lambda nn: (0, 0)),
            pl.BlockSpec((1, coutp), lambda nn: (0, 0)),
            pl.BlockSpec((1, coutp), lambda nn: (0, 0)),
        ],
        out_specs=pl.BlockSpec((1, h, w, coutp), lambda nn: (nn, 0, 0, 0)),
        scratch_shapes=[
            pltpu.VMEM((hp2, wp_mid, coutp), jnp.bfloat16),   # conv1 output (+halo)
            pltpu.VMEM((th * w, k1), jnp.bfloat16),            # im2col patch, conv1
            pltpu.VMEM((th * w, k2), jnp.bfloat16),            # im2col patch, conv2
        ],
        compiler_params=pltpu.CompilerParams(
            dimension_semantics=("parallel",),    # batch across TCs on v7x
            vmem_limit_bytes=int(vmem_limit)),
        cost_estimate=cost,
    )(f_padded, w1, s1, b1, w2, s2, b2)


# ------------------------------- JAX glue --------------------------------------
def bilinear_upsample_align_corners(x_nhwc, out_h, out_w):
    """F.interpolate(mode='bilinear', align_corners=True) on NHWC input."""
    n, h, w, c = x_nhwc.shape
    if out_h > 1:
        ys = jnp.arange(out_h, dtype=jnp.float32) * ((h - 1) / (out_h - 1))
    else:
        ys = jnp.zeros((out_h,), jnp.float32)
    if out_w > 1:
        xs = jnp.arange(out_w, dtype=jnp.float32) * ((w - 1) / (out_w - 1))
    else:
        xs = jnp.zeros((out_w,), jnp.float32)

    y0 = jnp.floor(ys).astype(jnp.int32)
    y1 = jnp.minimum(y0 + 1, h - 1)
    wy = (ys - y0.astype(jnp.float32))[None, :, None, None]
    x0 = jnp.floor(xs).astype(jnp.int32)
    x1 = jnp.minimum(x0 + 1, w - 1)
    wx = (xs - x0.astype(jnp.float32))[None, None, :, None]

    def gather(yi, xi):
        return x_nhwc[:, yi][:, :, xi]  # (N, out_h, out_w, C)

    top = gather(y0, x0) * (1.0 - wx) + gather(y0, x1) * wx
    bot = gather(y1, x0) * (1.0 - wx) + gather(y1, x1) * wx
    return top * (1.0 - wy) + bot * wy


def init_params(key, skip_input, output_features):
    """Deterministic synthetic parameters for the two Conv+BN blocks, folded
    (eval-mode BN) and pre-packed into the kernel-ready lane-padded layout.
    Raw HWIO copies are kept under "ref" for the pure-JAX reference."""
    ks = jax.random.split(key, 8)

    def block(kw, kb, kg, kbe, cin, cout):
        # Conv weight generated directly in HWIO (3,3,Cin,Cout).
        # TODO(synk): real PyTorch weights are OIHW and would need a transpose.
        w = 0.05 * jax.random.normal(kw, (3, 3, cin, cout), jnp.float32)
        b_conv = 0.01 * jax.random.normal(kb, (cout,), jnp.float32)
        gamma = 1.0 + 0.1 * jax.random.normal(kg, (cout,), jnp.float32)
        beta = 0.1 * jax.random.normal(kbe, (cout,), jnp.float32)
        run_mean = jnp.zeros((cout,), jnp.float32)
        run_var = jnp.ones((cout,), jnp.float32)
        scale = gamma / jnp.sqrt(run_var + BN_EPS)          # eval-mode BN fold
        bias = (b_conv - run_mean) * scale + beta
        return w, scale, bias

    cout = output_features
    coutp = _round_up(cout, LANE)
    cin1p = _round_up(skip_input, LANE)

    w1, s1, b1 = block(ks[0], ks[1], ks[2], ks[3], skip_input, cout)
    w2, s2, b2 = block(ks[4], ks[5], ks[6], ks[7], cout, cout)

    def prep(w, scale, bias, cinp):
        cin, co = w.shape[2], w.shape[3]
        wp = jnp.zeros((3, 3, cinp, coutp), jnp.float32)
        wp = wp.at[:, :, :cin, :co].set(w)
        w_flat = wp.reshape(9 * cinp, coutp).astype(jnp.bfloat16)
        # Padded scale/bias entries stay exactly zero so the padded output
        # channels of each conv block are exactly zero (conv2 K-row safety).
        sp = jnp.zeros((1, coutp), jnp.float32).at[0, :co].set(scale)
        bp = jnp.zeros((1, coutp), jnp.float32).at[0, :co].set(bias)
        return w_flat, sp, bp

    w1f, s1p, b1p = prep(w1, s1, b1, cin1p)
    w2f, s2p, b2p = prep(w2, s2, b2, coutp)   # conv2 consumes lane-padded conv1 output

    return {
        "w1": w1f, "s1": s1p, "b1": b1p,
        "w2": w2f, "s2": s2p, "b2": b2p,
        "cout": cout, "coutp": coutp, "cin1p": cin1p,
        "ref": {"w1": w1, "s1": s1, "b1": b1, "w2": w2, "s2": s2, "b2": b2},
    }


def upsample_bn_forward(params, x_nchw, concat_nchw):
    """Equivalent to UpSampleBN.forward(x, concat_with) (NCHW in / NCHW out)."""
    # NCHW -> NHWC (channels to the lane dim).
    x = jnp.transpose(x_nchw, (0, 2, 3, 1))
    skip = jnp.transpose(concat_nchw, (0, 2, 3, 1))
    out_h, out_w = skip.shape[1], skip.shape[2]

    # Bilinear (align_corners=True) upsample, cast to bf16 before the prep pass.
    up_x = bilinear_upsample_align_corners(x, out_h, out_w).astype(jnp.bfloat16)
    skip = skip.astype(jnp.bfloat16)

    # Single prep pass (fused under jit): channel concat [up_x, skip], 1-px zero
    # halo, width pad so W+2 is a sublane multiple, channel pad to a lane multiple.
    cin1 = up_x.shape[-1] + skip.shape[-1]
    wp_in = _round_up(out_w + 2, SUBLANE)
    f = jnp.concatenate([up_x, skip], axis=-1)
    f = jnp.pad(f, ((0, 0), (1, 1), (1, wp_in - out_w - 1),
                    (0, params["cin1p"] - cin1)))

    out = upsample_bn_fused(f, params["w1"], params["s1"], params["b1"],
                            params["w2"], params["s2"], params["b2"],
                            out_h, out_w)

    out = out[:, :, :, :params["cout"]].astype(x_nchw.dtype)
    return jnp.transpose(out, (0, 3, 1, 2))               # -> NCHW


def reference_forward(ref, x_nchw, concat_nchw):
    """Pure-JAX f32 reference (XLA conv) for correctness checking."""
    x = jnp.transpose(x_nchw, (0, 2, 3, 1))
    skip = jnp.transpose(concat_nchw, (0, 2, 3, 1))
    up = bilinear_upsample_align_corners(x, skip.shape[1], skip.shape[2])
    f = jnp.concatenate([up, skip], axis=-1)

    def block(z, w, s, b):
        y = jax.lax.conv_general_dilated(
            z, w, window_strides=(1, 1), padding=((1, 1), (1, 1)),
            dimension_numbers=("NHWC", "HWIO", "NHWC"))
        y = y * s + b
        return jnp.where(y >= 0, y, NEG_SLOPE * y)

    h = block(f, ref["w1"], ref["s1"], ref["b1"])
    h = block(h, ref["w2"], ref["s2"], ref["b2"])
    return jnp.transpose(h, (0, 3, 1, 2))


# ---------------------------------- main ----------------------------------------
if __name__ == "__main__":
    key = jax.random.PRNGKey(0)
    kx, kc, kp = jax.random.split(key, 3)

    # x: low-res feature map; concat_with: skip connection (larger spatial size).
    x = jax.random.normal(kx, (2, 4, 8, 8), jnp.float32)              # NCHW
    concat_with = jax.random.normal(kc, (2, 4, 16, 16), jnp.float32)  # NCHW

    skip_input = x.shape[1] + concat_with.shape[1]   # 8
    output_features = 4
    params = init_params(kp, skip_input, output_features)

    fwd = jax.jit(lambda a, b: upsample_bn_forward(params, a, b))
    out = jax.block_until_ready(fwd(x, concat_with))
    assert out.shape == (2, output_features, 16, 16), out.shape

    ref_out = reference_forward(params["ref"], x, concat_with)
    max_err = float(jnp.max(jnp.abs(out - ref_out)))
    ref_scale = float(jnp.max(jnp.abs(ref_out)))
    tol = max(0.08 * ref_scale, 0.02)   # relative tolerance for bf16 activations
    assert max_err <= tol, f"max abs error {max_err} vs tolerance {tol}"

    print("KERNEL_OK")
</pallas_src>

<mosaic_0001>
module attributes {stable_mosaic.version = 11 : i64} {
  func.func @_upsample_bn_kernel(%arg0: i32, %arg1: memref<1x18x24x128xbf16, #tpu.memory_space<vmem>>, %arg2: memref<1152x128xbf16, #tpu.memory_space<vmem>>, %arg3: memref<1x128xf32, #tpu.memory_space<vmem>>, %arg4: memref<1x128xf32, #tpu.memory_space<vmem>>, %arg5: memref<1152x128xbf16, #tpu.memory_space<vmem>>, %arg6: memref<1x128xf32, #tpu.memory_space<vmem>>, %arg7: memref<1x128xf32, #tpu.memory_space<vmem>>, %arg8: memref<1x16x16x128xbf16, #tpu.memory_space<vmem>>, %arg9: memref<18x24x128xbf16, #tpu.memory_space<vmem>>, %arg10: memref<256x1152xbf16, #tpu.memory_space<vmem>>, %arg11: memref<256x1152xbf16, #tpu.memory_space<vmem>>) attributes {dimension_semantics = [#tpu.dimension_semantics<parallel>], iteration_bounds = array<i64: 2>, scalar_prefetch = 0 : i64, scratch_operands = 3 : i64, tpu.core_type = #tpu.core_type<tc>, window_params = [{transform_indices = @transform_0, window_bounds = array<i64: 1, 18, 24, 128>}, {pipeline_mode = #tpu.pipeline_mode<synchronous>, transform_indices = @transform_1, window_bounds = array<i64: 1152, 128>}, {pipeline_mode = #tpu.pipeline_mode<synchronous>, transform_indices = @transform_2, window_bounds = array<i64: 1, 128>}, {pipeline_mode = #tpu.pipeline_mode<synchronous>, transform_indices = @transform_3, window_bounds = array<i64: 1, 128>}, {pipeline_mode = #tpu.pipeline_mode<synchronous>, transform_indices = @transform_4, window_bounds = array<i64: 1152, 128>}, {pipeline_mode = #tpu.pipeline_mode<synchronous>, transform_indices = @transform_5, window_bounds = array<i64: 1, 128>}, {pipeline_mode = #tpu.pipeline_mode<synchronous>, transform_indices = @transform_6, window_bounds = array<i64: 1, 128>}, {transform_indices = @transform_7, window_bounds = array<i64: 1, 16, 16, 128>}]} {
    %cst = arith.constant 0.000000e+00 : bf16
    %0 = vector.broadcast %cst : bf16 to vector<1x24x128xbf16>
    %c0 = arith.constant 0 : index
    %c0_0 = arith.constant 0 : index
    %c0_1 = arith.constant 0 : index
    %1 = vector.load %arg9[%c0, %c0_0, %c0_1] : memref<18x24x128xbf16, #tpu.memory_space<vmem>>, vector<1x24x128xbf16>
    tpu.vector_store %arg9[%c0, %c0_0, %c0_1], %0 {strides = array<i32>} : memref<18x24x128xbf16, #tpu.memory_space<vmem>>, vector<1x24x128xbf16>,
    %cst_2 = arith.constant 0.000000e+00 : bf16
    %2 = vector.broadcast %cst_2 : bf16 to vector<1x24x128xbf16>
    %c17 = arith.constant 17 : index
    %c0_3 = arith.constant 0 : index
    %c0_4 = arith.constant 0 : index
    %3 = vector.load %arg9[%c17, %c0_3, %c0_4] : memref<18x24x128xbf16, #tpu.memory_space<vmem>>, vector<1x24x128xbf16>
    tpu.vector_store %arg9[%c17, %c0_3, %c0_4], %2 {strides = array<i32>} : memref<18x24x128xbf16, #tpu.memory_space<vmem>>, vector<1x24x128xbf16>,
    %cst_5 = arith.constant 0.000000e+00 : bf16
    %4 = vector.broadcast %cst_5 : bf16 to vector<18x1x128xbf16>
    %c0_6 = arith.constant 0 : index
    %c0_7 = arith.constant 0 : index
    %c0_8 = arith.constant 0 : index
    %5 = vector.load %arg9[%c0_6, %c0_7, %c0_8] : memref<18x24x128xbf16, #tpu.memory_space<vmem>>, vector<18x1x128xbf16>
    tpu.vector_store %arg9[%c0_6, %c0_7, %c0_8], %4 {strides = array<i32>} : memref<18x24x128xbf16, #tpu.memory_space<vmem>>, vector<18x1x128xbf16>,
    %cst_9 = arith.constant 0.000000e+00 : bf16
    %6 = vector.broadcast %cst_9 : bf16 to vector<18x7x128xbf16>
    %c0_10 = arith.constant 0 : index
    %c17_11 = arith.constant 17 : index
    %c0_12 = arith.constant 0 : index
    %7 = vector.load %arg9[%c0_10, %c17_11, %c0_12] : memref<18x24x128xbf16, #tpu.memory_space<vmem>>, vector<18x7x128xbf16>
    tpu.vector_store %arg9[%c0_10, %c17_11, %c0_12], %6 {strides = array<i32>} : memref<18x24x128xbf16, #tpu.memory_space<vmem>>, vector<18x7x128xbf16>,
    %c0_i32 = arith.constant 0 : i32
    %c1_i32 = arith.constant 1 : i32
    %8 = arith.muli %c0_i32, %c1_i32 : i32
    %c0_i32_13 = arith.constant 0 : i32
    %9 = arith.addi %c0_i32_13, %8 : i32
    %c16_i32 = arith.constant 16 : i32
    %10 = arith.muli %9, %c16_i32 : i32
    %c0_i32_14 = arith.constant 0 : i32
    %11 = arith.addi %10, %c0_i32_14 : i32
    %c0_15 = arith.constant 0 : index
    %12 = arith.index_cast %11 : i32 to index
    %c0_16 = arith.constant 0 : index
    %c0_17 = arith.constant 0 : index
    %13 = vector.load %arg1[%c0_15, %12, %c0_16, %c0_17] : memref<1x18x24x128xbf16, #tpu.memory_space<vmem>>, vector<1x16x16x128xbf16>
    %14 = vector.shape_cast %13 : vector<1x16x16x128xbf16> to vector<16x16x128xbf16>
    %15 = vector.shape_cast %14 : vector<16x16x128xbf16> to vector<256x128xbf16>
    %c0_18 = arith.constant 0 : index
    %c0_19 = arith.constant 0 : index
    %16 = vector.load %arg10[%c0_18, %c0_19] : memref<256x1152xbf16, #tpu.memory_space<vmem>>, vector<256x128xbf16>
    tpu.vector_store %arg10[%c0_18, %c0_19], %15 {strides = array<i32>} : memref<256x1152xbf16, #tpu.memory_space<vmem>>, vector<256x128xbf16>,
    %c0_i32_20 = arith.constant 0 : i32
    %17 = arith.addi %10, %c0_i32_20 : i32
    %c0_21 = arith.constant 0 : index
    %18 = arith.index_cast %17 : i32 to index
    %c1 = arith.constant 1 : index
    %c0_22 = arith.constant 0 : index
    %19 = vector.load %arg1[%c0_21, %18, %c1, %c0_22] : memref<1x18x24x128xbf16, #tpu.memory_space<vmem>>, vector<1x16x16x128xbf16>
    %20 = vector.shape_cast %19 : vector<1x16x16x128xbf16> to vector<16x16x128xbf16>
    %21 = vector.shape_cast %20 : vector<16x16x128xbf16> to vector<256x128xbf16>
    %c0_23 = arith.constant 0 : index
    %c128 = arith.constant 128 : index
    %22 = vector.load %arg10[%c0_23, %c128] : memref<256x1152xbf16, #tpu.memory_space<vmem>>, vector<256x128xbf16>
    tpu.vector_store %arg10[%c0_23, %c128], %21 {strides = array<i32>} : memref<256x1152xbf16, #tpu.memory_space<vmem>>, vector<256x128xbf16>,
    %c0_i32_24 = arith.constant 0 : i32
    %23 = arith.addi %10, %c0_i32_24 : i32
    %c0_25 = arith.constant 0 : index
    %24 = arith.index_cast %23 : i32 to index
    %c2 = arith.constant 2 : index
    %c0_26 = arith.constant 0 : index
    %25 = vector.load %arg1[%c0_25, %24, %c2, %c0_26] : memref<1x18x24x128xbf16, #tpu.memory_space<vmem>>, vector<1x16x16x128xbf16>
    %26 = vector.shape_cast %25 : vector<1x16x16x128xbf16> to vector<16x16x128xbf16>
    %27 = vector.shape_cast %26 : vector<16x16x128xbf16> to vector<256x128xbf16>
    %c0_27 = arith.constant 0 : index
    %c256 = arith.constant 256 : index
    %28 = vector.load %arg10[%c0_27, %c256] : memref<256x1152xbf16, #tpu.memory_space<vmem>>, vector<256x128xbf16>
    tpu.vector_store %arg10[%c0_27, %c256], %27 {strides = array<i32>} : memref<256x1152xbf16, #tpu.memory_space<vmem>>, vector<256x128xbf16>,
    %c1_i32_28 = arith.constant 1 : i32
    %29 = arith.addi %10, %c1_i32_28 : i32
    %c0_29 = arith.constant 0 : index
    %30 = arith.index_cast %29 : i32 to index
    %c0_30 = arith.constant 0 : index
    %c0_31 = arith.constant 0 : index
    %31 = vector.load %arg1[%c0_29, %30, %c0_30, %c0_31] : memref<1x18x24x128xbf16, #tpu.memory_space<vmem>>, vector<1x16x16x128xbf16>
    %32 = vector.shape_cast %31 : vector<1x16x16x128xbf16> to vector<16x16x128xbf16>
    %33 = vector.shape_cast %32 : vector<16x16x128xbf16> to vector<256x128xbf16>
    %c0_32 = arith.constant 0 : index
    %c384 = arith.constant 384 : index
    %34 = vector.load %arg10[%c0_32, %c384] : memref<256x1152xbf16, #tpu.memory_space<vmem>>, vector<256x128xbf16>
    tpu.vector_store %arg10[%c0_32, %c384], %33 {strides = array<i32>} : memref<256x1152xbf16, #tpu.memory_space<vmem>>, vector<256x128xbf16>,
    %c1_i32_33 = arith.constant 1 : i32
    %35 = arith.addi %10, %c1_i32_33 : i32
    %c0_34 = arith.constant 0 : index
    %36 = arith.index_cast %35 : i32 to index
    %c1_35 = arith.constant 1 : index
    %c0_36 = arith.constant 0 : index
    %37 = vector.load %arg1[%c0_34, %36, %c1_35, %c0_36] : memref<1x18x24x128xbf16, #tpu.memory_space<vmem>>, vector<1x16x16x128xbf16>
    %38 = vector.shape_cast %37 : vector<1x16x16x128xbf16> to vector<16x16x128xbf16>
    %39 = vector.shape_cast %38 : vector<16x16x128xbf16> to vector<256x128xbf16>
    %c0_37 = arith.constant 0 : index
    %c512 = arith.constant 512 : index
    %40 = vector.load %arg10[%c0_37, %c512] : memref<256x1152xbf16, #tpu.memory_space<vmem>>, vector<256x128xbf16>
    tpu.vector_store %arg10[%c0_37, %c512], %39 {strides = array<i32>} : memref<256x1152xbf16, #tpu.memory_space<vmem>>, vector<256x128xbf16>,
    %c1_i32_38 = arith.constant 1 : i32
    %41 = arith.addi %10, %c1_i32_38 : i32
    %c0_39 = arith.constant 0 : index
    %42 = arith.index_cast %41 : i32 to index
    %c2_40 = arith.constant 2 : index
    %c0_41 = arith.constant 0 : index
    %43 = vector.load %arg1[%c0_39, %42, %c2_40, %c0_41] : memref<1x18x24x128xbf16, #tpu.memory_space<vmem>>, vector<1x16x16x128xbf16>
    %44 = vector.shape_cast %43 : vector<1x16x16x128xbf16> to vector<16x16x128xbf16>
    %45 = vector.shape_cast %44 : vector<16x16x128xbf16> to vector<256x128xbf16>
    %c0_42 = arith.constant 0 : index
    %c640 = arith.constant 640 : index
    %46 = vector.load %arg10[%c0_42, %c640] : memref<256x1152xbf16, #tpu.memory_space<vmem>>, vector<256x128xbf16>
    tpu.vector_store %arg10[%c0_42, %c640], %45 {strides = array<i32>} : memref<256x1152xbf16, #tpu.memory_space<vmem>>, vector<256x128xbf16>,
    %c2_i32 = arith.constant 2 : i32
    %47 = arith.addi %10, %c2_i32 : i32
    %c0_43 = arith.constant 0 : index
    %48 = arith.index_cast %47 : i32 to index
    %c0_44 = arith.constant 0 : index
    %c0_45 = arith.constant 0 : index
    %49 = vector.load %arg1[%c0_43, %48, %c0_44, %c0_45] : memref<1x18x24x128xbf16, #tpu.memory_space<vmem>>, vector<1x16x16x128xbf16>
    %50 = vector.shape_cast %49 : vector<1x16x16x128xbf16> to vector<16x16x128xbf16>
    %51 = vector.shape_cast %50 : vector<16x16x128xbf16> to vector<256x128xbf16>
    %c0_46 = arith.constant 0 : index
    %c768 = arith.constant 768 : index
    %52 = vector.load %arg10[%c0_46, %c768] : memref<256x1152xbf16, #tpu.memory_space<vmem>>, vector<256x128xbf16>
    tpu.vector_store %arg10[%c0_46, %c768], %51 {strides = array<i32>} : memref<256x1152xbf16, #tpu.memory_space<vmem>>, vector<256x128xbf16>,
    %c2_i32_47 = arith.constant 2 : i32
    %53 = arith.addi %10, %c2_i32_47 : i32
    %c0_48 = arith.constant 0 : index
    %54 = arith.index_cast %53 : i32 to index
    %c1_49 = arith.constant 1 : index
    %c0_50 = arith.constant 0 : index
    %55 = vector.load %arg1[%c0_48, %54, %c1_49, %c0_50] : memref<1x18x24x128xbf16, #tpu.memory_space<vmem>>, vector<1x16x16x128xbf16>
    %56 = vector.shape_cast %55 : vector<1x16x16x128xbf16> to vector<16x16x128xbf16>
    %57 = vector.shape_cast %56 : vector<16x16x128xbf16> to vector<256x128xbf16>
    %c0_51 = arith.constant 0 : index
    %c896 = arith.constant 896 : index
    %58 = vector.load %arg10[%c0_51, %c896] : memref<256x1152xbf16, #tpu.memory_space<vmem>>, vector<256x128xbf16>
    tpu.vector_store %arg10[%c0_51, %c896], %57 {strides = array<i32>} : memref<256x1152xbf16, #tpu.memory_space<vmem>>, vector<256x128xbf16>,
    %c2_i32_52 = arith.constant 2 : i32
    %59 = arith.addi %10, %c2_i32_52 : i32
    %c0_53 = arith.constant 0 : index
    %60 = arith.index_cast %59 : i32 to index
    %c2_54 = arith.constant 2 : index
    %c0_55 = arith.constant 0 : index
    %61 = vector.load %arg1[%c0_53, %60, %c2_54, %c0_55] : memref<1x18x24x128xbf16, #tpu.memory_space<vmem>>, vector<1x16x16x128xbf16>
    %62 = vector.shape_cast %61 : vector<1x16x16x128xbf16> to vector<16x16x128xbf16>
    %63 = vector.shape_cast %62 : vector<16x16x128xbf16> to vector<256x128xbf16>
    %c0_56 = arith.constant 0 : index
    %c1024 = arith.constant 1024 : index
    %64 = vector.load %arg10[%c0_56, %c1024] : memref<256x1152xbf16, #tpu.memory_space<vmem>>, vector<256x128xbf16>
    tpu.vector_store %arg10[%c0_56, %c1024], %63 {strides = array<i32>} : memref<256x1152xbf16, #tpu.memory_space<vmem>>, vector<256x128xbf16>,
    %c0_57 = arith.constant 0 : index
    %c0_58 = arith.constant 0 : index
    %65 = vector.load %arg10[%c0_57, %c0_58] : memref<256x1152xbf16, #tpu.memory_space<vmem>>, vector<256x1152xbf16>
    %c0_59 = arith.constant 0 : index
    %c0_60 = arith.constant 0 : index
    %66 = vector.load %arg2[%c0_59, %c0_60] : memref<1152x128xbf16, #tpu.memory_space<vmem>>, vector<1152x128xbf16>
    %cst_61 = arith.constant dense<0.000000e+00> : vector<256x128xf32>
    %67 = tpu.matmul %65, %66, %cst_61 {dimension_numbers = #tpu.dot_dimension_numbers<[1], [0], [0], [1], [0, 0, 1, 1], [], []>} : vector<256x1152xbf16>, vector<1152x128xbf16>, vector<256x128xf32> -> vector<256x128xf32>
    %c0_62 = arith.constant 0 : index
    %c0_63 = arith.constant 0 : index
    %68 = vector.load %arg3[%c0_62, %c0_63] : memref<1x128xf32, #tpu.memory_space<vmem>>, vector<1x128xf32>
    %69 = vector.broadcast %68 : vector<1x128xf32> to vector<256x128xf32>
    %70 = arith.mulf %67, %69 : vector<256x128xf32>
    %c0_64 = arith.constant 0 : index
    %c0_65 = arith.constant 0 : index
    %71 = vector.load %arg4[%c0_64, %c0_65] : memref<1x128xf32, #tpu.memory_space<vmem>>, vector<1x128xf32>
    %72 = vector.broadcast %71 : vector<1x128xf32> to vector<256x128xf32>
    %73 = arith.addf %70, %72 : vector<256x128xf32>
    %cst_66 = arith.constant 0.000000e+00 : f32
    %74 = vector.broadcast %cst_66 : f32 to vector<256x128xf32>
    %75 = arith.cmpf oge, %73, %74 : vector<256x128xf32>
    %cst_67 = arith.constant 0.00999999977 : f32
    %76 = vector.broadcast %cst_67 : f32 to vector<256x128xf32>
    %77 = arith.mulf %76, %73 : vector<256x128xf32>
    %78 = arith.select %75, %73, %77 : vector<256x128xi1>, vector<256x128xf32>
    %79 = vector.shape_cast %78 : vector<256x128xf32> to vector<16x16x128xf32>
    %80 = arith.truncf %79 : vector<16x16x128xf32> to vector<16x16x128xbf16>
    %c1_i32_68 = arith.constant 1 : i32
    %81 = arith.addi %10, %c1_i32_68 : i32
    %82 = arith.index_cast %81 : i32 to index
    %c1_69 = arith.constant 1 : index
    %c0_70 = arith.constant 0 : index
    %83 = vector.load %arg9[%82, %c1_69, %c0_70] : memref<18x24x128xbf16, #tpu.memory_space<vmem>>, vector<16x16x128xbf16>
    tpu.vector_store %arg9[%82, %c1_69, %c0_70], %80 {strides = array<i32>} : memref<18x24x128xbf16, #tpu.memory_space<vmem>>, vector<16x16x128xbf16>,
    %c1_i32_71 = arith.constant 1 : i32
    %c0_i32_72 = arith.constant 0 : i32
    %c1_i32_73 = arith.constant 1 : i32
    %84 = arith.muli %c0_i32_72, %c1_i32_73 : i32
    %c0_i32_74 = arith.constant 0 : i32
    %85 = arith.addi %c0_i32_74, %84 : i32
    %c16_i32_75 = arith.constant 16 : i32
    %86 = arith.muli %85, %c16_i32_75 : i32
    %c0_i32_76 = arith.constant 0 : i32
    %87 = arith.addi %86, %c0_i32_76 : i32
    %88 = arith.index_cast %87 : i32 to index
    %c0_77 = arith.constant 0 : index
    %c0_78 = arith.constant 0 : index
    %89 = vector.load %arg9[%88, %c0_77, %c0_78] : memref<18x24x128xbf16, #tpu.memory_space<vmem>>, vector<16x16x128xbf16>
    %90 = vector.shape_cast %89 : vector<16x16x128xbf16> to vector<256x128xbf16>
    %c0_79 = arith.constant 0 : index
    %c0_80 = arith.constant 0 : index
    %91 = vector.load %arg11[%c0_79, %c0_80] : memref<256x1152xbf16, #tpu.memory_space<vmem>>, vector<256x128xbf16>
    tpu.vector_store %arg11[%c0_79, %c0_80], %90 {strides = array<i32>} : memref<256x1152xbf16, #tpu.memory_space<vmem>>, vector<256x128xbf16>,
    %c0_i32_81 = arith.constant 0 : i32
    %92 = arith.addi %86, %c0_i32_81 : i32
    %93 = arith.index_cast %92 : i32 to index
    %c1_82 = arith.constant 1 : index
    %c0_83 = arith.constant 0 : index
    %94 = vector.load %arg9[%93, %c1_82, %c0_83] : memref<18x24x128xbf16, #tpu.memory_space<vmem>>, vector<16x16x128xbf16>
    %95 = vector.shape_cast %94 : vector<16x16x128xbf16> to vector<256x128xbf16>
    %c0_84 = arith.constant 0 : index
    %c128_85 = arith.constant 128 : index
    %96 = vector.load %arg11[%c0_84, %c128_85] : memref<256x1152xbf16, #tpu.memory_space<vmem>>, vector<256x128xbf16>
    tpu.vector_store %arg11[%c0_84, %c128_85], %95 {strides = array<i32>} : memref<256x1152xbf16, #tpu.memory_space<vmem>>, vector<256x128xbf16>,
    %c0_i32_86 = arith.constant 0 : i32
    %97 = arith.addi %86, %c0_i32_86 : i32
    %98 = arith.index_cast %97 : i32 to index
    %c2_87 = arith.constant 2 : index
    %c0_88 = arith.constant 0 : index
    %99 = vector.load %arg9[%98, %c2_87, %c0_88] : memref<18x24x128xbf16, #tpu.memory_space<vmem>>, vector<16x16x128xbf16>
    %100 = vector.shape_cast %99 : vector<16x16x128xbf16> to vector<256x128xbf16>
    %c0_89 = arith.constant 0 : index
    %c256_90 = arith.constant 256 : index
    %101 = vector.load %arg11[%c0_89, %c256_90] : memref<256x1152xbf16, #tpu.memory_space<vmem>>, vector<256x128xbf16>
    tpu.vector_store %arg11[%c0_89, %c256_90], %100 {strides = array<i32>} : memref<256x1152xbf16, #tpu.memory_space<vmem>>, vector<256x128xbf16>,
    %c1_i32_91 = arith.constant 1 : i32
    %102 = arith.addi %86, %c1_i32_91 : i32
    %103 = arith.index_cast %102 : i32 to index
    %c0_92 = arith.constant 0 : index
    %c0_93 = arith.constant 0 : index
    %104 = vector.load %arg9[%103, %c0_92, %c0_93] : memref<18x24x128xbf16, #tpu.memory_space<vmem>>, vector<16x16x128xbf16>
    %105 = vector.shape_cast %104 : vector<16x16x128xbf16> to vector<256x128xbf16>
    %c0_94 = arith.constant 0 : index
    %c384_95 = arith.constant 384 : index
    %106 = vector.load %arg11[%c0_94, %c384_95] : memref<256x1152xbf16, #tpu.memory_space<vmem>>, vector<256x128xbf16>
    tpu.vector_store %arg11[%c0_94, %c384_95], %105 {strides = array<i32>} : memref<256x1152xbf16, #tpu.memory_space<vmem>>, vector<256x128xbf16>,
    %c1_i32_96 = arith.constant 1 : i32
    %107 = arith.addi %86, %c1_i32_96 : i32
    %108 = arith.index_cast %107 : i32 to index
    %c1_97 = arith.constant 1 : index
    %c0_98 = arith.constant 0 : index
    %109 = vector.load %arg9[%108, %c1_97, %c0_98] : memref<18x24x128xbf16, #tpu.memory_space<vmem>>, vector<16x16x128xbf16>
    %110 = vector.shape_cast %109 : vector<16x16x128xbf16> to vector<256x128xbf16>
    %c0_99 = arith.constant 0 : index
    %c512_100 = arith.constant 512 : index
    %111 = vector.load %arg11[%c0_99, %c512_100] : memref<256x1152xbf16, #tpu.memory_space<vmem>>, vector<256x128xbf16>
    tpu.vector_store %arg11[%c0_99, %c512_100], %110 {strides = array<i32>} : memref<256x1152xbf16, #tpu.memory_space<vmem>>, vector<256x128xbf16>,
    %c1_i32_101 = arith.constant 1 : i32
    %112 = arith.addi %86, %c1_i32_101 : i32
    %113 = arith.index_cast %112 : i32 to index
    %c2_102 = arith.constant 2 : index
    %c0_103 = arith.constant 0 : index
    %114 = vector.load %arg9[%113, %c2_102, %c0_103] : memref<18x24x128xbf16, #tpu.memory_space<vmem>>, vector<16x16x128xbf16>
    %115 = vector.shape_cast %114 : vector<16x16x128xbf16> to vector<256x128xbf16>
    %c0_104 = arith.constant 0 : index
    %c640_105 = arith.constant 640 : index
    %116 = vector.load %arg11[%c0_104, %c640_105] : memref<256x1152xbf16, #tpu.memory_space<vmem>>, vector<256x128xbf16>
    tpu.vector_store %arg11[%c0_104, %c640_105], %115 {strides = array<i32>} : memref<256x1152xbf16, #tpu.memory_space<vmem>>, vector<256x128xbf16>,
    %c2_i32_106 = arith.constant 2 : i32
    %117 = arith.addi %86, %c2_i32_106 : i32
    %118 = arith.index_cast %117 : i32 to index
    %c0_107 = arith.constant 0 : index
    %c0_108 = arith.constant 0 : index
    %119 = vector.load %arg9[%118, %c0_107, %c0_108] : memref<18x24x128xbf16, #tpu.memory_space<vmem>>, vector<16x16x128xbf16>
    %120 = vector.shape_cast %119 : vector<16x16x128xbf16> to vector<256x128xbf16>
    %c0_109 = arith.constant 0 : index
    %c768_110 = arith.constant 768 : index
    %121 = vector.load %arg11[%c0_109, %c768_110] : memref<256x1152xbf16, #tpu.memory_space<vmem>>, vector<256x128xbf16>
    tpu.vector_store %arg11[%c0_109, %c768_110], %120 {strides = array<i32>} : memref<256x1152xbf16, #tpu.memory_space<vmem>>, vector<256x128xbf16>,
    %c2_i32_111 = arith.constant 2 : i32
    %122 = arith.addi %86, %c2_i32_111 : i32
    %123 = arith.index_cast %122 : i32 to index
    %c1_112 = arith.constant 1 : index
    %c0_113 = arith.constant 0 : index
    %124 = vector.load %arg9[%123, %c1_112, %c0_113] : memref<18x24x128xbf16, #tpu.memory_space<vmem>>, vector<16x16x128xbf16>
    %125 = vector.shape_cast %124 : vector<16x16x128xbf16> to vector<256x128xbf16>
    %c0_114 = arith.constant 0 : index
    %c896_115 = arith.constant 896 : index
    %126 = vector.load %arg11[%c0_114, %c896_115] : memref<256x1152xbf16, #tpu.memory_space<vmem>>, vector<256x128xbf16>
    tpu.vector_store %arg11[%c0_114, %c896_115], %125 {strides = array<i32>} : memref<256x1152xbf16, #tpu.memory_space<vmem>>, vector<256x128xbf16>,
    %c2_i32_116 = arith.constant 2 : i32
    %127 = arith.addi %86, %c2_i32_116 : i32
    %128 = arith.index_cast %127 : i32 to index
    %c2_117 = arith.constant 2 : index
    %c0_118 = arith.constant 0 : index
    %129 = vector.load %arg9[%128, %c2_117, %c0_118] : memref<18x24x128xbf16, #tpu.memory_space<vmem>>, vector<16x16x128xbf16>
    %130 = vector.shape_cast %129 : vector<16x16x128xbf16> to vector<256x128xbf16>
    %c0_119 = arith.constant 0 : index
    %c1024_120 = arith.constant 1024 : index
    %131 = vector.load %arg11[%c0_119, %c1024_120] : memref<256x1152xbf16, #tpu.memory_space<vmem>>, vector<256x128xbf16>
    tpu.vector_store %arg11[%c0_119, %c1024_120], %130 {strides = array<i32>} : memref<256x1152xbf16, #tpu.memory_space<vmem>>, vector<256x128xbf16>,
    %c0_121 = arith.constant 0 : index
    %c0_122 = arith.constant 0 : index
    %132 = vector.load %arg11[%c0_121, %c0_122] : memref<256x1152xbf16, #tpu.memory_space<vmem>>, vector<256x1152xbf16>
    %c0_123 = arith.constant 0 : index
    %c0_124 = arith.constant 0 : index
    %133 = vector.load %arg5[%c0_123, %c0_124] : memref<1152x128xbf16, #tpu.memory_space<vmem>>, vector<1152x128xbf16>
    %cst_125 = arith.constant dense<0.000000e+00> : vector<256x128xf32>
    %134 = tpu.matmul %132, %133, %cst_125 {dimension_numbers = #tpu.dot_dimension_numbers<[1], [0], [0], [1], [0, 0, 1, 1], [], []>} : vector<256x1152xbf16>, vector<1152x128xbf16>, vector<256x128xf32> -> vector<256x128xf32>
    %c0_126 = arith.constant 0 : index
    %c0_127 = arith.constant 0 : index
    %135 = vector.load %arg6[%c0_126, %c0_127] : memref<1x128xf32, #tpu.memory_space<vmem>>, vector<1x128xf32>
    %136 = vector.broadcast %135 : vector<1x128xf32> to vector<256x128xf32>
    %137 = arith.mulf %134, %136 : vector<256x128xf32>
    %c0_128 = arith.constant 0 : index
    %c0_129 = arith.constant 0 : index
    %138 = vector.load %arg7[%c0_128, %c0_129] : memref<1x128xf32, #tpu.memory_space<vmem>>, vector<1x128xf32>
    %139 = vector.broadcast %138 : vector<1x128xf32> to vector<256x128xf32>
    %140 = arith.addf %137, %139 : vector<256x128xf32>
    %cst_130 = arith.constant 0.000000e+00 : f32
    %141 = vector.broadcast %cst_130 : f32 to vector<256x128xf32>
    %142 = arith.cmpf oge, %140, %141 : vector<256x128xf32>
    %cst_131 = arith.constant 0.00999999977 : f32
    %143 = vector.broadcast %cst_131 : f32 to vector<256x128xf32>
    %144 = arith.mulf %143, %140 : vector<256x128xf32>
    %145 = arith.select %142, %140, %144 : vector<256x128xi1>, vector<256x128xf32>
    %146 = vector.shape_cast %145 : vector<256x128xf32> to vector<16x16x128xf32>
    %147 = arith.truncf %146 : vector<16x16x128xf32> to vector<16x16x128xbf16>
    %c0_132 = arith.constant 0 : index
    %148 = arith.index_cast %86 : i32 to index
    %c0_133 = arith.constant 0 : index
    %c0_134 = arith.constant 0 : index
    %149 = vector.load %arg8[%c0_132, %148, %c0_133, %c0_134] : memref<1x16x16x128xbf16, #tpu.memory_space<vmem>>, vector<1x16x16x128xbf16>
    %150 = vector.shape_cast %149 : vector<1x16x16x128xbf16> to vector<16x16x128xbf16>
    %151 = vector.shape_cast %147 : vector<16x16x128xbf16> to vector<1x16x16x128xbf16>
    tpu.vector_store %arg8[%c0_132, %148, %c0_133, %c0_134], %151 {strides = array<i32>} : memref<1x16x16x128xbf16, #tpu.memory_space<vmem>>, vector<1x16x16x128xbf16>,
    %c1_i32_135 = arith.constant 1 : i32
    return
  }
  func.func @transform_0(%arg0: i32) -> (i32, i32, i32, i32) {
    %c0_i32 = arith.constant 0 : i32
    %c0_i32_0 = arith.constant 0 : i32
    %c0_i32_1 = arith.constant 0 : i32
    %c0_i32_2 = arith.constant 0 : i32
    return %arg0, %c0_i32, %c0_i32_0, %c0_i32_1 : i32, i32, i32, i32
  }
  func.func @transform_1(%arg0: i32) -> (i32, i32) {
    %c0_i32 = arith.constant 0 : i32
    %c0_i32_0 = arith.constant 0 : i32
    %c0_i32_1 = arith.constant 0 : i32
    return %c0_i32, %c0_i32_0 : i32, i32
  }
  func.func @transform_2(%arg0: i32) -> (i32, i32) {
    %c0_i32 = arith.constant 0 : i32
    %c0_i32_0 = arith.constant 0 : i32
    %c0_i32_1 = arith.constant 0 : i32
    return %c0_i32, %c0_i32_0 : i32, i32
  }
  func.func @transform_3(%arg0: i32) -> (i32, i32) {
    %c0_i32 = arith.constant 0 : i32
    %c0_i32_0 = arith.constant 0 : i32
    %c0_i32_1 = arith.constant 0 : i32
    return %c0_i32, %c0_i32_0 : i32, i32
  }
  func.func @transform_4(%arg0: i32) -> (i32, i32) {
    %c0_i32 = arith.constant 0 : i32
    %c0_i32_0 = arith.constant 0 : i32
    %c0_i32_1 = arith.constant 0 : i32
    return %c0_i32, %c0_i32_0 : i32, i32
  }
  func.func @transform_5(%arg0: i32) -> (i32, i32) {
    %c0_i32 = arith.constant 0 : i32
    %c0_i32_0 = arith.constant 0 : i32
    %c0_i32_1 = arith.constant 0 : i32
    return %c0_i32, %c0_i32_0 : i32, i32
  }
  func.func @transform_6(%arg0: i32) -> (i32, i32) {
    %c0_i32 = arith.constant 0 : i32
    %c0_i32_0 = arith.constant 0 : i32
    %c0_i32_1 = arith.constant 0 : i32
    return %c0_i32, %c0_i32_0 : i32, i32
  }
  func.func @transform_7(%arg0: i32) -> (i32, i32, i32, i32) {
    %c0_i32 = arith.constant 0 : i32
    %c0_i32_0 = arith.constant 0 : i32
    %c0_i32_1 = arith.constant 0 : i32
    %c0_i32_2 = arith.constant 0 : i32
    return %arg0, %c0_i32, %c0_i32_0, %c0_i32_1 : i32, i32, i32, i32
  }
}

</mosaic_0001>

<llo_original>
// kernel: _lambda_.1
$region0: #{_lambda_.1}
  #allocation0 [shape = 'u32[]', space=smem, size = 0x4, offset = 0x4, fixed_abs, tag = 'smem constant byte address 0x4 - core index']
  #allocation1 [shape = 'u32[144,128]{1,0:T(1,128)}', space=vmem, size = 0x12000, scoped, tag = 'internal scratch']
  #allocation2 [shape = 'bf16[18,24,128]{2,1,0:T(8,128)(2,1)}', space=vmem, size = 0x1b000, scoped, tag = 'scratch operand']
  #allocation3 [shape = 'bf16[256,1152]{1,0:T(8,128)(2,1)}', space=vmem, size = 0x90000, scoped, tag = 'scratch operand']
  #allocation4 [shape = 'bf16[256,1152]{1,0:T(8,128)(2,1)}', space=vmem, size = 0x90000, scoped, tag = 'scratch operand']
  %s0 = inlined_call_operand.vmem [shape: bf16[2,18,24,128], index: 0, kind: input, shape index: {}]
  %s1 = inlined_call_operand.vmem [shape: bf16[1152,128], index: 1, kind: input, shape index: {}]
  %s2 = inlined_call_operand.vmem [shape: f32[1,128], index: 2, kind: input, shape index: {}]
  %s3 = inlined_call_operand.vmem [shape: f32[1,128], index: 3, kind: input, shape index: {}]
  %s4 = inlined_call_operand.vmem [shape: bf16[1152,128], index: 4, kind: input, shape index: {}]
  %s5 = inlined_call_operand.vmem [shape: f32[1,128], index: 5, kind: input, shape index: {}]
  %s6 = inlined_call_operand.vmem [shape: f32[1,128], index: 6, kind: input, shape index: {}]
  %s7 = inlined_call_operand.vmem [shape: bf16[2,16,16,128], index: 7, kind: output, shape index: {}]
  %s8 = sld [smem:[#allocation0]]
  $region61: #{_lambda_.1} parent=0
    _
  %s10 = ssub.s32 1, %s8
  %s11 = scalar_select 0, %s10, %s8
  loop: start=0, step=1, limit=4
  $region2: #{_lambda_.1} parent=0 // loop_pre_header
    _
  $region3: #{_lambda_.1} parent=0 // loop_header
    %s13 = sphi 0, %s17
    %p14 = scmp.ge.s32.totalorder %s13, 4
    %s23 = sphi 0, %s25
    %s26 = sphi 0, %s23
    %s27 = sphi 0, %s26
    %s43 = sphi 0, %s27
    %s47 = sphi 0, %s47
    %s49 = sphi 0, %s47
    %s50 = sphi 0, %s49
    %s64 = sphi 0, %s50
    %s68 = sphi 0, %s68
    %s70 = sphi 0, %s68
    %s71 = sphi 0, %s70
    %s85 = sphi 0, %s71
    %s89 = sphi 0, %s89
    %s91 = sphi 0, %s89
    %s92 = sphi 0, %s91
    %s106 = sphi 0, %s92
    %s110 = sphi 0, %s110
    %s112 = sphi 0, %s110
    %s113 = sphi 0, %s112
    %s127 = sphi 0, %s113
    %s131 = sphi 0, %s131
    %s133 = sphi 0, %s131
    %s134 = sphi 0, %s133
    %s148 = sphi 0, %s134
    %s152 = sphi 0, %s152
    %s154 = sphi 0, %s152
    %s155 = sphi 0, %s154
    %s169 = sphi 0, %s155
    %s175 = sphi 0, %s177
    %s178 = sphi 0, %s175
    %s179 = sphi 0, %s178
    %s195 = sphi 0, %s179
  $region4: #{_lambda_.1} parent=0 // loop_header_branch
    %16 = sbr.rel (%p14) target = $region8
  $region5: #{_lambda_.1} parent=0 // loop_body
    %s18 = ssub.s32 %s13, 1
    %s19 = ssub.s32 %s13, 2
    %s20 = sadd.s32 %s13, 1
    %s21 = ssub.s32 %s13, %s20
    %p22 = scmp.eq.s32.totalorder %s21, 0
    %s24 = sadd.s32 %s23, 1
    %s25 = scalar_select %p22, %s23, %s24
    %p28 = pneg %p22
    %p29 = scmp.eq.s32.totalorder %s13, 1
    %p30 = por %p28, %p29
    %p31 = scmp.ne.s32.totalorder %s23, %s26
    %p32 = scmp.eq.s32.totalorder %s13, 0
    %p33 = por %p31, %p32
    %p34 = scmp.ne.s32.totalorder %s23, %s26
    %p35 = scmp.eq.s32.totalorder %s18, 1
    %p36 = por %p34, %p35
    %p37 = scmp.ne.s32.totalorder %s26, %s27
    %p38 = scmp.eq.s32.totalorder %s18, 0
    %p39 = por %p37, %p38
    %p40 = scmp.ne.s32.totalorder %s26, %s27
    %p41 = scmp.eq.s32.totalorder %s19, 1
    %p42 = por %p40, %p41
    %p44 = scmp.ne.s32.totalorder %s27, %s43
    %p45 = scmp.eq.s32.totalorder %s19, 0
    %p46 = por %p44, %p45
    %s48 = sadd.s32 %s47, 1
    %p51 = scmp.eq.s32.totalorder %s13, 1
    %p52 = scmp.ne.s32.totalorder %s47, %s49
    %p53 = scmp.eq.s32.totalorder %s13, 0
    %p54 = por %p52, %p53
    %p55 = scmp.ne.s32.totalorder %s47, %s49
    %p56 = scmp.eq.s32.totalorder %s18, 1
    %p57 = por %p55, %p56
    %p58 = scmp.ne.s32.totalorder %s49, %s50
    %p59 = scmp.eq.s32.totalorder %s18, 0
    %p60 = por %p58, %p59
    %p61 = scmp.ne.s32.totalorder %s49, %s50
    %p62 = scmp.eq.s32.totalorder %s19, 1
    %p63 = por %p61, %p62
    %p65 = scmp.ne.s32.totalorder %s50, %s64
    %p66 = scmp.eq.s32.totalorder %s19, 0
    %p67 = por %p65, %p66
    %s69 = sadd.s32 %s68, 1
    %p72 = scmp.eq.s32.totalorder %s13, 1
    %p73 = scmp.ne.s32.totalorder %s68, %s70
    %p74 = scmp.eq.s32.totalorder %s13, 0
    %p75 = por %p73, %p74
    %p76 = scmp.ne.s32.totalorder %s68, %s70
    %p77 = scmp.eq.s32.totalorder %s18, 1
    %p78 = por %p76, %p77
    %p79 = scmp.ne.s32.totalorder %s70, %s71
    %p80 = scmp.eq.s32.totalorder %s18, 0
    %p81 = por %p79, %p80
    %p82 = scmp.ne.s32.totalorder %s70, %s71
    %p83 = scmp.eq.s32.totalorder %s19, 1
    %p84 = por %p82, %p83
    %p86 = scmp.ne.s32.totalorder %s71, %s85
    %p87 = scmp.eq.s32.totalorder %s19, 0
    %p88 = por %p86, %p87
    %s90 = sadd.s32 %s89, 1
    %p93 = scmp.eq.s32.totalorder %s13, 1
    %p94 = scmp.ne.s32.totalorder %s89, %s91
    %p95 = scmp.eq.s32.totalorder %s13, 0
    %p96 = por %p94, %p95
    %p97 = scmp.ne.s32.totalorder %s89, %s91
    %p98 = scmp.eq.s32.totalorder %s18, 1
    %p99 = por %p97, %p98
    %p100 = scmp.ne.s32.totalorder %s91, %s92
    %p101 = scmp.eq.s32.totalorder %s18, 0
    %p102 = por %p100, %p101
    %p103 = scmp.ne.s32.totalorder %s91, %s92
    %p104 = scmp.eq.s32.totalorder %s19, 1
    %p105 = por %p103, %p104
    %p107 = scmp.ne.s32.totalorder %s92, %s106
    %p108 = scmp.eq.s32.totalorder %s19, 0
    %p109 = por %p107, %p108
    %s111 = sadd.s32 %s110, 1
    %p114 = scmp.eq.s32.totalorder %s13, 1
    %p115 = scmp.ne.s32.totalorder %s110, %s112
    %p116 = scmp.eq.s32.totalorder %s13, 0
    %p117 = por %p115, %p116
    %p118 = scmp.ne.s32.totalorder %s110, %s112
    %p119 = scmp.eq.s32.totalorder %s18, 1
    %p120 = por %p118, %p119
    %p121 = scmp.ne.s32.totalorder %s112, %s113
    %p122 = scmp.eq.s32.totalorder %s18, 0
    %p123 = por %p121, %p122
    %p124 = scmp.ne.s32.totalorder %s112, %s113
    %p125 = scmp.eq.s32.totalorder %s19, 1
    %p126 = por %p124, %p125
    %p128 = scmp.ne.s32.totalorder %s113, %s127
    %p129 = scmp.eq.s32.totalorder %s19, 0
    %p130 = por %p128, %p129
    %s132 = sadd.s32 %s131, 1
    %p135 = scmp.eq.s32.totalorder %s13, 1
    %p136 = scmp.ne.s32.totalorder %s131, %s133
    %p137 = scmp.eq.s32.totalorder %s13, 0
    %p138 = por %p136, %p137
    %p139 = scmp.ne.s32.totalorder %s131, %s133
    %p140 = scmp.eq.s32.totalorder %s18, 1
    %p141 = por %p139, %p140
    %p142 = scmp.ne.s32.totalorder %s133, %s134
    %p143 = scmp.eq.s32.totalorder %s18, 0
    %p144 = por %p142, %p143
    %p145 = scmp.ne.s32.totalorder %s133, %s134
    %p146 = scmp.eq.s32.totalorder %s19, 1
    %p147 = por %p145, %p146
    %p149 = scmp.ne.s32.totalorder %s134, %s148
    %p150 = scmp.eq.s32.totalorder %s19, 0
    %p151 = por %p149, %p150
    %s153 = sadd.s32 %s152, 1
    %p156 = scmp.eq.s32.totalorder %s13, 1
    %p157 = scmp.ne.s32.totalorder %s152, %s154
    %p158 = scmp.eq.s32.totalorder %s13, 0
    %p159 = por %p157, %p158
    %p160 = scmp.ne.s32.totalorder %s152, %s154
    %p161 = scmp.eq.s32.totalorder %s18, 1
    %p162 = por %p160, %p161
    %p163 = scmp.ne.s32.totalorder %s154, %s155
    %p164 = scmp.eq.s32.totalorder %s18, 0
    %p165 = por %p163, %p164
    %p166 = scmp.ne.s32.totalorder %s154, %s155
    %p167 = scmp.eq.s32.totalorder %s19, 1
    %p168 = por %p166, %p167
    %p170 = scmp.ne.s32.totalorder %s155, %s169
    %p171 = scmp.eq.s32.totalorder %s19, 0
    %p172 = por %p170, %p171
    %s173 = ssub.s32 %s13, %s20
    %p174 = scmp.eq.s32.totalorder %s173, 0
    %s176 = sadd.s32 %s175, 1
    %s177 = scalar_select %p174, %s175, %s176
    %p180 = pneg %p174
    %p181 = scmp.eq.s32.totalorder %s13, 1
    %p182 = por %p180, %p181
    %p183 = scmp.ne.s32.totalorder %s175, %s178
    %p184 = scmp.eq.s32.totalorder %s13, 0
    %p185 = por %p183, %p184
    %p186 = scmp.ne.s32.totalorder %s175, %s178
    %p187 = scmp.eq.s32.totalorder %s18, 1
    %p188 = por %p186, %p187
    %p189 = scmp.ne.s32.totalorder %s178, %s179
    %p190 = scmp.eq.s32.totalorder %s18, 0
    %p191 = por %p189, %p190
    %p192 = scmp.ne.s32.totalorder %s178, %s179
    %p193 = scmp.eq.s32.totalorder %s19, 1
    %p194 = por %p192, %p193
    %p196 = scmp.ne.s32.totalorder %s179, %s195
    %p197 = scmp.eq.s32.totalorder %s19, 0
    %p198 = por %p196, %p197
    %p199 = scmp.le.s32.totalorder 1, %s13
    %p200 = scmp.lt.s32.totalorder %s13, 3
    %p201 = pnand %p199, %p200
    %p202 = pneg %p201
    // Predicated region
    $region9: #{_lambda_.1} parent=5 // pred_check
      _
    $region10: #{_lambda_.1} parent=5 // pred_check_branch
      %204 = sbr.rel (%p201) target = $region12
    $region11: #{_lambda_.1} parent=5 // pred_region
      %s205 = ssub.s32 %s13, 1
      // Predicated region
      $region13: #{_lambda_.1} parent=11 // pred_check
        %p206 = pneg %p60
      $region14: #{_lambda_.1} parent=11 // pred_check_branch
        %208 = sbr.rel (%p206) target = $region16
      $region15: #{_lambda_.1} parent=11 // pred_region
        _
      $region16: #{_lambda_.1} parent=11 // pred_fallthru
        _
      // Predicated region
      $region17: #{_lambda_.1} parent=11 // pred_check
        %p209 = pneg %p81
      $region18: #{_lambda_.1} parent=11 // pred_check_branch
        %211 = sbr.rel (%p209) target = $region20
      $region19: #{_lambda_.1} parent=11 // pred_region
        _
      $region20: #{_lambda_.1} parent=11 // pred_fallthru
        _
      // Predicated region
      $region21: #{_lambda_.1} parent=11 // pred_check
        %p212 = pneg %p102
      $region22: #{_lambda_.1} parent=11 // pred_check_branch
        %214 = sbr.rel (%p212) target = $region24
      $region23: #{_lambda_.1} parent=11 // pred_region
        _
      $region24: #{_lambda_.1} parent=11 // pred_fallthru
        _
      // Predicated region
      $region25: #{_lambda_.1} parent=11 // pred_check
        %p215 = pneg %p123
      $region26: #{_lambda_.1} parent=11 // pred_check_branch
        %217 = sbr.rel (%p215) target = $region28
      $region27: #{_lambda_.1} parent=11 // pred_region
        _
      $region28: #{_lambda_.1} parent=11 // pred_fallthru
        _
      // Predicated region
      $region29: #{_lambda_.1} parent=11 // pred_check
        %p218 = pneg %p144
      $region30: #{_lambda_.1} parent=11 // pred_check_branch
        %220 = sbr.rel (%p218) target = $region32
      $region31: #{_lambda_.1} parent=11 // pred_region
        _
      $region32: #{_lambda_.1} parent=11 // pred_fallthru
        _
      // Predicated region
      $region33: #{_lambda_.1} parent=11 // pred_check
        %p221 = pneg %p165
      $region34: #{_lambda_.1} parent=11 // pred_check_branch
        %223 = sbr.rel (%p221) target = $region36
      $region35: #{_lambda_.1} parent=11 // pred_region
        _
      $region36: #{_lambda_.1} parent=11 // pred_fallthru
        _
    $region12: #{_lambda_.1} parent=5 // pred_fallthru
      _
    %p224 = scmp.lt.s32.totalorder %s13, 2
    // Predicated region
    $region37: #{_lambda_.1} parent=5 // pred_check
      %p225 = pneg %p224
    $region38: #{_lambda_.1} parent=5 // pred_check_branch
      %227 = sbr.rel (%p225) target = $region40
    $region39: #{_lambda_.1} parent=5 // pred_region
      // Predicated region
      $region41: #{_lambda_.1} parent=39 // pred_check
        %p228 = pneg %p33
      $region42: #{_lambda_.1} parent=39 // pred_check_branch
        %230 = sbr.rel (%p228) target = $region44
      $region43: #{_lambda_.1} parent=39 // pred_region
        %p231 = scmp.lt.s32.totalorder %s13, 1
        %s232 = scalar_select %p231, %s13, 1
        %s233 = smul.addr %s232, 54
        %s234 = smul.addr %s233, 4
        %s235 = scalar_lea.vmem %s0, %s234
      $region44: #{_lambda_.1} parent=39 // pred_fallthru
        _
    $region40: #{_lambda_.1} parent=5 // pred_fallthru
      _
    %p236 = scmp.le.s32.totalorder 1, %s13
    %p237 = scmp.lt.s32.totalorder %s13, 3
    %p238 = pnand %p236, %p237
    %p239 = pneg %p238
    // Predicated region
    $region45: #{_lambda_.1} parent=5 // pred_check
      _
    $region46: #{_lambda_.1} parent=5 // pred_check_branch
      %241 = sbr.rel (%p238) target = $region48
    $region47: #{_lambda_.1} parent=5 // pred_region
      %s242 = ssub.s32 %s13, 1
      %p243 = scmp.lt.s32.totalorder %s18, 1
      %s244 = scalar_select %p243, %s18, 1
      %s245 = smul.addr %s244, 54
      %s246 = smul.addr %s245, 4
      %s247 = scalar_lea.vmem %s0, %s246
      %p248 = pneg %p39
      %p249 = pneg %p36
      %p250 = pneg %p60
      %p251 = pneg %p57
      %p252 = pneg %p81
      %p253 = pneg %p78
      %p254 = pneg %p102
      %p255 = pneg %p99
      %p256 = pneg %p123
      %p257 = pneg %p120
      %p258 = pneg %p144
      %p259 = pneg %p141
      %p260 = pneg %p165
      %p261 = pneg %p162
      %p262 = pneg %p191
      %p263 = pneg %p188
      %p264 = scmp.lt.s32.totalorder %s18, 1
      %s265 = scalar_select %p264, %s18, 1
      %s266 = smul.addr %s265, 32
      %s267 = smul.addr %s266, 4
      %s268 = scalar_lea.vmem %s7, %s267
      %p269 = scmp.lt.s32.totalorder %s18, 1
      %s270 = scalar_select %p269, %s18, 1
      %s271 = smul.addr %s270, 54
      %s272 = smul.addr %s271, 4
      %s273 = scalar_lea.vmem %s0, %s272
      %p274 = scmp.lt.s32.totalorder %s18, 1
      %s275 = scalar_select %p274, %s18, 1
      %s276 = smul.addr %s275, 32
      %s277 = smul.addr %s276, 4
      %s278 = scalar_lea.vmem %s7, %s277
      %280 = vst [vmem:[#allocation2] sm:$0xf] 0
      %281 = vst [vmem:[#allocation2 + $0x4] sm:$0xf] 0
      %282 = vst [vmem:[#allocation2 + $0x8] sm:$0xf] 0
      %s283 = scalar_lea.vmem [#allocation2], 204
      %284 = vst [vmem:[%s283] sm:$0xf] 0
      %285 = vst [vmem:[%s283 + $0x4] sm:$0xf] 0
      %286 = vst [vmem:[%s283 + $0x8] sm:$0xf] 0
      %vm287 = vcmask 1040384
      %vm288 = vsmask.f32 256
      %vm289 = vmand %vm287, %vm288
      %v290 = vld [vmem:[#allocation2] sm:$0x1]
      %v291 = vsel %vm289, 0, %v290
      %292 = vst [vmem:[#allocation2] sm:$0x1] %v291
      %v293 = vld [vmem:[#allocation2 + $0xc] sm:$0x1]
      %v294 = vsel %vm289, 0, %v293
      %295 = vst [vmem:[#allocation2 + $0xc] sm:$0x1] %v294
      %v296 = vld [vmem:[#allocation2 + $0x18] sm:$0x1]
      %v297 = vsel %vm289, 0, %v296
      %298 = vst [vmem:[#allocation2 + $0x18] sm:$0x1] %v297
      %v299 = vld [vmem:[#allocation2 + $0x24] sm:$0x1]
      %v300 = vsel %vm289, 0, %v299
      %301 = vst [vmem:[#allocation2 + $0x24] sm:$0x1] %v300
      %v302 = vld [vmem:[#allocation2 + $0x30] sm:$0x1]
      %v303 = vsel %vm289, 0, %v302
      %304 = vst [vmem:[#allocation2 + $0x30] sm:$0x1] %v303
      %v305 = vld [vmem:[#allocation2 + $0x3c] sm:$0x1]
      %v306 = vsel %vm289, 0, %v305
      %307 = vst [vmem:[#allocation2 + $0x3c] sm:$0x1] %v306
      %v308 = vld [vmem:[#allocation2 + $0x48] sm:$0x1]
      %v309 = vsel %vm289, 0, %v308
      %310 = vst [vmem:[#allocation2 + $0x48] sm:$0x1] %v309
      %v311 = vld [vmem:[#allocation2 + $0x54] sm:$0x1]
      %v312 = vsel %vm289, 0, %v311
      %313 = vst [vmem:[#allocation2 + $0x54] sm:$0x1] %v312
      %v314 = vld [vmem:[#allocation2 + $0x60] sm:$0x1]
      %v315 = vsel %vm289, 0, %v314
      %316 = vst [vmem:[#allocation2 + $0x60] sm:$0x1] %v315
      %v317 = vld [vmem:[#allocation2 + $0x6c] sm:$0x1]
      %v318 = vsel %vm289, 0, %v317
      %319 = vst [vmem:[#allocation2 + $0x6c] sm:$0x1] %v318
      %v320 = vld [vmem:[#allocation2 + $0x78] sm:$0x1]
      %v321 = vsel %vm289, 0, %v320
      %322 = vst [vmem:[#allocation2 + $0x78] sm:$0x1] %v321
      %v323 = vld [vmem:[#allocation2 + $0x84] sm:$0x1]
      %v324 = vsel %vm289, 0, %v323
      %325 = vst [vmem:[#allocation2 + $0x84] sm:$0x1] %v324
      %v326 = vld [vmem:[#allocation2 + $0x90] sm:$0x1]
      %v327 = vsel %vm289, 0, %v326
      %328 = vst [vmem:[#allocation2 + $0x90] sm:$0x1] %v327
      %v329 = vld [vmem:[#allocation2 + $0x9c] sm:$0x1]
      %v330 = vsel %vm289, 0, %v329
      %331 = vst [vmem:[#allocation2 + $0x9c] sm:$0x1] %v330
      %v332 = vld [vmem:[#allocation2 + $0xa8] sm:$0x1]
      %v333 = vsel %vm289, 0, %v332
      %334 = vst [vmem:[#allocation2 + $0xa8] sm:$0x1] %v333
      %v335 = vld [vmem:[#allocation2 + $0xb4] sm:$0x1]
      %v336 = vsel %vm289, 0, %v335
      %337 = vst [vmem:[#allocation2 + $0xb4] sm:$0x1] %v336
      %v338 = vld [vmem:[#allocation2 + $0xc0] sm:$0x1]
      %v339 = vsel %vm289, 0, %v338
      %340 = vst [vmem:[#allocation2 + $0xc0] sm:$0x1] %v339
      %v341 = vld [vmem:[#allocation2 + $0xcc] sm:$0x1]
      %v342 = vsel %vm289, 0, %v341
      %343 = vst [vmem:[#allocation2 + $0xcc] sm:$0x1] %v342
      %vm344 = vcmask 1043456
      %vm345 = vsmask.f32 7938
      %vm346 = vmand %vm344, %vm345
      %v347 = vld [vmem:[#allocation2 + $0x8] sm:$0xf]
      %v348 = vsel %vm346, 0, %v347
      %349 = vst [vmem:[#allocation2 + $0x8] sm:$0xf] %v348
      %v350 = vld [vmem:[#allocation2 + $0x14] sm:$0xf]
      %v351 = vsel %vm346, 0, %v350
      %352 = vst [vmem:[#allocation2 + $0x14] sm:$0xf] %v351
      %v353 = vld [vmem:[#allocation2 + $0x20] sm:$0xf]
      %v354 = vsel %vm346, 0, %v353
      %355 = vst [vmem:[#allocation2 + $0x20] sm:$0xf] %v354
      %v356 = vld [vmem:[#allocation2 + $0x2c] sm:$0xf]
      %v357 = vsel %vm346, 0, %v356
      %358 = vst [vmem:[#allocation2 + $0x2c] sm:$0xf] %v357
      %v359 = vld [vmem:[#allocation2 + $0x38] sm:$0xf]
      %v360 = vsel %vm346, 0, %v359
      %361 = vst [vmem:[#allocation2 + $0x38] sm:$0xf] %v360
      %v362 = vld [vmem:[#allocation2 + $0x44] sm:$0xf]
      %v363 = vsel %vm346, 0, %v362
      %364 = vst [vmem:[#allocation2 + $0x44] sm:$0xf] %v363
      %v365 = vld [vmem:[#allocation2 + $0x50] sm:$0xf]
      %v366 = vsel %vm346, 0, %v365
      %367 = vst [vmem:[#allocation2 + $0x50] sm:$0xf] %v366
      %v368 = vld [vmem:[#allocation2 + $0x5c] sm:$0xf]
      %v369 = vsel %vm346, 0, %v368
      %370 = vst [vmem:[#allocation2 + $0x5c] sm:$0xf] %v369
      %v371 = vld [vmem:[#allocation2 + $0x68] sm:$0xf]
      %v372 = vsel %vm346, 0, %v371
      %373 = vst [vmem:[#allocation2 + $0x68] sm:$0xf] %v372
      %v374 = vld [vmem:[#allocation2 + $0x74] sm:$0xf]
      %v375 = vsel %vm346, 0, %v374
      %376 = vst [vmem:[#allocation2 + $0x74] sm:$0xf] %v375
      %v377 = vld [vmem:[#allocation2 + $0x80] sm:$0xf]
      %v378 = vsel %vm346, 0, %v377
      %379 = vst [vmem:[#allocation2 + $0x80] sm:$0xf] %v378
      %v380 = vld [vmem:[#allocation2 + $0x8c] sm:$0xf]
      %v381 = vsel %vm346, 0, %v380
      %382 = vst [vmem:[#allocation2 + $0x8c] sm:$0xf] %v381
      %v383 = vld [vmem:[#allocation2 + $0x98] sm:$0xf]
      %v384 = vsel %vm346, 0, %v383
      %385 = vst [vmem:[#allocation2 + $0x98] sm:$0xf] %v384
      %v386 = vld [vmem:[#allocation2 + $0xa4] sm:$0xf]
      %v387 = vsel %vm346, 0, %v386
      %388 = vst [vmem:[#allocation2 + $0xa4] sm:$0xf] %v387
      %v389 = vld [vmem:[#allocation2 + $0xb0] sm:$0xf]
      %v390 = vsel %vm346, 0, %v389
      %391 = vst [vmem:[#allocation2 + $0xb0] sm:$0xf] %v390
      %v392 = vld [vmem:[#allocation2 + $0xbc] sm:$0xf]
      %v393 = vsel %vm346, 0, %v392
      %394 = vst [vmem:[#allocation2 + $0xbc] sm:$0xf] %v393
      %v395 = vld [vmem:[#allocation2 + $0xc8] sm:$0xf]
      %v396 = vsel %vm346, 0, %v395
      %397 = vst [vmem:[#allocation2 + $0xc8] sm:$0xf] %v396
      %v398 = vld [vmem:[#allocation2 + $0xd4] sm:$0xf]
      %v399 = vsel %vm346, 0, %v398
      %400 = vst [vmem:[#allocation2 + $0xd4] sm:$0xf] %v399
      %v401 = vld [vmem:[%s273] sm:$0xf]
      %v402 = vld [vmem:[%s273 + $0x4] sm:$0xf]
      %v403 = vld [vmem:[%s273 + $0xc] sm:$0xf]
      %v404 = vld [vmem:[%s273 + $0x10] sm:$0xf]
      %v405 = vld [vmem:[%s273 + $0x18] sm:$0xf]
      %v406 = vld [vmem:[%s273 + $0x1c] sm:$0xf]
      %v407 = vld [vmem:[%s273 + $0x24] sm:$0xf]
      %v408 = vld [vmem:[%s273 + $0x28] sm:$0xf]
      %v409 = vld [vmem:[%s273 + $0x30] sm:$0xf]
      %v410 = vld [vmem:[%s273 + $0x34] sm:$0xf]
      %v411 = vld [vmem:[%s273 + $0x3c] sm:$0xf]
      %v412 = vld [vmem:[%s273 + $0x40] sm:$0xf]
      %v413 = vld [vmem:[%s273 + $0x48] sm:$0xf]
      %v414 = vld [vmem:[%s273 + $0x4c] sm:$0xf]
      %v415 = vld [vmem:[%s273 + $0x54] sm:$0xf]
      %v416 = vld [vmem:[%s273 + $0x58] sm:$0xf]
      %v417 = vld [vmem:[%s273 + $0x60] sm:$0xf]
      %v418 = vld [vmem:[%s273 + $0x64] sm:$0xf]
      %v419 = vld [vmem:[%s273 + $0x6c] sm:$0xf]
      %v420 = vld [vmem:[%s273 + $0x70] sm:$0xf]
      %v421 = vld [vmem:[%s273 + $0x78] sm:$0xf]
      %v422 = vld [vmem:[%s273 + $0x7c] sm:$0xf]
      %v423 = vld [vmem:[%s273 + $0x84] sm:$0xf]
      %v424 = vld [vmem:[%s273 + $0x88] sm:$0xf]
      %v425 = vld [vmem:[%s273 + $0x90] sm:$0xf]
      %v426 = vld [vmem:[%s273 + $0x94] sm:$0xf]
      %v427 = vld [vmem:[%s273 + $0x9c] sm:$0xf]
      %v428 = vld [vmem:[%s273 + $0xa0] sm:$0xf]
      %v429 = vld [vmem:[%s273 + $0xa8] sm:$0xf]
      %v430 = vld [vmem:[%s273 + $0xac] sm:$0xf]
      %v431 = vld [vmem:[%s273 + $0xb4] sm:$0xf]
      %v432 = vld [vmem:[%s273 + $0xb8] sm:$0xf]
      %433 = vst [vmem:[#allocation3] sm:$0xf] %v401
      %434 = vst [vmem:[#allocation3 + $0x24] sm:$0xf] %v402
      %435 = vst [vmem:[#allocation3 + $0x48] sm:$0xf] %v403
      %436 = vst [vmem:[#allocation3 + $0x6c] sm:$0xf] %v404
      %437 = vst [vmem:[#allocation3 + $0x90] sm:$0xf] %v405
      %438 = vst [vmem:[#allocation3 + $0xb4] sm:$0xf] %v406
      %439 = vst [vmem:[#allocation3 + $0xd8] sm:$0xf] %v407
      %440 = vst [vmem:[#allocation3 + $0xfc] sm:$0xf] %v408
      %441 = vst [vmem:[#allocation3 + $0x120] sm:$0xf] %v409
      %442 = vst [vmem:[#allocation3 + $0x144] sm:$0xf] %v410
      %443 = vst [vmem:[#allocation3 + $0x168] sm:$0xf] %v411
      %444 = vst [vmem:[#allocation3 + $0x18c] sm:$0xf] %v412
      %445 = vst [vmem:[#allocation3 + $0x1b0] sm:$0xf] %v413
      %446 = vst [vmem:[#allocation3 + $0x1d4] sm:$0xf] %v414
      %447 = vst [vmem:[#allocation3 + $0x1f8] sm:$0xf] %v415
      %448 = vst [vmem:[#allocation3 + $0x21c] sm:$0xf] %v416
      %449 = vst [vmem:[#allocation3 + $0x240] sm:$0xf] %v417
      %450 = vst [vmem:[#allocation3 + $0x264] sm:$0xf] %v418
      %451 = vst [vmem:[#allocation3 + $0x288] sm:$0xf] %v419
      %452 = vst [vmem:[#allocation3 + $0x2ac] sm:$0xf] %v420
      %453 = vst [vmem:[#allocation3 + $0x2d0] sm:$0xf] %v421
      %454 = vst [vmem:[#allocation3 + $0x2f4] sm:$0xf] %v422
      %455 = vst [vmem:[#allocation3 + $0x318] sm:$0xf] %v423
      %456 = vst [vmem:[#allocation3 + $0x33c] sm:$0xf] %v424
      %457 = vst [vmem:[#allocation3 + $0x360] sm:$0xf] %v425
      %458 = vst [vmem:[#allocation3 + $0x384] sm:$0xf] %v426
      %459 = vst [vmem:[#allocation3 + $0x3a8] sm:$0xf] %v427
      %460 = vst [vmem:[#allocation3 + $0x3cc] sm:$0xf] %v428
      %461 = vst [vmem:[#allocation3 + $0x3f0] sm:$0xf] %v429
      %462 = vst [vmem:[#allocation3 + $0x414] sm:$0xf] %v430
      %463 = vst [vmem:[#allocation3 + $0x438] sm:$0xf] %v431
      %464 = vst [vmem:[#allocation3 + $0x45c] sm:$0xf] %v432
      %v465 = vld [vmem:[%s273] sm:$0xf]
      %v466 = vld [vmem:[%s273 + $0x4] sm:$0xf]
      %v467 = vld [vmem:[%s273 + $0x8] sm:$0x1]
      %v468 = vld [vmem:[%s273 + $0xc] sm:$0xf]
      %v469 = vld [vmem:[%s273 + $0x10] sm:$0xf]
      %v470 = vld [vmem:[%s273 + $0x14] sm:$0x1]
      %v471 = vld [vmem:[%s273 + $0x18] sm:$0xf]
      %v472 = vld [vmem:[%s273 + $0x1c] sm:$0xf]
      %v473 = vld [vmem:[%s273 + $0x20] sm:$0x1]
      %v474 = vld [vmem:[%s273 + $0x24] sm:$0xf]
      %v475 = vld [vmem:[%s273 + $0x28] sm:$0xf]
      %v476 = vld [vmem:[%s273 + $0x2c] sm:$0x1]
      %v477 = vld [vmem:[%s273 + $0x30] sm:$0xf]
      %v478 = vld [vmem:[%s273 + $0x34] sm:$0xf]
      %v479 = vld [vmem:[%s273 + $0x38] sm:$0x1]
      %v480 = vld [vmem:[%s273 + $0x3c] sm:$0xf]
      %v481 = vld [vmem:[%s273 + $0x40] sm:$0xf]
      %v482 = vld [vmem:[%s273 + $0x44] sm:$0x1]
      %v483 = vld [vmem:[%s273 + $0x48] sm:$0xf]
      %v484 = vld [vmem:[%s273 + $0x4c] sm:$0xf]
      %v485 = vld [vmem:[%s273 + $0x50] sm:$0x1]
      %v486 = vld [vmem:[%s273 + $0x54] sm:$0xf]
      %v487 = vld [vmem:[%s273 + $0x58] sm:$0xf]
      %v488 = vld [vmem:[%s273 + $0x5c] sm:$0x1]
      %v489 = vld [vmem:[%s273 + $0x60] sm:$0xf]
      %v490 = vld [vmem:[%s273 + $0x64] sm:$0xf]
      %v491 = vld [vmem:[%s273 + $0x68] sm:$0x1]
      %v492 = vld [vmem:[%s273 + $0x6c] sm:$0xf]
      %v493 = vld [vmem:[%s273 + $0x70] sm:$0xf]
      %v494 = vld [vmem:[%s273 + $0x74] sm:$0x1]
      %v495 = vld [vmem:[%s273 + $0x78] sm:$0xf]
      %v496 = vld [vmem:[%s273 + $0x7c] sm:$0xf]
      %v497 = vld [vmem:[%s273 + $0x80] sm:$0x1]
      %v498 = vld [vmem:[%s273 + $0x84] sm:$0xf]
      %v499 = vld [vmem:[%s273 + $0x88] sm:$0xf]
      %v500 = vld [vmem:[%s273 + $0x8c] sm:$0x1]
      %v501 = vld [vmem:[%s273 + $0x90] sm:$0xf]
      %v502 = vld [vmem:[%s273 + $0x94] sm:$0xf]
      %v503 = vld [vmem:[%s273 + $0x98] sm:$0x1]
      %v504 = vld [vmem:[%s273 + $0x9c] sm:$0xf]
      %v505 = vld [vmem:[%s273 + $0xa0] sm:$0xf]
      %v506 = vld [vmem:[%s273 + $0xa4] sm:$0x1]
      %v507 = vld [vmem:[%s273 + $0xa8] sm:$0xf]
      %v508 = vld [vmem:[%s273 + $0xac] sm:$0xf]
      %v509 = vld [vmem:[%s273 + $0xb0] sm:$0x1]
      %v510 = vld [vmem:[%s273 + $0xb4] sm:$0xf]
      %v511 = vld [vmem:[%s273 + $0xb8] sm:$0xf]
      %v512 = vld [vmem:[%s273 + $0xbc] sm:$0x1]
      %vm513 = vsmask.f32 3328
      %vm514 = vsmask.f32 7440
      %vm515 = vmor %vm513, %vm514
      %v517 = vshrl.u32 %v465, 16
      %v519 = vrot.slane %v517, 4
      %v520 = vshll.u32 %v465, 16
      %v522 = vrot.slane %v520, 5
      %v523 = vor.u32 %v519, %v522
      %v524 = vrot.slane %v523, 4
      %v526 = vshll.u32 %v466, 16
      %v528 = vrot.slane %v526, 5
      %v529 = vsel %vm515, %v524, %v528
      %v530 = vshrl.u32 %v466, 16
      %v532 = vrot.slane %v530, 4
      %v533 = vor.u32 %v532, %v528
      %v534 = vrot.slane %v533, 4
      %v536 = vshll.u32 %v467, 16
      %v538 = vrot.slane %v536, 5
      %v539 = vsel %vm515, %v534, %v538
      %v541 = vshrl.u32 %v468, 16
      %v543 = vrot.slane %v541, 4
      %v544 = vshll.u32 %v468, 16
      %v546 = vrot.slane %v544, 5
      %v547 = vor.u32 %v543, %v546
      %v548 = vrot.slane %v547, 4
      %v550 = vshll.u32 %v469, 16
      %v552 = vrot.slane %v550, 5
      %v553 = vsel %vm515, %v548, %v552
      %v554 = vshrl.u32 %v469, 16
      %v556 = vrot.slane %v554, 4
      %v557 = vor.u32 %v556, %v552
      %v558 = vrot.slane %v557, 4
      %v560 = vshll.u32 %v470, 16
      %v562 = vrot.slane %v560, 5
      %v563 = vsel %vm515, %v558, %v562
      %v565 = vshrl.u32 %v471, 16
      %v567 = vrot.slane %v565, 4
      %v568 = vshll.u32 %v471, 16
      %v570 = vrot.slane %v568, 5
      %v571 = vor.u32 %v567, %v570
      %v572 = vrot.slane %v571, 4
      %v574 = vshll.u32 %v472, 16
      %v576 = vrot.slane %v574, 5
      %v577 = vsel %vm515, %v572, %v576
      %v578 = vshrl.u32 %v472, 16
      %v580 = vrot.slane %v578, 4
      %v581 = vor.u32 %v580, %v576
      %v582 = vrot.slane %v581, 4
      %v584 = vshll.u32 %v473, 16
      %v586 = vrot.slane %v584, 5
      %v587 = vsel %vm515, %v582, %v586
      %v589 = vshrl.u32 %v474, 16
      %v591 = vrot.slane %v589, 4
      %v592 = vshll.u32 %v474, 16
      %v594 = vrot.slane %v592, 5
      %v595 = vor.u32 %v591, %v594
      %v596 = vrot.slane %v595, 4
      %v598 = vshll.u32 %v475, 16
      %v600 = vrot.slane %v598, 5
      %v601 = vsel %vm515, %v596, %v600
      %v602 = vshrl.u32 %v475, 16
      %v604 = vrot.slane %v602, 4
      %v605 = vor.u32 %v604, %v600
      %v606 = vrot.slane %v605, 4
      %v608 = vshll.u32 %v476, 16
      %v610 = vrot.slane %v608, 5
      %v611 = vsel %vm515, %v606, %v610
      %v613 = vshrl.u32 %v477, 16
      %v615 = vrot.slane %v613, 4
      %v616 = vshll.u32 %v477, 16
      %v618 = vrot.slane %v616, 5
      %v619 = vor.u32 %v615, %v618
      %v620 = vrot.slane %v619, 4
      %v622 = vshll.u32 %v478, 16
      %v624 = vrot.slane %v622, 5
      %v625 = vsel %vm515, %v620, %v624
      %v626 = vshrl.u32 %v478, 16
      %v628 = vrot.slane %v626, 4
      %v629 = vor.u32 %v628, %v624
      %v630 = vrot.slane %v629, 4
      %v632 = vshll.u32 %v479, 16
      %v634 = vrot.slane %v632, 5
      %v635 = vsel %vm515, %v630, %v634
      %v637 = vshrl.u32 %v480, 16
      %v639 = vrot.slane %v637, 4
      %v640 = vshll.u32 %v480, 16
      %v642 = vrot.slane %v640, 5
      %v643 = vor.u32 %v639, %v642
      %v644 = vrot.slane %v643, 4
      %v646 = vshll.u32 %v481, 16
      %v648 = vrot.slane %v646, 5
      %v649 = vsel %vm515, %v644, %v648
      %v650 = vshrl.u32 %v481, 16
      %v652 = vrot.slane %v650, 4
      %v653 = vor.u32 %v652, %v648
      %v654 = vrot.slane %v653, 4
      %v656 = vshll.u32 %v482, 16
      %v658 = vrot.slane %v656, 5
      %v659 = vsel %vm515, %v654, %v658
      %v661 = vshrl.u32 %v483, 16
      %v663 = vrot.slane %v661, 4
      %v664 = vshll.u32 %v483, 16
      %v666 = vrot.slane %v664, 5
      %v667 = vor.u32 %v663, %v666
      %v668 = vrot.slane %v667, 4
      %v670 = vshll.u32 %v484, 16
      %v672 = vrot.slane %v670, 5
      %v673 = vsel %vm515, %v668, %v672
      %v674 = vshrl.u32 %v484, 16
      %v676 = vrot.slane %v674, 4
      %v677 = vor.u32 %v676, %v672
      %v678 = vrot.slane %v677, 4
      %v680 = vshll.u32 %v485, 16
      %v682 = vrot.slane %v680, 5
      %v683 = vsel %vm515, %v678, %v682
      %v685 = vshrl.u32 %v486, 16
      %v687 = vrot.slane %v685, 4
      %v688 = vshll.u32 %v486, 16
      %v690 = vrot.slane %v688, 5
      %v691 = vor.u32 %v687, %v690
      %v692 = vrot.slane %v691, 4
      %v694 = vshll.u32 %v487, 16
      %v696 = vrot.slane %v694, 5
      %v697 = vsel %vm515, %v692, %v696
      %v698 = vshrl.u32 %v487, 16
      %v700 = vrot.slane %v698, 4
      %v701 = vor.u32 %v700, %v696
      %v702 = vrot.slane %v701, 4
      %v704 = vshll.u32 %v488, 16
      %v706 = vrot.slane %v704, 5
      %v707 = vsel %vm515, %v702, %v706
      %v709 = vshrl.u32 %v489, 16
      %v711 = vrot.slane %v709, 4
      %v712 = vshll.u32 %v489, 16
      %v714 = vrot.slane %v712, 5
      %v715 = vor.u32 %v711, %v714
      %v716 = vrot.slane %v715, 4
      %v718 = vshll.u32 %v490, 16
      %v720 = vrot.slane %v718, 5
      %v721 = vsel %vm515, %v716, %v720
      %v722 = vshrl.u32 %v490, 16
      %v724 = vrot.slane %v722, 4
      %v725 = vor.u32 %v724, %v720
      %v726 = vrot.slane %v725, 4
      %v728 = vshll.u32 %v491, 16
      %v730 = vrot.slane %v728, 5
      %v731 = vsel %vm515, %v726, %v730
      %v733 = vshrl.u32 %v492, 16
      %v735 = vrot.slane %v733, 4
      %v736 = vshll.u32 %v492, 16
      %v738 = vrot.slane %v736, 5
      %v739 = vor.u32 %v735, %v738
      %v740 = vrot.slane %v739, 4
      %v742 = vshll.u32 %v493, 16
      %v744 = vrot.slane %v742, 5
      %v745 = vsel %vm515, %v740, %v744
      %v746 = vshrl.u32 %v493, 16
      %v748 = vrot.slane %v746, 4
      %v749 = vor.u32 %v748, %v744
      %v750 = vrot.slane %v749, 4
      %v752 = vshll.u32 %v494, 16
      %v754 = vrot.slane %v752, 5
      %v755 = vsel %vm515, %v750, %v754
      %v757 = vshrl.u32 %v495, 16
      %v759 = vrot.slane %v757, 4
      %v760 = vshll.u32 %v495, 16
      %v762 = vrot.slane %v760, 5
      %v763 = vor.u32 %v759, %v762
      %v764 = vrot.slane %v763, 4
      %v766 = vshll.u32 %v496, 16
      %v768 = vrot.slane %v766, 5
      %v769 = vsel %vm515, %v764, %v768
      %v770 = vshrl.u32 %v496, 16
      %v772 = vrot.slane %v770, 4
      %v773 = vor.u32 %v772, %v768
      %v774 = vrot.slane %v773, 4
      %v776 = vshll.u32 %v497, 16
      %v778 = vrot.slane %v776, 5
      %v779 = vsel %vm515, %v774, %v778
      %v781 = vshrl.u32 %v498, 16
      %v783 = vrot.slane %v781, 4
      %v784 = vshll.u32 %v498, 16
      %v786 = vrot.slane %v784, 5
      %v787 = vor.u32 %v783, %v786
      %v788 = vrot.slane %v787, 4
      %v790 = vshll.u32 %v499, 16
      %v792 = vrot.slane %v790, 5
      %v793 = vsel %vm515, %v788, %v792
      %v794 = vshrl.u32 %v499, 16
      %v796 = vrot.slane %v794, 4
      %v797 = vor.u32 %v796, %v792
      %v798 = vrot.slane %v797, 4
      %v800 = vshll.u32 %v500, 16
      %v802 = vrot.slane %v800, 5
      %v803 = vsel %vm515, %v798, %v802
      %v805 = vshrl.u32 %v501, 16
      %v807 = vrot.slane %v805, 4
      %v808 = vshll.u32 %v501, 16
      %v810 = vrot.slane %v808, 5
      %v811 = vor.u32 %v807, %v810
      %v812 = vrot.slane %v811, 4
      %v814 = vshll.u32 %v502, 16
      %v816 = vrot.slane %v814, 5
      %v817 = vsel %vm515, %v812, %v816
      %v818 = vshrl.u32 %v502, 16
      %v820 = vrot.slane %v818, 4
      %v821 = vor.u32 %v820, %v816
      %v822 = vrot.slane %v821, 4
      %v824 = vshll.u32 %v503, 16
      %v826 = vrot.slane %v824, 5
      %v827 = vsel %vm515, %v822, %v826
      %v829 = vshrl.u32 %v504, 16
      %v831 = vrot.slane %v829, 4
      %v832 = vshll.u32 %v504, 16
      %v834 = vrot.slane %v832, 5
      %v835 = vor.u32 %v831, %v834
      %v836 = vrot.slane %v835, 4
      %v838 = vshll.u32 %v505, 16
      %v840 = vrot.slane %v838, 5
      %v841 = vsel %vm515, %v836, %v840
      %v842 = vshrl.u32 %v505, 16
      %v844 = vrot.slane %v842, 4
      %v845 = vor.u32 %v844, %v840
      %v846 = vrot.slane %v845, 4
      %v848 = vshll.u32 %v506, 16
      %v850 = vrot.slane %v848, 5
      %v851 = vsel %vm515, %v846, %v850
      %v853 = vshrl.u32 %v507, 16
      %v855 = vrot.slane %v853, 4
      %v856 = vshll.u32 %v507, 16
      %v858 = vrot.slane %v856, 5
      %v859 = vor.u32 %v855, %v858
      %v860 = vrot.slane %v859, 4
      %v862 = vshll.u32 %v508, 16
      %v864 = vrot.slane %v862, 5
      %v865 = vsel %vm515, %v860, %v864
      %v866 = vshrl.u32 %v508, 16
      %v868 = vrot.slane %v866, 4
      %v869 = vor.u32 %v868, %v864
      %v870 = vrot.slane %v869, 4
      %v872 = vshll.u32 %v509, 16
      %v874 = vrot.slane %v872, 5
      %v875 = vsel %vm515, %v870, %v874
      %v877 = vshrl.u32 %v510, 16
      %v879 = vrot.slane %v877, 4
      %v880 = vshll.u32 %v510, 16
      %v882 = vrot.slane %v880, 5
      %v883 = vor.u32 %v879, %v882
      %v884 = vrot.slane %v883, 4
      %v886 = vshll.u32 %v511, 16
      %v888 = vrot.slane %v886, 5
      %v889 = vsel %vm515, %v884, %v888
      %v890 = vshrl.u32 %v511, 16
      %v892 = vrot.slane %v890, 4
      %v893 = vor.u32 %v892, %v888
      %v894 = vrot.slane %v893, 4
      %v896 = vshll.u32 %v512, 16
      %v898 = vrot.slane %v896, 5
      %v899 = vsel %vm515, %v894, %v898
      %932 = vst [vmem:[#allocation3 + $0x4] sm:$0xf] %v529
      %933 = vst [vmem:[#allocation3 + $0x28] sm:$0xf] %v539
      %934 = vst [vmem:[#allocation3 + $0x4c] sm:$0xf] %v553
      %935 = vst [vmem:[#allocation3 + $0x70] sm:$0xf] %v563
      %936 = vst [vmem:[#allocation3 + $0x94] sm:$0xf] %v577
      %937 = vst [vmem:[#allocation3 + $0xb8] sm:$0xf] %v587
      %938 = vst [vmem:[#allocation3 + $0xdc] sm:$0xf] %v601
      %939 = vst [vmem:[#allocation3 + $0x100] sm:$0xf] %v611
      %940 = vst [vmem:[#allocation3 + $0x124] sm:$0xf] %v625
      %941 = vst [vmem:[#allocation3 + $0x148] sm:$0xf] %v635
      %942 = vst [vmem:[#allocation3 + $0x16c] sm:$0xf] %v649
      %943 = vst [vmem:[#allocation3 + $0x190] sm:$0xf] %v659
      %944 = vst [vmem:[#allocation3 + $0x1b4] sm:$0xf] %v673
      %945 = vst [vmem:[#allocation3 + $0x1d8] sm:$0xf] %v683
      %946 = vst [vmem:[#allocation3 + $0x1fc] sm:$0xf] %v697
      %947 = vst [vmem:[#allocation3 + $0x220] sm:$0xf] %v707
      %948 = vst [vmem:[#allocation3 + $0x244] sm:$0xf] %v721
      %949 = vst [vmem:[#allocation3 + $0x268] sm:$0xf] %v731
      %950 = vst [vmem:[#allocation3 + $0x28c] sm:$0xf] %v745
      %951 = vst [vmem:[#allocation3 + $0x2b0] sm:$0xf] %v755
      %952 = vst [vmem:[#allocation3 + $0x2d4] sm:$0xf] %v769
      %953 = vst [vmem:[#allocation3 + $0x2f8] sm:$0xf] %v779
      %954 = vst [vmem:[#allocation3 + $0x31c] sm:$0xf] %v793
      %955 = vst [vmem:[#allocation3 + $0x340] sm:$0xf] %v803
      %956 = vst [vmem:[#allocation3 + $0x364] sm:$0xf] %v817
      %957 = vst [vmem:[#allocation3 + $0x388] sm:$0xf] %v827
      %958 = vst [vmem:[#allocation3 + $0x3ac] sm:$0xf] %v841
      %959 = vst [vmem:[#allocation3 + $0x3d0] sm:$0xf] %v851
      %960 = vst [vmem:[#allocation3 + $0x3f4] sm:$0xf] %v865
      %961 = vst [vmem:[#allocation3 + $0x418] sm:$0xf] %v875
      %962 = vst [vmem:[#allocation3 + $0x43c] sm:$0xf] %v889
      %963 = vst [vmem:[#allocation3 + $0x460] sm:$0xf] %v899
      %v964 = vld [vmem:[%s273] sm:$0xe]
      %v965 = vld [vmem:[%s273 + $0x4] sm:$0xf]
      %v966 = vld [vmem:[%s273 + $0x8] sm:$0x1]
      %v967 = vld [vmem:[%s273 + $0xc] sm:$0xe]
      %v968 = vld [vmem:[%s273 + $0x10] sm:$0xf]
      %v969 = vld [vmem:[%s273 + $0x14] sm:$0x1]
      %v970 = vld [vmem:[%s273 + $0x18] sm:$0xe]
      %v971 = vld [vmem:[%s273 + $0x1c] sm:$0xf]
      %v972 = vld [vmem:[%s273 + $0x20] sm:$0x1]
      %v973 = vld [vmem:[%s273 + $0x24] sm:$0xe]
      %v974 = vld [vmem:[%s273 + $0x28] sm:$0xf]
      %v975 = vld [vmem:[%s273 + $0x2c] sm:$0x1]
      %v976 = vld [vmem:[%s273 + $0x30] sm:$0xe]
      %v977 = vld [vmem:[%s273 + $0x34] sm:$0xf]
      %v978 = vld [vmem:[%s273 + $0x38] sm:$0x1]
      %v979 = vld [vmem:[%s273 + $0x3c] sm:$0xe]
      %v980 = vld [vmem:[%s273 + $0x40] sm:$0xf]
      %v981 = vld [vmem:[%s273 + $0x44] sm:$0x1]
      %v982 = vld [vmem:[%s273 + $0x48] sm:$0xe]
      %v983 = vld [vmem:[%s273 + $0x4c] sm:$0xf]
      %v984 = vld [vmem:[%s273 + $0x50] sm:$0x1]
      %v985 = vld [vmem:[%s273 + $0x54] sm:$0xe]
      %v986 = vld [vmem:[%s273 + $0x58] sm:$0xf]
      %v987 = vld [vmem:[%s273 + $0x5c] sm:$0x1]
      %v988 = vld [vmem:[%s273 + $0x60] sm:$0xe]
      %v989 = vld [vmem:[%s273 + $0x64] sm:$0xf]
      %v990 = vld [vmem:[%s273 + $0x68] sm:$0x1]
      %v991 = vld [vmem:[%s273 + $0x6c] sm:$0xe]
      %v992 = vld [vmem:[%s273 + $0x70] sm:$0xf]
      %v993 = vld [vmem:[%s273 + $0x74] sm:$0x1]
      %v994 = vld [vmem:[%s273 + $0x78] sm:$0xe]
      %v995 = vld [vmem:[%s273 + $0x7c] sm:$0xf]
      %v996 = vld [vmem:[%s273 + $0x80] sm:$0x1]
      %v997 = vld [vmem:[%s273 + $0x84] sm:$0xe]
      %v998 = vld [vmem:[%s273 + $0x88] sm:$0xf]
      %v999 = vld [vmem:[%s273 + $0x8c] sm:$0x1]
      %v1000 = vld [vmem:[%s273 + $0x90] sm:$0xe]
      %v1001 = vld [vmem:[%s273 + $0x94] sm:$0xf]
      %v1002 = vld [vmem:[%s273 + $0x98] sm:$0x1]
      %v1003 = vld [vmem:[%s273 + $0x9c] sm:$0xe]
      %v1004 = vld [vmem:[%s273 + $0xa0] sm:$0xf]
      %v1005 = vld [vmem:[%s273 + $0xa4] sm:$0x1]
      %v1006 = vld [vmem:[%s273 + $0xa8] sm:$0xe]
      %v1007 = vld [vmem:[%s273 + $0xac] sm:$0xf]
      %v1008 = vld [vmem:[%s273 + $0xb0] sm:$0x1]
      %v1009 = vld [vmem:[%s273 + $0xb4] sm:$0xe]
      %v1010 = vld [vmem:[%s273 + $0xb8] sm:$0xf]
      %v1011 = vld [vmem:[%s273 + $0xbc] sm:$0x1]
      %vm1060 = vcmask 1042432
      %vm1061 = vcmask 1046532
      %vm1062 = vmor %vm1060, %vm1061
      %v1063 = vrot.slane %v964, 5
      %v1064 = vrot.slane %v1063, 4
      %v1065 = vrot.slane %v965, 5
      %v1066 = vsel %vm1062, %v1064, %v1065
      %v1067 = vrot.slane %v1065, 4
      %v1068 = vrot.slane %v966, 5
      %v1069 = vsel %vm1062, %v1067, %v1068
      %v1070 = vrot.slane %v967, 5
      %v1071 = vrot.slane %v1070, 4
      %v1072 = vrot.slane %v968, 5
      %v1073 = vsel %vm1062, %v1071, %v1072
      %v1074 = vrot.slane %v1072, 4
      %v1075 = vrot.slane %v969, 5
      %v1076 = vsel %vm1062, %v1074, %v1075
      %v1077 = vrot.slane %v970, 5
      %v1078 = vrot.slane %v1077, 4
      %v1079 = vrot.slane %v971, 5
      %v1080 = vsel %vm1062, %v1078, %v1079
      %v1081 = vrot.slane %v1079, 4
      %v1082 = vrot.slane %v972, 5
      %v1083 = vsel %vm1062, %v1081, %v1082
      %v1084 = vrot.slane %v973, 5
      %v1085 = vrot.slane %v1084, 4
      %v1086 = vrot.slane %v974, 5
      %v1087 = vsel %vm1062, %v1085, %v1086
      %v1088 = vrot.slane %v1086, 4
      %v1089 = vrot.slane %v975, 5
      %v1090 = vsel %vm1062, %v1088, %v1089
      %v1091 = vrot.slane %v976, 5
      %v1092 = vrot.slane %v1091, 4
      %v1093 = vrot.slane %v977, 5
      %v1094 = vsel %vm1062, %v1092, %v1093
      %v1095 = vrot.slane %v1093, 4
      %v1096 = vrot.slane %v978, 5
      %v1097 = vsel %vm1062, %v1095, %v1096
      %v1098 = vrot.slane %v979, 5
      %v1099 = vrot.slane %v1098, 4
      %v1100 = vrot.slane %v980, 5
      %v1101 = vsel %vm1062, %v1099, %v1100
      %v1102 = vrot.slane %v1100, 4
      %v1103 = vrot.slane %v981, 5
      %v1104 = vsel %vm1062, %v1102, %v1103
      %v1105 = vrot.slane %v982, 5
      %v1106 = vrot.slane %v1105, 4
      %v1107 = vrot.slane %v983, 5
      %v1108 = vsel %vm1062, %v1106, %v1107
      %v1109 = vrot.slane %v1107, 4
      %v1110 = vrot.slane %v984, 5
      %v1111 = vsel %vm1062, %v1109, %v1110
      %v1112 = vrot.slane %v985, 5
      %v1113 = vrot.slane %v1112, 4
      %v1114 = vrot.slane %v986, 5
      %v1115 = vsel %vm1062, %v1113, %v1114
      %v1116 = vrot.slane %v1114, 4
      %v1117 = vrot.slane %v987, 5
      %v1118 = vsel %vm1062, %v1116, %v1117
      %v1119 = vrot.slane %v988, 5
      %v1120 = vrot.slane %v1119, 4
      %v1121 = vrot.slane %v989, 5
      %v1122 = vsel %vm1062, %v1120, %v1121
      %v1123 = vrot.slane %v1121, 4
      %v1124 = vrot.slane %v990, 5
      %v1125 = vsel %vm1062, %v1123, %v1124
      %v1126 = vrot.slane %v991, 5
      %v1127 = vrot.slane %v1126, 4
      %v1128 = vrot.slane %v992, 5
      %v1129 = vsel %vm1062, %v1127, %v1128
      %v1130 = vrot.slane %v1128, 4
      %v1131 = vrot.slane %v993, 5
      %v1132 = vsel %vm1062, %v1130, %v1131
      %v1133 = vrot.slane %v994, 5
      %v1134 = vrot.slane %v1133, 4
      %v1135 = vrot.slane %v995, 5
      %v1136 = vsel %vm1062, %v1134, %v1135
      %v1137 = vrot.slane %v1135, 4
      %v1138 = vrot.slane %v996, 5
      %v1139 = vsel %vm1062, %v1137, %v1138
      %v1140 = vrot.slane %v997, 5
      %v1141 = vrot.slane %v1140, 4
      %v1142 = vrot.slane %v998, 5
      %v1143 = vsel %vm1062, %v1141, %v1142
      %v1144 = vrot.slane %v1142, 4
      %v1145 = vrot.slane %v999, 5
      %v1146 = vsel %vm1062, %v1144, %v1145
      %v1147 = vrot.slane %v1000, 5
      %v1148 = vrot.slane %v1147, 4
      %v1149 = vrot.slane %v1001, 5
      %v1150 = vsel %vm1062, %v1148, %v1149
      %v1151 = vrot.slane %v1149, 4
      %v1152 = vrot.slane %v1002, 5
      %v1153 = vsel %vm1062, %v1151, %v1152
      %v1154 = vrot.slane %v1003, 5
      %v1155 = vrot.slane %v1154, 4
      %v1156 = vrot.slane %v1004, 5
      %v1157 = vsel %vm1062, %v1155, %v1156
      %v1158 = vrot.slane %v1156, 4
      %v1159 = vrot.slane %v1005, 5
      %v1160 = vsel %vm1062, %v1158, %v1159
      %v1161 = vrot.slane %v1006, 5
      %v1162 = vrot.slane %v1161, 4
      %v1163 = vrot.slane %v1007, 5
      %v1164 = vsel %vm1062, %v1162, %v1163
      %v1165 = vrot.slane %v1163, 4
      %v1166 = vrot.slane %v1008, 5
      %v1167 = vsel %vm1062, %v1165, %v1166
      %v1168 = vrot.slane %v1009, 5
      %v1169 = vrot.slane %v1168, 4
      %v1170 = vrot.slane %v1010, 5
      %v1171 = vsel %vm1062, %v1169, %v1170
      %v1172 = vrot.slane %v1170, 4
      %v1173 = vrot.slane %v1011, 5
      %v1174 = vsel %vm1062, %v1172, %v1173
      %1207 = vst [vmem:[#allocation3 + $0x8] sm:$0xf] %v1066
      %1208 = vst [vmem:[#allocation3 + $0x2c] sm:$0xf] %v1069
      %1209 = vst [vmem:[#allocation3 + $0x50] sm:$0xf] %v1073
      %1210 = vst [vmem:[#allocation3 + $0x74] sm:$0xf] %v1076
      %1211 = vst [vmem:[#allocation3 + $0x98] sm:$0xf] %v1080
      %1212 = vst [vmem:[#allocation3 + $0xbc] sm:$0xf] %v1083
      %1213 = vst [vmem:[#allocation3 + $0xe0] sm:$0xf] %v1087
      %1214 = vst [vmem:[#allocation3 + $0x104] sm:$0xf] %v1090
      %1215 = vst [vmem:[#allocation3 + $0x128] sm:$0xf] %v1094
      %1216 = vst [vmem:[#allocation3 + $0x14c] sm:$0xf] %v1097
      %1217 = vst [vmem:[#allocation3 + $0x170] sm:$0xf] %v1101
      %1218 = vst [vmem:[#allocation3 + $0x194] sm:$0xf] %v1104
      %1219 = vst [vmem:[#allocation3 + $0x1b8] sm:$0xf] %v1108
      %1220 = vst [vmem:[#allocation3 + $0x1dc] sm:$0xf] %v1111
      %1221 = vst [vmem:[#allocation3 + $0x200] sm:$0xf] %v1115
      %1222 = vst [vmem:[#allocation3 + $0x224] sm:$0xf] %v1118
      %1223 = vst [vmem:[#allocation3 + $0x248] sm:$0xf] %v1122
      %1224 = vst [vmem:[#allocation3 + $0x26c] sm:$0xf] %v1125
      %1225 = vst [vmem:[#allocation3 + $0x290] sm:$0xf] %v1129
      %1226 = vst [vmem:[#allocation3 + $0x2b4] sm:$0xf] %v1132
      %1227 = vst [vmem:[#allocation3 + $0x2d8] sm:$0xf] %v1136
      %1228 = vst [vmem:[#allocation3 + $0x2fc] sm:$0xf] %v1139
      %1229 = vst [vmem:[#allocation3 + $0x320] sm:$0xf] %v1143
      %1230 = vst [vmem:[#allocation3 + $0x344] sm:$0xf] %v1146
      %1231 = vst [vmem:[#allocation3 + $0x368] sm:$0xf] %v1150
      %1232 = vst [vmem:[#allocation3 + $0x38c] sm:$0xf] %v1153
      %1233 = vst [vmem:[#allocation3 + $0x3b0] sm:$0xf] %v1157
      %1234 = vst [vmem:[#allocation3 + $0x3d4] sm:$0xf] %v1160
      %1235 = vst [vmem:[#allocation3 + $0x3f8] sm:$0xf] %v1164
      %1236 = vst [vmem:[#allocation3 + $0x41c] sm:$0xf] %v1167
      %1237 = vst [vmem:[#allocation3 + $0x440] sm:$0xf] %v1171
      %1238 = vst [vmem:[#allocation3 + $0x464] sm:$0xf] %v1174
      %s1239 = scalar_lea.vmem %s273, 12
      %v1240 = vld [vmem:[%s1239] sm:$0xf]
      %v1241 = vld [vmem:[%s1239 + $0x4] sm:$0xf]
      %v1242 = vld [vmem:[%s1239 + $0xc] sm:$0xf]
      %v1243 = vld [vmem:[%s1239 + $0x10] sm:$0xf]
      %v1244 = vld [vmem:[%s1239 + $0x18] sm:$0xf]
      %v1245 = vld [vmem:[%s1239 + $0x1c] sm:$0xf]
      %v1246 = vld [vmem:[%s1239 + $0x24] sm:$0xf]
      %v1247 = vld [vmem:[%s1239 + $0x28] sm:$0xf]
      %v1248 = vld [vmem:[%s1239 + $0x30] sm:$0xf]
      %v1249 = vld [vmem:[%s1239 + $0x34] sm:$0xf]
      %v1250 = vld [vmem:[%s1239 + $0x3c] sm:$0xf]
      %v1251 = vld [vmem:[%s1239 + $0x40] sm:$0xf]
      %v1252 = vld [vmem:[%s1239 + $0x48] sm:$0xf]
      %v1253 = vld [vmem:[%s1239 + $0x4c] sm:$0xf]
      %v1254 = vld [vmem:[%s1239 + $0x54] sm:$0xf]
      %v1255 = vld [vmem:[%s1239 + $0x58] sm:$0xf]
      %v1256 = vld [vmem:[%s1239 + $0x60] sm:$0xf]
      %v1257 = vld [vmem:[%s1239 + $0x64] sm:$0xf]
      %v1258 = vld [vmem:[%s1239 + $0x6c] sm:$0xf]
      %v1259 = vld [vmem:[%s1239 + $0x70] sm:$0xf]
      %v1260 = vld [vmem:[%s1239 + $0x78] sm:$0xf]
      %v1261 = vld [vmem:[%s1239 + $0x7c] sm:$0xf]
      %v1262 = vld [vmem:[%s1239 + $0x84] sm:$0xf]
      %v1263 = vld [vmem:[%s1239 + $0x88] sm:$0xf]
      %v1264 = vld [vmem:[%s1239 + $0x90] sm:$0xf]
      %v1265 = vld [vmem:[%s1239 + $0x94] sm:$0xf]
      %v1266 = vld [vmem:[%s1239 + $0x9c] sm:$0xf]
      %v1267 = vld [vmem:[%s1239 + $0xa0] sm:$0xf]
      %v1268 = vld [vmem:[%s1239 + $0xa8] sm:$0xf]
      %v1269 = vld [vmem:[%s1239 + $0xac] sm:$0xf]
      %v1270 = vld [vmem:[%s1239 + $0xb4] sm:$0xf]
      %v1271 = vld [vmem:[%s1239 + $0xb8] sm:$0xf]
      %1272 = vst [vmem:[#allocation3 + $0xc] sm:$0xf] %v1240
      %1273 = vst [vmem:[#allocation3 + $0x30] sm:$0xf] %v1241
      %1274 = vst [vmem:[#allocation3 + $0x54] sm:$0xf] %v1242
      %1275 = vst [vmem:[#allocation3 + $0x78] sm:$0xf] %v1243
      %1276 = vst [vmem:[#allocation3 + $0x9c] sm:$0xf] %v1244
      %1277 = vst [vmem:[#allocation3 + $0xc0] sm:$0xf] %v1245
      %1278 = vst [vmem:[#allocation3 + $0xe4] sm:$0xf] %v1246
      %1279 = vst [vmem:[#allocation3 + $0x108] sm:$0xf] %v1247
      %1280 = vst [vmem:[#allocation3 + $0x12c] sm:$0xf] %v1248
      %1281 = vst [vmem:[#allocation3 + $0x150] sm:$0xf] %v1249
      %1282 = vst [vmem:[#allocation3 + $0x174] sm:$0xf] %v1250
      %1283 = vst [vmem:[#allocation3 + $0x198] sm:$0xf] %v1251
      %1284 = vst [vmem:[#allocation3 + $0x1bc] sm:$0xf] %v1252
      %1285 = vst [vmem:[#allocation3 + $0x1e0] sm:$0xf] %v1253
      %1286 = vst [vmem:[#allocation3 + $0x204] sm:$0xf] %v1254
      %1287 = vst [vmem:[#allocation3 + $0x228] sm:$0xf] %v1255
      %1288 = vst [vmem:[#allocation3 + $0x24c] sm:$0xf] %v1256
      %1289 = vst [vmem:[#allocation3 + $0x270] sm:$0xf] %v1257
      %1290 = vst [vmem:[#allocation3 + $0x294] sm:$0xf] %v1258
      %1291 = vst [vmem:[#allocation3 + $0x2b8] sm:$0xf] %v1259
      %1292 = vst [vmem:[#allocation3 + $0x2dc] sm:$0xf] %v1260
      %1293 = vst [vmem:[#allocation3 + $0x300] sm:$0xf] %v1261
      %1294 = vst [vmem:[#allocation3 + $0x324] sm:$0xf] %v1262
      %1295 = vst [vmem:[#allocation3 + $0x348] sm:$0xf] %v1263
      %1296 = vst [vmem:[#allocation3 + $0x36c] sm:$0xf] %v1264
      %1297 = vst [vmem:[#allocation3 + $0x390] sm:$0xf] %v1265
      %1298 = vst [vmem:[#allocation3 + $0x3b4] sm:$0xf] %v1266
      %1299 = vst [vmem:[#allocation3 + $0x3d8] sm:$0xf] %v1267
      %1300 = vst [vmem:[#allocation3 + $0x3fc] sm:$0xf] %v1268
      %1301 = vst [vmem:[#allocation3 + $0x420] sm:$0xf] %v1269
      %1302 = vst [vmem:[#allocation3 + $0x444] sm:$0xf] %v1270
      %1303 = vst [vmem:[#allocation3 + $0x468] sm:$0xf] %v1271
      %v1304 = vld [vmem:[%s1239] sm:$0xf]
      %v1305 = vld [vmem:[%s1239 + $0x4] sm:$0xf]
      %v1306 = vld [vmem:[%s1239 + $0x8] sm:$0x1]
      %v1307 = vld [vmem:[%s1239 + $0xc] sm:$0xf]
      %v1308 = vld [vmem:[%s1239 + $0x10] sm:$0xf]
      %v1309 = vld [vmem:[%s1239 + $0x14] sm:$0x1]
      %v1310 = vld [vmem:[%s1239 + $0x18] sm:$0xf]
      %v1311 = vld [vmem:[%s1239 + $0x1c] sm:$0xf]
      %v1312 = vld [vmem:[%s1239 + $0x20] sm:$0x1]
      %v1313 = vld [vmem:[%s1239 + $0x24] sm:$0xf]
      %v1314 = vld [vmem:[%s1239 + $0x28] sm:$0xf]
      %v1315 = vld [vmem:[%s1239 + $0x2c] sm:$0x1]
      %v1316 = vld [vmem:[%s1239 + $0x30] sm:$0xf]
      %v1317 = vld [vmem:[%s1239 + $0x34] sm:$0xf]
      %v1318 = vld [vmem:[%s1239 + $0x38] sm:$0x1]
      %v1319 = vld [vmem:[%s1239 + $0x3c] sm:$0xf]
      %v1320 = vld [vmem:[%s1239 + $0x40] sm:$0xf]
      %v1321 = vld [vmem:[%s1239 + $0x44] sm:$0x1]
      %v1322 = vld [vmem:[%s1239 + $0x48] sm:$0xf]
      %v1323 = vld [vmem:[%s1239 + $0x4c] sm:$0xf]
      %v1324 = vld [vmem:[%s1239 + $0x50] sm:$0x1]
      %v1325 = vld [vmem:[%s1239 + $0x54] sm:$0xf]
      %v1326 = vld [vmem:[%s1239 + $0x58] sm:$0xf]
      %v1327 = vld [vmem:[%s1239 + $0x5c] sm:$0x1]
      %v1328 = vld [vmem:[%s1239 + $0x60] sm:$0xf]
      %v1329 = vld [vmem:[%s1239 + $0x64] sm:$0xf]
      %v1330 = vld [vmem:[%s1239 + $0x68] sm:$0x1]
      %v1331 = vld [vmem:[%s1239 + $0x6c] sm:$0xf]
      %v1332 = vld [vmem:[%s1239 + $0x70] sm:$0xf]
      %v1333 = vld [vmem:[%s1239 + $0x74] sm:$0x1]
      %v1334 = vld [vmem:[%s1239 + $0x78] sm:$0xf]
      %v1335 = vld [vmem:[%s1239 + $0x7c] sm:$0xf]
      %v1336 = vld [vmem:[%s1239 + $0x80] sm:$0x1]
      %v1337 = vld [vmem:[%s1239 + $0x84] sm:$0xf]
      %v1338 = vld [vmem:[%s1239 + $0x88] sm:$0xf]
      %v1339 = vld [vmem:[%s1239 + $0x8c] sm:$0x1]
      %v1340 = vld [vmem:[%s1239 + $0x90] sm:$0xf]
      %v1341 = vld [vmem:[%s1239 + $0x94] sm:$0xf]
      %v1342 = vld [vmem:[%s1239 + $0x98] sm:$0x1]
      %v1343 = vld [vmem:[%s1239 + $0x9c] sm:$0xf]
      %v1344 = vld [vmem:[%s1239 + $0xa0] sm:$0xf]
      %v1345 = vld [vmem:[%s1239 + $0xa4] sm:$0x1]
      %v1346 = vld [vmem:[%s1239 + $0xa8] sm:$0xf]
      %v1347 = vld [vmem:[%s1239 + $0xac] sm:$0xf]
      %v1348 = vld [vmem:[%s1239 + $0xb0] sm:$0x1]
      %v1349 = vld [vmem:[%s1239 + $0xb4] sm:$0xf]
      %v1350 = vld [vmem:[%s1239 + $0xb8] sm:$0xf]
      %v1351 = vld [vmem:[%s1239 + $0xbc] sm:$0x1]
      %v1353 = vshrl.u32 %v1304, 16
      %v1355 = vrot.slane %v1353, 4
      %v1356 = vshll.u32 %v1304, 16
      %v1358 = vrot.slane %v1356, 5
      %v1359 = vor.u32 %v1355, %v1358
      %v1360 = vrot.slane %v1359, 4
      %v1362 = vshll.u32 %v1305, 16
      %v1364 = vrot.slane %v1362, 5
      %v1365 = vsel %vm515, %v1360, %v1364
      %v1366 = vshrl.u32 %v1305, 16
      %v1368 = vrot.slane %v1366, 4
      %v1369 = vor.u32 %v1368, %v1364
      %v1370 = vrot.slane %v1369, 4
      %v1372 = vshll.u32 %v1306, 16
      %v1374 = vrot.slane %v1372, 5
      %v1375 = vsel %vm515, %v1370, %v1374
      %v1377 = vshrl.u32 %v1307, 16
      %v1379 = vrot.slane %v1377, 4
      %v1380 = vshll.u32 %v1307, 16
      %v1382 = vrot.slane %v1380, 5
      %v1383 = vor.u32 %v1379, %v1382
      %v1384 = vrot.slane %v1383, 4
      %v1386 = vshll.u32 %v1308, 16
      %v1388 = vrot.slane %v1386, 5
      %v1389 = vsel %vm515, %v1384, %v1388
      %v1390 = vshrl.u32 %v1308, 16
      %v1392 = vrot.slane %v1390, 4
      %v1393 = vor.u32 %v1392, %v1388
      %v1394 = vrot.slane %v1393, 4
      %v1396 = vshll.u32 %v1309, 16
      %v1398 = vrot.slane %v1396, 5
      %v1399 = vsel %vm515, %v1394, %v1398
      %v1401 = vshrl.u32 %v1310, 16
      %v1403 = vrot.slane %v1401, 4
      %v1404 = vshll.u32 %v1310, 16
      %v1406 = vrot.slane %v1404, 5
      %v1407 = vor.u32 %v1403, %v1406
      %v1408 = vrot.slane %v1407, 4
      %v1410 = vshll.u32 %v1311, 16
      %v1412 = vrot.slane %v1410, 5
      %v1413 = vsel %vm515, %v1408, %v1412
      %v1414 = vshrl.u32 %v1311, 16
      %v1416 = vrot.slane %v1414, 4
      %v1417 = vor.u32 %v1416, %v1412
      %v1418 = vrot.slane %v1417, 4
      %v1420 = vshll.u32 %v1312, 16
      %v1422 = vrot.slane %v1420, 5
      %v1423 = vsel %vm515, %v1418, %v1422
      %v1425 = vshrl.u32 %v1313, 16
      %v1427 = vrot.slane %v1425, 4
      %v1428 = vshll.u32 %v1313, 16
      %v1430 = vrot.slane %v1428, 5
      %v1431 = vor.u32 %v1427, %v1430
      %v1432 = vrot.slane %v1431, 4
      %v1434 = vshll.u32 %v1314, 16
      %v1436 = vrot.slane %v1434, 5
      %v1437 = vsel %vm515, %v1432, %v1436
      %v1438 = vshrl.u32 %v1314, 16
      %v1440 = vrot.slane %v1438, 4
      %v1441 = vor.u32 %v1440, %v1436
      %v1442 = vrot.slane %v1441, 4
      %v1444 = vshll.u32 %v1315, 16
      %v1446 = vrot.slane %v1444, 5
      %v1447 = vsel %vm515, %v1442, %v1446
      %v1449 = vshrl.u32 %v1316, 16
      %v1451 = vrot.slane %v1449, 4
      %v1452 = vshll.u32 %v1316, 16
      %v1454 = vrot.slane %v1452, 5
      %v1455 = vor.u32 %v1451, %v1454
      %v1456 = vrot.slane %v1455, 4
      %v1458 = vshll.u32 %v1317, 16
      %v1460 = vrot.slane %v1458, 5
      %v1461 = vsel %vm515, %v1456, %v1460
      %v1462 = vshrl.u32 %v1317, 16
      %v1464 = vrot.slane %v1462, 4
      %v1465 = vor.u32 %v1464, %v1460
      %v1466 = vrot.slane %v1465, 4
      %v1468 = vshll.u32 %v1318, 16
      %v1470 = vrot.slane %v1468, 5
      %v1471 = vsel %vm515, %v1466, %v1470
      %v1473 = vshrl.u32 %v1319, 16
      %v1475 = vrot.slane %v1473, 4
      %v1476 = vshll.u32 %v1319, 16
      %v1478 = vrot.slane %v1476, 5
      %v1479 = vor.u32 %v1475, %v1478
      %v1480 = vrot.slane %v1479, 4
      %v1482 = vshll.u32 %v1320, 16
      %v1484 = vrot.slane %v1482, 5
      %v1485 = vsel %vm515, %v1480, %v1484
      %v1486 = vshrl.u32 %v1320, 16
      %v1488 = vrot.slane %v1486, 4
      %v1489 = vor.u32 %v1488, %v1484
      %v1490 = vrot.slane %v1489, 4
      %v1492 = vshll.u32 %v1321, 16
      %v1494 = vrot.slane %v1492, 5
      %v1495 = vsel %vm515, %v1490, %v1494
      %v1497 = vshrl.u32 %v1322, 16
      %v1499 = vrot.slane %v1497, 4
      %v1500 = vshll.u32 %v1322, 16
      %v1502 = vrot.slane %v1500, 5
      %v1503 = vor.u32 %v1499, %v1502
      %v1504 = vrot.slane %v1503, 4
      %v1506 = vshll.u32 %v1323, 16
      %v1508 = vrot.slane %v1506, 5
      %v1509 = vsel %vm515, %v1504, %v1508
      %v1510 = vshrl.u32 %v1323, 16
      %v1512 = vrot.slane %v1510, 4
      %v1513 = vor.u32 %v1512, %v1508
      %v1514 = vrot.slane %v1513, 4
      %v1516 = vshll.u32 %v1324, 16
      %v1518 = vrot.slane %v1516, 5
      %v1519 = vsel %vm515, %v1514, %v1518
      %v1521 = vshrl.u32 %v1325, 16
      %v1523 = vrot.slane %v1521, 4
      %v1524 = vshll.u32 %v1325, 16
      %v1526 = vrot.slane %v1524, 5
      %v1527 = vor.u32 %v1523, %v1526
      %v1528 = vrot.slane %v1527, 4
      %v1530 = vshll.u32 %v1326, 16
      %v1532 = vrot.slane %v1530, 5
      %v1533 = vsel %vm515, %v1528, %v1532
      %v1534 = vshrl.u32 %v1326, 16
      %v1536 = vrot.slane %v1534, 4
      %v1537 = vor.u32 %v1536, %v1532
      %v1538 = vrot.slane %v1537, 4
      %v1540 = vshll.u32 %v1327, 16
      %v1542 = vrot.slane %v1540, 5
      %v1543 = vsel %vm515, %v1538, %v1542
      %v1545 = vshrl.u32 %v1328, 16
      %v1547 = vrot.slane %v1545, 4
      %v1548 = vshll.u32 %v1328, 16
      %v1550 = vrot.slane %v1548, 5
      %v1551 = vor.u32 %v1547, %v1550
      %v1552 = vrot.slane %v1551, 4
      %v1554 = vshll.u32 %v1329, 16
      %v1556 = vrot.slane %v1554, 5
      %v1557 = vsel %vm515, %v1552, %v1556
      %v1558 = vshrl.u32 %v1329, 16
      %v1560 = vrot.slane %v1558, 4
      %v1561 = vor.u32 %v1560, %v1556
      %v1562 = vrot.slane %v1561, 4
      %v1564 = vshll.u32 %v1330, 16
      %v1566 = vrot.slane %v1564, 5
      %v1567 = vsel %vm515, %v1562, %v1566
      %v1569 = vshrl.u32 %v1331, 16
      %v1571 = vrot.slane %v1569, 4
      %v1572 = vshll.u32 %v1331, 16
      %v1574 = vrot.slane %v1572, 5
      %v1575 = vor.u32 %v1571, %v1574
      %v1576 = vrot.slane %v1575, 4
      %v1578 = vshll.u32 %v1332, 16
      %v1580 = vrot.slane %v1578, 5
      %v1581 = vsel %vm515, %v1576, %v1580
      %v1582 = vshrl.u32 %v1332, 16
      %v1584 = vrot.slane %v1582, 4
      %v1585 = vor.u32 %v1584, %v1580
      %v1586 = vrot.slane %v1585, 4
      %v1588 = vshll.u32 %v1333, 16
      %v1590 = vrot.slane %v1588, 5
      %v1591 = vsel %vm515, %v1586, %v1590
      %v1593 = vshrl.u32 %v1334, 16
      %v1595 = vrot.slane %v1593, 4
      %v1596 = vshll.u32 %v1334, 16
      %v1598 = vrot.slane %v1596, 5
      %v1599 = vor.u32 %v1595, %v1598
      %v1600 = vrot.slane %v1599, 4
      %v1602 = vshll.u32 %v1335, 16
      %v1604 = vrot.slane %v1602, 5
      %v1605 = vsel %vm515, %v1600, %v1604
      %v1606 = vshrl.u32 %v1335, 16
      %v1608 = vrot.slane %v1606, 4
      %v1609 = vor.u32 %v1608, %v1604
      %v1610 = vrot.slane %v1609, 4
      %v1612 = vshll.u32 %v1336, 16
      %v1614 = vrot.slane %v1612, 5
      %v1615 = vsel %vm515, %v1610, %v1614
      %v1617 = vshrl.u32 %v1337, 16
      %v1619 = vrot.slane %v1617, 4
      %v1620 = vshll.u32 %v1337, 16
      %v1622 = vrot.slane %v1620, 5
      %v1623 = vor.u32 %v1619, %v1622
      %v1624 = vrot.slane %v1623, 4
      %v1626 = vshll.u32 %v1338, 16
      %v1628 = vrot.slane %v1626, 5
      %v1629 = vsel %vm515, %v1624, %v1628
      %v1630 = vshrl.u32 %v1338, 16
      %v1632 = vrot.slane %v1630, 4
      %v1633 = vor.u32 %v1632, %v1628
      %v1634 = vrot.slane %v1633, 4
      %v1636 = vshll.u32 %v1339, 16
      %v1638 = vrot.slane %v1636, 5
      %v1639 = vsel %vm515, %v1634, %v1638
      %v1641 = vshrl.u32 %v1340, 16
      %v1643 = vrot.slane %v1641, 4
      %v1644 = vshll.u32 %v1340, 16
      %v1646 = vrot.slane %v1644, 5
      %v1647 = vor.u32 %v1643, %v1646
      %v1648 = vrot.slane %v1647, 4
      %v1650 = vshll.u32 %v1341, 16
      %v1652 = vrot.slane %v1650, 5
      %v1653 = vsel %vm515, %v1648, %v1652
      %v1654 = vshrl.u32 %v1341, 16
      %v1656 = vrot.slane %v1654, 4
      %v1657 = vor.u32 %v1656, %v1652
      %v1658 = vrot.slane %v1657, 4
      %v1660 = vshll.u32 %v1342, 16
      %v1662 = vrot.slane %v1660, 5
      %v1663 = vsel %vm515, %v1658, %v1662
      %v1665 = vshrl.u32 %v1343, 16
      %v1667 = vrot.slane %v1665, 4
      %v1668 = vshll.u32 %v1343, 16
      %v1670 = vrot.slane %v1668, 5
      %v1671 = vor.u32 %v1667, %v1670
      %v1672 = vrot.slane %v1671, 4
      %v1674 = vshll.u32 %v1344, 16
      %v1676 = vrot.slane %v1674, 5
      %v1677 = vsel %vm515, %v1672, %v1676
      %v1678 = vshrl.u32 %v1344, 16
      %v1680 = vrot.slane %v1678, 4
      %v1681 = vor.u32 %v1680, %v1676
      %v1682 = vrot.slane %v1681, 4
      %v1684 = vshll.u32 %v1345, 16
      %v1686 = vrot.slane %v1684, 5
      %v1687 = vsel %vm515, %v1682, %v1686
      %v1689 = vshrl.u32 %v1346, 16
      %v1691 = vrot.slane %v1689, 4
      %v1692 = vshll.u32 %v1346, 16
      %v1694 = vrot.slane %v1692, 5
      %v1695 = vor.u32 %v1691, %v1694
      %v1696 = vrot.slane %v1695, 4
      %v1698 = vshll.u32 %v1347, 16
      %v1700 = vrot.slane %v1698, 5
      %v1701 = vsel %vm515, %v1696, %v1700
      %v1702 = vshrl.u32 %v1347, 16
      %v1704 = vrot.slane %v1702, 4
      %v1705 = vor.u32 %v1704, %v1700
      %v1706 = vrot.slane %v1705, 4
      %v1708 = vshll.u32 %v1348, 16
      %v1710 = vrot.slane %v1708, 5
      %v1711 = vsel %vm515, %v1706, %v1710
      %v1713 = vshrl.u32 %v1349, 16
      %v1715 = vrot.slane %v1713, 4
      %v1716 = vshll.u32 %v1349, 16
      %v1718 = vrot.slane %v1716, 5
      %v1719 = vor.u32 %v1715, %v1718
      %v1720 = vrot.slane %v1719, 4
      %v1722 = vshll.u32 %v1350, 16
      %v1724 = vrot.slane %v1722, 5
      %v1725 = vsel %vm515, %v1720, %v1724
      %v1726 = vshrl.u32 %v1350, 16
      %v1728 = vrot.slane %v1726, 4
      %v1729 = vor.u32 %v1728, %v1724
      %v1730 = vrot.slane %v1729, 4
      %v1732 = vshll.u32 %v1351, 16
      %v1734 = vrot.slane %v1732, 5
      %v1735 = vsel %vm515, %v1730, %v1734
      %1768 = vst [vmem:[#allocation3 + $0x10] sm:$0xf] %v1365
      %1769 = vst [vmem:[#allocation3 + $0x34] sm:$0xf] %v1375
      %1770 = vst [vmem:[#allocation3 + $0x58] sm:$0xf] %v1389
      %1771 = vst [vmem:[#allocation3 + $0x7c] sm:$0xf] %v1399
      %1772 = vst [vmem:[#allocation3 + $0xa0] sm:$0xf] %v1413
      %1773 = vst [vmem:[#allocation3 + $0xc4] sm:$0xf] %v1423
      %1774 = vst [vmem:[#allocation3 + $0xe8] sm:$0xf] %v1437
      %1775 = vst [vmem:[#allocation3 + $0x10c] sm:$0xf] %v1447
      %1776 = vst [vmem:[#allocation3 + $0x130] sm:$0xf] %v1461
      %1777 = vst [vmem:[#allocation3 + $0x154] sm:$0xf] %v1471
      %1778 = vst [vmem:[#allocation3 + $0x178] sm:$0xf] %v1485
      %1779 = vst [vmem:[#allocation3 + $0x19c] sm:$0xf] %v1495
      %1780 = vst [vmem:[#allocation3 + $0x1c0] sm:$0xf] %v1509
      %1781 = vst [vmem:[#allocation3 + $0x1e4] sm:$0xf] %v1519
      %1782 = vst [vmem:[#allocation3 + $0x208] sm:$0xf] %v1533
      %1783 = vst [vmem:[#allocation3 + $0x22c] sm:$0xf] %v1543
      %1784 = vst [vmem:[#allocation3 + $0x250] sm:$0xf] %v1557
      %1785 = vst [vmem:[#allocation3 + $0x274] sm:$0xf] %v1567
      %1786 = vst [vmem:[#allocation3 + $0x298] sm:$0xf] %v1581
      %1787 = vst [vmem:[#allocation3 + $0x2bc] sm:$0xf] %v1591
      %1788 = vst [vmem:[#allocation3 + $0x2e0] sm:$0xf] %v1605
      %1789 = vst [vmem:[#allocation3 + $0x304] sm:$0xf] %v1615
      %1790 = vst [vmem:[#allocation3 + $0x328] sm:$0xf] %v1629
      %1791 = vst [vmem:[#allocation3 + $0x34c] sm:$0xf] %v1639
      %1792 = vst [vmem:[#allocation3 + $0x370] sm:$0xf] %v1653
      %1793 = vst [vmem:[#allocation3 + $0x394] sm:$0xf] %v1663
      %1794 = vst [vmem:[#allocation3 + $0x3b8] sm:$0xf] %v1677
      %1795 = vst [vmem:[#allocation3 + $0x3dc] sm:$0xf] %v1687
      %1796 = vst [vmem:[#allocation3 + $0x400] sm:$0xf] %v1701
      %1797 = vst [vmem:[#allocation3 + $0x424] sm:$0xf] %v1711
      %1798 = vst [vmem:[#allocation3 + $0x448] sm:$0xf] %v1725
      %1799 = vst [vmem:[#allocation3 + $0x46c] sm:$0xf] %v1735
      %v1800 = vld [vmem:[%s1239] sm:$0xe]
      %v1801 = vld [vmem:[%s1239 + $0x4] sm:$0xf]
      %v1802 = vld [vmem:[%s1239 + $0x8] sm:$0x1]
      %v1803 = vld [vmem:[%s1239 + $0xc] sm:$0xe]
      %v1804 = vld [vmem:[%s1239 + $0x10] sm:$0xf]
      %v1805 = vld [vmem:[%s1239 + $0x14] sm:$0x1]
      %v1806 = vld [vmem:[%s1239 + $0x18] sm:$0xe]
      %v1807 = vld [vmem:[%s1239 + $0x1c] sm:$0xf]
      %v1808 = vld [vmem:[%s1239 + $0x20] sm:$0x1]
      %v1809 = vld [vmem:[%s1239 + $0x24] sm:$0xe]
      %v1810 = vld [vmem:[%s1239 + $0x28] sm:$0xf]
      %v1811 = vld [vmem:[%s1239 + $0x2c] sm:$0x1]
      %v1812 = vld [vmem:[%s1239 + $0x30] sm:$0xe]
      %v1813 = vld [vmem:[%s1239 + $0x34] sm:$0xf]
      %v1814 = vld [vmem:[%s1239 + $0x38] sm:$0x1]
      %v1815 = vld [vmem:[%s1239 + $0x3c] sm:$0xe]
      %v1816 = vld [vmem:[%s1239 + $0x40] sm:$0xf]
      %v1817 = vld [vmem:[%s1239 + $0x44] sm:$0x1]
      %v1818 = vld [vmem:[%s1239 + $0x48] sm:$0xe]
      %v1819 = vld [vmem:[%s1239 + $0x4c] sm:$0xf]
      %v1820 = vld [vmem:[%s1239 + $0x50] sm:$0x1]
      %v1821 = vld [vmem:[%s1239 + $0x54] sm:$0xe]
      %v1822 = vld [vmem:[%s1239 + $0x58] sm:$0xf]
      %v1823 = vld [vmem:[%s1239 + $0x5c] sm:$0x1]
      %v1824 = vld [vmem:[%s1239 + $0x60] sm:$0xe]
      %v1825 = vld [vmem:[%s1239 + $0x64] sm:$0xf]
      %v1826 = vld [vmem:[%s1239 + $0x68] sm:$0x1]
      %v1827 = vld [vmem:[%s1239 + $0x6c] sm:$0xe]
      %v1828 = vld [vmem:[%s1239 + $0x70] sm:$0xf]
      %v1829 = vld [vmem:[%s1239 + $0x74] sm:$0x1]
      %v1830 = vld [vmem:[%s1239 + $0x78] sm:$0xe]
      %v1831 = vld [vmem:[%s1239 + $0x7c] sm:$0xf]
      %v1832 = vld [vmem:[%s1239 + $0x80] sm:$0x1]
      %v1833 = vld [vmem:[%s1239 + $0x84] sm:$0xe]
      %v1834 = vld [vmem:[%s1239 + $0x88] sm:$0xf]
      %v1835 = vld [vmem:[%s1239 + $0x8c] sm:$0x1]
      %v1836 = vld [vmem:[%s1239 + $0x90] sm:$0xe]
      %v1837 = vld [vmem:[%s1239 + $0x94] sm:$0xf]
      %v1838 = vld [vmem:[%s1239 + $0x98] sm:$0x1]
      %v1839 = vld [vmem:[%s1239 + $0x9c] sm:$0xe]
      %v1840 = vld [vmem:[%s1239 + $0xa0] sm:$0xf]
      %v1841 = vld [vmem:[%s1239 + $0xa4] sm:$0x1]
      %v1842 = vld [vmem:[%s1239 + $0xa8] sm:$0xe]
      %v1843 = vld [vmem:[%s1239 + $0xac] sm:$0xf]
      %v1844 = vld [vmem:[%s1239 + $0xb0] sm:$0x1]
      %v1845 = vld [vmem:[%s1239 + $0xb4] sm:$0xe]
      %v1846 = vld [vmem:[%s1239 + $0xb8] sm:$0xf]
      %v1847 = vld [vmem:[%s1239 + $0xbc] sm:$0x1]
      %v1896 = vrot.slane %v1800, 5
      %v1897 = vrot.slane %v1896, 4
      %v1898 = vrot.slane %v1801, 5
      %v1899 = vsel %vm1062, %v1897, %v1898
      %v1900 = vrot.slane %v1898, 4
      %v1901 = vrot.slane %v1802, 5
      %v1902 = vsel %vm1062, %v1900, %v1901
      %v1903 = vrot.slane %v1803, 5
      %v1904 = vrot.slane %v1903, 4
      %v1905 = vrot.slane %v1804, 5
      %v1906 = vsel %vm1062, %v1904, %v1905
      %v1907 = vrot.slane %v1905, 4
      %v1908 = vrot.slane %v1805, 5
      %v1909 = vsel %vm1062, %v1907, %v1908
      %v1910 = vrot.slane %v1806, 5
      %v1911 = vrot.slane %v1910, 4
      %v1912 = vrot.slane %v1807, 5
      %v1913 = vsel %vm1062, %v1911, %v1912
      %v1914 = vrot.slane %v1912, 4
      %v1915 = vrot.slane %v1808, 5
      %v1916 = vsel %vm1062, %v1914, %v1915
      %v1917 = vrot.slane %v1809, 5
      %v1918 = vrot.slane %v1917, 4
      %v1919 = vrot.slane %v1810, 5
      %v1920 = vsel %vm1062, %v1918, %v1919
      %v1921 = vrot.slane %v1919, 4
      %v1922 = vrot.slane %v1811, 5
      %v1923 = vsel %vm1062, %v1921, %v1922
      %v1924 = vrot.slane %v1812, 5
      %v1925 = vrot.slane %v1924, 4
      %v1926 = vrot.slane %v1813, 5
      %v1927 = vsel %vm1062, %v1925, %v1926
      %v1928 = vrot.slane %v1926, 4
      %v1929 = vrot.slane %v1814, 5
      %v1930 = vsel %vm1062, %v1928, %v1929
      %v1931 = vrot.slane %v1815, 5
      %v1932 = vrot.slane %v1931, 4
      %v1933 = vrot.slane %v1816, 5
      %v1934 = vsel %vm1062, %v1932, %v1933
      %v1935 = vrot.slane %v1933, 4
      %v1936 = vrot.slane %v1817, 5
      %v1937 = vsel %vm1062, %v1935, %v1936
      %v1938 = vrot.slane %v1818, 5
      %v1939 = vrot.slane %v1938, 4
      %v1940 = vrot.slane %v1819, 5
      %v1941 = vsel %vm1062, %v1939, %v1940
      %v1942 = vrot.slane %v1940, 4
      %v1943 = vrot.slane %v1820, 5
      %v1944 = vsel %vm1062, %v1942, %v1943
      %v1945 = vrot.slane %v1821, 5
      %v1946 = vrot.slane %v1945, 4
      %v1947 = vrot.slane %v1822, 5
      %v1948 = vsel %vm1062, %v1946, %v1947
      %v1949 = vrot.slane %v1947, 4
      %v1950 = vrot.slane %v1823, 5
      %v1951 = vsel %vm1062, %v1949, %v1950
      %v1952 = vrot.slane %v1824, 5
      %v1953 = vrot.slane %v1952, 4
      %v1954 = vrot.slane %v1825, 5
      %v1955 = vsel %vm1062, %v1953, %v1954
      %v1956 = vrot.slane %v1954, 4
      %v1957 = vrot.slane %v1826, 5
      %v1958 = vsel %vm1062, %v1956, %v1957
      %v1959 = vrot.slane %v1827, 5
      %v1960 = vrot.slane %v1959, 4
      %v1961 = vrot.slane %v1828, 5
      %v1962 = vsel %vm1062, %v1960, %v1961
      %v1963 = vrot.slane %v1961, 4
      %v1964 = vrot.slane %v1829, 5
      %v1965 = vsel %vm1062, %v1963, %v1964
      %v1966 = vrot.slane %v1830, 5
      %v1967 = vrot.slane %v1966, 4
      %v1968 = vrot.slane %v1831, 5
      %v1969 = vsel %vm1062, %v1967, %v1968
      %v1970 = vrot.slane %v1968, 4
      %v1971 = vrot.slane %v1832, 5
      %v1972 = vsel %vm1062, %v1970, %v1971
      %v1973 = vrot.slane %v1833, 5
      %v1974 = vrot.slane %v1973, 4
      %v1975 = vrot.slane %v1834, 5
      %v1976 = vsel %vm1062, %v1974, %v1975
      %v1977 = vrot.slane %v1975, 4
      %v1978 = vrot.slane %v1835, 5
      %v1979 = vsel %vm1062, %v1977, %v1978
      %v1980 = vrot.slane %v1836, 5
      %v1981 = vrot.slane %v1980, 4
      %v1982 = vrot.slane %v1837, 5
      %v1983 = vsel %vm1062, %v1981, %v1982
      %v1984 = vrot.slane %v1982, 4
      %v1985 = vrot.slane %v1838, 5
      %v1986 = vsel %vm1062, %v1984, %v1985
      %v1987 = vrot.slane %v1839, 5
      %v1988 = vrot.slane %v1987, 4
      %v1989 = vrot.slane %v1840, 5
      %v1990 = vsel %vm1062, %v1988, %v1989
      %v1991 = vrot.slane %v1989, 4
      %v1992 = vrot.slane %v1841, 5
      %v1993 = vsel %vm1062, %v1991, %v1992
      %v1994 = vrot.slane %v1842, 5
      %v1995 = vrot.slane %v1994, 4
      %v1996 = vrot.slane %v1843, 5
      %v1997 = vsel %vm1062, %v1995, %v1996
      %v1998 = vrot.slane %v1996, 4
      %v1999 = vrot.slane %v1844, 5
      %v2000 = vsel %vm1062, %v1998, %v1999
      %v2001 = vrot.slane %v1845, 5
      %v2002 = vrot.slane %v2001, 4
      %v2003 = vrot.slane %v1846, 5
      %v2004 = vsel %vm1062, %v2002, %v2003
      %v2005 = vrot.slane %v2003, 4
      %v2006 = vrot.slane %v1847, 5
      %v2007 = vsel %vm1062, %v2005, %v2006
      %2040 = vst [vmem:[#allocation3 + $0x14] sm:$0xf] %v1899
      %2041 = vst [vmem:[#allocation3 + $0x38] sm:$0xf] %v1902
      %2042 = vst [vmem:[#allocation3 + $0x5c] sm:$0xf] %v1906
      %2043 = vst [vmem:[#allocation3 + $0x80] sm:$0xf] %v1909
      %2044 = vst [vmem:[#allocation3 + $0xa4] sm:$0xf] %v1913
      %2045 = vst [vmem:[#allocation3 + $0xc8] sm:$0xf] %v1916
      %2046 = vst [vmem:[#allocation3 + $0xec] sm:$0xf] %v1920
      %2047 = vst [vmem:[#allocation3 + $0x110] sm:$0xf] %v1923
      %2048 = vst [vmem:[#allocation3 + $0x134] sm:$0xf] %v1927
      %2049 = vst [vmem:[#allocation3 + $0x158] sm:$0xf] %v1930
      %2050 = vst [vmem:[#allocation3 + $0x17c] sm:$0xf] %v1934
      %2051 = vst [vmem:[#allocation3 + $0x1a0] sm:$0xf] %v1937
      %2052 = vst [vmem:[#allocation3 + $0x1c4] sm:$0xf] %v1941
      %2053 = vst [vmem:[#allocation3 + $0x1e8] sm:$0xf] %v1944
      %2054 = vst [vmem:[#allocation3 + $0x20c] sm:$0xf] %v1948
      %2055 = vst [vmem:[#allocation3 + $0x230] sm:$0xf] %v1951
      %2056 = vst [vmem:[#allocation3 + $0x254] sm:$0xf] %v1955
      %2057 = vst [vmem:[#allocation3 + $0x278] sm:$0xf] %v1958
      %2058 = vst [vmem:[#allocation3 + $0x29c] sm:$0xf] %v1962
      %2059 = vst [vmem:[#allocation3 + $0x2c0] sm:$0xf] %v1965
      %2060 = vst [vmem:[#allocation3 + $0x2e4] sm:$0xf] %v1969
      %2061 = vst [vmem:[#allocation3 + $0x308] sm:$0xf] %v1972
      %2062 = vst [vmem:[#allocation3 + $0x32c] sm:$0xf] %v1976
      %2063 = vst [vmem:[#allocation3 + $0x350] sm:$0xf] %v1979
      %2064 = vst [vmem:[#allocation3 + $0x374] sm:$0xf] %v1983
      %2065 = vst [vmem:[#allocation3 + $0x398] sm:$0xf] %v1986
      %2066 = vst [vmem:[#allocation3 + $0x3bc] sm:$0xf] %v1990
      %2067 = vst [vmem:[#allocation3 + $0x3e0] sm:$0xf] %v1993
      %2068 = vst [vmem:[#allocation3 + $0x404] sm:$0xf] %v1997
      %2069 = vst [vmem:[#allocation3 + $0x428] sm:$0xf] %v2000
      %2070 = vst [vmem:[#allocation3 + $0x44c] sm:$0xf] %v2004
      %2071 = vst [vmem:[#allocation3 + $0x470] sm:$0xf] %v2007
      %s2072 = scalar_lea.vmem %s273, 24
      %v2073 = vld [vmem:[%s2072] sm:$0xf]
      %v2074 = vld [vmem:[%s2072 + $0x4] sm:$0xf]
      %v2075 = vld [vmem:[%s2072 + $0xc] sm:$0xf]
      %v2076 = vld [vmem:[%s2072 + $0x10] sm:$0xf]
      %v2077 = vld [vmem:[%s2072 + $0x18] sm:$0xf]
      %v2078 = vld [vmem:[%s2072 + $0x1c] sm:$0xf]
      %v2079 = vld [vmem:[%s2072 + $0x24] sm:$0xf]
      %v2080 = vld [vmem:[%s2072 + $0x28] sm:$0xf]
      %v2081 = vld [vmem:[%s2072 + $0x30] sm:$0xf]
      %v2082 = vld [vmem:[%s2072 + $0x34] sm:$0xf]
      %v2083 = vld [vmem:[%s2072 + $0x3c] sm:$0xf]
      %v2084 = vld [vmem:[%s2072 + $0x40] sm:$0xf]
      %v2085 = vld [vmem:[%s2072 + $0x48] sm:$0xf]
      %v2086 = vld [vmem:[%s2072 + $0x4c] sm:$0xf]
      %v2087 = vld [vmem:[%s2072 + $0x54] sm:$0xf]
      %v2088 = vld [vmem:[%s2072 + $0x58] sm:$0xf]
      %v2089 = vld [vmem:[%s2072 + $0x60] sm:$0xf]
      %v2090 = vld [vmem:[%s2072 + $0x64] sm:$0xf]
      %v2091 = vld [vmem:[%s2072 + $0x6c] sm:$0xf]
      %v2092 = vld [vmem:[%s2072 + $0x70] sm:$0xf]
      %v2093 = vld [vmem:[%s2072 + $0x78] sm:$0xf]
      %v2094 = vld [vmem:[%s2072 + $0x7c] sm:$0xf]
      %v2095 = vld [vmem:[%s2072 + $0x84] sm:$0xf]
      %v2096 = vld [vmem:[%s2072 + $0x88] sm:$0xf]
      %v2097 = vld [vmem:[%s2072 + $0x90] sm:$0xf]
      %v2098 = vld [vmem:[%s2072 + $0x94] sm:$0xf]
      %v2099 = vld [vmem:[%s2072 + $0x9c] sm:$0xf]
      %v2100 = vld [vmem:[%s2072 + $0xa0] sm:$0xf]
      %v2101 = vld [vmem:[%s2072 + $0xa8] sm:$0xf]
      %v2102 = vld [vmem:[%s2072 + $0xac] sm:$0xf]
      %v2103 = vld [vmem:[%s2072 + $0xb4] sm:$0xf]
      %v2104 = vld [vmem:[%s2072 + $0xb8] sm:$0xf]
      %2105 = vst [vmem:[#allocation3 + $0x18] sm:$0xf] %v2073
      %2106 = vst [vmem:[#allocation3 + $0x3c] sm:$0xf] %v2074
      %2107 = vst [vmem:[#allocation3 + $0x60] sm:$0xf] %v2075
      %2108 = vst [vmem:[#allocation3 + $0x84] sm:$0xf] %v2076
      %2109 = vst [vmem:[#allocation3 + $0xa8] sm:$0xf] %v2077
      %2110 = vst [vmem:[#allocation3 + $0xcc] sm:$0xf] %v2078
      %2111 = vst [vmem:[#allocation3 + $0xf0] sm:$0xf] %v2079
      %2112 = vst [vmem:[#allocation3 + $0x114] sm:$0xf] %v2080
      %2113 = vst [vmem:[#allocation3 + $0x138] sm:$0xf] %v2081
      %2114 = vst [vmem:[#allocation3 + $0x15c] sm:$0xf] %v2082
      %2115 = vst [vmem:[#allocation3 + $0x180] sm:$0xf] %v2083
      %2116 = vst [vmem:[#allocation3 + $0x1a4] sm:$0xf] %v2084
      %2117 = vst [vmem:[#allocation3 + $0x1c8] sm:$0xf] %v2085
      %2118 = vst [vmem:[#allocation3 + $0x1ec] sm:$0xf] %v2086
      %2119 = vst [vmem:[#allocation3 + $0x210] sm:$0xf] %v2087
      %2120 = vst [vmem:[#allocation3 + $0x234] sm:$0xf] %v2088
      %2121 = vst [vmem:[#allocation3 + $0x258] sm:$0xf] %v2089
      %2122 = vst [vmem:[#allocation3 + $0x27c] sm:$0xf] %v2090
      %2123 = vst [vmem:[#allocation3 + $0x2a0] sm:$0xf] %v2091
      %2124 = vst [vmem:[#allocation3 + $0x2c4] sm:$0xf] %v2092
      %2125 = vst [vmem:[#allocation3 + $0x2e8] sm:$0xf] %v2093
      %2126 = vst [vmem:[#allocation3 + $0x30c] sm:$0xf] %v2094
      %2127 = vst [vmem:[#allocation3 + $0x330] sm:$0xf] %v2095
      %2128 = vst [vmem:[#allocation3 + $0x354] sm:$0xf] %v2096
      %2129 = vst [vmem:[#allocation3 + $0x378] sm:$0xf] %v2097
      %2130 = vst [vmem:[#allocation3 + $0x39c] sm:$0xf] %v2098
      %2131 = vst [vmem:[#allocation3 + $0x3c0] sm:$0xf] %v2099
      %2132 = vst [vmem:[#allocation3 + $0x3e4] sm:$0xf] %v2100
      %2133 = vst [vmem:[#allocation3 + $0x408] sm:$0xf] %v2101
      %2134 = vst [vmem:[#allocation3 + $0x42c] sm:$0xf] %v2102
      %2135 = vst [vmem:[#allocation3 + $0x450] sm:$0xf] %v2103
      %2136 = vst [vmem:[#allocation3 + $0x474] sm:$0xf] %v2104
      %v2137 = vld [vmem:[%s2072] sm:$0xf]
      %v2138 = vld [vmem:[%s2072 + $0x4] sm:$0xf]
      %v2139 = vld [vmem:[%s2072 + $0x8] sm:$0x1]
      %v2140 = vld [vmem:[%s2072 + $0xc] sm:$0xf]
      %v2141 = vld [vmem:[%s2072 + $0x10] sm:$0xf]
      %v2142 = vld [vmem:[%s2072 + $0x14] sm:$0x1]
      %v2143 = vld [vmem:[%s2072 + $0x18] sm:$0xf]
      %v2144 = vld [vmem:[%s2072 + $0x1c] sm:$0xf]
      %v2145 = vld [vmem:[%s2072 + $0x20] sm:$0x1]
      %v2146 = vld [vmem:[%s2072 + $0x24] sm:$0xf]
      %v2147 = vld [vmem:[%s2072 + $0x28] sm:$0xf]
      %v2148 = vld [vmem:[%s2072 + $0x2c] sm:$0x1]
      %v2149 = vld [vmem:[%s2072 + $0x30] sm:$0xf]
      %v2150 = vld [vmem:[%s2072 + $0x34] sm:$0xf]
      %v2151 = vld [vmem:[%s2072 + $0x38] sm:$0x1]
      %v2152 = vld [vmem:[%s2072 + $0x3c] sm:$0xf]
      %v2153 = vld [vmem:[%s2072 + $0x40] sm:$0xf]
      %v2154 = vld [vmem:[%s2072 + $0x44] sm:$0x1]
      %v2155 = vld [vmem:[%s2072 + $0x48] sm:$0xf]
      %v2156 = vld [vmem:[%s2072 + $0x4c] sm:$0xf]
      %v2157 = vld [vmem:[%s2072 + $0x50] sm:$0x1]
      %v2158 = vld [vmem:[%s2072 + $0x54] sm:$0xf]
      %v2159 = vld [vmem:[%s2072 + $0x58] sm:$0xf]
      %v2160 = vld [vmem:[%s2072 + $0x5c] sm:$0x1]
      %v2161 = vld [vmem:[%s2072 + $0x60] sm:$0xf]
      %v2162 = vld [vmem:[%s2072 + $0x64] sm:$0xf]
      %v2163 = vld [vmem:[%s2072 + $0x68] sm:$0x1]
      %v2164 = vld [vmem:[%s2072 + $0x6c] sm:$0xf]
      %v2165 = vld [vmem:[%s2072 + $0x70] sm:$0xf]
      %v2166 = vld [vmem:[%s2072 + $0x74] sm:$0x1]
      %v2167 = vld [vmem:[%s2072 + $0x78] sm:$0xf]
      %v2168 = vld [vmem:[%s2072 + $0x7c] sm:$0xf]
      %v2169 = vld [vmem:[%s2072 + $0x80] sm:$0x1]
      %v2170 = vld [vmem:[%s2072 + $0x84] sm:$0xf]
      %v2171 = vld [vmem:[%s2072 + $0x88] sm:$0xf]
      %v2172 = vld [vmem:[%s2072 + $0x8c] sm:$0x1]
      %v2173 = vld [vmem:[%s2072 + $0x90] sm:$0xf]
      %v2174 = vld [vmem:[%s2072 + $0x94] sm:$0xf]
      %v2175 = vld [vmem:[%s2072 + $0x98] sm:$0x1]
      %v2176 = vld [vmem:[%s2072 + $0x9c] sm:$0xf]
      %v2177 = vld [vmem:[%s2072 + $0xa0] sm:$0xf]
      %v2178 = vld [vmem:[%s2072 + $0xa4] sm:$0x1]
      %v2179 = vld [vmem:[%s2072 + $0xa8] sm:$0xf]
      %v2180 = vld [vmem:[%s2072 + $0xac] sm:$0xf]
      %v2181 = vld [vmem:[%s2072 + $0xb0] sm:$0x1]
      %v2182 = vld [vmem:[%s2072 + $0xb4] sm:$0xf]
      %v2183 = vld [vmem:[%s2072 + $0xb8] sm:$0xf]
      %v2184 = vld [vmem:[%s2072 + $0xbc] sm:$0x1]
      %v2186 = vshrl.u32 %v2137, 16
      %v2188 = vrot.slane %v2186, 4
      %v2189 = vshll.u32 %v2137, 16
      %v2191 = vrot.slane %v2189, 5
      %v2192 = vor.u32 %v2188, %v2191
      %v2193 = vrot.slane %v2192, 4
      %v2195 = vshll.u32 %v2138, 16
      %v2197 = vrot.slane %v2195, 5
      %v2198 = vsel %vm515, %v2193, %v2197
      %v2199 = vshrl.u32 %v2138, 16
      %v2201 = vrot.slane %v2199, 4
      %v2202 = vor.u32 %v2201, %v2197
      %v2203 = vrot.slane %v2202, 4
      %v2205 = vshll.u32 %v2139, 16
      %v2207 = vrot.slane %v2205, 5
      %v2208 = vsel %vm515, %v2203, %v2207
      %v2210 = vshrl.u32 %v2140, 16
      %v2212 = vrot.slane %v2210, 4
      %v2213 = vshll.u32 %v2140, 16
      %v2215 = vrot.slane %v2213, 5
      %v2216 = vor.u32 %v2212, %v2215
      %v2217 = vrot.slane %v2216, 4
      %v2219 = vshll.u32 %v2141, 16
      %v2221 = vrot.slane %v2219, 5
      %v2222 = vsel %vm515, %v2217, %v2221
      %v2223 = vshrl.u32 %v2141, 16
      %v2225 = vrot.slane %v2223, 4
      %v2226 = vor.u32 %v2225, %v2221
      %v2227 = vrot.slane %v2226, 4
      %v2229 = vshll.u32 %v2142, 16
      %v2231 = vrot.slane %v2229, 5
      %v2232 = vsel %vm515, %v2227, %v2231
      %v2234 = vshrl.u32 %v2143, 16
      %v2236 = vrot.slane %v2234, 4
      %v2237 = vshll.u32 %v2143, 16
      %v2239 = vrot.slane %v2237, 5
      %v2240 = vor.u32 %v2236, %v2239
      %v2241 = vrot.slane %v2240, 4
      %v2243 = vshll.u32 %v2144, 16
      %v2245 = vrot.slane %v2243, 5
      %v2246 = vsel %vm515, %v2241, %v2245
      %v2247 = vshrl.u32 %v2144, 16
      %v2249 = vrot.slane %v2247, 4
      %v2250 = vor.u32 %v2249, %v2245
      %v2251 = vrot.slane %v2250, 4
      %v2253 = vshll.u32 %v2145, 16
      %v2255 = vrot.slane %v2253, 5
      %v2256 = vsel %vm515, %v2251, %v2255
      %v2258 = vshrl.u32 %v2146, 16
      %v2260 = vrot.slane %v2258, 4
      %v2261 = vshll.u32 %v2146, 16
      %v2263 = vrot.slane %v2261, 5
      %v2264 = vor.u32 %v2260, %v2263
      %v2265 = vrot.slane %v2264, 4
      %v2267 = vshll.u32 %v2147, 16
      %v2269 = vrot.slane %v2267, 5
      %v2270 = vsel %vm515, %v2265, %v2269
      %v2271 = vshrl.u32 %v2147, 16
      %v2273 = vrot.slane %v2271, 4
      %v2274 = vor.u32 %v2273, %v2269
      %v2275 = vrot.slane %v2274, 4
      %v2277 = vshll.u32 %v2148, 16
      %v2279 = vrot.slane %v2277, 5
      %v2280 = vsel %vm515, %v2275, %v2279
      %v2282 = vshrl.u32 %v2149, 16
      %v2284 = vrot.slane %v2282, 4
      %v2285 = vshll.u32 %v2149, 16
      %v2287 = vrot.slane %v2285, 5
      %v2288 = vor.u32 %v2284, %v2287
      %v2289 = vrot.slane %v2288, 4
      %v2291 = vshll.u32 %v2150, 16
      %v2293 = vrot.slane %v2291, 5
      %v2294 = vsel %vm515, %v2289, %v2293
      %v2295 = vshrl.u32 %v2150, 16
      %v2297 = vrot.slane %v2295, 4
      %v2298 = vor.u32 %v2297, %v2293
      %v2299 = vrot.slane %v2298, 4
      %v2301 = vshll.u32 %v2151, 16
      %v2303 = vrot.slane %v2301, 5
      %v2304 = vsel %vm515, %v2299, %v2303
      %v2306 = vshrl.u32 %v2152, 16
      %v2308 = vrot.slane %v2306, 4
      %v2309 = vshll.u32 %v2152, 16
      %v2311 = vrot.slane %v2309, 5
      %v2312 = vor.u32 %v2308, %v2311
      %v2313 = vrot.slane %v2312, 4
      %v2315 = vshll.u32 %v2153, 16
      %v2317 = vrot.slane %v2315, 5
      %v2318 = vsel %vm515, %v2313, %v2317
      %v2319 = vshrl.u32 %v2153, 16
      %v2321 = vrot.slane %v2319, 4
      %v2322 = vor.u32 %v2321, %v2317
      %v2323 = vrot.slane %v2322, 4
      %v2325 = vshll.u32 %v2154, 16
      %v2327 = vrot.slane %v2325, 5
      %v2328 = vsel %vm515, %v2323, %v2327
      %v2330 = vshrl.u32 %v2155, 16
      %v2332 = vrot.slane %v2330, 4
      %v2333 = vshll.u32 %v2155, 16
      %v2335 = vrot.slane %v2333, 5
      %v2336 = vor.u32 %v2332, %v2335
      %v2337 = vrot.slane %v2336, 4
      %v2339 = vshll.u32 %v2156, 16
      %v2341 = vrot.slane %v2339, 5
      %v2342 = vsel %vm515, %v2337, %v2341
      %v2343 = vshrl.u32 %v2156, 16
      %v2345 = vrot.slane %v2343, 4
      %v2346 = vor.u32 %v2345, %v2341
      %v2347 = vrot.slane %v2346, 4
      %v2349 = vshll.u32 %v2157, 16
      %v2351 = vrot.slane %v2349, 5
      %v2352 = vsel %vm515, %v2347, %v2351
      %v2354 = vshrl.u32 %v2158, 16
      %v2356 = vrot.slane %v2354, 4
      %v2357 = vshll.u32 %v2158, 16
      %v2359 = vrot.slane %v2357, 5
      %v2360 = vor.u32 %v2356, %v2359
      %v2361 = vrot.slane %v2360, 4
      %v2363 = vshll.u32 %v2159, 16
      %v2365 = vrot.slane %v2363, 5
      %v2366 = vsel %vm515, %v2361, %v2365
      %v2367 = vshrl.u32 %v2159, 16
      %v2369 = vrot.slane %v2367, 4
      %v2370 = vor.u32 %v2369, %v2365
      %v2371 = vrot.slane %v2370, 4
      %v2373 = vshll.u32 %v2160, 16
      %v2375 = vrot.slane %v2373, 5
      %v2376 = vsel %vm515, %v2371, %v2375
      %v2378 = vshrl.u32 %v2161, 16
      %v2380 = vrot.slane %v2378, 4
      %v2381 = vshll.u32 %v2161, 16
      %v2383 = vrot.slane %v2381, 5
      %v2384 = vor.u32 %v2380, %v2383
      %v2385 = vrot.slane %v2384, 4
      %v2387 = vshll.u32 %v2162, 16
      %v2389 = vrot.slane %v2387, 5
      %v2390 = vsel %vm515, %v2385, %v2389
      %v2391 = vshrl.u32 %v2162, 16
      %v2393 = vrot.slane %v2391, 4
      %v2394 = vor.u32 %v2393, %v2389
      %v2395 = vrot.slane %v2394, 4
      %v2397 = vshll.u32 %v2163, 16
      %v2399 = vrot.slane %v2397, 5
      %v2400 = vsel %vm515, %v2395, %v2399
      %v2402 = vshrl.u32 %v2164, 16
      %v2404 = vrot.slane %v2402, 4
      %v2405 = vshll.u32 %v2164, 16
      %v2407 = vrot.slane %v2405, 5
      %v2408 = vor.u32 %v2404, %v2407
      %v2409 = vrot.slane %v2408, 4
      %v2411 = vshll.u32 %v2165, 16
      %v2413 = vrot.slane %v2411, 5
      %v2414 = vsel %vm515, %v2409, %v2413
      %v2415 = vshrl.u32 %v2165, 16
      %v2417 = vrot.slane %v2415, 4
      %v2418 = vor.u32 %v2417, %v2413
      %v2419 = vrot.slane %v2418, 4
      %v2421 = vshll.u32 %v2166, 16
      %v2423 = vrot.slane %v2421, 5
      %v2424 = vsel %vm515, %v2419, %v2423
      %v2426 = vshrl.u32 %v2167, 16
      %v2428 = vrot.slane %v2426, 4
      %v2429 = vshll.u32 %v2167, 16
      %v2431 = vrot.slane %v2429, 5
      %v2432 = vor.u32 %v2428, %v2431
      %v2433 = vrot.slane %v2432, 4
      %v2435 = vshll.u32 %v2168, 16
      %v2437 = vrot.slane %v2435, 5
      %v2438 = vsel %vm515, %v2433, %v2437
      %v2439 = vshrl.u32 %v2168, 16
      %v2441 = vrot.slane %v2439, 4
      %v2442 = vor.u32 %v2441, %v2437
      %v2443 = vrot.slane %v2442, 4
      %v2445 = vshll.u32 %v2169, 16
      %v2447 = vrot.slane %v2445, 5
      %v2448 = vsel %vm515, %v2443, %v2447
      %v2450 = vshrl.u32 %v2170, 16
      %v2452 = vrot.slane %v2450, 4
      %v2453 = vshll.u32 %v2170, 16
      %v2455 = vrot.slane %v2453, 5
      %v2456 = vor.u32 %v2452, %v2455
      %v2457 = vrot.slane %v2456, 4
      %v2459 = vshll.u32 %v2171, 16
      %v2461 = vrot.slane %v2459, 5
      %v2462 = vsel %vm515, %v2457, %v2461
      %v2463 = vshrl.u32 %v2171, 16
      %v2465 = vrot.slane %v2463, 4
      %v2466 = vor.u32 %v2465, %v2461
      %v2467 = vrot.slane %v2466, 4
      %v2469 = vshll.u32 %v2172, 16
      %v2471 = vrot.slane %v2469, 5
      %v2472 = vsel %vm515, %v2467, %v2471
      %v2474 = vshrl.u32 %v2173, 16
      %v2476 = vrot.slane %v2474, 4
      %v2477 = vshll.u32 %v2173, 16
      %v2479 = vrot.slane %v2477, 5
      %v2480 = vor.u32 %v2476, %v2479
      %v2481 = vrot.slane %v2480, 4
      %v2483 = vshll.u32 %v2174, 16
      %v2485 = vrot.slane %v2483, 5
      %v2486 = vsel %vm515, %v2481, %v2485
      %v2487 = vshrl.u32 %v2174, 16
      %v2489 = vrot.slane %v2487, 4
      %v2490 = vor.u32 %v2489, %v2485
      %v2491 = vrot.slane %v2490, 4
      %v2493 = vshll.u32 %v2175, 16
      %v2495 = vrot.slane %v2493, 5
      %v2496 = vsel %vm515, %v2491, %v2495
      %v2498 = vshrl.u32 %v2176, 16
      %v2500 = vrot.slane %v2498, 4
      %v2501 = vshll.u32 %v2176, 16
      %v2503 = vrot.slane %v2501, 5
      %v2504 = vor.u32 %v2500, %v2503
      %v2505 = vrot.slane %v2504, 4
      %v2507 = vshll.u32 %v2177, 16
      %v2509 = vrot.slane %v2507, 5
      %v2510 = vsel %vm515, %v2505, %v2509
      %v2511 = vshrl.u32 %v2177, 16
      %v2513 = vrot.slane %v2511, 4
      %v2514 = vor.u32 %v2513, %v2509
      %v2515 = vrot.slane %v2514, 4
      %v2517 = vshll.u32 %v2178, 16
      %v2519 = vrot.slane %v2517, 5
      %v2520 = vsel %vm515, %v2515, %v2519
      %v2522 = vshrl.u32 %v2179, 16
      %v2524 = vrot.slane %v2522, 4
      %v2525 = vshll.u32 %v2179, 16
      %v2527 = vrot.slane %v2525, 5
      %v2528 = vor.u32 %v2524, %v2527
      %v2529 = vrot.slane %v2528, 4
      %v2531 = vshll.u32 %v2180, 16
      %v2533 = vrot.slane %v2531, 5
      %v2534 = vsel %vm515, %v2529, %v2533
      %v2535 = vshrl.u32 %v2180, 16
      %v2537 = vrot.slane %v2535, 4
      %v2538 = vor.u32 %v2537, %v2533
      %v2539 = vrot.slane %v2538, 4
      %v2541 = vshll.u32 %v2181, 16
      %v2543 = vrot.slane %v2541, 5
      %v2544 = vsel %vm515, %v2539, %v2543
      %v2546 = vshrl.u32 %v2182, 16
      %v2548 = vrot.slane %v2546, 4
      %v2549 = vshll.u32 %v2182, 16
      %v2551 = vrot.slane %v2549, 5
      %v2552 = vor.u32 %v2548, %v2551
      %v2553 = vrot.slane %v2552, 4
      %v2555 = vshll.u32 %v2183, 16
      %v2557 = vrot.slane %v2555, 5
      %v2558 = vsel %vm515, %v2553, %v2557
      %v2559 = vshrl.u32 %v2183, 16
      %v2561 = vrot.slane %v2559, 4
      %v2562 = vor.u32 %v2561, %v2557
      %v2563 = vrot.slane %v2562, 4
      %v2565 = vshll.u32 %v2184, 16
      %v2567 = vrot.slane %v2565, 5
      %v2568 = vsel %vm515, %v2563, %v2567
      %2601 = vst [vmem:[#allocation3 + $0x1c] sm:$0xf] %v2198
      %2602 = vst [vmem:[#allocation3 + $0x40] sm:$0xf] %v2208
      %2603 = vst [vmem:[#allocation3 + $0x64] sm:$0xf] %v2222
      %2604 = vst [vmem:[#allocation3 + $0x88] sm:$0xf] %v2232
      %2605 = vst [vmem:[#allocation3 + $0xac] sm:$0xf] %v2246
      %2606 = vst [vmem:[#allocation3 + $0xd0] sm:$0xf] %v2256
      %2607 = vst [vmem:[#allocation3 + $0xf4] sm:$0xf] %v2270
      %2608 = vst [vmem:[#allocation3 + $0x118] sm:$0xf] %v2280
      %2609 = vst [vmem:[#allocation3 + $0x13c] sm:$0xf] %v2294
      %2610 = vst [vmem:[#allocation3 + $0x160] sm:$0xf] %v2304
      %2611 = vst [vmem:[#allocation3 + $0x184] sm:$0xf] %v2318
      %2612 = vst [vmem:[#allocation3 + $0x1a8] sm:$0xf] %v2328
      %2613 = vst [vmem:[#allocation3 + $0x1cc] sm:$0xf] %v2342
      %2614 = vst [vmem:[#allocation3 + $0x1f0] sm:$0xf] %v2352
      %2615 = vst [vmem:[#allocation3 + $0x214] sm:$0xf] %v2366
      %2616 = vst [vmem:[#allocation3 + $0x238] sm:$0xf] %v2376
      %2617 = vst [vmem:[#allocation3 + $0x25c] sm:$0xf] %v2390
      %2618 = vst [vmem:[#allocation3 + $0x280] sm:$0xf] %v2400
      %2619 = vst [vmem:[#allocation3 + $0x2a4] sm:$0xf] %v2414
      %2620 = vst [vmem:[#allocation3 + $0x2c8] sm:$0xf] %v2424
      %2621 = vst [vmem:[#allocation3 + $0x2ec] sm:$0xf] %v2438
      %2622 = vst [vmem:[#allocation3 + $0x310] sm:$0xf] %v2448
      %2623 = vst [vmem:[#allocation3 + $0x334] sm:$0xf] %v2462
      %2624 = vst [vmem:[#allocation3 + $0x358] sm:$0xf] %v2472
      %2625 = vst [vmem:[#allocation3 + $0x37c] sm:$0xf] %v2486
      %2626 = vst [vmem:[#allocation3 + $0x3a0] sm:$0xf] %v2496
      %2627 = vst [vmem:[#allocation3 + $0x3c4] sm:$0xf] %v2510
      %2628 = vst [vmem:[#allocation3 + $0x3e8] sm:$0xf] %v2520
      %2629 = vst [vmem:[#allocation3 + $0x40c] sm:$0xf] %v2534
      %2630 = vst [vmem:[#allocation3 + $0x430] sm:$0xf] %v2544
      %2631 = vst [vmem:[#allocation3 + $0x454] sm:$0xf] %v2558
      %2632 = vst [vmem:[#allocation3 + $0x478] sm:$0xf] %v2568
      %v2633 = vld [vmem:[%s2072] sm:$0xe]
      %v2634 = vld [vmem:[%s2072 + $0x4] sm:$0xf]
      %v2635 = vld [vmem:[%s2072 + $0x8] sm:$0x1]
      %v2636 = vld [vmem:[%s2072 + $0xc] sm:$0xe]
      %v2637 = vld [vmem:[%s2072 + $0x10] sm:$0xf]
      %v2638 = vld [vmem:[%s2072 + $0x14] sm:$0x1]
      %v2639 = vld [vmem:[%s2072 + $0x18] sm:$0xe]
      %v2640 = vld [vmem:[%s2072 + $0x1c] sm:$0xf]
      %v2641 = vld [vmem:[%s2072 + $0x20] sm:$0x1]
      %v2642 = vld [vmem:[%s2072 + $0x24] sm:$0xe]
      %v2643 = vld [vmem:[%s2072 + $0x28] sm:$0xf]
      %v2644 = vld [vmem:[%s2072 + $0x2c] sm:$0x1]
      %v2645 = vld [vmem:[%s2072 + $0x30] sm:$0xe]
      %v2646 = vld [vmem:[%s2072 + $0x34] sm:$0xf]
      %v2647 = vld [vmem:[%s2072 + $0x38] sm:$0x1]
      %v2648 = vld [vmem:[%s2072 + $0x3c] sm:$0xe]
      %v2649 = vld [vmem:[%s2072 + $0x40] sm:$0xf]
      %v2650 = vld [vmem:[%s2072 + $0x44] sm:$0x1]
      %v2651 = vld [vmem:[%s2072 + $0x48] sm:$0xe]
      %v2652 = vld [vmem:[%s2072 + $0x4c] sm:$0xf]
      %v2653 = vld [vmem:[%s2072 + $0x50] sm:$0x1]
      %v2654 = vld [vmem:[%s2072 + $0x54] sm:$0xe]
      %v2655 = vld [vmem:[%s2072 + $0x58] sm:$0xf]
      %v2656 = vld [vmem:[%s2072 + $0x5c] sm:$0x1]
      %v2657 = vld [vmem:[%s2072 + $0x60] sm:$0xe]
      %v2658 = vld [vmem:[%s2072 + $0x64] sm:$0xf]
      %v2659 = vld [vmem:[%s2072 + $0x68] sm:$0x1]
      %v2660 = vld [vmem:[%s2072 + $0x6c] sm:$0xe]
      %v2661 = vld [vmem:[%s2072 + $0x70] sm:$0xf]
      %v2662 = vld [vmem:[%s2072 + $0x74] sm:$0x1]
      %v2663 = vld [vmem:[%s2072 + $0x78] sm:$0xe]
      %v2664 = vld [vmem:[%s2072 + $0x7c] sm:$0xf]
      %v2665 = vld [vmem:[%s2072 + $0x80] sm:$0x1]
      %v2666 = vld [vmem:[%s2072 + $0x84] sm:$0xe]
      %v2667 = vld [vmem:[%s2072 + $0x88] sm:$0xf]
      %v2668 = vld [vmem:[%s2072 + $0x8c] sm:$0x1]
      %v2669 = vld [vmem:[%s2072 + $0x90] sm:$0xe]
      %v2670 = vld [vmem:[%s2072 + $0x94] sm:$0xf]
      %v2671 = vld [vmem:[%s2072 + $0x98] sm:$0x1]
      %v2672 = vld [vmem:[%s2072 + $0x9c] sm:$0xe]
      %v2673 = vld [vmem:[%s2072 + $0xa0] sm:$0xf]
      %v2674 = vld [vmem:[%s2072 + $0xa4] sm:$0x1]
      %v2675 = vld [vmem:[%s2072 + $0xa8] sm:$0xe]
      %v2676 = vld [vmem:[%s2072 + $0xac] sm:$0xf]
      %v2677 = vld [vmem:[%s2072 + $0xb0] sm:$0x1]
      %v2678 = vld [vmem:[%s2072 + $0xb4] sm:$0xe]
      %v2679 = vld [vmem:[%s2072 + $0xb8] sm:$0xf]
      %v2680 = vld [vmem:[%s2072 + $0xbc] sm:$0x1]
      %v2729 = vrot.slane %v2633, 5
      %v2730 = vrot.slane %v2729, 4
      %v2731 = vrot.slane %v2634, 5
      %v2732 = vsel %vm1062, %v2730, %v2731
      %v2733 = vrot.slane %v2731, 4
      %v2734 = vrot.slane %v2635, 5
      %v2735 = vsel %vm1062, %v2733, %v2734
      %v2736 = vrot.slane %v2636, 5
      %v2737 = vrot.slane %v2736, 4
      %v2738 = vrot.slane %v2637, 5
      %v2739 = vsel %vm1062, %v2737, %v2738
      %v2740 = vrot.slane %v2738, 4
      %v2741 = vrot.slane %v2638, 5
      %v2742 = vsel %vm1062, %v2740, %v2741
      %v2743 = vrot.slane %v2639, 5
      %v2744 = vrot.slane %v2743, 4
      %v2745 = vrot.slane %v2640, 5
      %v2746 = vsel %vm1062, %v2744, %v2745
      %v2747 = vrot.slane %v2745, 4
      %v2748 = vrot.slane %v2641, 5
      %v2749 = vsel %vm1062, %v2747, %v2748
      %v2750 = vrot.slane %v2642, 5
      %v2751 = vrot.slane %v2750, 4
      %v2752 = vrot.slane %v2643, 5
      %v2753 = vsel %vm1062, %v2751, %v2752
      %v2754 = vrot.slane %v2752, 4
      %v2755 = vrot.slane %v2644, 5
      %v2756 = vsel %vm1062, %v2754, %v2755
      %v2757 = vrot.slane %v2645, 5
      %v2758 = vrot.slane %v2757, 4
      %v2759 = vrot.slane %v2646, 5
      %v2760 = vsel %vm1062, %v2758, %v2759
      %v2761 = vrot.slane %v2759, 4
      %v2762 = vrot.slane %v2647, 5
      %v2763 = vsel %vm1062, %v2761, %v2762
      %v2764 = vrot.slane %v2648, 5
      %v2765 = vrot.slane %v2764, 4
      %v2766 = vrot.slane %v2649, 5
      %v2767 = vsel %vm1062, %v2765, %v2766
      %v2768 = vrot.slane %v2766, 4
      %v2769 = vrot.slane %v2650, 5
      %v2770 = vsel %vm1062, %v2768, %v2769
      %v2771 = vrot.slane %v2651, 5
      %v2772 = vrot.slane %v2771, 4
      %v2773 = vrot.slane %v2652, 5
      %v2774 = vsel %vm1062, %v2772, %v2773
      %v2775 = vrot.slane %v2773, 4
      %v2776 = vrot.slane %v2653, 5
      %v2777 = vsel %vm1062, %v2775, %v2776
      %v2778 = vrot.slane %v2654, 5
      %v2779 = vrot.slane %v2778, 4
      %v2780 = vrot.slane %v2655, 5
      %v2781 = vsel %vm1062, %v2779, %v2780
      %v2782 = vrot.slane %v2780, 4
      %v2783 = vrot.slane %v2656, 5
      %v2784 = vsel %vm1062, %v2782, %v2783
      %v2785 = vrot.slane %v2657, 5
      %v2786 = vrot.slane %v2785, 4
      %v2787 = vrot.slane %v2658, 5
      %v2788 = vsel %vm1062, %v2786, %v2787
      %v2789 = vrot.slane %v2787, 4
      %v2790 = vrot.slane %v2659, 5
      %v2791 = vsel %vm1062, %v2789, %v2790
      %v2792 = vrot.slane %v2660, 5
      %v2793 = vrot.slane %v2792, 4
      %v2794 = vrot.slane %v2661, 5
      %v2795 = vsel %vm1062, %v2793, %v2794
      %v2796 = vrot.slane %v2794, 4
      %v2797 = vrot.slane %v2662, 5
      %v2798 = vsel %vm1062, %v2796, %v2797
      %v2799 = vrot.slane %v2663, 5
      %v2800 = vrot.slane %v2799, 4
      %v2801 = vrot.slane %v2664, 5
      %v2802 = vsel %vm1062, %v2800, %v2801
      %v2803 = vrot.slane %v2801, 4
      %v2804 = vrot.slane %v2665, 5
      %v2805 = vsel %vm1062, %v2803, %v2804
      %v2806 = vrot.slane %v2666, 5
      %v2807 = vrot.slane %v2806, 4
      %v2808 = vrot.slane %v2667, 5
      %v2809 = vsel %vm1062, %v2807, %v2808
      %v2810 = vrot.slane %v2808, 4
      %v2811 = vrot.slane %v2668, 5
      %v2812 = vsel %vm1062, %v2810, %v2811
      %v2813 = vrot.slane %v2669, 5
      %v2814 = vrot.slane %v2813, 4
      %v2815 = vrot.slane %v2670, 5
      %v2816 = vsel %vm1062, %v2814, %v2815
      %v2817 = vrot.slane %v2815, 4
      %v2818 = vrot.slane %v2671, 5
      %v2819 = vsel %vm1062, %v2817, %v2818
      %v2820 = vrot.slane %v2672, 5
      %v2821 = vrot.slane %v2820, 4
      %v2822 = vrot.slane %v2673, 5
      %v2823 = vsel %vm1062, %v2821, %v2822
      %v2824 = vrot.slane %v2822, 4
      %v2825 = vrot.slane %v2674, 5
      %v2826 = vsel %vm1062, %v2824, %v2825
      %v2827 = vrot.slane %v2675, 5
      %v2828 = vrot.slane %v2827, 4
      %v2829 = vrot.slane %v2676, 5
      %v2830 = vsel %vm1062, %v2828, %v2829
      %v2831 = vrot.slane %v2829, 4
      %v2832 = vrot.slane %v2677, 5
      %v2833 = vsel %vm1062, %v2831, %v2832
      %v2834 = vrot.slane %v2678, 5
      %v2835 = vrot.slane %v2834, 4
      %v2836 = vrot.slane %v2679, 5
      %v2837 = vsel %vm1062, %v2835, %v2836
      %v2838 = vrot.slane %v2836, 4
      %v2839 = vrot.slane %v2680, 5
      %v2840 = vsel %vm1062, %v2838, %v2839
      %2873 = vst [vmem:[#allocation3 + $0x20] sm:$0xf] %v2732
      %2874 = vst [vmem:[#allocation3 + $0x44] sm:$0xf] %v2735
      %2875 = vst [vmem:[#allocation3 + $0x68] sm:$0xf] %v2739
      %2876 = vst [vmem:[#allocation3 + $0x8c] sm:$0xf] %v2742
      %2877 = vst [vmem:[#allocation3 + $0xb0] sm:$0xf] %v2746
      %2878 = vst [vmem:[#allocation3 + $0xd4] sm:$0xf] %v2749
      %2879 = vst [vmem:[#allocation3 + $0xf8] sm:$0xf] %v2753
      %2880 = vst [vmem:[#allocation3 + $0x11c] sm:$0xf] %v2756
      %2881 = vst [vmem:[#allocation3 + $0x140] sm:$0xf] %v2760
      %2882 = vst [vmem:[#allocation3 + $0x164] sm:$0xf] %v2763
      %2883 = vst [vmem:[#allocation3 + $0x188] sm:$0xf] %v2767
      %2884 = vst [vmem:[#allocation3 + $0x1ac] sm:$0xf] %v2770
      %2885 = vst [vmem:[#allocation3 + $0x1d0] sm:$0xf] %v2774
      %2886 = vst [vmem:[#allocation3 + $0x1f4] sm:$0xf] %v2777
      %2887 = vst [vmem:[#allocation3 + $0x218] sm:$0xf] %v2781
      %2888 = vst [vmem:[#allocation3 + $0x23c] sm:$0xf] %v2784
      %2889 = vst [vmem:[#allocation3 + $0x260] sm:$0xf] %v2788
      %2890 = vst [vmem:[#allocation3 + $0x284] sm:$0xf] %v2791
      %2891 = vst [vmem:[#allocation3 + $0x2a8] sm:$0xf] %v2795
      %2892 = vst [vmem:[#allocation3 + $0x2cc] sm:$0xf] %v2798
      %2893 = vst [vmem:[#allocation3 + $0x2f0] sm:$0xf] %v2802
      %2894 = vst [vmem:[#allocation3 + $0x314] sm:$0xf] %v2805
      %2895 = vst [vmem:[#allocation3 + $0x338] sm:$0xf] %v2809
      %2896 = vst [vmem:[#allocation3 + $0x35c] sm:$0xf] %v2812
      %2897 = vst [vmem:[#allocation3 + $0x380] sm:$0xf] %v2816
      %2898 = vst [vmem:[#allocation3 + $0x3a4] sm:$0xf] %v2819
      %2899 = vst [vmem:[#allocation3 + $0x3c8] sm:$0xf] %v2823
      %2900 = vst [vmem:[#allocation3 + $0x3ec] sm:$0xf] %v2826
      %2901 = vst [vmem:[#allocation3 + $0x410] sm:$0xf] %v2830
      %2902 = vst [vmem:[#allocation3 + $0x434] sm:$0xf] %v2833
      %2903 = vst [vmem:[#allocation3 + $0x458] sm:$0xf] %v2837
      %2904 = vst [vmem:[#allocation3 + $0x47c] sm:$0xf] %v2840
      %v2905 = vld [vmem:[#allocation3] sm:$0xff]
      %v2906 = vld [vmem:[#allocation3 + $0x8] sm:$0xff]
      %v2907 = vld [vmem:[#allocation3 + $0x10] sm:$0xff]
      %v2908 = vld [vmem:[#allocation3 + $0x18] sm:$0xff]
      %v2909 = vld [vmem:[#allocation3 + $0x20] sm:$0xf]
      %v2910 = vld [vmem:[#allocation3 + $0x24] sm:$0xff]
      %v2911 = vld [vmem:[#allocation3 + $0x2c] sm:$0xff]
      %v2912 = vld [vmem:[#allocation3 + $0x34] sm:$0xff]
      %v2913 = vld [vmem:[#allocation3 + $0x3c] sm:$0xff]
      %v2914 = vld [vmem:[#allocation3 + $0x44] sm:$0xf]
      %v2915 = vld [vmem:[#allocation3 + $0x48] sm:$0xff]
      %v2916 = vld [vmem:[#allocation3 + $0x50] sm:$0xff]
      %v2917 = vld [vmem:[#allocation3 + $0x58] sm:$0xff]
      %v2918 = vld [vmem:[#allocation3 + $0x60] sm:$0xff]
      %v2919 = vld [vmem:[#allocation3 + $0x68] sm:$0xf]
      %v2920 = vld [vmem:[#allocation3 + $0x6c] sm:$0xff]
      %v2921 = vld [vmem:[#allocation3 + $0x74] sm:$0xff]
      %v2922 = vld [vmem:[#allocation3 + $0x7c] sm:$0xff]
      %v2923 = vld [vmem:[#allocation3 + $0x84] sm:$0xff]
      %v2924 = vld [vmem:[#allocation3 + $0x8c] sm:$0xf]
      %v2925 = vld [vmem:[#allocation3 + $0x90] sm:$0xff]
      %v2926 = vld [vmem:[#allocation3 + $0x98] sm:$0xff]
      %v2927 = vld [vmem:[#allocation3 + $0xa0] sm:$0xff]
      %v2928 = vld [vmem:[#allocation3 + $0xa8] sm:$0xff]
      %v2929 = vld [vmem:[#allocation3 + $0xb0] sm:$0xf]
      %v2930 = vld [vmem:[#allocation3 + $0xb4] sm:$0xff]
      %v2931 = vld [vmem:[#allocation3 + $0xbc] sm:$0xff]
      %v2932 = vld [vmem:[#allocation3 + $0xc4] sm:$0xff]
      %v2933 = vld [vmem:[#allocation3 + $0xcc] sm:$0xff]
      %v2934 = vld [vmem:[#allocation3 + $0xd4] sm:$0xf]
      %v2935 = vld [vmem:[#allocation3 + $0xd8] sm:$0xff]
      %v2936 = vld [vmem:[#allocation3 + $0xe0] sm:$0xff]
      %v2937 = vld [vmem:[#allocation3 + $0xe8] sm:$0xff]
      %v2938 = vld [vmem:[#allocation3 + $0xf0] sm:$0xff]
      %v2939 = vld [vmem:[#allocation3 + $0xf8] sm:$0xf]
      %v2940 = vld [vmem:[#allocation3 + $0xfc] sm:$0xff]
      %v2941 = vld [vmem:[#allocation3 + $0x104] sm:$0xff]
      %v2942 = vld [vmem:[#allocation3 + $0x10c] sm:$0xff]
      %v2943 = vld [vmem:[#allocation3 + $0x114] sm:$0xff]
      %v2944 = vld [vmem:[#allocation3 + $0x11c] sm:$0xf]
      %v2945 = vld [vmem:[#allocation3 + $0x120] sm:$0xff]
      %v2946 = vld [vmem:[#allocation3 + $0x128] sm:$0xff]
      %v2947 = vld [vmem:[#allocation3 + $0x130] sm:$0xff]
      %v2948 = vld [vmem:[#allocation3 + $0x138] sm:$0xff]
      %v2949 = vld [vmem:[#allocation3 + $0x140] sm:$0xf]
      %v2950 = vld [vmem:[#allocation3 + $0x144] sm:$0xff]
      %v2951 = vld [vmem:[#allocation3 + $0x14c] sm:$0xff]
      %v2952 = vld [vmem:[#allocation3 + $0x154] sm:$0xff]
      %v2953 = vld [vmem:[#allocation3 + $0x15c] sm:$0xff]
      %v2954 = vld [vmem:[#allocation3 + $0x164] sm:$0xf]
      %v2955 = vld [vmem:[#allocation3 + $0x168] sm:$0xff]
      %v2956 = vld [vmem:[#allocation3 + $0x170] sm:$0xff]
      %v2957 = vld [vmem:[#allocation3 + $0x178] sm:$0xff]
      %v2958 = vld [vmem:[#allocation3 + $0x180] sm:$0xff]
      %v2959 = vld [vmem:[#allocation3 + $0x188] sm:$0xf]
      %v2960 = vld [vmem:[#allocation3 + $0x18c] sm:$0xff]
      %v2961 = vld [vmem:[#allocation3 + $0x194] sm:$0xff]
      %v2962 = vld [vmem:[#allocation3 + $0x19c] sm:$0xff]
      %v2963 = vld [vmem:[#allocation3 + $0x1a4] sm:$0xff]
      %v2964 = vld [vmem:[#allocation3 + $0x1ac] sm:$0xf]
      %v2965 = vld [vmem:[#allocation3 + $0x1b0] sm:$0xff]
      %v2966 = vld [vmem:[#allocation3 + $0x1b8] sm:$0xff]
      %v2967 = vld [vmem:[#allocation3 + $0x1c0] sm:$0xff]
      %v2968 = vld [vmem:[#allocation3 + $0x1c8] sm:$0xff]
      %v2969 = vld [vmem:[#allocation3 + $0x1d0] sm:$0xf]
      %v2970 = vld [vmem:[#allocation3 + $0x1d4] sm:$0xff]
      %v2971 = vld [vmem:[#allocation3 + $0x1dc] sm:$0xff]
      %v2972 = vld [vmem:[#allocation3 + $0x1e4] sm:$0xff]
      %v2973 = vld [vmem:[#allocation3 + $0x1ec] sm:$0xff]
      %v2974 = vld [vmem:[#allocation3 + $0x1f4] sm:$0xf]
      %v2975 = vld [vmem:[#allocation3 + $0x1f8] sm:$0xff]
      %v2976 = vld [vmem:[#allocation3 + $0x200] sm:$0xff]
      %v2977 = vld [vmem:[#allocation3 + $0x208] sm:$0xff]
      %v2978 = vld [vmem:[#allocation3 + $0x210] sm:$0xff]
      %v2979 = vld [vmem:[#allocation3 + $0x218] sm:$0xf]
      %v2980 = vld [vmem:[#allocation3 + $0x21c] sm:$0xff]
      %v2981 = vld [vmem:[#allocation3 + $0x224] sm:$0xff]
      %v2982 = vld [vmem:[#allocation3 + $0x22c] sm:$0xff]
      %v2983 = vld [vmem:[#allocation3 + $0x234] sm:$0xff]
      %v2984 = vld [vmem:[#allocation3 + $0x23c] sm:$0xf]
      %v2985 = vld [vmem:[#allocation3 + $0x240] sm:$0xff]
      %v2986 = vld [vmem:[#allocation3 + $0x248] sm:$0xff]
      %v2987 = vld [vmem:[#allocation3 + $0x250] sm:$0xff]
      %v2988 = vld [vmem:[#allocation3 + $0x258] sm:$0xff]
      %v2989 = vld [vmem:[#allocation3 + $0x260] sm:$0xf]
      %v2990 = vld [vmem:[#allocation3 + $0x264] sm:$0xff]
      %v2991 = vld [vmem:[#allocation3 + $0x26c] sm:$0xff]
      %v2992 = vld [vmem:[#allocation3 + $0x274] sm:$0xff]
      %v2993 = vld [vmem:[#allocation3 + $0x27c] sm:$0xff]
      %v2994 = vld [vmem:[#allocation3 + $0x284] sm:$0xf]
      %v2995 = vld [vmem:[#allocation3 + $0x288] sm:$0xff]
      %v2996 = vld [vmem:[#allocation3 + $0x290] sm:$0xff]
      %v2997 = vld [vmem:[#allocation3 + $0x298] sm:$0xff]
      %v2998 = vld [vmem:[#allocation3 + $0x2a0] sm:$0xff]
      %v2999 = vld [vmem:[#allocation3 + $0x2a8] sm:$0xf]
      %v3000 = vld [vmem:[#allocation3 + $0x2ac] sm:$0xff]
      %v3001 = vld [vmem:[#allocation3 + $0x2b4] sm:$0xff]
      %v3002 = vld [vmem:[#allocation3 + $0x2bc] sm:$0xff]
      %v3003 = vld [vmem:[#allocation3 + $0x2c4] sm:$0xff]
      %v3004 = vld [vmem:[#allocation3 + $0x2cc] sm:$0xf]
      %v3005 = vld [vmem:[#allocation3 + $0x2d0] sm:$0xff]
      %v3006 = vld [vmem:[#allocation3 + $0x2d8] sm:$0xff]
      %v3007 = vld [vmem:[#allocation3 + $0x2e0] sm:$0xff]
      %v3008 = vld [vmem:[#allocation3 + $0x2e8] sm:$0xff]
      %v3009 = vld [vmem:[#allocation3 + $0x2f0] sm:$0xf]
      %v3010 = vld [vmem:[#allocation3 + $0x2f4] sm:$0xff]
      %v3011 = vld [vmem:[#allocation3 + $0x2fc] sm:$0xff]
      %v3012 = vld [vmem:[#allocation3 + $0x304] sm:$0xff]
      %v3013 = vld [vmem:[#allocation3 + $0x30c] sm:$0xff]
      %v3014 = vld [vmem:[#allocation3 + $0x314] sm:$0xf]
      %v3015 = vld [vmem:[#allocation3 + $0x318] sm:$0xff]
      %v3016 = vld [vmem:[#allocation3 + $0x320] sm:$0xff]
      %v3017 = vld [vmem:[#allocation3 + $0x328] sm:$0xff]
      %v3018 = vld [vmem:[#allocation3 + $0x330] sm:$0xff]
      %v3019 = vld [vmem:[#allocation3 + $0x338] sm:$0xf]
      %v3020 = vld [vmem:[#allocation3 + $0x33c] sm:$0xff]
      %v3021 = vld [vmem:[#allocation3 + $0x344] sm:$0xff]
      %v3022 = vld [vmem:[#allocation3 + $0x34c] sm:$0xff]
      %v3023 = vld [vmem:[#allocation3 + $0x354] sm:$0xff]
      %v3024 = vld [vmem:[#allocation3 + $0x35c] sm:$0xf]
      %v3025 = vld [vmem:[#allocation3 + $0x360] sm:$0xff]
      %v3026 = vld [vmem:[#allocation3 + $0x368] sm:$0xff]
      %v3027 = vld [vmem:[#allocation3 + $0x370] sm:$0xff]
      %v3028 = vld [vmem:[#allocation3 + $0x378] sm:$0xff]
      %v3029 = vld [vmem:[#allocation3 + $0x380] sm:$0xf]
      %v3030 = vld [vmem:[#allocation3 + $0x384] sm:$0xff]
      %v3031 = vld [vmem:[#allocation3 + $0x38c] sm:$0xff]
      %v3032 = vld [vmem:[#allocation3 + $0x394] sm:$0xff]
      %v3033 = vld [vmem:[#allocation3 + $0x39c] sm:$0xff]
      %v3034 = vld [vmem:[#allocation3 + $0x3a4] sm:$0xf]
      %v3035 = vld [vmem:[#allocation3 + $0x3a8] sm:$0xff]
      %v3036 = vld [vmem:[#allocation3 + $0x3b0] sm:$0xff]
      %v3037 = vld [vmem:[#allocation3 + $0x3b8] sm:$0xff]
      %v3038 = vld [vmem:[#allocation3 + $0x3c0] sm:$0xff]
      %v3039 = vld [vmem:[#allocation3 + $0x3c8] sm:$0xf]
      %v3040 = vld [vmem:[#allocation3 + $0x3cc] sm:$0xff]
      %v3041 = vld [vmem:[#allocation3 + $0x3d4] sm:$0xff]
      %v3042 = vld [vmem:[#allocation3 + $0x3dc] sm:$0xff]
      %v3043 = vld [vmem:[#allocation3 + $0x3e4] sm:$0xff]
      %v3044 = vld [vmem:[#allocation3 + $0x3ec] sm:$0xf]
      %v3045 = vld [vmem:[#allocation3 + $0x3f0] sm:$0xff]
      %v3046 = vld [vmem:[#allocation3 + $0x3f8] sm:$0xff]
      %v3047 = vld [vmem:[#allocation3 + $0x400] sm:$0xff]
      %v3048 = vld [vmem:[#allocation3 + $0x408] sm:$0xff]
      %v3049 = vld [vmem:[#allocation3 + $0x410] sm:$0xf]
      %v3050 = vld [vmem:[#allocation3 + $0x414] sm:$0xff]
      %v3051 = vld [vmem:[#allocation3 + $0x41c] sm:$0xff]
      %v3052 = vld [vmem:[#allocation3 + $0x424] sm:$0xff]
      %v3053 = vld [vmem:[#allocation3 + $0x42c] sm:$0xff]
      %v3054 = vld [vmem:[#allocation3 + $0x434] sm:$0xf]
      %v3055 = vld [vmem:[#allocation3 + $0x438] sm:$0xff]
      %v3056 = vld [vmem:[#allocation3 + $0x440] sm:$0xff]
      %v3057 = vld [vmem:[#allocation3 + $0x448] sm:$0xff]
      %v3058 = vld [vmem:[#allocation3 + $0x450] sm:$0xff]
      %v3059 = vld [vmem:[#allocation3 + $0x458] sm:$0xf]
      %v3060 = vld [vmem:[#allocation3 + $0x45c] sm:$0xff]
      %v3061 = vld [vmem:[#allocation3 + $0x464] sm:$0xff]
      %v3062 = vld [vmem:[#allocation3 + $0x46c] sm:$0xff]
      %v3063 = vld [vmem:[#allocation3 + $0x474] sm:$0xff]
      %v3064 = vld [vmem:[#allocation3 + $0x47c] sm:$0xf]
      %v3065 = vld [vmem:[%s1] sm:$0xf]
      %v3066 = vld [vmem:[%s1 + $0x4] sm:$0xf]
      %v3067 = vld [vmem:[%s1 + $0x8] sm:$0xf]
      %v3068 = vld [vmem:[%s1 + $0xc] sm:$0xf]
      %v3069 = vld [vmem:[%s1 + $0x10] sm:$0xf]
      %v3070 = vld [vmem:[%s1 + $0x14] sm:$0xf]
      %v3071 = vld [vmem:[%s1 + $0x18] sm:$0xf]
      %v3072 = vld [vmem:[%s1 + $0x1c] sm:$0xf]
      %v3073 = vld [vmem:[%s1 + $0x20] sm:$0xf]
      %v3074 = vld [vmem:[%s1 + $0x24] sm:$0xf]
      %v3075 = vld [vmem:[%s1 + $0x28] sm:$0xf]
      %v3076 = vld [vmem:[%s1 + $0x2c] sm:$0xf]
      %v3077 = vld [vmem:[%s1 + $0x30] sm:$0xf]
      %v3078 = vld [vmem:[%s1 + $0x34] sm:$0xf]
      %v3079 = vld [vmem:[%s1 + $0x38] sm:$0xf]
      %v3080 = vld [vmem:[%s1 + $0x3c] sm:$0xf]
      %v3081 = vld [vmem:[%s1 + $0x40] sm:$0xf]
      %v3082 = vld [vmem:[%s1 + $0x44] sm:$0xf]
      %v3083 = vld [vmem:[%s1 + $0x48] sm:$0xf]
      %v3084 = vld [vmem:[%s1 + $0x4c] sm:$0xf]
      %v3085 = vld [vmem:[%s1 + $0x50] sm:$0xf]
      %v3086 = vld [vmem:[%s1 + $0x54] sm:$0xf]
      %v3087 = vld [vmem:[%s1 + $0x58] sm:$0xf]
      %v3088 = vld [vmem:[%s1 + $0x5c] sm:$0xf]
      %v3089 = vld [vmem:[%s1 + $0x60] sm:$0xf]
      %v3090 = vld [vmem:[%s1 + $0x64] sm:$0xf]
      %v3091 = vld [vmem:[%s1 + $0x68] sm:$0xf]
      %v3092 = vld [vmem:[%s1 + $0x6c] sm:$0xf]
      %v3093 = vld [vmem:[%s1 + $0x70] sm:$0xf]
      %v3094 = vld [vmem:[%s1 + $0x74] sm:$0xf]
      %v3095 = vld [vmem:[%s1 + $0x78] sm:$0xf]
      %v3096 = vld [vmem:[%s1 + $0x7c] sm:$0xf]
      %v3097 = vld [vmem:[%s1 + $0x80] sm:$0xf]
      %v3098 = vld [vmem:[%s1 + $0x84] sm:$0xf]
      %v3099 = vld [vmem:[%s1 + $0x88] sm:$0xf]
      %v3100 = vld [vmem:[%s1 + $0x8c] sm:$0xf]
      %v3101 = vld [vmem:[%s1 + $0x90] sm:$0xf]
      %v3102 = vld [vmem:[%s1 + $0x94] sm:$0xf]
      %v3103 = vld [vmem:[%s1 + $0x98] sm:$0xf]
      %v3104 = vld [vmem:[%s1 + $0x9c] sm:$0xf]
      %v3105 = vld [vmem:[%s1 + $0xa0] sm:$0xf]
      %v3106 = vld [vmem:[%s1 + $0xa4] sm:$0xf]
      %v3107 = vld [vmem:[%s1 + $0xa8] sm:$0xf]
      %v3108 = vld [vmem:[%s1 + $0xac] sm:$0xf]
      %v3109 = vld [vmem:[%s1 + $0xb0] sm:$0xf]
      %v3110 = vld [vmem:[%s1 + $0xb4] sm:$0xf]
      %v3111 = vld [vmem:[%s1 + $0xb8] sm:$0xf]
      %v3112 = vld [vmem:[%s1 + $0xbc] sm:$0xf]
      %v3113 = vld [vmem:[%s1 + $0xc0] sm:$0xf]
      %v3114 = vld [vmem:[%s1 + $0xc4] sm:$0xf]
      %v3115 = vld [vmem:[%s1 + $0xc8] sm:$0xf]
      %v3116 = vld [vmem:[%s1 + $0xcc] sm:$0xf]
      %v3117 = vld [vmem:[%s1 + $0xd0] sm:$0xf]
      %v3118 = vld [vmem:[%s1 + $0xd4] sm:$0xf]
      %v3119 = vld [vmem:[%s1 + $0xd8] sm:$0xf]
      %v3120 = vld [vmem:[%s1 + $0xdc] sm:$0xf]
      %v3121 = vld [vmem:[%s1 + $0xe0] sm:$0xf]
      %v3122 = vld [vmem:[%s1 + $0xe4] sm:$0xf]
      %v3123 = vld [vmem:[%s1 + $0xe8] sm:$0xf]
      %v3124 = vld [vmem:[%s1 + $0xec] sm:$0xf]
      %v3125 = vld [vmem:[%s1 + $0xf0] sm:$0xf]
      %v3126 = vld [vmem:[%s1 + $0xf4] sm:$0xf]
      %v3127 = vld [vmem:[%s1 + $0xf8] sm:$0xf]
      %v3128 = vld [vmem:[%s1 + $0xfc] sm:$0xf]
      %v3129 = vld [vmem:[%s1 + $0x100] sm:$0xf]
      %v3130 = vld [vmem:[%s1 + $0x104] sm:$0xf]
      %v3131 = vld [vmem:[%s1 + $0x108] sm:$0xf]
      %v3132 = vld [vmem:[%s1 + $0x10c] sm:$0xf]
      %v3133 = vld [vmem:[%s1 + $0x110] sm:$0xf]
      %v3134 = vld [vmem:[%s1 + $0x114] sm:$0xf]
      %v3135 = vld [vmem:[%s1 + $0x118] sm:$0xf]
      %v3136 = vld [vmem:[%s1 + $0x11c] sm:$0xf]
      %v3137 = vld [vmem:[%s1 + $0x120] sm:$0xf]
      %v3138 = vld [vmem:[%s1 + $0x124] sm:$0xf]
      %v3139 = vld [vmem:[%s1 + $0x128] sm:$0xf]
      %v3140 = vld [vmem:[%s1 + $0x12c] sm:$0xf]
      %v3141 = vld [vmem:[%s1 + $0x130] sm:$0xf]
      %v3142 = vld [vmem:[%s1 + $0x134] sm:$0xf]
      %v3143 = vld [vmem:[%s1 + $0x138] sm:$0xf]
      %v3144 = vld [vmem:[%s1 + $0x13c] sm:$0xf]
      %v3145 = vld [vmem:[%s1 + $0x140] sm:$0xf]
      %v3146 = vld [vmem:[%s1 + $0x144] sm:$0xf]
      %v3147 = vld [vmem:[%s1 + $0x148] sm:$0xf]
      %v3148 = vld [vmem:[%s1 + $0x14c] sm:$0xf]
      %v3149 = vld [vmem:[%s1 + $0x150] sm:$0xf]
      %v3150 = vld [vmem:[%s1 + $0x154] sm:$0xf]
      %v3151 = vld [vmem:[%s1 + $0x158] sm:$0xf]
      %v3152 = vld [vmem:[%s1 + $0x15c] sm:$0xf]
      %v3153 = vld [vmem:[%s1 + $0x160] sm:$0xf]
      %v3154 = vld [vmem:[%s1 + $0x164] sm:$0xf]
      %v3155 = vld [vmem:[%s1 + $0x168] sm:$0xf]
      %v3156 = vld [vmem:[%s1 + $0x16c] sm:$0xf]
      %v3157 = vld [vmem:[%s1 + $0x170] sm:$0xf]
      %v3158 = vld [vmem:[%s1 + $0x174] sm:$0xf]
      %v3159 = vld [vmem:[%s1 + $0x178] sm:$0xf]
      %v3160 = vld [vmem:[%s1 + $0x17c] sm:$0xf]
      %v3161 = vld [vmem:[%s1 + $0x180] sm:$0xf]
      %v3162 = vld [vmem:[%s1 + $0x184] sm:$0xf]
      %v3163 = vld [vmem:[%s1 + $0x188] sm:$0xf]
      %v3164 = vld [vmem:[%s1 + $0x18c] sm:$0xf]
      %v3165 = vld [vmem:[%s1 + $0x190] sm:$0xf]
      %v3166 = vld [vmem:[%s1 + $0x194] sm:$0xf]
      %v3167 = vld [vmem:[%s1 + $0x198] sm:$0xf]
      %v3168 = vld [vmem:[%s1 + $0x19c] sm:$0xf]
      %v3169 = vld [vmem:[%s1 + $0x1a0] sm:$0xf]
      %v3170 = vld [vmem:[%s1 + $0x1a4] sm:$0xf]
      %v3171 = vld [vmem:[%s1 + $0x1a8] sm:$0xf]
      %v3172 = vld [vmem:[%s1 + $0x1ac] sm:$0xf]
      %v3173 = vld [vmem:[%s1 + $0x1b0] sm:$0xf]
      %v3174 = vld [vmem:[%s1 + $0x1b4] sm:$0xf]
      %v3175 = vld [vmem:[%s1 + $0x1b8] sm:$0xf]
      %v3176 = vld [vmem:[%s1 + $0x1bc] sm:$0xf]
      %v3177 = vld [vmem:[%s1 + $0x1c0] sm:$0xf]
      %v3178 = vld [vmem:[%s1 + $0x1c4] sm:$0xf]
      %v3179 = vld [vmem:[%s1 + $0x1c8] sm:$0xf]
      %v3180 = vld [vmem:[%s1 + $0x1cc] sm:$0xf]
      %v3181 = vld [vmem:[%s1 + $0x1d0] sm:$0xf]
      %v3182 = vld [vmem:[%s1 + $0x1d4] sm:$0xf]
      %v3183 = vld [vmem:[%s1 + $0x1d8] sm:$0xf]
      %v3184 = vld [vmem:[%s1 + $0x1dc] sm:$0xf]
      %v3185 = vld [vmem:[%s1 + $0x1e0] sm:$0xf]
      %v3186 = vld [vmem:[%s1 + $0x1e4] sm:$0xf]
      %v3187 = vld [vmem:[%s1 + $0x1e8] sm:$0xf]
      %v3188 = vld [vmem:[%s1 + $0x1ec] sm:$0xf]
      %v3189 = vld [vmem:[%s1 + $0x1f0] sm:$0xf]
      %v3190 = vld [vmem:[%s1 + $0x1f4] sm:$0xf]
      %v3191 = vld [vmem:[%s1 + $0x1f8] sm:$0xf]
      %v3192 = vld [vmem:[%s1 + $0x1fc] sm:$0xf]
      %v3193 = vld [vmem:[%s1 + $0x200] sm:$0xf]
      %v3194 = vld [vmem:[%s1 + $0x204] sm:$0xf]
      %v3195 = vld [vmem:[%s1 + $0x208] sm:$0xf]
      %v3196 = vld [vmem:[%s1 + $0x20c] sm:$0xf]
      %v3197 = vld [vmem:[%s1 + $0x210] sm:$0xf]
      %v3198 = vld [vmem:[%s1 + $0x214] sm:$0xf]
      %v3199 = vld [vmem:[%s1 + $0x218] sm:$0xf]
      %v3200 = vld [vmem:[%s1 + $0x21c] sm:$0xf]
      %v3201 = vld [vmem:[%s1 + $0x220] sm:$0xf]
      %v3202 = vld [vmem:[%s1 + $0x224] sm:$0xf]
      %v3203 = vld [vmem:[%s1 + $0x228] sm:$0xf]
      %v3204 = vld [vmem:[%s1 + $0x22c] sm:$0xf]
      %v3205 = vld [vmem:[%s1 + $0x230] sm:$0xf]
      %v3206 = vld [vmem:[%s1 + $0x234] sm:$0xf]
      %v3207 = vld [vmem:[%s1 + $0x238] sm:$0xf]
      %v3208 = vld [vmem:[%s1 + $0x23c] sm:$0xf]
      %v3369 = vunpack.c.l.b16 %v2905
      %v3370 = vunpack.c.h.b16 %v2905
      %v3371 = vunpack.c.l.b16 %v2906
      %v3372 = vunpack.c.h.b16 %v2906
      %v3373 = vunpack.c.l.b16 %v2907
      %v3374 = vunpack.c.h.b16 %v2907
      %v3375 = vunpack.c.l.b16 %v2908
      %v3376 = vunpack.c.h.b16 %v2908
      %v3377 = vunpack.c.l.b16 %v2909
      %v3378 = vunpack.c.l.b16 %v2910
      %v3379 = vunpack.c.h.b16 %v2910
      %v3380 = vunpack.c.l.b16 %v2911
      %v3381 = vunpack.c.h.b16 %v2911
      %v3382 = vunpack.c.l.b16 %v2912
      %v3383 = vunpack.c.h.b16 %v2912
      %v3384 = vunpack.c.l.b16 %v2913
      %v3385 = vunpack.c.h.b16 %v2913
      %v3386 = vunpack.c.l.b16 %v2914
      %v3387 = vunpack.c.l.b16 %v2915
      %v3388 = vunpack.c.h.b16 %v2915
      %v3389 = vunpack.c.l.b16 %v2916
      %v3390 = vunpack.c.h.b16 %v2916
      %v3391 = vunpack.c.l.b16 %v2917
      %v3392 = vunpack.c.h.b16 %v2917
      %v3393 = vunpack.c.l.b16 %v2918
      %v3394 = vunpack.c.h.b16 %v2918
      %v3395 = vunpack.c.l.b16 %v2919
      %v3396 = vunpack.c.l.b16 %v2920
      %v3397 = vunpack.c.h.b16 %v2920
      %v3398 = vunpack.c.l.b16 %v2921
      %v3399 = vunpack.c.h.b16 %v2921
      %v3400 = vunpack.c.l.b16 %v2922
      %v3401 = vunpack.c.h.b16 %v2922
      %v3402 = vunpack.c.l.b16 %v2923
      %v3403 = vunpack.c.h.b16 %v2923
      %v3404 = vunpack.c.l.b16 %v2924
      %v3405 = vunpack.c.l.b16 %v2925
      %v3406 = vunpack.c.h.b16 %v2925
      %v3407 = vunpack.c.l.b16 %v2926
      %v3408 = vunpack.c.h.b16 %v2926
      %v3409 = vunpack.c.l.b16 %v2927
      %v3410 = vunpack.c.h.b16 %v2927
      %v3411 = vunpack.c.l.b16 %v2928
      %v3412 = vunpack.c.h.b16 %v2928
      %v3413 = vunpack.c.l.b16 %v2929
      %v3414 = vunpack.c.l.b16 %v2930
      %v3415 = vunpack.c.h.b16 %v2930
      %v3416 = vunpack.c.l.b16 %v2931
      %v3417 = vunpack.c.h.b16 %v2931
      %v3418 = vunpack.c.l.b16 %v2932
      %v3419 = vunpack.c.h.b16 %v2932
      %v3420 = vunpack.c.l.b16 %v2933
      %v3421 = vunpack.c.h.b16 %v2933
      %v3422 = vunpack.c.l.b16 %v2934
      %v3423 = vunpack.c.l.b16 %v2935
      %v3424 = vunpack.c.h.b16 %v2935
      %v3425 = vunpack.c.l.b16 %v2936
      %v3426 = vunpack.c.h.b16 %v2936
      %v3427 = vunpack.c.l.b16 %v2937
      %v3428 = vunpack.c.h.b16 %v2937
      %v3429 = vunpack.c.l.b16 %v2938
      %v3430 = vunpack.c.h.b16 %v2938
      %v3431 = vunpack.c.l.b16 %v2939
      %v3432 = vunpack.c.l.b16 %v2940
      %v3433 = vunpack.c.h.b16 %v2940
      %v3434 = vunpack.c.l.b16 %v2941
      %v3435 = vunpack.c.h.b16 %v2941
      %v3436 = vunpack.c.l.b16 %v2942
      %v3437 = vunpack.c.h.b16 %v2942
      %v3438 = vunpack.c.l.b16 %v2943
      %v3439 = vunpack.c.h.b16 %v2943
      %v3440 = vunpack.c.l.b16 %v2944
      %v3441 = vunpack.c.l.b16 %v2945
      %v3442 = vunpack.c.h.b16 %v2945
      %v3443 = vunpack.c.l.b16 %v2946
      %v3444 = vunpack.c.h.b16 %v2946
      %v3445 = vunpack.c.l.b16 %v2947
      %v3446 = vunpack.c.h.b16 %v2947
      %v3447 = vunpack.c.l.b16 %v2948
      %v3448 = vunpack.c.h.b16 %v2948
      %v3449 = vunpack.c.l.b16 %v2949
      %v3450 = vunpack.c.l.b16 %v2950
      %v3451 = vunpack.c.h.b16 %v2950
      %v3452 = vunpack.c.l.b16 %v2951
      %v3453 = vunpack.c.h.b16 %v2951
      %v3454 = vunpack.c.l.b16 %v2952
      %v3455 = vunpack.c.h.b16 %v2952
      %v3456 = vunpack.c.l.b16 %v2953
      %v3457 = vunpack.c.h.b16 %v2953
      %v3458 = vunpack.c.l.b16 %v2954
      %v3459 = vunpack.c.l.b16 %v2955
      %v3460 = vunpack.c.h.b16 %v2955
      %v3461 = vunpack.c.l.b16 %v2956
      %v3462 = vunpack.c.h.b16 %v2956
      %v3463 = vunpack.c.l.b16 %v2957
      %v3464 = vunpack.c.h.b16 %v2957
      %v3465 = vunpack.c.l.b16 %v2958
      %v3466 = vunpack.c.h.b16 %v2958
      %v3467 = vunpack.c.l.b16 %v2959
      %v3468 = vunpack.c.l.b16 %v2960
      %v3469 = vunpack.c.h.b16 %v2960
      %v3470 = vunpack.c.l.b16 %v2961
      %v3471 = vunpack.c.h.b16 %v2961
      %v3472 = vunpack.c.l.b16 %v2962
      %v3473 = vunpack.c.h.b16 %v2962
      %v3474 = vunpack.c.l.b16 %v2963
      %v3475 = vunpack.c.h.b16 %v2963
      %v3476 = vunpack.c.l.b16 %v2964
      %v3477 = vunpack.c.l.b16 %v2965
      %v3478 = vunpack.c.h.b16 %v2965
      %v3479 = vunpack.c.l.b16 %v2966
      %v3480 = vunpack.c.h.b16 %v2966
      %v3481 = vunpack.c.l.b16 %v2967
      %v3482 = vunpack.c.h.b16 %v2967
      %v3483 = vunpack.c.l.b16 %v2968
      %v3484 = vunpack.c.h.b16 %v2968
      %v3485 = vunpack.c.l.b16 %v2969
      %v3486 = vunpack.c.l.b16 %v2970
      %v3487 = vunpack.c.h.b16 %v2970
      %v3488 = vunpack.c.l.b16 %v2971
      %v3489 = vunpack.c.h.b16 %v2971
      %v3490 = vunpack.c.l.b16 %v2972
      %v3491 = vunpack.c.h.b16 %v2972
      %v3492 = vunpack.c.l.b16 %v2973
      %v3493 = vunpack.c.h.b16 %v2973
      %v3494 = vunpack.c.l.b16 %v2974
      %v3495 = vunpack.c.l.b16 %v2975
      %v3496 = vunpack.c.h.b16 %v2975
      %v3497 = vunpack.c.l.b16 %v2976
      %v3498 = vunpack.c.h.b16 %v2976
      %v3499 = vunpack.c.l.b16 %v2977
      %v3500 = vunpack.c.h.b16 %v2977
      %v3501 = vunpack.c.l.b16 %v2978
      %v3502 = vunpack.c.h.b16 %v2978
      %v3503 = vunpack.c.l.b16 %v2979
      %v3504 = vunpack.c.l.b16 %v2980
      %v3505 = vunpack.c.h.b16 %v2980
      %v3506 = vunpack.c.l.b16 %v2981
      %v3507 = vunpack.c.h.b16 %v2981
      %v3508 = vunpack.c.l.b16 %v2982
      %v3509 = vunpack.c.h.b16 %v2982
      %v3510 = vunpack.c.l.b16 %v2983
      %v3511 = vunpack.c.h.b16 %v2983
      %v3512 = vunpack.c.l.b16 %v2984
      %v3513 = vunpack.c.l.b16 %v2985
      %v3514 = vunpack.c.h.b16 %v2985
      %v3515 = vunpack.c.l.b16 %v2986
      %v3516 = vunpack.c.h.b16 %v2986
      %v3517 = vunpack.c.l.b16 %v2987
      %v3518 = vunpack.c.h.b16 %v2987
      %v3519 = vunpack.c.l.b16 %v2988
      %v3520 = vunpack.c.h.b16 %v2988
      %v3521 = vunpack.c.l.b16 %v2989
      %v3522 = vunpack.c.l.b16 %v2990
      %v3523 = vunpack.c.h.b16 %v2990
      %v3524 = vunpack.c.l.b16 %v2991
      %v3525 = vunpack.c.h.b16 %v2991
      %v3526 = vunpack.c.l.b16 %v2992
      %v3527 = vunpack.c.h.b16 %v2992
      %v3528 = vunpack.c.l.b16 %v2993
      %v3529 = vunpack.c.h.b16 %v2993
      %v3530 = vunpack.c.l.b16 %v2994
      %v3531 = vunpack.c.l.b16 %v2995
      %v3532 = vunpack.c.h.b16 %v2995
      %v3533 = vunpack.c.l.b16 %v2996
      %v3534 = vunpack.c.h.b16 %v2996
      %v3535 = vunpack.c.l.b16 %v2997
      %v3536 = vunpack.c.h.b16 %v2997
      %v3537 = vunpack.c.l.b16 %v2998
      %v3538 = vunpack.c.h.b16 %v2998
      %v3539 = vunpack.c.l.b16 %v2999
      %v3540 = vunpack.c.l.b16 %v3000
      %v3541 = vunpack.c.h.b16 %v3000
      %v3542 = vunpack.c.l.b16 %v3001
      %v3543 = vunpack.c.h.b16 %v3001
      %v3544 = vunpack.c.l.b16 %v3002
      %v3545 = vunpack.c.h.b16 %v3002
      %v3546 = vunpack.c.l.b16 %v3003
      %v3547 = vunpack.c.h.b16 %v3003
      %v3548 = vunpack.c.l.b16 %v3004
      %v3549 = vunpack.c.l.b16 %v3005
      %v3550 = vunpack.c.h.b16 %v3005
      %v3551 = vunpack.c.l.b16 %v3006
      %v3552 = vunpack.c.h.b16 %v3006
      %v3553 = vunpack.c.l.b16 %v3007
      %v3554 = vunpack.c.h.b16 %v3007
      %v3555 = vunpack.c.l.b16 %v3008
      %v3556 = vunpack.c.h.b16 %v3008
      %v3557 = vunpack.c.l.b16 %v3009
      %v3558 = vunpack.c.l.b16 %v3010
      %v3559 = vunpack.c.h.b16 %v3010
      %v3560 = vunpack.c.l.b16 %v3011
      %v3561 = vunpack.c.h.b16 %v3011
      %v3562 = vunpack.c.l.b16 %v3012
      %v3563 = vunpack.c.h.b16 %v3012
      %v3564 = vunpack.c.l.b16 %v3013
      %v3565 = vunpack.c.h.b16 %v3013
      %v3566 = vunpack.c.l.b16 %v3014
      %v3567 = vunpack.c.l.b16 %v3015
      %v3568 = vunpack.c.h.b16 %v3015
      %v3569 = vunpack.c.l.b16 %v3016
      %v3570 = vunpack.c.h.b16 %v3016
      %v3571 = vunpack.c.l.b16 %v3017
      %v3572 = vunpack.c.h.b16 %v3017
      %v3573 = vunpack.c.l.b16 %v3018
      %v3574 = vunpack.c.h.b16 %v3018
      %v3575 = vunpack.c.l.b16 %v3019
      %v3576 = vunpack.c.l.b16 %v3020
      %v3577 = vunpack.c.h.b16 %v3020
      %v3578 = vunpack.c.l.b16 %v3021
      %v3579 = vunpack.c.h.b16 %v3021
      %v3580 = vunpack.c.l.b16 %v3022
      %v3581 = vunpack.c.h.b16 %v3022
      %v3582 = vunpack.c.l.b16 %v3023
      %v3583 = vunpack.c.h.b16 %v3023
      %v3584 = vunpack.c.l.b16 %v3024
      %v3585 = vunpack.c.l.b16 %v3025
      %v3586 = vunpack.c.h.b16 %v3025
      %v3587 = vunpack.c.l.b16 %v3026
      %v3588 = vunpack.c.h.b16 %v3026
      %v3589 = vunpack.c.l.b16 %v3027
      %v3590 = vunpack.c.h.b16 %v3027
      %v3591 = vunpack.c.l.b16 %v3028
      %v3592 = vunpack.c.h.b16 %v3028
      %v3593 = vunpack.c.l.b16 %v3029
      %v3594 = vunpack.c.l.b16 %v3030
      %v3595 = vunpack.c.h.b16 %v3030
      %v3596 = vunpack.c.l.b16 %v3031
      %v3597 = vunpack.c.h.b16 %v3031
      %v3598 = vunpack.c.l.b16 %v3032
      %v3599 = vunpack.c.h.b16 %v3032
      %v3600 = vunpack.c.l.b16 %v3033
      %v3601 = vunpack.c.h.b16 %v3033
      %v3602 = vunpack.c.l.b16 %v3034
      %v3603 = vunpack.c.l.b16 %v3035
      %v3604 = vunpack.c.h.b16 %v3035
      %v3605 = vunpack.c.l.b16 %v3036
      %v3606 = vunpack.c.h.b16 %v3036
      %v3607 = vunpack.c.l.b16 %v3037
      %v3608 = vunpack.c.h.b16 %v3037
      %v3609 = vunpack.c.l.b16 %v3038
      %v3610 = vunpack.c.h.b16 %v3038
      %v3611 = vunpack.c.l.b16 %v3039
      %v3612 = vunpack.c.l.b16 %v3040
      %v3613 = vunpack.c.h.b16 %v3040
      %v3614 = vunpack.c.l.b16 %v3041
      %v3615 = vunpack.c.h.b16 %v3041
      %v3616 = vunpack.c.l.b16 %v3042
      %v3617 = vunpack.c.h.b16 %v3042
      %v3618 = vunpack.c.l.b16 %v3043
      %v3619 = vunpack.c.h.b16 %v3043
      %v3620 = vunpack.c.l.b16 %v3044
      %v3621 = vunpack.c.l.b16 %v3045
      %v3622 = vunpack.c.h.b16 %v3045
      %v3623 = vunpack.c.l.b16 %v3046
      %v3624 = vunpack.c.h.b16 %v3046
      %v3625 = vunpack.c.l.b16 %v3047
      %v3626 = vunpack.c.h.b16 %v3047
      %v3627 = vunpack.c.l.b16 %v3048
      %v3628 = vunpack.c.h.b16 %v3048
      %v3629 = vunpack.c.l.b16 %v3049
      %v3630 = vunpack.c.l.b16 %v3050
      %v3631 = vunpack.c.h.b16 %v3050
      %v3632 = vunpack.c.l.b16 %v3051
      %v3633 = vunpack.c.h.b16 %v3051
      %v3634 = vunpack.c.l.b16 %v3052
      %v3635 = vunpack.c.h.b16 %v3052
      %v3636 = vunpack.c.l.b16 %v3053
      %v3637 = vunpack.c.h.b16 %v3053
      %v3638 = vunpack.c.l.b16 %v3054
      %v3639 = vunpack.c.l.b16 %v3055
      %v3640 = vunpack.c.h.b16 %v3055
      %v3641 = vunpack.c.l.b16 %v3056
      %v3642 = vunpack.c.h.b16 %v3056
      %v3643 = vunpack.c.l.b16 %v3057
      %v3644 = vunpack.c.h.b16 %v3057
      %v3645 = vunpack.c.l.b16 %v3058
      %v3646 = vunpack.c.h.b16 %v3058
      %v3647 = vunpack.c.l.b16 %v3059
      %v3648 = vunpack.c.l.b16 %v3060
      %v3649 = vunpack.c.h.b16 %v3060
      %v3650 = vunpack.c.l.b16 %v3061
      %v3651 = vunpack.c.h.b16 %v3061
      %v3652 = vunpack.c.l.b16 %v3062
      %v3653 = vunpack.c.h.b16 %v3062
      %v3654 = vunpack.c.l.b16 %v3063
      %v3655 = vunpack.c.h.b16 %v3063
      %v3656 = vunpack.c.l.b16 %v3064
      %v3657 = vpack.c.b16 %v3378, %v3369
      %v3658 = vpack.c.b16 %v3379, %v3370
      %v3659 = vpack.c.b16 %v3380, %v3371
      %v3660 = vpack.c.b16 %v3381, %v3372
      %v3661 = vpack.c.b16 %v3382, %v3373
      %v3662 = vpack.c.b16 %v3383, %v3374
      %v3663 = vpack.c.b16 %v3384, %v3375
      %v3664 = vpack.c.b16 %v3385, %v3376
      %v3665 = vpack.c.b16 %v3386, %v3377
      %v3666 = vpack.c.b16 %v3396, %v3387
      %v3667 = vpack.c.b16 %v3397, %v3388
      %v3668 = vpack.c.b16 %v3398, %v3389
      %v3669 = vpack.c.b16 %v3399, %v3390
      %v3670 = vpack.c.b16 %v3400, %v3391
      %v3671 = vpack.c.b16 %v3401, %v3392
      %v3672 = vpack.c.b16 %v3402, %v3393
      %v3673 = vpack.c.b16 %v3403, %v3394
      %v3674 = vpack.c.b16 %v3404, %v3395
      %v3675 = vpack.c.b16 %v3414, %v3405
      %v3676 = vpack.c.b16 %v3415, %v3406
      %v3677 = vpack.c.b16 %v3416, %v3407
      %v3678 = vpack.c.b16 %v3417, %v3408
      %v3679 = vpack.c.b16 %v3418, %v3409
      %v3680 = vpack.c.b16 %v3419, %v3410
      %v3681 = vpack.c.b16 %v3420, %v3411
      %v3682 = vpack.c.b16 %v3421, %v3412
      %v3683 = vpack.c.b16 %v3422, %v3413
      %v3684 = vpack.c.b16 %v3432, %v3423
      %v3685 = vpack.c.b16 %v3433, %v3424
      %v3686 = vpack.c.b16 %v3434, %v3425
      %v3687 = vpack.c.b16 %v3435, %v3426
      %v3688 = vpack.c.b16 %v3436, %v3427
      %v3689 = vpack.c.b16 %v3437, %v3428
      %v3690 = vpack.c.b16 %v3438, %v3429
      %v3691 = vpack.c.b16 %v3439, %v3430
      %v3692 = vpack.c.b16 %v3440, %v3431
      %v3693 = vpack.c.b16 %v3450, %v3441
      %v3694 = vpack.c.b16 %v3451, %v3442
      %v3695 = vpack.c.b16 %v3452, %v3443
      %v3696 = vpack.c.b16 %v3453, %v3444
      %v3697 = vpack.c.b16 %v3454, %v3445
      %v3698 = vpack.c.b16 %v3455, %v3446
      %v3699 = vpack.c.b16 %v3456, %v3447
      %v3700 = vpack.c.b16 %v3457, %v3448
      %v3701 = vpack.c.b16 %v3458, %v3449
      %v3702 = vpack.c.b16 %v3468, %v3459
      %v3703 = vpack.c.b16 %v3469, %v3460
      %v3704 = vpack.c.b16 %v3470, %v3461
      %v3705 = vpack.c.b16 %v3471, %v3462
      %v3706 = vpack.c.b16 %v3472, %v3463
      %v3707 = vpack.c.b16 %v3473, %v3464
      %v3708 = vpack.c.b16 %v3474, %v3465
      %v3709 = vpack.c.b16 %v3475, %v3466
      %v3710 = vpack.c.b16 %v3476, %v3467
      %v3711 = vpack.c.b16 %v3486, %v3477
      %v3712 = vpack.c.b16 %v3487, %v3478
      %v3713 = vpack.c.b16 %v3488, %v3479
      %v3714 = vpack.c.b16 %v3489, %v3480
      %v3715 = vpack.c.b16 %v3490, %v3481
      %v3716 = vpack.c.b16 %v3491, %v3482
      %v3717 = vpack.c.b16 %v3492, %v3483
      %v3718 = vpack.c.b16 %v3493, %v3484
      %v3719 = vpack.c.b16 %v3494, %v3485
      %v3720 = vpack.c.b16 %v3504, %v3495
      %v3721 = vpack.c.b16 %v3505, %v3496
      %v3722 = vpack.c.b16 %v3506, %v3497
      %v3723 = vpack.c.b16 %v3507, %v3498
      %v3724 = vpack.c.b16 %v3508, %v3499
      %v3725 = vpack.c.b16 %v3509, %v3500
      %v3726 = vpack.c.b16 %v3510, %v3501
      %v3727 = vpack.c.b16 %v3511, %v3502
      %v3728 = vpack.c.b16 %v3512, %v3503
      %v3729 = vpack.c.b16 %v3522, %v3513
      %v3730 = vpack.c.b16 %v3523, %v3514
      %v3731 = vpack.c.b16 %v3524, %v3515
      %v3732 = vpack.c.b16 %v3525, %v3516
      %v3733 = vpack.c.b16 %v3526, %v3517
      %v3734 = vpack.c.b16 %v3527, %v3518
      %v3735 = vpack.c.b16 %v3528, %v3519
      %v3736 = vpack.c.b16 %v3529, %v3520
      %v3737 = vpack.c.b16 %v3530, %v3521
      %v3738 = vpack.c.b16 %v3540, %v3531
      %v3739 = vpack.c.b16 %v3541, %v3532
      %v3740 = vpack.c.b16 %v3542, %v3533
      %v3741 = vpack.c.b16 %v3543, %v3534
      %v3742 = vpack.c.b16 %v3544, %v3535
      %v3743 = vpack.c.b16 %v3545, %v3536
      %v3744 = vpack.c.b16 %v3546, %v3537
      %v3745 = vpack.c.b16 %v3547, %v3538
      %v3746 = vpack.c.b16 %v3548, %v3539
      %v3747 = vpack.c.b16 %v3558, %v3549
      %v3748 = vpack.c.b16 %v3559, %v3550
      %v3749 = vpack.c.b16 %v3560, %v3551
      %v3750 = vpack.c.b16 %v3561, %v3552
      %v3751 = vpack.c.b16 %v3562, %v3553
      %v3752 = vpack.c.b16 %v3563, %v3554
      %v3753 = vpack.c.b16 %v3564, %v3555
      %v3754 = vpack.c.b16 %v3565, %v3556
      %v3755 = vpack.c.b16 %v3566, %v3557
      %v3756 = vpack.c.b16 %v3576, %v3567
      %v3757 = vpack.c.b16 %v3577, %v3568
      %v3758 = vpack.c.b16 %v3578, %v3569
      %v3759 = vpack.c.b16 %v3579, %v3570
      %v3760 = vpack.c.b16 %v3580, %v3571
      %v3761 = vpack.c.b16 %v3581, %v3572
      %v3762 = vpack.c.b16 %v3582, %v3573
      %v3763 = vpack.c.b16 %v3583, %v3574
      %v3764 = vpack.c.b16 %v3584, %v3575
      %v3765 = vpack.c.b16 %v3594, %v3585
      %v3766 = vpack.c.b16 %v3595, %v3586
      %v3767 = vpack.c.b16 %v3596, %v3587
      %v3768 = vpack.c.b16 %v3597, %v3588
      %v3769 = vpack.c.b16 %v3598, %v3589
      %v3770 = vpack.c.b16 %v3599, %v3590
      %v3771 = vpack.c.b16 %v3600, %v3591
      %v3772 = vpack.c.b16 %v3601, %v3592
      %v3773 = vpack.c.b16 %v3602, %v3593
      %v3774 = vpack.c.b16 %v3612, %v3603
      %v3775 = vpack.c.b16 %v3613, %v3604
      %v3776 = vpack.c.b16 %v3614, %v3605
      %v3777 = vpack.c.b16 %v3615, %v3606
      %v3778 = vpack.c.b16 %v3616, %v3607
      %v3779 = vpack.c.b16 %v3617, %v3608
      %v3780 = vpack.c.b16 %v3618, %v3609
      %v3781 = vpack.c.b16 %v3619, %v3610
      %v3782 = vpack.c.b16 %v3620, %v3611
      %v3783 = vpack.c.b16 %v3630, %v3621
      %v3784 = vpack.c.b16 %v3631, %v3622
      %v3785 = vpack.c.b16 %v3632, %v3623
      %v3786 = vpack.c.b16 %v3633, %v3624
      %v3787 = vpack.c.b16 %v3634, %v3625
      %v3788 = vpack.c.b16 %v3635, %v3626
      %v3789 = vpack.c.b16 %v3636, %v3627
      %v3790 = vpack.c.b16 %v3637, %v3628
      %v3791 = vpack.c.b16 %v3638, %v3629
      %v3792 = vpack.c.b16 %v3648, %v3639
      %v3793 = vpack.c.b16 %v3649, %v3640
      %v3794 = vpack.c.b16 %v3650, %v3641
      %v3795 = vpack.c.b16 %v3651, %v3642
      %v3796 = vpack.c.b16 %v3652, %v3643
      %v3797 = vpack.c.b16 %v3653, %v3644
      %v3798 = vpack.c.b16 %v3654, %v3645
      %v3799 = vpack.c.b16 %v3655, %v3646
      %v3800 = vpack.c.b16 %v3656, %v3647
      %v4089 = vunpack.c.l.b16 %v3065
      %v4090 = vunpack.c.l.b16 %v3066
      %v4091 = vunpack.c.l.b16 %v3067
      %v4092 = vunpack.c.l.b16 %v3068
      %v4093 = vunpack.c.l.b16 %v3069
      %v4094 = vunpack.c.l.b16 %v3070
      %v4095 = vunpack.c.l.b16 %v3071
      %v4096 = vunpack.c.l.b16 %v3072
      %v4097 = vunpack.c.l.b16 %v3073
      %v4098 = vunpack.c.l.b16 %v3074
      %v4099 = vunpack.c.l.b16 %v3075
      %v4100 = vunpack.c.l.b16 %v3076
      %v4101 = vunpack.c.l.b16 %v3077
      %v4102 = vunpack.c.l.b16 %v3078
      %v4103 = vunpack.c.l.b16 %v3079
      %v4104 = vunpack.c.l.b16 %v3080
      %v4105 = vunpack.c.l.b16 %v3081
      %v4106 = vunpack.c.l.b16 %v3082
      %v4107 = vunpack.c.l.b16 %v3083
      %v4108 = vunpack.c.l.b16 %v3084
      %v4109 = vunpack.c.l.b16 %v3085
      %v4110 = vunpack.c.l.b16 %v3086
      %v4111 = vunpack.c.l.b16 %v3087
      %v4112 = vunpack.c.l.b16 %v3088
      %v4113 = vunpack.c.l.b16 %v3089
      %v4114 = vunpack.c.l.b16 %v3090
      %v4115 = vunpack.c.l.b16 %v3091
      %v4116 = vunpack.c.l.b16 %v3092
      %v4117 = vunpack.c.l.b16 %v3093
      %v4118 = vunpack.c.l.b16 %v3094
      %v4119 = vunpack.c.l.b16 %v3095
      %v4120 = vunpack.c.l.b16 %v3096
      %v4121 = vunpack.c.l.b16 %v3097
      %v4122 = vunpack.c.l.b16 %v3098
      %v4123 = vunpack.c.l.b16 %v3099
      %v4124 = vunpack.c.l.b16 %v3100
      %v4125 = vunpack.c.l.b16 %v3101
      %v4126 = vunpack.c.l.b16 %v3102
      %v4127 = vunpack.c.l.b16 %v3103
      %v4128 = vunpack.c.l.b16 %v3104
      %v4129 = vunpack.c.l.b16 %v3105
      %v4130 = vunpack.c.l.b16 %v3106
      %v4131 = vunpack.c.l.b16 %v3107
      %v4132 = vunpack.c.l.b16 %v3108
      %v4133 = vunpack.c.l.b16 %v3109
      %v4134 = vunpack.c.l.b16 %v3110
      %v4135 = vunpack.c.l.b16 %v3111
      %v4136 = vunpack.c.l.b16 %v3112
      %v4137 = vunpack.c.l.b16 %v3113
      %v4138 = vunpack.c.l.b16 %v3114
      %v4139 = vunpack.c.l.b16 %v3115
      %v4140 = vunpack.c.l.b16 %v3116
      %v4141 = vunpack.c.l.b16 %v3117
      %v4142 = vunpack.c.l.b16 %v3118
      %v4143 = vunpack.c.l.b16 %v3119
      %v4144 = vunpack.c.l.b16 %v3120
      %v4145 = vunpack.c.l.b16 %v3121
      %v4146 = vunpack.c.l.b16 %v3122
      %v4147 = vunpack.c.l.b16 %v3123
      %v4148 = vunpack.c.l.b16 %v3124
      %v4149 = vunpack.c.l.b16 %v3125
      %v4150 = vunpack.c.l.b16 %v3126
      %v4151 = vunpack.c.l.b16 %v3127
      %v4152 = vunpack.c.l.b16 %v3128
      %v4153 = vunpack.c.l.b16 %v3129
      %v4154 = vunpack.c.l.b16 %v3130
      %v4155 = vunpack.c.l.b16 %v3131
      %v4156 = vunpack.c.l.b16 %v3132
      %v4157 = vunpack.c.l.b16 %v3133
      %v4158 = vunpack.c.l.b16 %v3134
      %v4159 = vunpack.c.l.b16 %v3135
      %v4160 = vunpack.c.l.b16 %v3136
      %v4161 = vunpack.c.l.b16 %v3137
      %v4162 = vunpack.c.l.b16 %v3138
      %v4163 = vunpack.c.l.b16 %v3139
      %v4164 = vunpack.c.l.b16 %v3140
      %v4165 = vunpack.c.l.b16 %v3141
      %v4166 = vunpack.c.l.b16 %v3142
      %v4167 = vunpack.c.l.b16 %v3143
      %v4168 = vunpack.c.l.b16 %v3144
      %v4169 = vunpack.c.l.b16 %v3145
      %v4170 = vunpack.c.l.b16 %v3146
      %v4171 = vunpack.c.l.b16 %v3147
      %v4172 = vunpack.c.l.b16 %v3148
      %v4173 = vunpack.c.l.b16 %v3149
      %v4174 = vunpack.c.l.b16 %v3150
      %v4175 = vunpack.c.l.b16 %v3151
      %v4176 = vunpack.c.l.b16 %v3152
      %v4177 = vunpack.c.l.b16 %v3153
      %v4178 = vunpack.c.l.b16 %v3154
      %v4179 = vunpack.c.l.b16 %v3155
      %v4180 = vunpack.c.l.b16 %v3156
      %v4181 = vunpack.c.l.b16 %v3157
      %v4182 = vunpack.c.l.b16 %v3158
      %v4183 = vunpack.c.l.b16 %v3159
      %v4184 = vunpack.c.l.b16 %v3160
      %v4185 = vunpack.c.l.b16 %v3161
      %v4186 = vunpack.c.l.b16 %v3162
      %v4187 = vunpack.c.l.b16 %v3163
      %v4188 = vunpack.c.l.b16 %v3164
      %v4189 = vunpack.c.l.b16 %v3165
      %v4190 = vunpack.c.l.b16 %v3166
      %v4191 = vunpack.c.l.b16 %v3167
      %v4192 = vunpack.c.l.b16 %v3168
      %v4193 = vunpack.c.l.b16 %v3169
      %v4194 = vunpack.c.l.b16 %v3170
      %v4195 = vunpack.c.l.b16 %v3171
      %v4196 = vunpack.c.l.b16 %v3172
      %v4197 = vunpack.c.l.b16 %v3173
      %v4198 = vunpack.c.l.b16 %v3174
      %v4199 = vunpack.c.l.b16 %v3175
      %v4200 = vunpack.c.l.b16 %v3176
      %v4201 = vunpack.c.l.b16 %v3177
      %v4202 = vunpack.c.l.b16 %v3178
      %v4203 = vunpack.c.l.b16 %v3179
      %v4204 = vunpack.c.l.b16 %v3180
      %v4205 = vunpack.c.l.b16 %v3181
      %v4206 = vunpack.c.l.b16 %v3182
      %v4207 = vunpack.c.l.b16 %v3183
      %v4208 = vunpack.c.l.b16 %v3184
      %v4209 = vunpack.c.l.b16 %v3185
      %v4210 = vunpack.c.l.b16 %v3186
      %v4211 = vunpack.c.l.b16 %v3187
      %v4212 = vunpack.c.l.b16 %v3188
      %v4213 = vunpack.c.l.b16 %v3189
      %v4214 = vunpack.c.l.b16 %v3190
      %v4215 = vunpack.c.l.b16 %v3191
      %v4216 = vunpack.c.l.b16 %v3192
      %v4217 = vunpack.c.l.b16 %v3193
      %v4218 = vunpack.c.l.b16 %v3194
      %v4219 = vunpack.c.l.b16 %v3195
      %v4220 = vunpack.c.l.b16 %v3196
      %v4221 = vunpack.c.l.b16 %v3197
      %v4222 = vunpack.c.l.b16 %v3198
      %v4223 = vunpack.c.l.b16 %v3199
      %v4224 = vunpack.c.l.b16 %v3200
      %v4225 = vunpack.c.l.b16 %v3201
      %v4226 = vunpack.c.l.b16 %v3202
      %v4227 = vunpack.c.l.b16 %v3203
      %v4228 = vunpack.c.l.b16 %v3204
      %v4229 = vunpack.c.l.b16 %v3205
      %v4230 = vunpack.c.l.b16 %v3206
      %v4231 = vunpack.c.l.b16 %v3207
      %v4232 = vunpack.c.l.b16 %v3208
      %v4233 = vpack.c.b16 %v4090, %v4089
      %v4234 = vpack.c.b16 %v4092, %v4091
      %v4235 = vpack.c.b16 %v4094, %v4093
      %v4236 = vpack.c.b16 %v4096, %v4095
      %v4237 = vpack.c.b16 %v4098, %v4097
      %v4238 = vpack.c.b16 %v4100, %v4099
      %v4239 = vpack.c.b16 %v4102, %v4101
      %v4240 = vpack.c.b16 %v4104, %v4103
      %v4241 = vpack.c.b16 %v4106, %v4105
      %v4242 = vpack.c.b16 %v4108, %v4107
      %v4243 = vpack.c.b16 %v4110, %v4109
      %v4244 = vpack.c.b16 %v4112, %v4111
      %v4245 = vpack.c.b16 %v4114, %v4113
      %v4246 = vpack.c.b16 %v4116, %v4115
      %v4247 = vpack.c.b16 %v4118, %v4117
      %v4248 = vpack.c.b16 %v4120, %v4119
      %v4249 = vpack.c.b16 %v4122, %v4121
      %v4250 = vpack.c.b16 %v4124, %v4123
      %v4251 = vpack.c.b16 %v4126, %v4125
      %v4252 = vpack.c.b16 %v4128, %v4127
      %v4253 = vpack.c.b16 %v4130, %v4129
      %v4254 = vpack.c.b16 %v4132, %v4131
      %v4255 = vpack.c.b16 %v4134, %v4133
      %v4256 = vpack.c.b16 %v4136, %v4135
      %v4257 = vpack.c.b16 %v4138, %v4137
      %v4258 = vpack.c.b16 %v4140, %v4139
      %v4259 = vpack.c.b16 %v4142, %v4141
      %v4260 = vpack.c.b16 %v4144, %v4143
      %v4261 = vpack.c.b16 %v4146, %v4145
      %v4262 = vpack.c.b16 %v4148, %v4147
      %v4263 = vpack.c.b16 %v4150, %v4149
      %v4264 = vpack.c.b16 %v4152, %v4151
      %v4265 = vpack.c.b16 %v4154, %v4153
      %v4266 = vpack.c.b16 %v4156, %v4155
      %v4267 = vpack.c.b16 %v4158, %v4157
      %v4268 = vpack.c.b16 %v4160, %v4159
      %v4269 = vpack.c.b16 %v4162, %v4161
      %v4270 = vpack.c.b16 %v4164, %v4163
      %v4271 = vpack.c.b16 %v4166, %v4165
      %v4272 = vpack.c.b16 %v4168, %v4167
      %v4273 = vpack.c.b16 %v4170, %v4169
      %v4274 = vpack.c.b16 %v4172, %v4171
      %v4275 = vpack.c.b16 %v4174, %v4173
      %v4276 = vpack.c.b16 %v4176, %v4175
      %v4277 = vpack.c.b16 %v4178, %v4177
      %v4278 = vpack.c.b16 %v4180, %v4179
      %v4279 = vpack.c.b16 %v4182, %v4181
      %v4280 = vpack.c.b16 %v4184, %v4183
      %v4281 = vpack.c.b16 %v4186, %v4185
      %v4282 = vpack.c.b16 %v4188, %v4187
      %v4283 = vpack.c.b16 %v4190, %v4189
      %v4284 = vpack.c.b16 %v4192, %v4191
      %v4285 = vpack.c.b16 %v4194, %v4193
      %v4286 = vpack.c.b16 %v4196, %v4195
      %v4287 = vpack.c.b16 %v4198, %v4197
      %v4288 = vpack.c.b16 %v4200, %v4199
      %v4289 = vpack.c.b16 %v4202, %v4201
      %v4290 = vpack.c.b16 %v4204, %v4203
      %v4291 = vpack.c.b16 %v4206, %v4205
      %v4292 = vpack.c.b16 %v4208, %v4207
      %v4293 = vpack.c.b16 %v4210, %v4209
      %v4294 = vpack.c.b16 %v4212, %v4211
      %v4295 = vpack.c.b16 %v4214, %v4213
      %v4296 = vpack.c.b16 %v4216, %v4215
      %v4297 = vpack.c.b16 %v4218, %v4217
      %v4298 = vpack.c.b16 %v4220, %v4219
      %v4299 = vpack.c.b16 %v4222, %v4221
      %v4300 = vpack.c.b16 %v4224, %v4223
      %v4301 = vpack.c.b16 %v4226, %v4225
      %v4302 = vpack.c.b16 %v4228, %v4227
      %v4303 = vpack.c.b16 %v4230, %v4229
      %v4304 = vpack.c.b16 %v4232, %v4231
      %4377 = vmatprep.subr.bf16.mxu0 0
      %4378 = vmatpush1.bf16.msra.mxu0 %v4240
      %4379 = vmatprep.subr.bf16.mxu0 0
      %4380 = vmatpush1.bf16.msra.mxu0 %v4239
      %4381 = vmatprep.subr.bf16.mxu0 0
      %4382 = vmatpush1.bf16.msra.mxu0 %v4238
      %4383 = vmatprep.subr.bf16.mxu0 0
      %4384 = vmatpush1.bf16.msra.mxu0 %v4237
      %4385 = vmatprep.subr.bf16.mxu0 0
      %4386 = vmatpush1.bf16.msra.mxu0 %v4236
      %4387 = vmatprep.subr.bf16.mxu0 0
      %4388 = vmatpush1.bf16.msra.mxu0 %v4235
      %4389 = vmatprep.subr.bf16.mxu0 0
      %4390 = vmatpush1.bf16.msra.mxu0 %v4234
      %4391 = vmatprep.subr.bf16.mxu0 0
      %4392 = vmatpush1.bf16.msra.mxu0 %v4233
      %4393 = vmatprep.subr.bf16.mxu0 0
      %4394 = vmatpush2.bf16.msra.mxu0 %v4248
      %4395 = vmatprep.subr.bf16.mxu0 0
      %4396 = vmatpush2.bf16.msra.mxu0 %v4247
      %4397 = vmatprep.subr.bf16.mxu0 0
      %4398 = vmatpush2.bf16.msra.mxu0 %v4246
      %4399 = vmatprep.subr.bf16.mxu0 0
      %4400 = vmatpush2.bf16.msra.mxu0 %v4245
      %4401 = vmatprep.subr.bf16.mxu0 0
      %4402 = vmatpush2.bf16.msra.mxu0 %v4244
      %4403 = vmatprep.subr.bf16.mxu0 0
      %4404 = vmatpush2.bf16.msra.mxu0 %v4243
      %4405 = vmatprep.subr.bf16.mxu0 0
      %4406 = vmatpush2.bf16.msra.mxu0 %v4242
      %4407 = vmatprep.subr.bf16.mxu0 0
      %4408 = vmatpush2.bf16.msra.mxu0 %v4241
      %4409 = vmatprep.mubr.bf16.mxu0 %v3658
      %4410 = vmatmul.mubr.bf16.gmra.mxu0 %v3657
      %v4411 = vpop.f32.mrf.mxu0
      %v4412 = vadd.f32 0.0, %v4411
      %v4413 = vpop.f32.mrf.mxu0
      %v4414 = vpop.f32.mrf.mxu0
      %v4415 = vadd.f32 0.0, %v4414
      %v4416 = vpop.f32.mrf.mxu0
      %4417 = vmatprep.mubr.bf16.mxu0 %v3667
      %4418 = vmatmul.mubr.bf16.gmra.mxu0 %v3666
      %v4419 = vpop.f32.mrf.mxu0
      %v4420 = vadd.f32 0.0, %v4419
      %v4421 = vpop.f32.mrf.mxu0
      %v4422 = vpop.f32.mrf.mxu0
      %v4423 = vadd.f32 0.0, %v4422
      %v4424 = vpop.f32.mrf.mxu0
      %4425 = vmatprep.mubr.bf16.mxu0 %v3676
      %4426 = vmatmul.mubr.bf16.gmra.mxu0 %v3675
      %v4427 = vpop.f32.mrf.mxu0
      %v4428 = vadd.f32 0.0, %v4427
      %v4429 = vpop.f32.mrf.mxu0
      %v4430 = vpop.f32.mrf.mxu0
      %v4431 = vadd.f32 0.0, %v4430
      %v4432 = vpop.f32.mrf.mxu0
      %4433 = vmatprep.mubr.bf16.mxu0 %v3685
      %4434 = vmatmul.mubr.bf16.gmra.mxu0 %v3684
      %v4435 = vpop.f32.mrf.mxu0
      %v4436 = vadd.f32 0.0, %v4435
      %v4437 = vpop.f32.mrf.mxu0
      %v4438 = vpop.f32.mrf.mxu0
      %v4439 = vadd.f32 0.0, %v4438
      %v4440 = vpop.f32.mrf.mxu0
      %4441 = vmatprep.mubr.bf16.mxu0 %v3694
      %4442 = vmatmul.mubr.bf16.gmra.mxu0 %v3693
      %v4443 = vpop.f32.mrf.mxu0
      %v4444 = vadd.f32 0.0, %v4443
      %v4445 = vpop.f32.mrf.mxu0
      %v4446 = vpop.f32.mrf.mxu0
      %v4447 = vadd.f32 0.0, %v4446
      %v4448 = vpop.f32.mrf.mxu0
      %4449 = vmatprep.mubr.bf16.mxu0 %v3703
      %4450 = vmatmul.mubr.bf16.gmra.mxu0 %v3702
      %v4451 = vpop.f32.mrf.mxu0
      %v4452 = vadd.f32 0.0, %v4451
      %v4453 = vpop.f32.mrf.mxu0
      %v4454 = vpop.f32.mrf.mxu0
      %v4455 = vadd.f32 0.0, %v4454
      %v4456 = vpop.f32.mrf.mxu0
      %4457 = vmatprep.mubr.bf16.mxu0 %v3712
      %4458 = vmatmul.mubr.bf16.gmra.mxu0 %v3711
      %v4459 = vpop.f32.mrf.mxu0
      %v4460 = vadd.f32 0.0, %v4459
      %v4461 = vpop.f32.mrf.mxu0
      %v4462 = vpop.f32.mrf.mxu0
      %v4463 = vadd.f32 0.0, %v4462
      %v4464 = vpop.f32.mrf.mxu0
      %4465 = vmatprep.mubr.bf16.mxu0 %v3721
      %4466 = vmatmul.mubr.bf16.gmra.mxu0 %v3720
      %v4467 = vpop.f32.mrf.mxu0
      %v4468 = vadd.f32 0.0, %v4467
      %v4469 = vpop.f32.mrf.mxu0
      %v4470 = vpop.f32.mrf.mxu0
      %v4471 = vadd.f32 0.0, %v4470
      %v4472 = vpop.f32.mrf.mxu0
      %4473 = vmatprep.mubr.bf16.mxu0 %v3730
      %4474 = vmatmul.mubr.bf16.gmra.mxu0 %v3729
      %v4475 = vpop.f32.mrf.mxu0
      %v4476 = vadd.f32 0.0, %v4475
      %v4477 = vpop.f32.mrf.mxu0
      %v4478 = vpop.f32.mrf.mxu0
      %v4479 = vadd.f32 0.0, %v4478
      %v4480 = vpop.f32.mrf.mxu0
      %4481 = vmatprep.mubr.bf16.mxu0 %v3739
      %4482 = vmatmul.mubr.bf16.gmra.mxu0 %v3738
      %v4483 = vpop.f32.mrf.mxu0
      %v4484 = vadd.f32 0.0, %v4483
      %v4485 = vpop.f32.mrf.mxu0
      %v4486 = vpop.f32.mrf.mxu0
      %v4487 = vadd.f32 0.0, %v4486
      %v4488 = vpop.f32.mrf.mxu0
      %4489 = vmatprep.mubr.bf16.mxu0 %v3748
      %4490 = vmatmul.mubr.bf16.gmra.mxu0 %v3747
      %v4491 = vpop.f32.mrf.mxu0
      %v4492 = vadd.f32 0.0, %v4491
      %v4493 = vpop.f32.mrf.mxu0
      %v4494 = vpop.f32.mrf.mxu0
      %v4495 = vadd.f32 0.0, %v4494
      %v4496 = vpop.f32.mrf.mxu0
      %4497 = vmatprep.mubr.bf16.mxu0 %v3757
      %4498 = vmatmul.mubr.bf16.gmra.mxu0 %v3756
      %v4499 = vpop.f32.mrf.mxu0
      %v4500 = vadd.f32 0.0, %v4499
      %v4501 = vpop.f32.mrf.mxu0
      %v4502 = vpop.f32.mrf.mxu0
      %v4503 = vadd.f32 0.0, %v4502
      %v4504 = vpop.f32.mrf.mxu0
      %4505 = vmatprep.mubr.bf16.mxu0 %v3766
      %4506 = vmatmul.mubr.bf16.gmra.mxu0 %v3765
      %v4507 = vpop.f32.mrf.mxu0
      %v4508 = vadd.f32 0.0, %v4507
      %v4509 = vpop.f32.mrf.mxu0
      %v4510 = vpop.f32.mrf.mxu0
      %v4511 = vadd.f32 0.0, %v4510
      %v4512 = vpop.f32.mrf.mxu0
      %4513 = vmatprep.mubr.bf16.mxu0 %v3775
      %4514 = vmatmul.mubr.bf16.gmra.mxu0 %v3774
      %v4515 = vpop.f32.mrf.mxu0
      %v4516 = vadd.f32 0.0, %v4515
      %v4517 = vpop.f32.mrf.mxu0
      %v4518 = vpop.f32.mrf.mxu0
      %v4519 = vadd.f32 0.0, %v4518
      %v4520 = vpop.f32.mrf.mxu0
      %4521 = vmatprep.mubr.bf16.mxu0 %v3784
      %4522 = vmatmul.mubr.bf16.gmra.mxu0 %v3783
      %v4523 = vpop.f32.mrf.mxu0
      %v4524 = vadd.f32 0.0, %v4523
      %v4525 = vpop.f32.mrf.mxu0
      %v4526 = vpop.f32.mrf.mxu0
      %v4527 = vadd.f32 0.0, %v4526
      %v4528 = vpop.f32.mrf.mxu0
      %4529 = vmatprep.mubr.bf16.mxu0 %v3793
      %4530 = vmatmul.mubr.bf16.gmra.mxu0 %v3792
      %v4531 = vpop.f32.mrf.mxu0
      %v4532 = vadd.f32 0.0, %v4531
      %v4533 = vpop.f32.mrf.mxu0
      %v4534 = vpop.f32.mrf.mxu0
      %v4535 = vadd.f32 0.0, %v4534
      %v4536 = vpop.f32.mrf.mxu0
      %4537 = vdwg.mxu0
      %4538 = vmatprep.subr.bf16.mxu0 0
      %4539 = vmatpush1.bf16.msra.mxu0 %v4256
      %4540 = vmatprep.subr.bf16.mxu0 0
      %4541 = vmatpush1.bf16.msra.mxu0 %v4255
      %4542 = vmatprep.subr.bf16.mxu0 0
      %4543 = vmatpush1.bf16.msra.mxu0 %v4254
      %4544 = vmatprep.subr.bf16.mxu0 0
      %4545 = vmatpush1.bf16.msra.mxu0 %v4253
      %4546 = vmatprep.subr.bf16.mxu0 0
      %4547 = vmatpush1.bf16.msra.mxu0 %v4252
      %4548 = vmatprep.subr.bf16.mxu0 0
      %4549 = vmatpush1.bf16.msra.mxu0 %v4251
      %4550 = vmatprep.subr.bf16.mxu0 0
      %4551 = vmatpush1.bf16.msra.mxu0 %v4250
      %4552 = vmatprep.subr.bf16.mxu0 0
      %4553 = vmatpush1.bf16.msra.mxu0 %v4249
      %4554 = vmatprep.subr.bf16.mxu0 0
      %4555 = vmatpush2.bf16.msra.mxu0 %v4264
      %4556 = vmatprep.subr.bf16.mxu0 0
      %4557 = vmatpush2.bf16.msra.mxu0 %v4263
      %4558 = vmatprep.subr.bf16.mxu0 0
      %4559 = vmatpush2.bf16.msra.mxu0 %v4262
      %4560 = vmatprep.subr.bf16.mxu0 0
      %4561 = vmatpush2.bf16.msra.mxu0 %v4261
      %4562 = vmatprep.subr.bf16.mxu0 0
      %4563 = vmatpush2.bf16.msra.mxu0 %v4260
      %4564 = vmatprep.subr.bf16.mxu0 0
      %4565 = vmatpush2.bf16.msra.mxu0 %v4259
      %4566 = vmatprep.subr.bf16.mxu0 0
      %4567 = vmatpush2.bf16.msra.mxu0 %v4258
      %4568 = vmatprep.subr.bf16.mxu0 0
      %4569 = vmatpush2.bf16.msra.mxu0 %v4257
      %4570 = vmatprep.mubr.bf16.mxu0 %v3660
      %4571 = vmatmul.mubr.bf16.gmra.mxu0 %v3659
      %v4572 = vpop.f32.mrf.mxu0
      %v4573 = vadd.f32 %v4412, %v4572
      %v4574 = vpop.f32.mrf.mxu0
      %v4575 = vpop.f32.mrf.mxu0
      %v4576 = vadd.f32 %v4415, %v4575
      %v4577 = vpop.f32.mrf.mxu0
      %4578 = vmatprep.mubr.bf16.mxu0 %v3669
      %4579 = vmatmul.mubr.bf16.gmra.mxu0 %v3668
      %v4580 = vpop.f32.mrf.mxu0
      %v4581 = vadd.f32 %v4420, %v4580
      %v4582 = vpop.f32.mrf.mxu0
      %v4583 = vpop.f32.mrf.mxu0
      %v4584 = vadd.f32 %v4423, %v4583
      %v4585 = vpop.f32.mrf.mxu0
      %4586 = vmatprep.mubr.bf16.mxu0 %v3678
      %4587 = vmatmul.mubr.bf16.gmra.mxu0 %v3677
      %v4588 = vpop.f32.mrf.mxu0
      %v4589 = vadd.f32 %v4428, %v4588
      %v4590 = vpop.f32.mrf.mxu0
      %v4591 = vpop.f32.mrf.mxu0
      %v4592 = vadd.f32 %v4431, %v4591
      %v4593 = vpop.f32.mrf.mxu0
      %4594 = vmatprep.mubr.bf16.mxu0 %v3687
      %4595 = vmatmul.mubr.bf16.gmra.mxu0 %v3686
      %v4596 = vpop.f32.mrf.mxu0
      %v4597 = vadd.f32 %v4436, %v4596
      %v4598 = vpop.f32.mrf.mxu0
      %v4599 = vpop.f32.mrf.mxu0
      %v4600 = vadd.f32 %v4439, %v4599
      %v4601 = vpop.f32.mrf.mxu0
      %4602 = vmatprep.mubr.bf16.mxu0 %v3696
      %4603 = vmatmul.mubr.bf16.gmra.mxu0 %v3695
      %v4604 = vpop.f32.mrf.mxu0
      %v4605 = vadd.f32 %v4444, %v4604
      %v4606 = vpop.f32.mrf.mxu0
      %v4607 = vpop.f32.mrf.mxu0
      %v4608 = vadd.f32 %v4447, %v4607
      %v4609 = vpop.f32.mrf.mxu0
      %4610 = vmatprep.mubr.bf16.mxu0 %v3705
      %4611 = vmatmul.mubr.bf16.gmra.mxu0 %v3704
      %v4612 = vpop.f32.mrf.mxu0
      %v4613 = vadd.f32 %v4452, %v4612
      %v4614 = vpop.f32.mrf.mxu0
      %v4615 = vpop.f32.mrf.mxu0
      %v4616 = vadd.f32 %v4455, %v4615
      %v4617 = vpop.f32.mrf.mxu0
      %4618 = vmatprep.mubr.bf16.mxu0 %v3714
      %4619 = vmatmul.mubr.bf16.gmra.mxu0 %v3713
      %v4620 = vpop.f32.mrf.mxu0
      %v4621 = vadd.f32 %v4460, %v4620
      %v4622 = vpop.f32.mrf.mxu0
      %v4623 = vpop.f32.mrf.mxu0
      %v4624 = vadd.f32 %v4463, %v4623
      %v4625 = vpop.f32.mrf.mxu0
      %4626 = vmatprep.mubr.bf16.mxu0 %v3723
      %4627 = vmatmul.mubr.bf16.gmra.mxu0 %v3722
      %v4628 = vpop.f32.mrf.mxu0
      %v4629 = vadd.f32 %v4468, %v4628
      %v4630 = vpop.f32.mrf.mxu0
      %v4631 = vpop.f32.mrf.mxu0
      %v4632 = vadd.f32 %v4471, %v4631
      %v4633 = vpop.f32.mrf.mxu0
      %4634 = vmatprep.mubr.bf16.mxu0 %v3732
      %4635 = vmatmul.mubr.bf16.gmra.mxu0 %v3731
      %v4636 = vpop.f32.mrf.mxu0
      %v4637 = vadd.f32 %v4476, %v4636
      %v4638 = vpop.f32.mrf.mxu0
      %v4639 = vpop.f32.mrf.mxu0
      %v4640 = vadd.f32 %v4479, %v4639
      %v4641 = vpop.f32.mrf.mxu0
      %4642 = vmatprep.mubr.bf16.mxu0 %v3741
      %4643 = vmatmul.mubr.bf16.gmra.mxu0 %v3740
      %v4644 = vpop.f32.mrf.mxu0
      %v4645 = vadd.f32 %v4484, %v4644
      %v4646 = vpop.f32.mrf.mxu0
      %v4647 = vpop.f32.mrf.mxu0
      %v4648 = vadd.f32 %v4487, %v4647
      %v4649 = vpop.f32.mrf.mxu0
      %4650 = vmatprep.mubr.bf16.mxu0 %v3750
      %4651 = vmatmul.mubr.bf16.gmra.mxu0 %v3749
      %v4652 = vpop.f32.mrf.mxu0
      %v4653 = vadd.f32 %v4492, %v4652
      %v4654 = vpop.f32.mrf.mxu0
      %v4655 = vpop.f32.mrf.mxu0
      %v4656 = vadd.f32 %v4495, %v4655
      %v4657 = vpop.f32.mrf.mxu0
      %4658 = vmatprep.mubr.bf16.mxu0 %v3759
      %4659 = vmatmul.mubr.bf16.gmra.mxu0 %v3758
      %v4660 = vpop.f32.mrf.mxu0
      %v4661 = vadd.f32 %v4500, %v4660
      %v4662 = vpop.f32.mrf.mxu0
      %v4663 = vpop.f32.mrf.mxu0
      %v4664 = vadd.f32 %v4503, %v4663
      %v4665 = vpop.f32.mrf.mxu0
      %4666 = vmatprep.mubr.bf16.mxu0 %v3768
      %4667 = vmatmul.mubr.bf16.gmra.mxu0 %v3767
      %v4668 = vpop.f32.mrf.mxu0
      %v4669 = vadd.f32 %v4508, %v4668
      %v4670 = vpop.f32.mrf.mxu0
      %v4671 = vpop.f32.mrf.mxu0
      %v4672 = vadd.f32 %v4511, %v4671
      %v4673 = vpop.f32.mrf.mxu0
      %4674 = vmatprep.mubr.bf16.mxu0 %v3777
      %4675 = vmatmul.mubr.bf16.gmra.mxu0 %v3776
      %v4676 = vpop.f32.mrf.mxu0
      %v4677 = vadd.f32 %v4516, %v4676
      %v4678 = vpop.f32.mrf.mxu0
      %v4679 = vpop.f32.mrf.mxu0
      %v4680 = vadd.f32 %v4519, %v4679
      %v4681 = vpop.f32.mrf.mxu0
      %4682 = vmatprep.mubr.bf16.mxu0 %v3786
      %4683 = vmatmul.mubr.bf16.gmra.mxu0 %v3785
      %v4684 = vpop.f32.mrf.mxu0
      %v4685 = vadd.f32 %v4524, %v4684
      %v4686 = vpop.f32.mrf.mxu0
      %v4687 = vpop.f32.mrf.mxu0
      %v4688 = vadd.f32 %v4527, %v4687
      %v4689 = vpop.f32.mrf.mxu0
      %4690 = vmatprep.mubr.bf16.mxu0 %v3795
      %4691 = vmatmul.mubr.bf16.gmra.mxu0 %v3794
      %v4692 = vpop.f32.mrf.mxu0
      %v4693 = vadd.f32 %v4532, %v4692
      %v4694 = vpop.f32.mrf.mxu0
      %v4695 = vpop.f32.mrf.mxu0
      %v4696 = vadd.f32 %v4535, %v4695
      %v4697 = vpop.f32.mrf.mxu0
      %4698 = vdwg.mxu0
      %4699 = vmatprep.subr.bf16.mxu0 0
      %4700 = vmatpush1.bf16.msra.mxu0 %v4272
      %4701 = vmatprep.subr.bf16.mxu0 0
      %4702 = vmatpush1.bf16.msra.mxu0 %v4271
      %4703 = vmatprep.subr.bf16.mxu0 0
      %4704 = vmatpush1.bf16.msra.mxu0 %v4270
      %4705 = vmatprep.subr.bf16.mxu0 0
      %4706 = vmatpush1.bf16.msra.mxu0 %v4269
      %4707 = vmatprep.subr.bf16.mxu0 0
      %4708 = vmatpush1.bf16.msra.mxu0 %v4268
      %4709 = vmatprep.subr.bf16.mxu0 0
      %4710 = vmatpush1.bf16.msra.mxu0 %v4267
      %4711 = vmatprep.subr.bf16.mxu0 0
      %4712 = vmatpush1.bf16.msra.mxu0 %v4266
      %4713 = vmatprep.subr.bf16.mxu0 0
      %4714 = vmatpush1.bf16.msra.mxu0 %v4265
      %4715 = vmatprep.subr.bf16.mxu0 0
      %4716 = vmatpush2.bf16.msra.mxu0 %v4280
      %4717 = vmatprep.subr.bf16.mxu0 0
      %4718 = vmatpush2.bf16.msra.mxu0 %v4279
      %4719 = vmatprep.subr.bf16.mxu0 0
      %4720 = vmatpush2.bf16.msra.mxu0 %v4278
      %4721 = vmatprep.subr.bf16.mxu0 0
      %4722 = vmatpush2.bf16.msra.mxu0 %v4277
      %4723 = vmatprep.subr.bf16.mxu0 0
      %4724 = vmatpush2.bf16.msra.mxu0 %v4276
      %4725 = vmatprep.subr.bf16.mxu0 0
      %4726 = vmatpush2.bf16.msra.mxu0 %v4275
      %4727 = vmatprep.subr.bf16.mxu0 0
      %4728 = vmatpush2.bf16.msra.mxu0 %v4274
      %4729 = vmatprep.subr.bf16.mxu0 0
      %4730 = vmatpush2.bf16.msra.mxu0 %v4273
      %4731 = vmatprep.mubr.bf16.mxu0 %v3662
      %4732 = vmatmul.mubr.bf16.gmra.mxu0 %v3661
      %v4733 = vpop.f32.mrf.mxu0
      %v4734 = vadd.f32 %v4573, %v4733
      %v4735 = vpop.f32.mrf.mxu0
      %v4736 = vpop.f32.mrf.mxu0
      %v4737 = vadd.f32 %v4576, %v4736
      %v4738 = vpop.f32.mrf.mxu0
      %4739 = vmatprep.mubr.bf16.mxu0 %v3671
      %4740 = vmatmul.mubr.bf16.gmra.mxu0 %v3670
      %v4741 = vpop.f32.mrf.mxu0
      %v4742 = vadd.f32 %v4581, %v4741
      %v4743 = vpop.f32.mrf.mxu0
      %v4744 = vpop.f32.mrf.mxu0
      %v4745 = vadd.f32 %v4584, %v4744
      %v4746 = vpop.f32.mrf.mxu0
      %4747 = vmatprep.mubr.bf16.mxu0 %v3680
      %4748 = vmatmul.mubr.bf16.gmra.mxu0 %v3679
      %v4749 = vpop.f32.mrf.mxu0
      %v4750 = vadd.f32 %v4589, %v4749
      %v4751 = vpop.f32.mrf.mxu0
      %v4752 = vpop.f32.mrf.mxu0
      %v4753 = vadd.f32 %v4592, %v4752
      %v4754 = vpop.f32.mrf.mxu0
      %4755 = vmatprep.mubr.bf16.mxu0 %v3689
      %4756 = vmatmul.mubr.bf16.gmra.mxu0 %v3688
      %v4757 = vpop.f32.mrf.mxu0
      %v4758 = vadd.f32 %v4597, %v4757
      %v4759 = vpop.f32.mrf.mxu0
      %v4760 = vpop.f32.mrf.mxu0
      %v4761 = vadd.f32 %v4600, %v4760
      %v4762 = vpop.f32.mrf.mxu0
      %4763 = vmatprep.mubr.bf16.mxu0 %v3698
      %4764 = vmatmul.mubr.bf16.gmra.mxu0 %v3697
      %v4765 = vpop.f32.mrf.mxu0
      %v4766 = vadd.f32 %v4605, %v4765
      %v4767 = vpop.f32.mrf.mxu0
      %v4768 = vpop.f32.mrf.mxu0
      %v4769 = vadd.f32 %v4608, %v4768
      %v4770 = vpop.f32.mrf.mxu0
      %4771 = vmatprep.mubr.bf16.mxu0 %v3707
      %4772 = vmatmul.mubr.bf16.gmra.mxu0 %v3706
      %v4773 = vpop.f32.mrf.mxu0
      %v4774 = vadd.f32 %v4613, %v4773
      %v4775 = vpop.f32.mrf.mxu0
      %v4776 = vpop.f32.mrf.mxu0
      %v4777 = vadd.f32 %v4616, %v4776
      %v4778 = vpop.f32.mrf.mxu0
      %4779 = vmatprep.mubr.bf16.mxu0 %v3716
      %4780 = vmatmul.mubr.bf16.gmra.mxu0 %v3715
      %v4781 = vpop.f32.mrf.mxu0
      %v4782 = vadd.f32 %v4621, %v4781
      %v4783 = vpop.f32.mrf.mxu0
      %v4784 = vpop.f32.mrf.mxu0
      %v4785 = vadd.f32 %v4624, %v4784
      %v4786 = vpop.f32.mrf.mxu0
      %4787 = vmatprep.mubr.bf16.mxu0 %v3725
      %4788 = vmatmul.mubr.bf16.gmra.mxu0 %v3724
      %v4789 = vpop.f32.mrf.mxu0
      %v4790 = vadd.f32 %v4629, %v4789
      %v4791 = vpop.f32.mrf.mxu0
      %v4792 = vpop.f32.mrf.mxu0
      %v4793 = vadd.f32 %v4632, %v4792
      %v4794 = vpop.f32.mrf.mxu0
      %4795 = vmatprep.mubr.bf16.mxu0 %v3734
      %4796 = vmatmul.mubr.bf16.gmra.mxu0 %v3733
      %v4797 = vpop.f32.mrf.mxu0
      %v4798 = vadd.f32 %v4637, %v4797
      %v4799 = vpop.f32.mrf.mxu0
      %v4800 = vpop.f32.mrf.mxu0
      %v4801 = vadd.f32 %v4640, %v4800
      %v4802 = vpop.f32.mrf.mxu0
      %4803 = vmatprep.mubr.bf16.mxu0 %v3743
      %4804 = vmatmul.mubr.bf16.gmra.mxu0 %v3742
      %v4805 = vpop.f32.mrf.mxu0
      %v4806 = vadd.f32 %v4645, %v4805
      %v4807 = vpop.f32.mrf.mxu0
      %v4808 = vpop.f32.mrf.mxu0
      %v4809 = vadd.f32 %v4648, %v4808
      %v4810 = vpop.f32.mrf.mxu0
      %4811 = vmatprep.mubr.bf16.mxu0 %v3752
      %4812 = vmatmul.mubr.bf16.gmra.mxu0 %v3751
      %v4813 = vpop.f32.mrf.mxu0
      %v4814 = vadd.f32 %v4653, %v4813
      %v4815 = vpop.f32.mrf.mxu0
      %v4816 = vpop.f32.mrf.mxu0
      %v4817 = vadd.f32 %v4656, %v4816
      %v4818 = vpop.f32.mrf.mxu0
      %4819 = vmatprep.mubr.bf16.mxu0 %v3761
      %4820 = vmatmul.mubr.bf16.gmra.mxu0 %v3760
      %v4821 = vpop.f32.mrf.mxu0
      %v4822 = vadd.f32 %v4661, %v4821
      %v4823 = vpop.f32.mrf.mxu0
      %v4824 = vpop.f32.mrf.mxu0
      %v4825 = vadd.f32 %v4664, %v4824
      %v4826 = vpop.f32.mrf.mxu0
      %4827 = vmatprep.mubr.bf16.mxu0 %v3770
      %4828 = vmatmul.mubr.bf16.gmra.mxu0 %v3769
      %v4829 = vpop.f32.mrf.mxu0
      %v4830 = vadd.f32 %v4669, %v4829
      %v4831 = vpop.f32.mrf.mxu0
      %v4832 = vpop.f32.mrf.mxu0
      %v4833 = vadd.f32 %v4672, %v4832
      %v4834 = vpop.f32.mrf.mxu0
      %4835 = vmatprep.mubr.bf16.mxu0 %v3779
      %4836 = vmatmul.mubr.bf16.gmra.mxu0 %v3778
      %v4837 = vpop.f32.mrf.mxu0
      %v4838 = vadd.f32 %v4677, %v4837
      %v4839 = vpop.f32.mrf.mxu0
      %v4840 = vpop.f32.mrf.mxu0
      %v4841 = vadd.f32 %v4680, %v4840
      %v4842 = vpop.f32.mrf.mxu0
      %4843 = vmatprep.mubr.bf16.mxu0 %v3788
      %4844 = vmatmul.mubr.bf16.gmra.mxu0 %v3787
      %v4845 = vpop.f32.mrf.mxu0
      %v4846 = vadd.f32 %v4685, %v4845
      %v4847 = vpop.f32.mrf.mxu0
      %v4848 = vpop.f32.mrf.mxu0
      %v4849 = vadd.f32 %v4688, %v4848
      %v4850 = vpop.f32.mrf.mxu0
      %4851 = vmatprep.mubr.bf16.mxu0 %v3797
      %4852 = vmatmul.mubr.bf16.gmra.mxu0 %v3796
      %v4853 = vpop.f32.mrf.mxu0
      %v4854 = vadd.f32 %v4693, %v4853
      %v4855 = vpop.f32.mrf.mxu0
      %v4856 = vpop.f32.mrf.mxu0
      %v4857 = vadd.f32 %v4696, %v4856
      %v4858 = vpop.f32.mrf.mxu0
      %4859 = vdwg.mxu0
      %4860 = vmatprep.subr.bf16.mxu0 0
      %4861 = vmatpush1.bf16.msra.mxu0 %v4288
      %4862 = vmatprep.subr.bf16.mxu0 0
      %4863 = vmatpush1.bf16.msra.mxu0 %v4287
      %4864 = vmatprep.subr.bf16.mxu0 0
      %4865 = vmatpush1.bf16.msra.mxu0 %v4286
      %4866 = vmatprep.subr.bf16.mxu0 0
      %4867 = vmatpush1.bf16.msra.mxu0 %v4285
      %4868 = vmatprep.subr.bf16.mxu0 0
      %4869 = vmatpush1.bf16.msra.mxu0 %v4284
      %4870 = vmatprep.subr.bf16.mxu0 0
      %4871 = vmatpush1.bf16.msra.mxu0 %v4283
      %4872 = vmatprep.subr.bf16.mxu0 0
      %4873 = vmatpush1.bf16.msra.mxu0 %v4282
      %4874 = vmatprep.subr.bf16.mxu0 0
      %4875 = vmatpush1.bf16.msra.mxu0 %v4281
      %4876 = vmatprep.subr.bf16.mxu0 0
      %4877 = vmatpush2.bf16.msra.mxu0 %v4296
      %4878 = vmatprep.subr.bf16.mxu0 0
      %4879 = vmatpush2.bf16.msra.mxu0 %v4295
      %4880 = vmatprep.subr.bf16.mxu0 0
      %4881 = vmatpush2.bf16.msra.mxu0 %v4294
      %4882 = vmatprep.subr.bf16.mxu0 0
      %4883 = vmatpush2.bf16.msra.mxu0 %v4293
      %4884 = vmatprep.subr.bf16.mxu0 0
      %4885 = vmatpush2.bf16.msra.mxu0 %v4292
      %4886 = vmatprep.subr.bf16.mxu0 0
      %4887 = vmatpush2.bf16.msra.mxu0 %v4291
      %4888 = vmatprep.subr.bf16.mxu0 0
      %4889 = vmatpush2.bf16.msra.mxu0 %v4290
      %4890 = vmatprep.subr.bf16.mxu0 0
      %4891 = vmatpush2.bf16.msra.mxu0 %v4289
      %4892 = vmatprep.mubr.bf16.mxu0 %v3664
      %4893 = vmatmul.mubr.bf16.gmra.mxu0 %v3663
      %v4894 = vpop.f32.mrf.mxu0
      %v4895 = vadd.f32 %v4734, %v4894
      %v4896 = vpop.f32.mrf.mxu0
      %v4897 = vpop.f32.mrf.mxu0
      %v4898 = vadd.f32 %v4737, %v4897
      %v4899 = vpop.f32.mrf.mxu0
      %4900 = vmatprep.mubr.bf16.mxu0 %v3673
      %4901 = vmatmul.mubr.bf16.gmra.mxu0 %v3672
      %v4902 = vpop.f32.mrf.mxu0
      %v4903 = vadd.f32 %v4742, %v4902
      %v4904 = vpop.f32.mrf.mxu0
      %v4905 = vpop.f32.mrf.mxu0
      %v4906 = vadd.f32 %v4745, %v4905
      %v4907 = vpop.f32.mrf.mxu0
      %4908 = vmatprep.mubr.bf16.mxu0 %v3682
      %4909 = vmatmul.mubr.bf16.gmra.mxu0 %v3681
      %v4910 = vpop.f32.mrf.mxu0
      %v4911 = vadd.f32 %v4750, %v4910
      %v4912 = vpop.f32.mrf.mxu0
      %v4913 = vpop.f32.mrf.mxu0
      %v4914 = vadd.f32 %v4753, %v4913
      %v4915 = vpop.f32.mrf.mxu0
      %4916 = vmatprep.mubr.bf16.mxu0 %v3691
      %4917 = vmatmul.mubr.bf16.gmra.mxu0 %v3690
      %v4918 = vpop.f32.mrf.mxu0
      %v4919 = vadd.f32 %v4758, %v4918
      %v4920 = vpop.f32.mrf.mxu0
      %v4921 = vpop.f32.mrf.mxu0
      %v4922 = vadd.f32 %v4761, %v4921
      %v4923 = vpop.f32.mrf.mxu0
      %4924 = vmatprep.mubr.bf16.mxu0 %v3700
      %4925 = vmatmul.mubr.bf16.gmra.mxu0 %v3699
      %v4926 = vpop.f32.mrf.mxu0
      %v4927 = vadd.f32 %v4766, %v4926
      %v4928 = vpop.f32.mrf.mxu0
      %v4929 = vpop.f32.mrf.mxu0
      %v4930 = vadd.f32 %v4769, %v4929
      %v4931 = vpop.f32.mrf.mxu0
      %4932 = vmatprep.mubr.bf16.mxu0 %v3709
      %4933 = vmatmul.mubr.bf16.gmra.mxu0 %v3708
      %v4934 = vpop.f32.mrf.mxu0
      %v4935 = vadd.f32 %v4774, %v4934
      %v4936 = vpop.f32.mrf.mxu0
      %v4937 = vpop.f32.mrf.mxu0
      %v4938 = vadd.f32 %v4777, %v4937
      %v4939 = vpop.f32.mrf.mxu0
      %4940 = vmatprep.mubr.bf16.mxu0 %v3718
      %4941 = vmatmul.mubr.bf16.gmra.mxu0 %v3717
      %v4942 = vpop.f32.mrf.mxu0
      %v4943 = vadd.f32 %v4782, %v4942
      %v4944 = vpop.f32.mrf.mxu0
      %v4945 = vpop.f32.mrf.mxu0
      %v4946 = vadd.f32 %v4785, %v4945
      %v4947 = vpop.f32.mrf.mxu0
      %4948 = vmatprep.mubr.bf16.mxu0 %v3727
      %4949 = vmatmul.mubr.bf16.gmra.mxu0 %v3726
      %v4950 = vpop.f32.mrf.mxu0
      %v4951 = vadd.f32 %v4790, %v4950
      %v4952 = vpop.f32.mrf.mxu0
      %v4953 = vpop.f32.mrf.mxu0
      %v4954 = vadd.f32 %v4793, %v4953
      %v4955 = vpop.f32.mrf.mxu0
      %4956 = vmatprep.mubr.bf16.mxu0 %v3736
      %4957 = vmatmul.mubr.bf16.gmra.mxu0 %v3735
      %v4958 = vpop.f32.mrf.mxu0
      %v4959 = vadd.f32 %v4798, %v4958
      %v4960 = vpop.f32.mrf.mxu0
      %v4961 = vpop.f32.mrf.mxu0
      %v4962 = vadd.f32 %v4801, %v4961
      %v4963 = vpop.f32.mrf.mxu0
      %4964 = vmatprep.mubr.bf16.mxu0 %v3745
      %4965 = vmatmul.mubr.bf16.gmra.mxu0 %v3744
      %v4966 = vpop.f32.mrf.mxu0
      %v4967 = vadd.f32 %v4806, %v4966
      %v4968 = vpop.f32.mrf.mxu0
      %v4969 = vpop.f32.mrf.mxu0
      %v4970 = vadd.f32 %v4809, %v4969
      %v4971 = vpop.f32.mrf.mxu0
      %4972 = vmatprep.mubr.bf16.mxu0 %v3754
      %4973 = vmatmul.mubr.bf16.gmra.mxu0 %v3753
      %v4974 = vpop.f32.mrf.mxu0
      %v4975 = vadd.f32 %v4814, %v4974
      %v4976 = vpop.f32.mrf.mxu0
      %v4977 = vpop.f32.mrf.mxu0
      %v4978 = vadd.f32 %v4817, %v4977
      %v4979 = vpop.f32.mrf.mxu0
      %4980 = vmatprep.mubr.bf16.mxu0 %v3763
      %4981 = vmatmul.mubr.bf16.gmra.mxu0 %v3762
      %v4982 = vpop.f32.mrf.mxu0
      %v4983 = vadd.f32 %v4822, %v4982
      %v4984 = vpop.f32.mrf.mxu0
      %v4985 = vpop.f32.mrf.mxu0
      %v4986 = vadd.f32 %v4825, %v4985
      %v4987 = vpop.f32.mrf.mxu0
      %4988 = vmatprep.mubr.bf16.mxu0 %v3772
      %4989 = vmatmul.mubr.bf16.gmra.mxu0 %v3771
      %v4990 = vpop.f32.mrf.mxu0
      %v4991 = vadd.f32 %v4830, %v4990
      %v4992 = vpop.f32.mrf.mxu0
      %v4993 = vpop.f32.mrf.mxu0
      %v4994 = vadd.f32 %v4833, %v4993
      %v4995 = vpop.f32.mrf.mxu0
      %4996 = vmatprep.mubr.bf16.mxu0 %v3781
      %4997 = vmatmul.mubr.bf16.gmra.mxu0 %v3780
      %v4998 = vpop.f32.mrf.mxu0
      %v4999 = vadd.f32 %v4838, %v4998
      %v5000 = vpop.f32.mrf.mxu0
      %v5001 = vpop.f32.mrf.mxu0
      %v5002 = vadd.f32 %v4841, %v5001
      %v5003 = vpop.f32.mrf.mxu0
      %5004 = vmatprep.mubr.bf16.mxu0 %v3790
      %5005 = vmatmul.mubr.bf16.gmra.mxu0 %v3789
      %v5006 = vpop.f32.mrf.mxu0
      %v5007 = vadd.f32 %v4846, %v5006
      %v5008 = vpop.f32.mrf.mxu0
      %v5009 = vpop.f32.mrf.mxu0
      %v5010 = vadd.f32 %v4849, %v5009
      %v5011 = vpop.f32.mrf.mxu0
      %5012 = vmatprep.mubr.bf16.mxu0 %v3799
      %5013 = vmatmul.mubr.bf16.gmra.mxu0 %v3798
      %v5014 = vpop.f32.mrf.mxu0
      %v5015 = vadd.f32 %v4854, %v5014
      %v5016 = vpop.f32.mrf.mxu0
      %v5017 = vpop.f32.mrf.mxu0
      %v5018 = vadd.f32 %v4857, %v5017
      %v5019 = vpop.f32.mrf.mxu0
      %5020 = vdwg.mxu0
      %5021 = vmatprep.subr.bf16.mxu0 0
      %5022 = vmatpush1.bf16.msra.mxu0 %v4304
      %5023 = vmatprep.subr.bf16.mxu0 0
      %5024 = vmatpush1.bf16.msra.mxu0 %v4303
      %5025 = vmatprep.subr.bf16.mxu0 0
      %5026 = vmatpush1.bf16.msra.mxu0 %v4302
      %5027 = vmatprep.subr.bf16.mxu0 0
      %5028 = vmatpush1.bf16.msra.mxu0 %v4301
      %5029 = vmatprep.subr.bf16.mxu0 0
      %5030 = vmatpush1.bf16.msra.mxu0 %v4300
      %5031 = vmatprep.subr.bf16.mxu0 0
      %5032 = vmatpush1.bf16.msra.mxu0 %v4299
      %5033 = vmatprep.subr.bf16.mxu0 0
      %5034 = vmatpush1.bf16.msra.mxu0 %v4298
      %5035 = vmatprep.subr.bf16.mxu0 0
      %5036 = vmatpush1.bf16.msra.mxu0 %v4297
      %5037 = vmatprep.subr.bf16.mxu0 0
      %5038 = vmatpush2.bf16.msra.mxu0 0
      %5039 = vmatprep.subr.bf16.mxu0 0
      %5040 = vmatpush2.bf16.msra.mxu0 0
      %5041 = vmatprep.subr.bf16.mxu0 0
      %5042 = vmatpush2.bf16.msra.mxu0 0
      %5043 = vmatprep.subr.bf16.mxu0 0
      %5044 = vmatpush2.bf16.msra.mxu0 0
      %5045 = vmatprep.subr.bf16.mxu0 0
      %5046 = vmatpush2.bf16.msra.mxu0 0
      %5047 = vmatprep.subr.bf16.mxu0 0
      %5048 = vmatpush2.bf16.msra.mxu0 0
      %5049 = vmatprep.subr.bf16.mxu0 0
      %5050 = vmatpush2.bf16.msra.mxu0 0
      %5051 = vmatprep.subr.bf16.mxu0 0
      %5052 = vmatpush2.bf16.msra.mxu0 0
      %5053 = vmatprep.mubr.bf16.mxu0 0
      %5054 = vmatmul.mubr.bf16.gmra.mxu0 %v3665
      %v5055 = vpop.f32.mrf.mxu0
      %v5056 = vadd.f32 %v4895, %v5055
      %v5057 = vpop.f32.mrf.mxu0
      %v5058 = vpop.f32.mrf.mxu0
      %v5059 = vadd.f32 %v4898, %v5058
      %v5060 = vpop.f32.mrf.mxu0
      %5061 = vmatprep.mubr.bf16.mxu0 0
      %5062 = vmatmul.mubr.bf16.gmra.mxu0 %v3674
      %v5063 = vpop.f32.mrf.mxu0
      %v5064 = vadd.f32 %v4903, %v5063
      %v5065 = vpop.f32.mrf.mxu0
      %v5066 = vpop.f32.mrf.mxu0
      %v5067 = vadd.f32 %v4906, %v5066
      %v5068 = vpop.f32.mrf.mxu0
      %5069 = vmatprep.mubr.bf16.mxu0 0
      %5070 = vmatmul.mubr.bf16.gmra.mxu0 %v3683
      %v5071 = vpop.f32.mrf.mxu0
      %v5072 = vadd.f32 %v4911, %v5071
      %v5073 = vpop.f32.mrf.mxu0
      %v5074 = vpop.f32.mrf.mxu0
      %v5075 = vadd.f32 %v4914, %v5074
      %v5076 = vpop.f32.mrf.mxu0
      %5077 = vmatprep.mubr.bf16.mxu0 0
      %5078 = vmatmul.mubr.bf16.gmra.mxu0 %v3692
      %v5079 = vpop.f32.mrf.mxu0
      %v5080 = vadd.f32 %v4919, %v5079
      %v5081 = vpop.f32.mrf.mxu0
      %v5082 = vpop.f32.mrf.mxu0
      %v5083 = vadd.f32 %v4922, %v5082
      %v5084 = vpop.f32.mrf.mxu0
      %5085 = vmatprep.mubr.bf16.mxu0 0
      %5086 = vmatmul.mubr.bf16.gmra.mxu0 %v3701
      %v5087 = vpop.f32.mrf.mxu0
      %v5088 = vadd.f32 %v4927, %v5087
      %v5089 = vpop.f32.mrf.mxu0
      %v5090 = vpop.f32.mrf.mxu0
      %v5091 = vadd.f32 %v4930, %v5090
      %v5092 = vpop.f32.mrf.mxu0
      %5093 = vmatprep.mubr.bf16.mxu0 0
      %5094 = vmatmul.mubr.bf16.gmra.mxu0 %v3710
      %v5095 = vpop.f32.mrf.mxu0
      %v5096 = vadd.f32 %v4935, %v5095
      %v5097 = vpop.f32.mrf.mxu0
      %v5098 = vpop.f32.mrf.mxu0
      %v5099 = vadd.f32 %v4938, %v5098
      %v5100 = vpop.f32.mrf.mxu0
      %5101 = vmatprep.mubr.bf16.mxu0 0
      %5102 = vmatmul.mubr.bf16.gmra.mxu0 %v3719
      %v5103 = vpop.f32.mrf.mxu0
      %v5104 = vadd.f32 %v4943, %v5103
      %v5105 = vpop.f32.mrf.mxu0
      %v5106 = vpop.f32.mrf.mxu0
      %v5107 = vadd.f32 %v4946, %v5106
      %v5108 = vpop.f32.mrf.mxu0
      %5109 = vmatprep.mubr.bf16.mxu0 0
      %5110 = vmatmul.mubr.bf16.gmra.mxu0 %v3728
      %v5111 = vpop.f32.mrf.mxu0
      %v5112 = vadd.f32 %v4951, %v5111
      %v5113 = vpop.f32.mrf.mxu0
      %v5114 = vpop.f32.mrf.mxu0
      %v5115 = vadd.f32 %v4954, %v5114
      %v5116 = vpop.f32.mrf.mxu0
      %5117 = vmatprep.mubr.bf16.mxu0 0
      %5118 = vmatmul.mubr.bf16.gmra.mxu0 %v3737
      %v5119 = vpop.f32.mrf.mxu0
      %v5120 = vadd.f32 %v4959, %v5119
      %v5121 = vpop.f32.mrf.mxu0
      %v5122 = vpop.f32.mrf.mxu0
      %v5123 = vadd.f32 %v4962, %v5122
      %v5124 = vpop.f32.mrf.mxu0
      %5125 = vmatprep.mubr.bf16.mxu0 0
      %5126 = vmatmul.mubr.bf16.gmra.mxu0 %v3746
      %v5127 = vpop.f32.mrf.mxu0
      %v5128 = vadd.f32 %v4967, %v5127
      %v5129 = vpop.f32.mrf.mxu0
      %v5130 = vpop.f32.mrf.mxu0
      %v5131 = vadd.f32 %v4970, %v5130
      %v5132 = vpop.f32.mrf.mxu0
      %5133 = vmatprep.mubr.bf16.mxu0 0
      %5134 = vmatmul.mubr.bf16.gmra.mxu0 %v3755
      %v5135 = vpop.f32.mrf.mxu0
      %v5136 = vadd.f32 %v4975, %v5135
      %v5137 = vpop.f32.mrf.mxu0
      %v5138 = vpop.f32.mrf.mxu0
      %v5139 = vadd.f32 %v4978, %v5138
      %v5140 = vpop.f32.mrf.mxu0
      %5141 = vmatprep.mubr.bf16.mxu0 0
      %5142 = vmatmul.mubr.bf16.gmra.mxu0 %v3764
      %v5143 = vpop.f32.mrf.mxu0
      %v5144 = vadd.f32 %v4983, %v5143
      %v5145 = vpop.f32.mrf.mxu0
      %v5146 = vpop.f32.mrf.mxu0
      %v5147 = vadd.f32 %v4986, %v5146
      %v5148 = vpop.f32.mrf.mxu0
      %5149 = vmatprep.mubr.bf16.mxu0 0
      %5150 = vmatmul.mubr.bf16.gmra.mxu0 %v3773
      %v5151 = vpop.f32.mrf.mxu0
      %v5152 = vadd.f32 %v4991, %v5151
      %v5153 = vpop.f32.mrf.mxu0
      %v5154 = vpop.f32.mrf.mxu0
      %v5155 = vadd.f32 %v4994, %v5154
      %v5156 = vpop.f32.mrf.mxu0
      %5157 = vmatprep.mubr.bf16.mxu0 0
      %5158 = vmatmul.mubr.bf16.gmra.mxu0 %v3782
      %v5159 = vpop.f32.mrf.mxu0
      %v5160 = vadd.f32 %v4999, %v5159
      %v5161 = vpop.f32.mrf.mxu0
      %v5162 = vpop.f32.mrf.mxu0
      %v5163 = vadd.f32 %v5002, %v5162
      %v5164 = vpop.f32.mrf.mxu0
      %5165 = vmatprep.mubr.bf16.mxu0 0
      %5166 = vmatmul.mubr.bf16.gmra.mxu0 %v3791
      %v5167 = vpop.f32.mrf.mxu0
      %v5168 = vadd.f32 %v5007, %v5167
      %v5169 = vpop.f32.mrf.mxu0
      %v5170 = vpop.f32.mrf.mxu0
      %v5171 = vadd.f32 %v5010, %v5170
      %v5172 = vpop.f32.mrf.mxu0
      %5173 = vmatprep.mubr.bf16.mxu0 0
      %5174 = vmatmul.mubr.bf16.gmra.mxu0 %v3800
      %v5175 = vpop.f32.mrf.mxu0
      %v5176 = vadd.f32 %v5015, %v5175
      %v5177 = vpop.f32.mrf.mxu0
      %v5178 = vpop.f32.mrf.mxu0
      %v5179 = vadd.f32 %v5018, %v5178
      %v5180 = vpop.f32.mrf.mxu0
      %5181 = vdwg.mxu0
      %v5182 = vld [vmem:[%s2] sm:$0x1]
      %v5184 = vlaneseq
      %v5185 = vshrl.u32 %v5184, 7
      %v5186 = vsub.s32 0, %v5185
      %v5187 = vrot.slane %v5182, %v5186
      %v5189 = vmul.f32 %v5056, %v5187
      %v5190 = vmul.f32 %v5059, %v5187
      %v5191 = vmul.f32 %v5064, %v5187
      %v5192 = vmul.f32 %v5067, %v5187
      %v5193 = vmul.f32 %v5072, %v5187
      %v5194 = vmul.f32 %v5075, %v5187
      %v5195 = vmul.f32 %v5080, %v5187
      %v5196 = vmul.f32 %v5083, %v5187
      %v5197 = vmul.f32 %v5088, %v5187
      %v5198 = vmul.f32 %v5091, %v5187
      %v5199 = vmul.f32 %v5096, %v5187
      %v5200 = vmul.f32 %v5099, %v5187
      %v5201 = vmul.f32 %v5104, %v5187
      %v5202 = vmul.f32 %v5107, %v5187
      %v5203 = vmul.f32 %v5112, %v5187
      %v5204 = vmul.f32 %v5115, %v5187
      %v5205 = vmul.f32 %v5120, %v5187
      %v5206 = vmul.f32 %v5123, %v5187
      %v5207 = vmul.f32 %v5128, %v5187
      %v5208 = vmul.f32 %v5131, %v5187
      %v5209 = vmul.f32 %v5136, %v5187
      %v5210 = vmul.f32 %v5139, %v5187
      %v5211 = vmul.f32 %v5144, %v5187
      %v5212 = vmul.f32 %v5147, %v5187
      %v5213 = vmul.f32 %v5152, %v5187
      %v5214 = vmul.f32 %v5155, %v5187
      %v5215 = vmul.f32 %v5160, %v5187
      %v5216 = vmul.f32 %v5163, %v5187
      %v5217 = vmul.f32 %v5168, %v5187
      %v5218 = vmul.f32 %v5171, %v5187
      %v5219 = vmul.f32 %v5176, %v5187
      %v5220 = vmul.f32 %v5179, %v5187
      %v5221 = vld [vmem:[%s3] sm:$0x1]
      %v5223 = vlaneseq
      %v5224 = vshrl.u32 %v5223, 7
      %v5225 = vsub.s32 0, %v5224
      %v5226 = vrot.slane %v5221, %v5225
      %v5228 = vadd.f32 %v5189, %v5226
      %v5229 = vadd.f32 %v5190, %v5226
      %v5230 = vadd.f32 %v5191, %v5226
      %v5231 = vadd.f32 %v5192, %v5226
      %v5232 = vadd.f32 %v5193, %v5226
      %v5233 = vadd.f32 %v5194, %v5226
      %v5234 = vadd.f32 %v5195, %v5226
      %v5235 = vadd.f32 %v5196, %v5226
      %v5236 = vadd.f32 %v5197, %v5226
      %v5237 = vadd.f32 %v5198, %v5226
      %v5238 = vadd.f32 %v5199, %v5226
      %v5239 = vadd.f32 %v5200, %v5226
      %v5240 = vadd.f32 %v5201, %v5226
      %v5241 = vadd.f32 %v5202, %v5226
      %v5242 = vadd.f32 %v5203, %v5226
      %v5243 = vadd.f32 %v5204, %v5226
      %v5244 = vadd.f32 %v5205, %v5226
      %v5245 = vadd.f32 %v5206, %v5226
      %v5246 = vadd.f32 %v5207, %v5226
      %v5247 = vadd.f32 %v5208, %v5226
      %v5248 = vadd.f32 %v5209, %v5226
      %v5249 = vadd.f32 %v5210, %v5226
      %v5250 = vadd.f32 %v5211, %v5226
      %v5251 = vadd.f32 %v5212, %v5226
      %v5252 = vadd.f32 %v5213, %v5226
      %v5253 = vadd.f32 %v5214, %v5226
      %v5254 = vadd.f32 %v5215, %v5226
      %v5255 = vadd.f32 %v5216, %v5226
      %v5256 = vadd.f32 %v5217, %v5226
      %v5257 = vadd.f32 %v5218, %v5226
      %v5258 = vadd.f32 %v5219, %v5226
      %v5259 = vadd.f32 %v5220, %v5226
      %vm5260 = vcmp.ge.f32.partialorder %v5228, 0.0
      %vm5261 = vcmp.ge.f32.partialorder %v5229, 0.0
      %vm5262 = vcmp.ge.f32.partialorder %v5230, 0.0
      %vm5263 = vcmp.ge.f32.partialorder %v5231, 0.0
      %vm5264 = vcmp.ge.f32.partialorder %v5232, 0.0
      %vm5265 = vcmp.ge.f32.partialorder %v5233, 0.0
      %vm5266 = vcmp.ge.f32.partialorder %v5234, 0.0
      %vm5267 = vcmp.ge.f32.partialorder %v5235, 0.0
      %vm5268 = vcmp.ge.f32.partialorder %v5236, 0.0
      %vm5269 = vcmp.ge.f32.partialorder %v5237, 0.0
      %vm5270 = vcmp.ge.f32.partialorder %v5238, 0.0
      %vm5271 = vcmp.ge.f32.partialorder %v5239, 0.0
      %vm5272 = vcmp.ge.f32.partialorder %v5240, 0.0
      %vm5273 = vcmp.ge.f32.partialorder %v5241, 0.0
      %vm5274 = vcmp.ge.f32.partialorder %v5242, 0.0
      %vm5275 = vcmp.ge.f32.partialorder %v5243, 0.0
      %vm5276 = vcmp.ge.f32.partialorder %v5244, 0.0
      %vm5277 = vcmp.ge.f32.partialorder %v5245, 0.0
      %vm5278 = vcmp.ge.f32.partialorder %v5246, 0.0
      %vm5279 = vcmp.ge.f32.partialorder %v5247, 0.0
      %vm5280 = vcmp.ge.f32.partialorder %v5248, 0.0
      %vm5281 = vcmp.ge.f32.partialorder %v5249, 0.0
      %vm5282 = vcmp.ge.f32.partialorder %v5250, 0.0
      %vm5283 = vcmp.ge.f32.partialorder %v5251, 0.0
      %vm5284 = vcmp.ge.f32.partialorder %v5252, 0.0
      %vm5285 = vcmp.ge.f32.partialorder %v5253, 0.0
      %vm5286 = vcmp.ge.f32.partialorder %v5254, 0.0
      %vm5287 = vcmp.ge.f32.partialorder %v5255, 0.0
      %vm5288 = vcmp.ge.f32.partialorder %v5256, 0.0
      %vm5289 = vcmp.ge.f32.partialorder %v5257, 0.0
      %vm5290 = vcmp.ge.f32.partialorder %v5258, 0.0
      %vm5291 = vcmp.ge.f32.partialorder %v5259, 0.0
      %v5292 = vmul.f32 %v5228, 0.01
      %v5293 = vmul.f32 %v5229, 0.01
      %v5294 = vmul.f32 %v5230, 0.01
      %v5295 = vmul.f32 %v5231, 0.01
      %v5296 = vmul.f32 %v5232, 0.01
      %v5297 = vmul.f32 %v5233, 0.01
      %v5298 = vmul.f32 %v5234, 0.01
      %v5299 = vmul.f32 %v5235, 0.01
      %v5300 = vmul.f32 %v5236, 0.01
      %v5301 = vmul.f32 %v5237, 0.01
      %v5302 = vmul.f32 %v5238, 0.01
      %v5303 = vmul.f32 %v5239, 0.01
      %v5304 = vmul.f32 %v5240, 0.01
      %v5305 = vmul.f32 %v5241, 0.01
      %v5306 = vmul.f32 %v5242, 0.01
      %v5307 = vmul.f32 %v5243, 0.01
      %v5308 = vmul.f32 %v5244, 0.01
      %v5309 = vmul.f32 %v5245, 0.01
      %v5310 = vmul.f32 %v5246, 0.01
      %v5311 = vmul.f32 %v5247, 0.01
      %v5312 = vmul.f32 %v5248, 0.01
      %v5313 = vmul.f32 %v5249, 0.01
      %v5314 = vmul.f32 %v5250, 0.01
      %v5315 = vmul.f32 %v5251, 0.01
      %v5316 = vmul.f32 %v5252, 0.01
      %v5317 = vmul.f32 %v5253, 0.01
      %v5318 = vmul.f32 %v5254, 0.01
      %v5319 = vmul.f32 %v5255, 0.01
      %v5320 = vmul.f32 %v5256, 0.01
      %v5321 = vmul.f32 %v5257, 0.01
      %v5322 = vmul.f32 %v5258, 0.01
      %v5323 = vmul.f32 %v5259, 0.01
      %v5324 = vsel %vm5260, %v5228, %v5292
      %v5325 = vsel %vm5261, %v5229, %v5293
      %v5326 = vsel %vm5262, %v5230, %v5294
      %v5327 = vsel %vm5263, %v5231, %v5295
      %v5328 = vsel %vm5264, %v5232, %v5296
      %v5329 = vsel %vm5265, %v5233, %v5297
      %v5330 = vsel %vm5266, %v5234, %v5298
      %v5331 = vsel %vm5267, %v5235, %v5299
      %v5332 = vsel %vm5268, %v5236, %v5300
      %v5333 = vsel %vm5269, %v5237, %v5301
      %v5334 = vsel %vm5270, %v5238, %v5302
      %v5335 = vsel %vm5271, %v5239, %v5303
      %v5336 = vsel %vm5272, %v5240, %v5304
      %v5337 = vsel %vm5273, %v5241, %v5305
      %v5338 = vsel %vm5274, %v5242, %v5306
      %v5339 = vsel %vm5275, %v5243, %v5307
      %v5340 = vsel %vm5276, %v5244, %v5308
      %v5341 = vsel %vm5277, %v5245, %v5309
      %v5342 = vsel %vm5278, %v5246, %v5310
      %v5343 = vsel %vm5279, %v5247, %v5311
      %v5344 = vsel %vm5280, %v5248, %v5312
      %v5345 = vsel %vm5281, %v5249, %v5313
      %v5346 = vsel %vm5282, %v5250, %v5314
      %v5347 = vsel %vm5283, %v5251, %v5315
      %v5348 = vsel %vm5284, %v5252, %v5316
      %v5349 = vsel %vm5285, %v5253, %v5317
      %v5350 = vsel %vm5286, %v5254, %v5318
      %v5351 = vsel %vm5287, %v5255, %v5319
      %v5352 = vsel %vm5288, %v5256, %v5320
      %v5353 = vsel %vm5289, %v5257, %v5321
      %v5354 = vsel %vm5290, %v5258, %v5322
      %v5355 = vsel %vm5291, %v5259, %v5323
      %v5356 = vpack.c.bf16 %v5325, %v5324
      %v5357 = vpack.c.bf16 %v5327, %v5326
      %v5358 = vpack.c.bf16 %v5329, %v5328
      %v5359 = vpack.c.bf16 %v5331, %v5330
      %v5360 = vpack.c.bf16 %v5333, %v5332
      %v5361 = vpack.c.bf16 %v5335, %v5334
      %v5362 = vpack.c.bf16 %v5337, %v5336
      %v5363 = vpack.c.bf16 %v5339, %v5338
      %v5364 = vpack.c.bf16 %v5341, %v5340
      %v5365 = vpack.c.bf16 %v5343, %v5342
      %v5366 = vpack.c.bf16 %v5345, %v5344
      %v5367 = vpack.c.bf16 %v5347, %v5346
      %v5368 = vpack.c.bf16 %v5349, %v5348
      %v5369 = vpack.c.bf16 %v5351, %v5350
      %v5370 = vpack.c.bf16 %v5353, %v5352
      %v5371 = vpack.c.bf16 %v5355, %v5354
      %v5388 = vunpack.c.l.b16 %v5356
      %v5389 = vunpack.c.h.b16 %v5356
      %v5390 = vunpack.c.l.b16 %v5357
      %v5391 = vunpack.c.h.b16 %v5357
      %v5392 = vunpack.c.l.b16 %v5358
      %v5393 = vunpack.c.h.b16 %v5358
      %v5394 = vunpack.c.l.b16 %v5359
      %v5395 = vunpack.c.h.b16 %v5359
      %v5396 = vunpack.c.l.b16 %v5360
      %v5397 = vunpack.c.h.b16 %v5360
      %v5398 = vunpack.c.l.b16 %v5361
      %v5399 = vunpack.c.h.b16 %v5361
      %v5400 = vunpack.c.l.b16 %v5362
      %v5401 = vunpack.c.h.b16 %v5362
      %v5402 = vunpack.c.l.b16 %v5363
      %v5403 = vunpack.c.h.b16 %v5363
      %v5404 = vunpack.c.l.b16 %v5364
      %v5405 = vunpack.c.h.b16 %v5364
      %v5406 = vunpack.c.l.b16 %v5365
      %v5407 = vunpack.c.h.b16 %v5365
      %v5408 = vunpack.c.l.b16 %v5366
      %v5409 = vunpack.c.h.b16 %v5366
      %v5410 = vunpack.c.l.b16 %v5367
      %v5411 = vunpack.c.h.b16 %v5367
      %v5412 = vunpack.c.l.b16 %v5368
      %v5413 = vunpack.c.h.b16 %v5368
      %v5414 = vunpack.c.l.b16 %v5369
      %v5415 = vunpack.c.h.b16 %v5369
      %v5416 = vunpack.c.l.b16 %v5370
      %v5417 = vunpack.c.h.b16 %v5370
      %v5418 = vunpack.c.l.b16 %v5371
      %v5419 = vunpack.c.h.b16 %v5371
      %v5420 = vpack.c.b16 %v5388, %v5388
      %v5421 = vpack.c.b16 %v5389, %v5389
      %v5422 = vpack.c.b16 %v5390, %v5390
      %v5423 = vpack.c.b16 %v5391, %v5391
      %v5424 = vpack.c.b16 %v5392, %v5392
      %v5425 = vpack.c.b16 %v5393, %v5393
      %v5426 = vpack.c.b16 %v5394, %v5394
      %v5427 = vpack.c.b16 %v5395, %v5395
      %v5428 = vpack.c.b16 %v5396, %v5396
      %v5429 = vpack.c.b16 %v5397, %v5397
      %v5430 = vpack.c.b16 %v5398, %v5398
      %v5431 = vpack.c.b16 %v5399, %v5399
      %v5432 = vpack.c.b16 %v5400, %v5400
      %v5433 = vpack.c.b16 %v5401, %v5401
      %v5434 = vpack.c.b16 %v5402, %v5402
      %v5435 = vpack.c.b16 %v5403, %v5403
      %v5436 = vpack.c.b16 %v5404, %v5404
      %v5437 = vpack.c.b16 %v5405, %v5405
      %v5438 = vpack.c.b16 %v5406, %v5406
      %v5439 = vpack.c.b16 %v5407, %v5407
      %v5440 = vpack.c.b16 %v5408, %v5408
      %v5441 = vpack.c.b16 %v5409, %v5409
      %v5442 = vpack.c.b16 %v5410, %v5410
      %v5443 = vpack.c.b16 %v5411, %v5411
      %v5444 = vpack.c.b16 %v5412, %v5412
      %v5445 = vpack.c.b16 %v5413, %v5413
      %v5446 = vpack.c.b16 %v5414, %v5414
      %v5447 = vpack.c.b16 %v5415, %v5415
      %v5448 = vpack.c.b16 %v5416, %v5416
      %v5449 = vpack.c.b16 %v5417, %v5417
      %v5450 = vpack.c.b16 %v5418, %v5418
      %v5451 = vpack.c.b16 %v5419, %v5419
      %vm5452 = vsmask.f32 4368
      %vm5453 = vmor %vm288, %vm5452
      %v5455 = vshrl.u32 %v5420, 16
      %v5457 = vrot.slane %v5455, 7
      %v5458 = vshll.u32 %v5420, 16
      %v5460 = vor.u32 %v5457, %v5458
      %v5461 = vrot.slane %v5457, 4
      %v5463 = vshrl.u32 %v5421, 16
      %v5465 = vrot.slane %v5463, 7
      %v5466 = vshll.u32 %v5421, 16
      %v5468 = vor.u32 %v5465, %v5466
      %v5469 = vsel %vm5453, %v5461, %v5468
      %v5470 = vrot.slane %v5465, 4
      %v5472 = vshrl.u32 %v5422, 16
      %v5474 = vrot.slane %v5472, 7
      %v5475 = vshll.u32 %v5422, 16
      %v5477 = vor.u32 %v5474, %v5475
      %v5478 = vrot.slane %v5474, 4
      %v5480 = vshrl.u32 %v5423, 16
      %v5482 = vrot.slane %v5480, 7
      %v5483 = vshll.u32 %v5423, 16
      %v5485 = vor.u32 %v5482, %v5483
      %v5486 = vsel %vm5453, %v5478, %v5485
      %v5487 = vrot.slane %v5482, 4
      %v5489 = vshrl.u32 %v5424, 16
      %v5491 = vrot.slane %v5489, 7
      %v5492 = vshll.u32 %v5424, 16
      %v5494 = vor.u32 %v5491, %v5492
      %v5495 = vrot.slane %v5491, 4
      %v5497 = vshrl.u32 %v5425, 16
      %v5499 = vrot.slane %v5497, 7
      %v5500 = vshll.u32 %v5425, 16
      %v5502 = vor.u32 %v5499, %v5500
      %v5503 = vsel %vm5453, %v5495, %v5502
      %v5504 = vrot.slane %v5499, 4
      %v5506 = vshrl.u32 %v5426, 16
      %v5508 = vrot.slane %v5506, 7
      %v5509 = vshll.u32 %v5426, 16
      %v5511 = vor.u32 %v5508, %v5509
      %v5512 = vrot.slane %v5508, 4
      %v5514 = vshrl.u32 %v5427, 16
      %v5516 = vrot.slane %v5514, 7
      %v5517 = vshll.u32 %v5427, 16
      %v5519 = vor.u32 %v5516, %v5517
      %v5520 = vsel %vm5453, %v5512, %v5519
      %v5521 = vrot.slane %v5516, 4
      %v5523 = vshrl.u32 %v5428, 16
      %v5525 = vrot.slane %v5523, 7
      %v5526 = vshll.u32 %v5428, 16
      %v5528 = vor.u32 %v5525, %v5526
      %v5529 = vrot.slane %v5525, 4
      %v5531 = vshrl.u32 %v5429, 16
      %v5533 = vrot.slane %v5531, 7
      %v5534 = vshll.u32 %v5429, 16
      %v5536 = vor.u32 %v5533, %v5534
      %v5537 = vsel %vm5453, %v5529, %v5536
      %v5538 = vrot.slane %v5533, 4
      %v5540 = vshrl.u32 %v5430, 16
      %v5542 = vrot.slane %v5540, 7
      %v5543 = vshll.u32 %v5430, 16
      %v5545 = vor.u32 %v5542, %v5543
      %v5546 = vrot.slane %v5542, 4
      %v5548 = vshrl.u32 %v5431, 16
      %v5550 = vrot.slane %v5548, 7
      %v5551 = vshll.u32 %v5431, 16
      %v5553 = vor.u32 %v5550, %v5551
      %v5554 = vsel %vm5453, %v5546, %v5553
      %v5555 = vrot.slane %v5550, 4
      %v5557 = vshrl.u32 %v5432, 16
      %v5559 = vrot.slane %v5557, 7
      %v5560 = vshll.u32 %v5432, 16
      %v5562 = vor.u32 %v5559, %v5560
      %v5563 = vrot.slane %v5559, 4
      %v5565 = vshrl.u32 %v5433, 16
      %v5567 = vrot.slane %v5565, 7
      %v5568 = vshll.u32 %v5433, 16
      %v5570 = vor.u32 %v5567, %v5568
      %v5571 = vsel %vm5453, %v5563, %v5570
      %v5572 = vrot.slane %v5567, 4
      %v5574 = vshrl.u32 %v5434, 16
      %v5576 = vrot.slane %v5574, 7
      %v5577 = vshll.u32 %v5434, 16
      %v5579 = vor.u32 %v5576, %v5577
      %v5580 = vrot.slane %v5576, 4
      %v5582 = vshrl.u32 %v5435, 16
      %v5584 = vrot.slane %v5582, 7
      %v5585 = vshll.u32 %v5435, 16
      %v5587 = vor.u32 %v5584, %v5585
      %v5588 = vsel %vm5453, %v5580, %v5587
      %v5589 = vrot.slane %v5584, 4
      %v5591 = vshrl.u32 %v5436, 16
      %v5593 = vrot.slane %v5591, 7
      %v5594 = vshll.u32 %v5436, 16
      %v5596 = vor.u32 %v5593, %v5594
      %v5597 = vrot.slane %v5593, 4
      %v5599 = vshrl.u32 %v5437, 16
      %v5601 = vrot.slane %v5599, 7
      %v5602 = vshll.u32 %v5437, 16
      %v5604 = vor.u32 %v5601, %v5602
      %v5605 = vsel %vm5453, %v5597, %v5604
      %v5606 = vrot.slane %v5601, 4
      %v5608 = vshrl.u32 %v5438, 16
      %v5610 = vrot.slane %v5608, 7
      %v5611 = vshll.u32 %v5438, 16
      %v5613 = vor.u32 %v5610, %v5611
      %v5614 = vrot.slane %v5610, 4
      %v5616 = vshrl.u32 %v5439, 16
      %v5618 = vrot.slane %v5616, 7
      %v5619 = vshll.u32 %v5439, 16
      %v5621 = vor.u32 %v5618, %v5619
      %v5622 = vsel %vm5453, %v5614, %v5621
      %v5623 = vrot.slane %v5618, 4
      %v5625 = vshrl.u32 %v5440, 16
      %v5627 = vrot.slane %v5625, 7
      %v5628 = vshll.u32 %v5440, 16
      %v5630 = vor.u32 %v5627, %v5628
      %v5631 = vrot.slane %v5627, 4
      %v5633 = vshrl.u32 %v5441, 16
      %v5635 = vrot.slane %v5633, 7
      %v5636 = vshll.u32 %v5441, 16
      %v5638 = vor.u32 %v5635, %v5636
      %v5639 = vsel %vm5453, %v5631, %v5638
      %v5640 = vrot.slane %v5635, 4
      %v5642 = vshrl.u32 %v5442, 16
      %v5644 = vrot.slane %v5642, 7
      %v5645 = vshll.u32 %v5442, 16
      %v5647 = vor.u32 %v5644, %v5645
      %v5648 = vrot.slane %v5644, 4
      %v5650 = vshrl.u32 %v5443, 16
      %v5652 = vrot.slane %v5650, 7
      %v5653 = vshll.u32 %v5443, 16
      %v5655 = vor.u32 %v5652, %v5653
      %v5656 = vsel %vm5453, %v5648, %v5655
      %v5657 = vrot.slane %v5652, 4
      %v5659 = vshrl.u32 %v5444, 16
      %v5661 = vrot.slane %v5659, 7
      %v5662 = vshll.u32 %v5444, 16
      %v5664 = vor.u32 %v5661, %v5662
      %v5665 = vrot.slane %v5661, 4
      %v5667 = vshrl.u32 %v5445, 16
      %v5669 = vrot.slane %v5667, 7
      %v5670 = vshll.u32 %v5445, 16
      %v5672 = vor.u32 %v5669, %v5670
      %v5673 = vsel %vm5453, %v5665, %v5672
      %v5674 = vrot.slane %v5669, 4
      %v5676 = vshrl.u32 %v5446, 16
      %v5678 = vrot.slane %v5676, 7
      %v5679 = vshll.u32 %v5446, 16
      %v5681 = vor.u32 %v5678, %v5679
      %v5682 = vrot.slane %v5678, 4
      %v5684 = vshrl.u32 %v5447, 16
      %v5686 = vrot.slane %v5684, 7
      %v5687 = vshll.u32 %v5447, 16
      %v5689 = vor.u32 %v5686, %v5687
      %v5690 = vsel %vm5453, %v5682, %v5689
      %v5691 = vrot.slane %v5686, 4
      %v5693 = vshrl.u32 %v5448, 16
      %v5695 = vrot.slane %v5693, 7
      %v5696 = vshll.u32 %v5448, 16
      %v5698 = vor.u32 %v5695, %v5696
      %v5699 = vrot.slane %v5695, 4
      %v5701 = vshrl.u32 %v5449, 16
      %v5703 = vrot.slane %v5701, 7
      %v5704 = vshll.u32 %v5449, 16
      %v5706 = vor.u32 %v5703, %v5704
      %v5707 = vsel %vm5453, %v5699, %v5706
      %v5708 = vrot.slane %v5703, 4
      %v5710 = vshrl.u32 %v5450, 16
      %v5712 = vrot.slane %v5710, 7
      %v5713 = vshll.u32 %v5450, 16
      %v5715 = vor.u32 %v5712, %v5713
      %v5716 = vrot.slane %v5712, 4
      %v5718 = vshrl.u32 %v5451, 16
      %v5720 = vrot.slane %v5718, 7
      %v5721 = vshll.u32 %v5451, 16
      %v5723 = vor.u32 %v5720, %v5721
      %v5724 = vsel %vm5453, %v5716, %v5723
      %v5725 = vrot.slane %v5720, 4
      %s5774 = scalar_lea.vmem [#allocation2], 12
      %v5775 = vld [vmem:[%s5774] sm:$0xf]
      %v5776 = vsel %vm346, %v5460, %v5775
      %5777 = vst [vmem:[%s5774] sm:$0xf] %v5776
      %5778 = vst [vmem:[%s5774 + $0x4] sm:$0xf] %v5469
      %v5779 = vld [vmem:[%s5774 + $0x8] sm:$0x1]
      %v5780 = vsel %vm289, %v5470, %v5779
      %5781 = vst [vmem:[%s5774 + $0x8] sm:$0x1] %v5780
      %v5782 = vld [vmem:[%s5774 + $0xc] sm:$0xf]
      %v5783 = vsel %vm346, %v5477, %v5782
      %5784 = vst [vmem:[%s5774 + $0xc] sm:$0xf] %v5783
      %5785 = vst [vmem:[%s5774 + $0x10] sm:$0xf] %v5486
      %v5786 = vld [vmem:[%s5774 + $0x14] sm:$0x1]
      %v5787 = vsel %vm289, %v5487, %v5786
      %5788 = vst [vmem:[%s5774 + $0x14] sm:$0x1] %v5787
      %v5789 = vld [vmem:[%s5774 + $0x18] sm:$0xf]
      %v5790 = vsel %vm346, %v5494, %v5789
      %5791 = vst [vmem:[%s5774 + $0x18] sm:$0xf] %v5790
      %5792 = vst [vmem:[%s5774 + $0x1c] sm:$0xf] %v5503
      %v5793 = vld [vmem:[%s5774 + $0x20] sm:$0x1]
      %v5794 = vsel %vm289, %v5504, %v5793
      %5795 = vst [vmem:[%s5774 + $0x20] sm:$0x1] %v5794
      %v5796 = vld [vmem:[%s5774 + $0x24] sm:$0xf]
      %v5797 = vsel %vm346, %v5511, %v5796
      %5798 = vst [vmem:[%s5774 + $0x24] sm:$0xf] %v5797
      %5799 = vst [vmem:[%s5774 + $0x28] sm:$0xf] %v5520
      %v5800 = vld [vmem:[%s5774 + $0x2c] sm:$0x1]
      %v5801 = vsel %vm289, %v5521, %v5800
      %5802 = vst [vmem:[%s5774 + $0x2c] sm:$0x1] %v5801
      %v5803 = vld [vmem:[%s5774 + $0x30] sm:$0xf]
      %v5804 = vsel %vm346, %v5528, %v5803
      %5805 = vst [vmem:[%s5774 + $0x30] sm:$0xf] %v5804
      %5806 = vst [vmem:[%s5774 + $0x34] sm:$0xf] %v5537
      %v5807 = vld [vmem:[%s5774 + $0x38] sm:$0x1]
      %v5808 = vsel %vm289, %v5538, %v5807
      %5809 = vst [vmem:[%s5774 + $0x38] sm:$0x1] %v5808
      %v5810 = vld [vmem:[%s5774 + $0x3c] sm:$0xf]
      %v5811 = vsel %vm346, %v5545, %v5810
      %5812 = vst [vmem:[%s5774 + $0x3c] sm:$0xf] %v5811
      %5813 = vst [vmem:[%s5774 + $0x40] sm:$0xf] %v5554
      %v5814 = vld [vmem:[%s5774 + $0x44] sm:$0x1]
      %v5815 = vsel %vm289, %v5555, %v5814
      %5816 = vst [vmem:[%s5774 + $0x44] sm:$0x1] %v5815
      %v5817 = vld [vmem:[%s5774 + $0x48] sm:$0xf]
      %v5818 = vsel %vm346, %v5562, %v5817
      %5819 = vst [vmem:[%s5774 + $0x48] sm:$0xf] %v5818
      %5820 = vst [vmem:[%s5774 + $0x4c] sm:$0xf] %v5571
      %v5821 = vld [vmem:[%s5774 + $0x50] sm:$0x1]
      %v5822 = vsel %vm289, %v5572, %v5821
      %5823 = vst [vmem:[%s5774 + $0x50] sm:$0x1] %v5822
      %v5824 = vld [vmem:[%s5774 + $0x54] sm:$0xf]
      %v5825 = vsel %vm346, %v5579, %v5824
      %5826 = vst [vmem:[%s5774 + $0x54] sm:$0xf] %v5825
      %5827 = vst [vmem:[%s5774 + $0x58] sm:$0xf] %v5588
      %v5828 = vld [vmem:[%s5774 + $0x5c] sm:$0x1]
      %v5829 = vsel %vm289, %v5589, %v5828
      %5830 = vst [vmem:[%s5774 + $0x5c] sm:$0x1] %v5829
      %v5831 = vld [vmem:[%s5774 + $0x60] sm:$0xf]
      %v5832 = vsel %vm346, %v5596, %v5831
      %5833 = vst [vmem:[%s5774 + $0x60] sm:$0xf] %v5832
      %5834 = vst [vmem:[%s5774 + $0x64] sm:$0xf] %v5605
      %v5835 = vld [vmem:[%s5774 + $0x68] sm:$0x1]
      %v5836 = vsel %vm289, %v5606, %v5835
      %5837 = vst [vmem:[%s5774 + $0x68] sm:$0x1] %v5836
      %v5838 = vld [vmem:[%s5774 + $0x6c] sm:$0xf]
      %v5839 = vsel %vm346, %v5613, %v5838
      %5840 = vst [vmem:[%s5774 + $0x6c] sm:$0xf] %v5839
      %5841 = vst [vmem:[%s5774 + $0x70] sm:$0xf] %v5622
      %v5842 = vld [vmem:[%s5774 + $0x74] sm:$0x1]
      %v5843 = vsel %vm289, %v5623, %v5842
      %5844 = vst [vmem:[%s5774 + $0x74] sm:$0x1] %v5843
      %v5845 = vld [vmem:[%s5774 + $0x78] sm:$0xf]
      %v5846 = vsel %vm346, %v5630, %v5845
      %5847 = vst [vmem:[%s5774 + $0x78] sm:$0xf] %v5846
      %5848 = vst [vmem:[%s5774 + $0x7c] sm:$0xf] %v5639
      %v5849 = vld [vmem:[%s5774 + $0x80] sm:$0x1]
      %v5850 = vsel %vm289, %v5640, %v5849
      %5851 = vst [vmem:[%s5774 + $0x80] sm:$0x1] %v5850
      %v5852 = vld [vmem:[%s5774 + $0x84] sm:$0xf]
      %v5853 = vsel %vm346, %v5647, %v5852
      %5854 = vst [vmem:[%s5774 + $0x84] sm:$0xf] %v5853
      %5855 = vst [vmem:[%s5774 + $0x88] sm:$0xf] %v5656
      %v5856 = vld [vmem:[%s5774 + $0x8c] sm:$0x1]
      %v5857 = vsel %vm289, %v5657, %v5856
      %5858 = vst [vmem:[%s5774 + $0x8c] sm:$0x1] %v5857
      %v5859 = vld [vmem:[%s5774 + $0x90] sm:$0xf]
      %v5860 = vsel %vm346, %v5664, %v5859
      %5861 = vst [vmem:[%s5774 + $0x90] sm:$0xf] %v5860
      %5862 = vst [vmem:[%s5774 + $0x94] sm:$0xf] %v5673
      %v5863 = vld [vmem:[%s5774 + $0x98] sm:$0x1]
      %v5864 = vsel %vm289, %v5674, %v5863
      %5865 = vst [vmem:[%s5774 + $0x98] sm:$0x1] %v5864
      %v5866 = vld [vmem:[%s5774 + $0x9c] sm:$0xf]
      %v5867 = vsel %vm346, %v5681, %v5866
      %5868 = vst [vmem:[%s5774 + $0x9c] sm:$0xf] %v5867
      %5869 = vst [vmem:[%s5774 + $0xa0] sm:$0xf] %v5690
      %v5870 = vld [vmem:[%s5774 + $0xa4] sm:$0x1]
      %v5871 = vsel %vm289, %v5691, %v5870
      %5872 = vst [vmem:[%s5774 + $0xa4] sm:$0x1] %v5871
      %v5873 = vld [vmem:[%s5774 + $0xa8] sm:$0xf]
      %v5874 = vsel %vm346, %v5698, %v5873
      %5875 = vst [vmem:[%s5774 + $0xa8] sm:$0xf] %v5874
      %5876 = vst [vmem:[%s5774 + $0xac] sm:$0xf] %v5707
      %v5877 = vld [vmem:[%s5774 + $0xb0] sm:$0x1]
      %v5878 = vsel %vm289, %v5708, %v5877
      %5879 = vst [vmem:[%s5774 + $0xb0] sm:$0x1] %v5878
      %v5880 = vld [vmem:[%s5774 + $0xb4] sm:$0xf]
      %v5881 = vsel %vm346, %v5715, %v5880
      %5882 = vst [vmem:[%s5774 + $0xb4] sm:$0xf] %v5881
      %5883 = vst [vmem:[%s5774 + $0xb8] sm:$0xf] %v5724
      %v5884 = vld [vmem:[%s5774 + $0xbc] sm:$0x1]
      %v5885 = vsel %vm289, %v5725, %v5884
      %5886 = vst [vmem:[%s5774 + $0xbc] sm:$0x1] %v5885
      %v5887 = vld [vmem:[#allocation2] sm:$0xf]
      %v5888 = vld [vmem:[#allocation2 + $0x4] sm:$0xf]
      %v5889 = vld [vmem:[#allocation2 + $0xc] sm:$0xf]
      %v5890 = vld [vmem:[#allocation2 + $0x10] sm:$0xf]
      %v5891 = vld [vmem:[#allocation2 + $0x18] sm:$0xf]
      %v5892 = vld [vmem:[#allocation2 + $0x1c] sm:$0xf]
      %v5893 = vld [vmem:[#allocation2 + $0x24] sm:$0xf]
      %v5894 = vld [vmem:[#allocation2 + $0x28] sm:$0xf]
      %v5895 = vld [vmem:[#allocation2 + $0x30] sm:$0xf]
      %v5896 = vld [vmem:[#allocation2 + $0x34] sm:$0xf]
      %v5897 = vld [vmem:[#allocation2 + $0x3c] sm:$0xf]
      %v5898 = vld [vmem:[#allocation2 + $0x40] sm:$0xf]
      %v5899 = vld [vmem:[#allocation2 + $0x48] sm:$0xf]
      %v5900 = vld [vmem:[#allocation2 + $0x4c] sm:$0xf]
      %v5901 = vld [vmem:[#allocation2 + $0x54] sm:$0xf]
      %v5902 = vld [vmem:[#allocation2 + $0x58] sm:$0xf]
      %v5903 = vld [vmem:[#allocation2 + $0x60] sm:$0xf]
      %v5904 = vld [vmem:[#allocation2 + $0x64] sm:$0xf]
      %v5905 = vld [vmem:[#allocation2 + $0x6c] sm:$0xf]
      %v5906 = vld [vmem:[#allocation2 + $0x70] sm:$0xf]
      %v5907 = vld [vmem:[#allocation2 + $0x78] sm:$0xf]
      %v5908 = vld [vmem:[#allocation2 + $0x7c] sm:$0xf]
      %v5909 = vld [vmem:[#allocation2 + $0x84] sm:$0xf]
      %v5910 = vld [vmem:[#allocation2 + $0x88] sm:$0xf]
      %v5911 = vld [vmem:[#allocation2 + $0x90] sm:$0xf]
      %v5912 = vld [vmem:[#allocation2 + $0x94] sm:$0xf]
      %v5913 = vld [vmem:[#allocation2 + $0x9c] sm:$0xf]
      %v5914 = vld [vmem:[#allocation2 + $0xa0] sm:$0xf]
      %v5915 = vld [vmem:[#allocation2 + $0xa8] sm:$0xf]
      %v5916 = vld [vmem:[#allocation2 + $0xac] sm:$0xf]
      %v5917 = vld [vmem:[#allocation2 + $0xb4] sm:$0xf]
      %v5918 = vld [vmem:[#allocation2 + $0xb8] sm:$0xf]
      %5919 = vst [vmem:[#allocation4] sm:$0xf] %v5887
      %5920 = vst [vmem:[#allocation4 + $0x24] sm:$0xf] %v5888
      %5921 = vst [vmem:[#allocation4 + $0x48] sm:$0xf] %v5889
      %5922 = vst [vmem:[#allocation4 + $0x6c] sm:$0xf] %v5890
      %5923 = vst [vmem:[#allocation4 + $0x90] sm:$0xf] %v5891
      %5924 = vst [vmem:[#allocation4 + $0xb4] sm:$0xf] %v5892
      %5925 = vst [vmem:[#allocation4 + $0xd8] sm:$0xf] %v5893
      %5926 = vst [vmem:[#allocation4 + $0xfc] sm:$0xf] %v5894
      %5927 = vst [vmem:[#allocation4 + $0x120] sm:$0xf] %v5895
      %5928 = vst [vmem:[#allocation4 + $0x144] sm:$0xf] %v5896
      %5929 = vst [vmem:[#allocation4 + $0x168] sm:$0xf] %v5897
      %5930 = vst [vmem:[#allocation4 + $0x18c] sm:$0xf] %v5898
      %5931 = vst [vmem:[#allocation4 + $0x1b0] sm:$0xf] %v5899
      %5932 = vst [vmem:[#allocation4 + $0x1d4] sm:$0xf] %v5900
      %5933 = vst [vmem:[#allocation4 + $0x1f8] sm:$0xf] %v5901
      %5934 = vst [vmem:[#allocation4 + $0x21c] sm:$0xf] %v5902
      %5935 = vst [vmem:[#allocation4 + $0x240] sm:$0xf] %v5903
      %5936 = vst [vmem:[#allocation4 + $0x264] sm:$0xf] %v5904
      %5937 = vst [vmem:[#allocation4 + $0x288] sm:$0xf] %v5905
      %5938 = vst [vmem:[#allocation4 + $0x2ac] sm:$0xf] %v5906
      %5939 = vst [vmem:[#allocation4 + $0x2d0] sm:$0xf] %v5907
      %5940 = vst [vmem:[#allocation4 + $0x2f4] sm:$0xf] %v5908
      %5941 = vst [vmem:[#allocation4 + $0x318] sm:$0xf] %v5909
      %5942 = vst [vmem:[#allocation4 + $0x33c] sm:$0xf] %v5910
      %5943 = vst [vmem:[#allocation4 + $0x360] sm:$0xf] %v5911
      %5944 = vst [vmem:[#allocation4 + $0x384] sm:$0xf] %v5912
      %5945 = vst [vmem:[#allocation4 + $0x3a8] sm:$0xf] %v5913
      %5946 = vst [vmem:[#allocation4 + $0x3cc] sm:$0xf] %v5914
      %5947 = vst [vmem:[#allocation4 + $0x3f0] sm:$0xf] %v5915
      %5948 = vst [vmem:[#allocation4 + $0x414] sm:$0xf] %v5916
      %5949 = vst [vmem:[#allocation4 + $0x438] sm:$0xf] %v5917
      %5950 = vst [vmem:[#allocation4 + $0x45c] sm:$0xf] %v5918
      %v5951 = vld [vmem:[#allocation2] sm:$0xf]
      %v5952 = vld [vmem:[#allocation2 + $0x4] sm:$0xf]
      %v5953 = vld [vmem:[#allocation2 + $0x8] sm:$0x1]
      %v5954 = vld [vmem:[#allocation2 + $0xc] sm:$0xf]
      %v5955 = vld [vmem:[#allocation2 + $0x10] sm:$0xf]
      %v5956 = vld [vmem:[#allocation2 + $0x14] sm:$0x1]
      %v5957 = vld [vmem:[#allocation2 + $0x18] sm:$0xf]
      %v5958 = vld [vmem:[#allocation2 + $0x1c] sm:$0xf]
      %v5959 = vld [vmem:[#allocation2 + $0x20] sm:$0x1]
      %v5960 = vld [vmem:[#allocation2 + $0x24] sm:$0xf]
      %v5961 = vld [vmem:[#allocation2 + $0x28] sm:$0xf]
      %v5962 = vld [vmem:[#allocation2 + $0x2c] sm:$0x1]
      %v5963 = vld [vmem:[#allocation2 + $0x30] sm:$0xf]
      %v5964 = vld [vmem:[#allocation2 + $0x34] sm:$0xf]
      %v5965 = vld [vmem:[#allocation2 + $0x38] sm:$0x1]
      %v5966 = vld [vmem:[#allocation2 + $0x3c] sm:$0xf]
      %v5967 = vld [vmem:[#allocation2 + $0x40] sm:$0xf]
      %v5968 = vld [vmem:[#allocation2 + $0x44] sm:$0x1]
      %v5969 = vld [vmem:[#allocation2 + $0x48] sm:$0xf]
      %v5970 = vld [vmem:[#allocation2 + $0x4c] sm:$0xf]
      %v5971 = vld [vmem:[#allocation2 + $0x50] sm:$0x1]
      %v5972 = vld [vmem:[#allocation2 + $0x54] sm:$0xf]
      %v5973 = vld [vmem:[#allocation2 + $0x58] sm:$0xf]
      %v5974 = vld [vmem:[#allocation2 + $0x5c] sm:$0x1]
      %v5975 = vld [vmem:[#allocation2 + $0x60] sm:$0xf]
      %v5976 = vld [vmem:[#allocation2 + $0x64] sm:$0xf]
      %v5977 = vld [vmem:[#allocation2 + $0x68] sm:$0x1]
      %v5978 = vld [vmem:[#allocation2 + $0x6c] sm:$0xf]
      %v5979 = vld [vmem:[#allocation2 + $0x70] sm:$0xf]
      %v5980 = vld [vmem:[#allocation2 + $0x74] sm:$0x1]
      %v5981 = vld [vmem:[#allocation2 + $0x78] sm:$0xf]
      %v5982 = vld [vmem:[#allocation2 + $0x7c] sm:$0xf]
      %v5983 = vld [vmem:[#allocation2 + $0x80] sm:$0x1]
      %v5984 = vld [vmem:[#allocation2 + $0x84] sm:$0xf]
      %v5985 = vld [vmem:[#allocation2 + $0x88] sm:$0xf]
      %v5986 = vld [vmem:[#allocation2 + $0x8c] sm:$0x1]
      %v5987 = vld [vmem:[#allocation2 + $0x90] sm:$0xf]
      %v5988 = vld [vmem:[#allocation2 + $0x94] sm:$0xf]
      %v5989 = vld [vmem:[#allocation2 + $0x98] sm:$0x1]
      %v5990 = vld [vmem:[#allocation2 + $0x9c] sm:$0xf]
      %v5991 = vld [vmem:[#allocation2 + $0xa0] sm:$0xf]
      %v5992 = vld [vmem:[#allocation2 + $0xa4] sm:$0x1]
      %v5993 = vld [vmem:[#allocation2 + $0xa8] sm:$0xf]
      %v5994 = vld [vmem:[#allocation2 + $0xac] sm:$0xf]
      %v5995 = vld [vmem:[#allocation2 + $0xb0] sm:$0x1]
      %v5996 = vld [vmem:[#allocation2 + $0xb4] sm:$0xf]
      %v5997 = vld [vmem:[#allocation2 + $0xb8] sm:$0xf]
      %v5998 = vld [vmem:[#allocation2 + $0xbc] sm:$0x1]
      %v6000 = vshrl.u32 %v5951, 16
      %v6002 = vrot.slane %v6000, 4
      %v6003 = vshll.u32 %v5951, 16
      %v6005 = vrot.slane %v6003, 5
      %v6006 = vor.u32 %v6002, %v6005
      %v6007 = vrot.slane %v6006, 4
      %v6009 = vshll.u32 %v5952, 16
      %v6011 = vrot.slane %v6009, 5
      %v6012 = vsel %vm515, %v6007, %v6011
      %v6013 = vshrl.u32 %v5952, 16
      %v6015 = vrot.slane %v6013, 4
      %v6016 = vor.u32 %v6015, %v6011
      %v6017 = vrot.slane %v6016, 4
      %v6019 = vshll.u32 %v5953, 16
      %v6021 = vrot.slane %v6019, 5
      %v6022 = vsel %vm515, %v6017, %v6021
      %v6024 = vshrl.u32 %v5954, 16
      %v6026 = vrot.slane %v6024, 4
      %v6027 = vshll.u32 %v5954, 16
      %v6029 = vrot.slane %v6027, 5
      %v6030 = vor.u32 %v6026, %v6029
      %v6031 = vrot.slane %v6030, 4
      %v6033 = vshll.u32 %v5955, 16
      %v6035 = vrot.slane %v6033, 5
      %v6036 = vsel %vm515, %v6031, %v6035
      %v6037 = vshrl.u32 %v5955, 16
      %v6039 = vrot.slane %v6037, 4
      %v6040 = vor.u32 %v6039, %v6035
      %v6041 = vrot.slane %v6040, 4
      %v6043 = vshll.u32 %v5956, 16
      %v6045 = vrot.slane %v6043, 5
      %v6046 = vsel %vm515, %v6041, %v6045
      %v6048 = vshrl.u32 %v5957, 16
      %v6050 = vrot.slane %v6048, 4
      %v6051 = vshll.u32 %v5957, 16
      %v6053 = vrot.slane %v6051, 5
      %v6054 = vor.u32 %v6050, %v6053
      %v6055 = vrot.slane %v6054, 4
      %v6057 = vshll.u32 %v5958, 16
      %v6059 = vrot.slane %v6057, 5
      %v6060 = vsel %vm515, %v6055, %v6059
      %v6061 = vshrl.u32 %v5958, 16
      %v6063 = vrot.slane %v6061, 4
      %v6064 = vor.u32 %v6063, %v6059
      %v6065 = vrot.slane %v6064, 4
      %v6067 = vshll.u32 %v5959, 16
      %v6069 = vrot.slane %v6067, 5
      %v6070 = vsel %vm515, %v6065, %v6069
      %v6072 = vshrl.u32 %v5960, 16
      %v6074 = vrot.slane %v6072, 4
      %v6075 = vshll.u32 %v5960, 16
      %v6077 = vrot.slane %v6075, 5
      %v6078 = vor.u32 %v6074, %v6077
      %v6079 = vrot.slane %v6078, 4
      %v6081 = vshll.u32 %v5961, 16
      %v6083 = vrot.slane %v6081, 5
      %v6084 = vsel %vm515, %v6079, %v6083
      %v6085 = vshrl.u32 %v5961, 16
      %v6087 = vrot.slane %v6085, 4
      %v6088 = vor.u32 %v6087, %v6083
      %v6089 = vrot.slane %v6088, 4
      %v6091 = vshll.u32 %v5962, 16
      %v6093 = vrot.slane %v6091, 5
      %v6094 = vsel %vm515, %v6089, %v6093
      %v6096 = vshrl.u32 %v5963, 16
      %v6098 = vrot.slane %v6096, 4
      %v6099 = vshll.u32 %v5963, 16
      %v6101 = vrot.slane %v6099, 5
      %v6102 = vor.u32 %v6098, %v6101
      %v6103 = vrot.slane %v6102, 4
      %v6105 = vshll.u32 %v5964, 16
      %v6107 = vrot.slane %v6105, 5
      %v6108 = vsel %vm515, %v6103, %v6107
      %v6109 = vshrl.u32 %v5964, 16
      %v6111 = vrot.slane %v6109, 4
      %v6112 = vor.u32 %v6111, %v6107
      %v6113 = vrot.slane %v6112, 4
      %v6115 = vshll.u32 %v5965, 16
      %v6117 = vrot.slane %v6115, 5
      %v6118 = vsel %vm515, %v6113, %v6117
      %v6120 = vshrl.u32 %v5966, 16
      %v6122 = vrot.slane %v6120, 4
      %v6123 = vshll.u32 %v5966, 16
      %v6125 = vrot.slane %v6123, 5
      %v6126 = vor.u32 %v6122, %v6125
      %v6127 = vrot.slane %v6126, 4
      %v6129 = vshll.u32 %v5967, 16
      %v6131 = vrot.slane %v6129, 5
      %v6132 = vsel %vm515, %v6127, %v6131
      %v6133 = vshrl.u32 %v5967, 16
      %v6135 = vrot.slane %v6133, 4
      %v6136 = vor.u32 %v6135, %v6131
      %v6137 = vrot.slane %v6136, 4
      %v6139 = vshll.u32 %v5968, 16
      %v6141 = vrot.slane %v6139, 5
      %v6142 = vsel %vm515, %v6137, %v6141
      %v6144 = vshrl.u32 %v5969, 16
      %v6146 = vrot.slane %v6144, 4
      %v6147 = vshll.u32 %v5969, 16
      %v6149 = vrot.slane %v6147, 5
      %v6150 = vor.u32 %v6146, %v6149
      %v6151 = vrot.slane %v6150, 4
      %v6153 = vshll.u32 %v5970, 16
      %v6155 = vrot.slane %v6153, 5
      %v6156 = vsel %vm515, %v6151, %v6155
      %v6157 = vshrl.u32 %v5970, 16
      %v6159 = vrot.slane %v6157, 4
      %v6160 = vor.u32 %v6159, %v6155
      %v6161 = vrot.slane %v6160, 4
      %v6163 = vshll.u32 %v5971, 16
      %v6165 = vrot.slane %v6163, 5
      %v6166 = vsel %vm515, %v6161, %v6165
      %v6168 = vshrl.u32 %v5972, 16
      %v6170 = vrot.slane %v6168, 4
      %v6171 = vshll.u32 %v5972, 16
      %v6173 = vrot.slane %v6171, 5
      %v6174 = vor.u32 %v6170, %v6173
      %v6175 = vrot.slane %v6174, 4
      %v6177 = vshll.u32 %v5973, 16
      %v6179 = vrot.slane %v6177, 5
      %v6180 = vsel %vm515, %v6175, %v6179
      %v6181 = vshrl.u32 %v5973, 16
      %v6183 = vrot.slane %v6181, 4
      %v6184 = vor.u32 %v6183, %v6179
      %v6185 = vrot.slane %v6184, 4
      %v6187 = vshll.u32 %v5974, 16
      %v6189 = vrot.slane %v6187, 5
      %v6190 = vsel %vm515, %v6185, %v6189
      %v6192 = vshrl.u32 %v5975, 16
      %v6194 = vrot.slane %v6192, 4
      %v6195 = vshll.u32 %v5975, 16
      %v6197 = vrot.slane %v6195, 5
      %v6198 = vor.u32 %v6194, %v6197
      %v6199 = vrot.slane %v6198, 4
      %v6201 = vshll.u32 %v5976, 16
      %v6203 = vrot.slane %v6201, 5
      %v6204 = vsel %vm515, %v6199, %v6203
      %v6205 = vshrl.u32 %v5976, 16
      %v6207 = vrot.slane %v6205, 4
      %v6208 = vor.u32 %v6207, %v6203
      %v6209 = vrot.slane %v6208, 4
      %v6211 = vshll.u32 %v5977, 16
      %v6213 = vrot.slane %v6211, 5
      %v6214 = vsel %vm515, %v6209, %v6213
      %v6216 = vshrl.u32 %v5978, 16
      %v6218 = vrot.slane %v6216, 4
      %v6219 = vshll.u32 %v5978, 16
      %v6221 = vrot.slane %v6219, 5
      %v6222 = vor.u32 %v6218, %v6221
      %v6223 = vrot.slane %v6222, 4
      %v6225 = vshll.u32 %v5979, 16
      %v6227 = vrot.slane %v6225, 5
      %v6228 = vsel %vm515, %v6223, %v6227
      %v6229 = vshrl.u32 %v5979, 16
      %v6231 = vrot.slane %v6229, 4
      %v6232 = vor.u32 %v6231, %v6227
      %v6233 = vrot.slane %v6232, 4
      %v6235 = vshll.u32 %v5980, 16
      %v6237 = vrot.slane %v6235, 5
      %v6238 = vsel %vm515, %v6233, %v6237
      %v6240 = vshrl.u32 %v5981, 16
      %v6242 = vrot.slane %v6240, 4
      %v6243 = vshll.u32 %v5981, 16
      %v6245 = vrot.slane %v6243, 5
      %v6246 = vor.u32 %v6242, %v6245
      %v6247 = vrot.slane %v6246, 4
      %v6249 = vshll.u32 %v5982, 16
      %v6251 = vrot.slane %v6249, 5
      %v6252 = vsel %vm515, %v6247, %v6251
      %v6253 = vshrl.u32 %v5982, 16
      %v6255 = vrot.slane %v6253, 4
      %v6256 = vor.u32 %v6255, %v6251
      %v6257 = vrot.slane %v6256, 4
      %v6259 = vshll.u32 %v5983, 16
      %v6261 = vrot.slane %v6259, 5
      %v6262 = vsel %vm515, %v6257, %v6261
      %v6264 = vshrl.u32 %v5984, 16
      %v6266 = vrot.slane %v6264, 4
      %v6267 = vshll.u32 %v5984, 16
      %v6269 = vrot.slane %v6267, 5
      %v6270 = vor.u32 %v6266, %v6269
      %v6271 = vrot.slane %v6270, 4
      %v6273 = vshll.u32 %v5985, 16
      %v6275 = vrot.slane %v6273, 5
      %v6276 = vsel %vm515, %v6271, %v6275
      %v6277 = vshrl.u32 %v5985, 16
      %v6279 = vrot.slane %v6277, 4
      %v6280 = vor.u32 %v6279, %v6275
      %v6281 = vrot.slane %v6280, 4
      %v6283 = vshll.u32 %v5986, 16
      %v6285 = vrot.slane %v6283, 5
      %v6286 = vsel %vm515, %v6281, %v6285
      %v6288 = vshrl.u32 %v5987, 16
      %v6290 = vrot.slane %v6288, 4
      %v6291 = vshll.u32 %v5987, 16
      %v6293 = vrot.slane %v6291, 5
      %v6294 = vor.u32 %v6290, %v6293
      %v6295 = vrot.slane %v6294, 4
      %v6297 = vshll.u32 %v5988, 16
      %v6299 = vrot.slane %v6297, 5
      %v6300 = vsel %vm515, %v6295, %v6299
      %v6301 = vshrl.u32 %v5988, 16
      %v6303 = vrot.slane %v6301, 4
      %v6304 = vor.u32 %v6303, %v6299
      %v6305 = vrot.slane %v6304, 4
      %v6307 = vshll.u32 %v5989, 16
      %v6309 = vrot.slane %v6307, 5
      %v6310 = vsel %vm515, %v6305, %v6309
      %v6312 = vshrl.u32 %v5990, 16
      %v6314 = vrot.slane %v6312, 4
      %v6315 = vshll.u32 %v5990, 16
      %v6317 = vrot.slane %v6315, 5
      %v6318 = vor.u32 %v6314, %v6317
      %v6319 = vrot.slane %v6318, 4
      %v6321 = vshll.u32 %v5991, 16
      %v6323 = vrot.slane %v6321, 5
      %v6324 = vsel %vm515, %v6319, %v6323
      %v6325 = vshrl.u32 %v5991, 16
      %v6327 = vrot.slane %v6325, 4
      %v6328 = vor.u32 %v6327, %v6323
      %v6329 = vrot.slane %v6328, 4
      %v6331 = vshll.u32 %v5992, 16
      %v6333 = vrot.slane %v6331, 5
      %v6334 = vsel %vm515, %v6329, %v6333
      %v6336 = vshrl.u32 %v5993, 16
      %v6338 = vrot.slane %v6336, 4
      %v6339 = vshll.u32 %v5993, 16
      %v6341 = vrot.slane %v6339, 5
      %v6342 = vor.u32 %v6338, %v6341
      %v6343 = vrot.slane %v6342, 4
      %v6345 = vshll.u32 %v5994, 16
      %v6347 = vrot.slane %v6345, 5
      %v6348 = vsel %vm515, %v6343, %v6347
      %v6349 = vshrl.u32 %v5994, 16
      %v6351 = vrot.slane %v6349, 4
      %v6352 = vor.u32 %v6351, %v6347
      %v6353 = vrot.slane %v6352, 4
      %v6355 = vshll.u32 %v5995, 16
      %v6357 = vrot.slane %v6355, 5
      %v6358 = vsel %vm515, %v6353, %v6357
      %v6360 = vshrl.u32 %v5996, 16
      %v6362 = vrot.slane %v6360, 4
      %v6363 = vshll.u32 %v5996, 16
      %v6365 = vrot.slane %v6363, 5
      %v6366 = vor.u32 %v6362, %v6365
      %v6367 = vrot.slane %v6366, 4
      %v6369 = vshll.u32 %v5997, 16
      %v6371 = vrot.slane %v6369, 5
      %v6372 = vsel %vm515, %v6367, %v6371
      %v6373 = vshrl.u32 %v5997, 16
      %v6375 = vrot.slane %v6373, 4
      %v6376 = vor.u32 %v6375, %v6371
      %v6377 = vrot.slane %v6376, 4
      %v6379 = vshll.u32 %v5998, 16
      %v6381 = vrot.slane %v6379, 5
      %v6382 = vsel %vm515, %v6377, %v6381
      %6415 = vst [vmem:[#allocation4 + $0x4] sm:$0xf] %v6012
      %6416 = vst [vmem:[#allocation4 + $0x28] sm:$0xf] %v6022
      %6417 = vst [vmem:[#allocation4 + $0x4c] sm:$0xf] %v6036
      %6418 = vst [vmem:[#allocation4 + $0x70] sm:$0xf] %v6046
      %6419 = vst [vmem:[#allocation4 + $0x94] sm:$0xf] %v6060
      %6420 = vst [vmem:[#allocation4 + $0xb8] sm:$0xf] %v6070
      %6421 = vst [vmem:[#allocation4 + $0xdc] sm:$0xf] %v6084
      %6422 = vst [vmem:[#allocation4 + $0x100] sm:$0xf] %v6094
      %6423 = vst [vmem:[#allocation4 + $0x124] sm:$0xf] %v6108
      %6424 = vst [vmem:[#allocation4 + $0x148] sm:$0xf] %v6118
      %6425 = vst [vmem:[#allocation4 + $0x16c] sm:$0xf] %v6132
      %6426 = vst [vmem:[#allocation4 + $0x190] sm:$0xf] %v6142
      %6427 = vst [vmem:[#allocation4 + $0x1b4] sm:$0xf] %v6156
      %6428 = vst [vmem:[#allocation4 + $0x1d8] sm:$0xf] %v6166
      %6429 = vst [vmem:[#allocation4 + $0x1fc] sm:$0xf] %v6180
      %6430 = vst [vmem:[#allocation4 + $0x220] sm:$0xf] %v6190
      %6431 = vst [vmem:[#allocation4 + $0x244] sm:$0xf] %v6204
      %6432 = vst [vmem:[#allocation4 + $0x268] sm:$0xf] %v6214
      %6433 = vst [vmem:[#allocation4 + $0x28c] sm:$0xf] %v6228
      %6434 = vst [vmem:[#allocation4 + $0x2b0] sm:$0xf] %v6238
      %6435 = vst [vmem:[#allocation4 + $0x2d4] sm:$0xf] %v6252
      %6436 = vst [vmem:[#allocation4 + $0x2f8] sm:$0xf] %v6262
      %6437 = vst [vmem:[#allocation4 + $0x31c] sm:$0xf] %v6276
      %6438 = vst [vmem:[#allocation4 + $0x340] sm:$0xf] %v6286
      %6439 = vst [vmem:[#allocation4 + $0x364] sm:$0xf] %v6300
      %6440 = vst [vmem:[#allocation4 + $0x388] sm:$0xf] %v6310
      %6441 = vst [vmem:[#allocation4 + $0x3ac] sm:$0xf] %v6324
      %6442 = vst [vmem:[#allocation4 + $0x3d0] sm:$0xf] %v6334
      %6443 = vst [vmem:[#allocation4 + $0x3f4] sm:$0xf] %v6348
      %6444 = vst [vmem:[#allocation4 + $0x418] sm:$0xf] %v6358
      %6445 = vst [vmem:[#allocation4 + $0x43c] sm:$0xf] %v6372
      %6446 = vst [vmem:[#allocation4 + $0x460] sm:$0xf] %v6382
      %v6447 = vld [vmem:[#allocation2] sm:$0xe]
      %v6448 = vld [vmem:[#allocation2 + $0x4] sm:$0xf]
      %v6449 = vld [vmem:[#allocation2 + $0x8] sm:$0x1]
      %v6450 = vld [vmem:[#allocation2 + $0xc] sm:$0xe]
      %v6451 = vld [vmem:[#allocation2 + $0x10] sm:$0xf]
      %v6452 = vld [vmem:[#allocation2 + $0x14] sm:$0x1]
      %v6453 = vld [vmem:[#allocation2 + $0x18] sm:$0xe]
      %v6454 = vld [vmem:[#allocation2 + $0x1c] sm:$0xf]
      %v6455 = vld [vmem:[#allocation2 + $0x20] sm:$0x1]
      %v6456 = vld [vmem:[#allocation2 + $0x24] sm:$0xe]
      %v6457 = vld [vmem:[#allocation2 + $0x28] sm:$0xf]
      %v6458 = vld [vmem:[#allocation2 + $0x2c] sm:$0x1]
      %v6459 = vld [vmem:[#allocation2 + $0x30] sm:$0xe]
      %v6460 = vld [vmem:[#allocation2 + $0x34] sm:$0xf]
      %v6461 = vld [vmem:[#allocation2 + $0x38] sm:$0x1]
      %v6462 = vld [vmem:[#allocation2 + $0x3c] sm:$0xe]
      %v6463 = vld [vmem:[#allocation2 + $0x40] sm:$0xf]
      %v6464 = vld [vmem:[#allocation2 + $0x44] sm:$0x1]
      %v6465 = vld [vmem:[#allocation2 + $0x48] sm:$0xe]
      %v6466 = vld [vmem:[#allocation2 + $0x4c] sm:$0xf]
      %v6467 = vld [vmem:[#allocation2 + $0x50] sm:$0x1]
      %v6468 = vld [vmem:[#allocation2 + $0x54] sm:$0xe]
      %v6469 = vld [vmem:[#allocation2 + $0x58] sm:$0xf]
      %v6470 = vld [vmem:[#allocation2 + $0x5c] sm:$0x1]
      %v6471 = vld [vmem:[#allocation2 + $0x60] sm:$0xe]
      %v6472 = vld [vmem:[#allocation2 + $0x64] sm:$0xf]
      %v6473 = vld [vmem:[#allocation2 + $0x68] sm:$0x1]
      %v6474 = vld [vmem:[#allocation2 + $0x6c] sm:$0xe]
      %v6475 = vld [vmem:[#allocation2 + $0x70] sm:$0xf]
      %v6476 = vld [vmem:[#allocation2 + $0x74] sm:$0x1]
      %v6477 = vld [vmem:[#allocation2 + $0x78] sm:$0xe]
      %v6478 = vld [vmem:[#allocation2 + $0x7c] sm:$0xf]
      %v6479 = vld [vmem:[#allocation2 + $0x80] sm:$0x1]
      %v6480 = vld [vmem:[#allocation2 + $0x84] sm:$0xe]
      %v6481 = vld [vmem:[#allocation2 + $0x88] sm:$0xf]
      %v6482 = vld [vmem:[#allocation2 + $0x8c] sm:$0x1]
      %v6483 = vld [vmem:[#allocation2 + $0x90] sm:$0xe]
      %v6484 = vld [vmem:[#allocation2 + $0x94] sm:$0xf]
      %v6485 = vld [vmem:[#allocation2 + $0x98] sm:$0x1]
      %v6486 = vld [vmem:[#allocation2 + $0x9c] sm:$0xe]
      %v6487 = vld [vmem:[#allocation2 + $0xa0] sm:$0xf]
      %v6488 = vld [vmem:[#allocation2 + $0xa4] sm:$0x1]
      %v6489 = vld [vmem:[#allocation2 + $0xa8] sm:$0xe]
      %v6490 = vld [vmem:[#allocation2 + $0xac] sm:$0xf]
      %v6491 = vld [vmem:[#allocation2 + $0xb0] sm:$0x1]
      %v6492 = vld [vmem:[#allocation2 + $0xb4] sm:$0xe]
      %v6493 = vld [vmem:[#allocation2 + $0xb8] sm:$0xf]
      %v6494 = vld [vmem:[#allocation2 + $0xbc] sm:$0x1]
      %v6543 = vrot.slane %v6447, 5
      %v6544 = vrot.slane %v6543, 4
      %v6545 = vrot.slane %v6448, 5
      %v6546 = vsel %vm1062, %v6544, %v6545
      %v6547 = vrot.slane %v6545, 4
      %v6548 = vrot.slane %v6449, 5
      %v6549 = vsel %vm1062, %v6547, %v6548
      %v6550 = vrot.slane %v6450, 5
      %v6551 = vrot.slane %v6550, 4
      %v6552 = vrot.slane %v6451, 5
      %v6553 = vsel %vm1062, %v6551, %v6552
      %v6554 = vrot.slane %v6552, 4
      %v6555 = vrot.slane %v6452, 5
      %v6556 = vsel %vm1062, %v6554, %v6555
      %v6557 = vrot.slane %v6453, 5
      %v6558 = vrot.slane %v6557, 4
      %v6559 = vrot.slane %v6454, 5
      %v6560 = vsel %vm1062, %v6558, %v6559
      %v6561 = vrot.slane %v6559, 4
      %v6562 = vrot.slane %v6455, 5
      %v6563 = vsel %vm1062, %v6561, %v6562
      %v6564 = vrot.slane %v6456, 5
      %v6565 = vrot.slane %v6564, 4
      %v6566 = vrot.slane %v6457, 5
      %v6567 = vsel %vm1062, %v6565, %v6566
      %v6568 = vrot.slane %v6566, 4
      %v6569 = vrot.slane %v6458, 5
      %v6570 = vsel %vm1062, %v6568, %v6569
      %v6571 = vrot.slane %v6459, 5
      %v6572 = vrot.slane %v6571, 4
      %v6573 = vrot.slane %v6460, 5
      %v6574 = vsel %vm1062, %v6572, %v6573
      %v6575 = vrot.slane %v6573, 4
      %v6576 = vrot.slane %v6461, 5
      %v6577 = vsel %vm1062, %v6575, %v6576
      %v6578 = vrot.slane %v6462, 5
      %v6579 = vrot.slane %v6578, 4
      %v6580 = vrot.slane %v6463, 5
      %v6581 = vsel %vm1062, %v6579, %v6580
      %v6582 = vrot.slane %v6580, 4
      %v6583 = vrot.slane %v6464, 5
      %v6584 = vsel %vm1062, %v6582, %v6583
      %v6585 = vrot.slane %v6465, 5
      %v6586 = vrot.slane %v6585, 4
      %v6587 = vrot.slane %v6466, 5
      %v6588 = vsel %vm1062, %v6586, %v6587
      %v6589 = vrot.slane %v6587, 4
      %v6590 = vrot.slane %v6467, 5
      %v6591 = vsel %vm1062, %v6589, %v6590
      %v6592 = vrot.slane %v6468, 5
      %v6593 = vrot.slane %v6592, 4
      %v6594 = vrot.slane %v6469, 5
      %v6595 = vsel %vm1062, %v6593, %v6594
      %v6596 = vrot.slane %v6594, 4
      %v6597 = vrot.slane %v6470, 5
      %v6598 = vsel %vm1062, %v6596, %v6597
      %v6599 = vrot.slane %v6471, 5
      %v6600 = vrot.slane %v6599, 4
      %v6601 = vrot.slane %v6472, 5
      %v6602 = vsel %vm1062, %v6600, %v6601
      %v6603 = vrot.slane %v6601, 4
      %v6604 = vrot.slane %v6473, 5
      %v6605 = vsel %vm1062, %v6603, %v6604
      %v6606 = vrot.slane %v6474, 5
      %v6607 = vrot.slane %v6606, 4
      %v6608 = vrot.slane %v6475, 5
      %v6609 = vsel %vm1062, %v6607, %v6608
      %v6610 = vrot.slane %v6608, 4
      %v6611 = vrot.slane %v6476, 5
      %v6612 = vsel %vm1062, %v6610, %v6611
      %v6613 = vrot.slane %v6477, 5
      %v6614 = vrot.slane %v6613, 4
      %v6615 = vrot.slane %v6478, 5
      %v6616 = vsel %vm1062, %v6614, %v6615
      %v6617 = vrot.slane %v6615, 4
      %v6618 = vrot.slane %v6479, 5
      %v6619 = vsel %vm1062, %v6617, %v6618
      %v6620 = vrot.slane %v6480, 5
      %v6621 = vrot.slane %v6620, 4
      %v6622 = vrot.slane %v6481, 5
      %v6623 = vsel %vm1062, %v6621, %v6622
      %v6624 = vrot.slane %v6622, 4
      %v6625 = vrot.slane %v6482, 5
      %v6626 = vsel %vm1062, %v6624, %v6625
      %v6627 = vrot.slane %v6483, 5
      %v6628 = vrot.slane %v6627, 4
      %v6629 = vrot.slane %v6484, 5
      %v6630 = vsel %vm1062, %v6628, %v6629
      %v6631 = vrot.slane %v6629, 4
      %v6632 = vrot.slane %v6485, 5
      %v6633 = vsel %vm1062, %v6631, %v6632
      %v6634 = vrot.slane %v6486, 5
      %v6635 = vrot.slane %v6634, 4
      %v6636 = vrot.slane %v6487, 5
      %v6637 = vsel %vm1062, %v6635, %v6636
      %v6638 = vrot.slane %v6636, 4
      %v6639 = vrot.slane %v6488, 5
      %v6640 = vsel %vm1062, %v6638, %v6639
      %v6641 = vrot.slane %v6489, 5
      %v6642 = vrot.slane %v6641, 4
      %v6643 = vrot.slane %v6490, 5
      %v6644 = vsel %vm1062, %v6642, %v6643
      %v6645 = vrot.slane %v6643, 4
      %v6646 = vrot.slane %v6491, 5
      %v6647 = vsel %vm1062, %v6645, %v6646
      %v6648 = vrot.slane %v6492, 5
      %v6649 = vrot.slane %v6648, 4
      %v6650 = vrot.slane %v6493, 5
      %v6651 = vsel %vm1062, %v6649, %v6650
      %v6652 = vrot.slane %v6650, 4
      %v6653 = vrot.slane %v6494, 5
      %v6654 = vsel %vm1062, %v6652, %v6653
      %6687 = vst [vmem:[#allocation4 + $0x8] sm:$0xf] %v6546
      %6688 = vst [vmem:[#allocation4 + $0x2c] sm:$0xf] %v6549
      %6689 = vst [vmem:[#allocation4 + $0x50] sm:$0xf] %v6553
      %6690 = vst [vmem:[#allocation4 + $0x74] sm:$0xf] %v6556
      %6691 = vst [vmem:[#allocation4 + $0x98] sm:$0xf] %v6560
      %6692 = vst [vmem:[#allocation4 + $0xbc] sm:$0xf] %v6563
      %6693 = vst [vmem:[#allocation4 + $0xe0] sm:$0xf] %v6567
      %6694 = vst [vmem:[#allocation4 + $0x104] sm:$0xf] %v6570
      %6695 = vst [vmem:[#allocation4 + $0x128] sm:$0xf] %v6574
      %6696 = vst [vmem:[#allocation4 + $0x14c] sm:$0xf] %v6577
      %6697 = vst [vmem:[#allocation4 + $0x170] sm:$0xf] %v6581
      %6698 = vst [vmem:[#allocation4 + $0x194] sm:$0xf] %v6584
      %6699 = vst [vmem:[#allocation4 + $0x1b8] sm:$0xf] %v6588
      %6700 = vst [vmem:[#allocation4 + $0x1dc] sm:$0xf] %v6591
      %6701 = vst [vmem:[#allocation4 + $0x200] sm:$0xf] %v6595
      %6702 = vst [vmem:[#allocation4 + $0x224] sm:$0xf] %v6598
      %6703 = vst [vmem:[#allocation4 + $0x248] sm:$0xf] %v6602
      %6704 = vst [vmem:[#allocation4 + $0x26c] sm:$0xf] %v6605
      %6705 = vst [vmem:[#allocation4 + $0x290] sm:$0xf] %v6609
      %6706 = vst [vmem:[#allocation4 + $0x2b4] sm:$0xf] %v6612
      %6707 = vst [vmem:[#allocation4 + $0x2d8] sm:$0xf] %v6616
      %6708 = vst [vmem:[#allocation4 + $0x2fc] sm:$0xf] %v6619
      %6709 = vst [vmem:[#allocation4 + $0x320] sm:$0xf] %v6623
      %6710 = vst [vmem:[#allocation4 + $0x344] sm:$0xf] %v6626
      %6711 = vst [vmem:[#allocation4 + $0x368] sm:$0xf] %v6630
      %6712 = vst [vmem:[#allocation4 + $0x38c] sm:$0xf] %v6633
      %6713 = vst [vmem:[#allocation4 + $0x3b0] sm:$0xf] %v6637
      %6714 = vst [vmem:[#allocation4 + $0x3d4] sm:$0xf] %v6640
      %6715 = vst [vmem:[#allocation4 + $0x3f8] sm:$0xf] %v6644
      %6716 = vst [vmem:[#allocation4 + $0x41c] sm:$0xf] %v6647
      %6717 = vst [vmem:[#allocation4 + $0x440] sm:$0xf] %v6651
      %6718 = vst [vmem:[#allocation4 + $0x464] sm:$0xf] %v6654
      %v6719 = vld [vmem:[%s5774] sm:$0xf]
      %v6720 = vld [vmem:[%s5774 + $0x4] sm:$0xf]
      %v6721 = vld [vmem:[%s5774 + $0xc] sm:$0xf]
      %v6722 = vld [vmem:[%s5774 + $0x10] sm:$0xf]
      %v6723 = vld [vmem:[%s5774 + $0x18] sm:$0xf]
      %v6724 = vld [vmem:[%s5774 + $0x1c] sm:$0xf]
      %v6725 = vld [vmem:[%s5774 + $0x24] sm:$0xf]
      %v6726 = vld [vmem:[%s5774 + $0x28] sm:$0xf]
      %v6727 = vld [vmem:[%s5774 + $0x30] sm:$0xf]
      %v6728 = vld [vmem:[%s5774 + $0x34] sm:$0xf]
      %v6729 = vld [vmem:[%s5774 + $0x3c] sm:$0xf]
      %v6730 = vld [vmem:[%s5774 + $0x40] sm:$0xf]
      %v6731 = vld [vmem:[%s5774 + $0x48] sm:$0xf]
      %v6732 = vld [vmem:[%s5774 + $0x4c] sm:$0xf]
      %v6733 = vld [vmem:[%s5774 + $0x54] sm:$0xf]
      %v6734 = vld [vmem:[%s5774 + $0x58] sm:$0xf]
      %v6735 = vld [vmem:[%s5774 + $0x60] sm:$0xf]
      %v6736 = vld [vmem:[%s5774 + $0x64] sm:$0xf]
      %v6737 = vld [vmem:[%s5774 + $0x6c] sm:$0xf]
      %v6738 = vld [vmem:[%s5774 + $0x70] sm:$0xf]
      %v6739 = vld [vmem:[%s5774 + $0x78] sm:$0xf]
      %v6740 = vld [vmem:[%s5774 + $0x7c] sm:$0xf]
      %v6741 = vld [vmem:[%s5774 + $0x84] sm:$0xf]
      %v6742 = vld [vmem:[%s5774 + $0x88] sm:$0xf]
      %v6743 = vld [vmem:[%s5774 + $0x90] sm:$0xf]
      %v6744 = vld [vmem:[%s5774 + $0x94] sm:$0xf]
      %v6745 = vld [vmem:[%s5774 + $0x9c] sm:$0xf]
      %v6746 = vld [vmem:[%s5774 + $0xa0] sm:$0xf]
      %v6747 = vld [vmem:[%s5774 + $0xa8] sm:$0xf]
      %v6748 = vld [vmem:[%s5774 + $0xac] sm:$0xf]
      %v6749 = vld [vmem:[%s5774 + $0xb4] sm:$0xf]
      %v6750 = vld [vmem:[%s5774 + $0xb8] sm:$0xf]
      %6751 = vst [vmem:[#allocation4 + $0xc] sm:$0xf] %v6719
      %6752 = vst [vmem:[#allocation4 + $0x30] sm:$0xf] %v6720
      %6753 = vst [vmem:[#allocation4 + $0x54] sm:$0xf] %v6721
      %6754 = vst [vmem:[#allocation4 + $0x78] sm:$0xf] %v6722
      %6755 = vst [vmem:[#allocation4 + $0x9c] sm:$0xf] %v6723
      %6756 = vst [vmem:[#allocation4 + $0xc0] sm:$0xf] %v6724
      %6757 = vst [vmem:[#allocation4 + $0xe4] sm:$0xf] %v6725
      %6758 = vst [vmem:[#allocation4 + $0x108] sm:$0xf] %v6726
      %6759 = vst [vmem:[#allocation4 + $0x12c] sm:$0xf] %v6727
      %6760 = vst [vmem:[#allocation4 + $0x150] sm:$0xf] %v6728
      %6761 = vst [vmem:[#allocation4 + $0x174] sm:$0xf] %v6729
      %6762 = vst [vmem:[#allocation4 + $0x198] sm:$0xf] %v6730
      %6763 = vst [vmem:[#allocation4 + $0x1bc] sm:$0xf] %v6731
      %6764 = vst [vmem:[#allocation4 + $0x1e0] sm:$0xf] %v6732
      %6765 = vst [vmem:[#allocation4 + $0x204] sm:$0xf] %v6733
      %6766 = vst [vmem:[#allocation4 + $0x228] sm:$0xf] %v6734
      %6767 = vst [vmem:[#allocation4 + $0x24c] sm:$0xf] %v6735
      %6768 = vst [vmem:[#allocation4 + $0x270] sm:$0xf] %v6736
      %6769 = vst [vmem:[#allocation4 + $0x294] sm:$0xf] %v6737
      %6770 = vst [vmem:[#allocation4 + $0x2b8] sm:$0xf] %v6738
      %6771 = vst [vmem:[#allocation4 + $0x2dc] sm:$0xf] %v6739
      %6772 = vst [vmem:[#allocation4 + $0x300] sm:$0xf] %v6740
      %6773 = vst [vmem:[#allocation4 + $0x324] sm:$0xf] %v6741
      %6774 = vst [vmem:[#allocation4 + $0x348] sm:$0xf] %v6742
      %6775 = vst [vmem:[#allocation4 + $0x36c] sm:$0xf] %v6743
      %6776 = vst [vmem:[#allocation4 + $0x390] sm:$0xf] %v6744
      %6777 = vst [vmem:[#allocation4 + $0x3b4] sm:$0xf] %v6745
      %6778 = vst [vmem:[#allocation4 + $0x3d8] sm:$0xf] %v6746
      %6779 = vst [vmem:[#allocation4 + $0x3fc] sm:$0xf] %v6747
      %6780 = vst [vmem:[#allocation4 + $0x420] sm:$0xf] %v6748
      %6781 = vst [vmem:[#allocation4 + $0x444] sm:$0xf] %v6749
      %6782 = vst [vmem:[#allocation4 + $0x468] sm:$0xf] %v6750
      %v6783 = vld [vmem:[%s5774] sm:$0xf]
      %v6784 = vld [vmem:[%s5774 + $0x4] sm:$0xf]
      %v6785 = vld [vmem:[%s5774 + $0x8] sm:$0x1]
      %v6786 = vld [vmem:[%s5774 + $0xc] sm:$0xf]
      %v6787 = vld [vmem:[%s5774 + $0x10] sm:$0xf]
      %v6788 = vld [vmem:[%s5774 + $0x14] sm:$0x1]
      %v6789 = vld [vmem:[%s5774 + $0x18] sm:$0xf]
      %v6790 = vld [vmem:[%s5774 + $0x1c] sm:$0xf]
      %v6791 = vld [vmem:[%s5774 + $0x20] sm:$0x1]
      %v6792 = vld [vmem:[%s5774 + $0x24] sm:$0xf]
      %v6793 = vld [vmem:[%s5774 + $0x28] sm:$0xf]
      %v6794 = vld [vmem:[%s5774 + $0x2c] sm:$0x1]
      %v6795 = vld [vmem:[%s5774 + $0x30] sm:$0xf]
      %v6796 = vld [vmem:[%s5774 + $0x34] sm:$0xf]
      %v6797 = vld [vmem:[%s5774 + $0x38] sm:$0x1]
      %v6798 = vld [vmem:[%s5774 + $0x3c] sm:$0xf]
      %v6799 = vld [vmem:[%s5774 + $0x40] sm:$0xf]
      %v6800 = vld [vmem:[%s5774 + $0x44] sm:$0x1]
      %v6801 = vld [vmem:[%s5774 + $0x48] sm:$0xf]
      %v6802 = vld [vmem:[%s5774 + $0x4c] sm:$0xf]
      %v6803 = vld [vmem:[%s5774 + $0x50] sm:$0x1]
      %v6804 = vld [vmem:[%s5774 + $0x54] sm:$0xf]
      %v6805 = vld [vmem:[%s5774 + $0x58] sm:$0xf]
      %v6806 = vld [vmem:[%s5774 + $0x5c] sm:$0x1]
      %v6807 = vld [vmem:[%s5774 + $0x60] sm:$0xf]
      %v6808 = vld [vmem:[%s5774 + $0x64] sm:$0xf]
      %v6809 = vld [vmem:[%s5774 + $0x68] sm:$0x1]
      %v6810 = vld [vmem:[%s5774 + $0x6c] sm:$0xf]
      %v6811 = vld [vmem:[%s5774 + $0x70] sm:$0xf]
      %v6812 = vld [vmem:[%s5774 + $0x74] sm:$0x1]
      %v6813 = vld [vmem:[%s5774 + $0x78] sm:$0xf]
      %v6814 = vld [vmem:[%s5774 + $0x7c] sm:$0xf]
      %v6815 = vld [vmem:[%s5774 + $0x80] sm:$0x1]
      %v6816 = vld [vmem:[%s5774 + $0x84] sm:$0xf]
      %v6817 = vld [vmem:[%s5774 + $0x88] sm:$0xf]
      %v6818 = vld [vmem:[%s5774 + $0x8c] sm:$0x1]
      %v6819 = vld [vmem:[%s5774 + $0x90] sm:$0xf]
      %v6820 = vld [vmem:[%s5774 + $0x94] sm:$0xf]
      %v6821 = vld [vmem:[%s5774 + $0x98] sm:$0x1]
      %v6822 = vld [vmem:[%s5774 + $0x9c] sm:$0xf]
      %v6823 = vld [vmem:[%s5774 + $0xa0] sm:$0xf]
      %v6824 = vld [vmem:[%s5774 + $0xa4] sm:$0x1]
      %v6825 = vld [vmem:[%s5774 + $0xa8] sm:$0xf]
      %v6826 = vld [vmem:[%s5774 + $0xac] sm:$0xf]
      %v6827 = vld [vmem:[%s5774 + $0xb0] sm:$0x1]
      %v6828 = vld [vmem:[%s5774 + $0xb4] sm:$0xf]
      %v6829 = vld [vmem:[%s5774 + $0xb8] sm:$0xf]
      %v6830 = vld [vmem:[%s5774 + $0xbc] sm:$0x1]
      %v6832 = vshrl.u32 %v6783, 16
      %v6834 = vrot.slane %v6832, 4
      %v6835 = vshll.u32 %v6783, 16
      %v6837 = vrot.slane %v6835, 5
      %v6838 = vor.u32 %v6834, %v6837
      %v6839 = vrot.slane %v6838, 4
      %v6841 = vshll.u32 %v6784, 16
      %v6843 = vrot.slane %v6841, 5
      %v6844 = vsel %vm515, %v6839, %v6843
      %v6845 = vshrl.u32 %v6784, 16
      %v6847 = vrot.slane %v6845, 4
      %v6848 = vor.u32 %v6847, %v6843
      %v6849 = vrot.slane %v6848, 4
      %v6851 = vshll.u32 %v6785, 16
      %v6853 = vrot.slane %v6851, 5
      %v6854 = vsel %vm515, %v6849, %v6853
      %v6856 = vshrl.u32 %v6786, 16
      %v6858 = vrot.slane %v6856, 4
      %v6859 = vshll.u32 %v6786, 16
      %v6861 = vrot.slane %v6859, 5
      %v6862 = vor.u32 %v6858, %v6861
      %v6863 = vrot.slane %v6862, 4
      %v6865 = vshll.u32 %v6787, 16
      %v6867 = vrot.slane %v6865, 5
      %v6868 = vsel %vm515, %v6863, %v6867
      %v6869 = vshrl.u32 %v6787, 16
      %v6871 = vrot.slane %v6869, 4
      %v6872 = vor.u32 %v6871, %v6867
      %v6873 = vrot.slane %v6872, 4
      %v6875 = vshll.u32 %v6788, 16
      %v6877 = vrot.slane %v6875, 5
      %v6878 = vsel %vm515, %v6873, %v6877
      %v6880 = vshrl.u32 %v6789, 16
      %v6882 = vrot.slane %v6880, 4
      %v6883 = vshll.u32 %v6789, 16
      %v6885 = vrot.slane %v6883, 5
      %v6886 = vor.u32 %v6882, %v6885
      %v6887 = vrot.slane %v6886, 4
      %v6889 = vshll.u32 %v6790, 16
      %v6891 = vrot.slane %v6889, 5
      %v6892 = vsel %vm515, %v6887, %v6891
      %v6893 = vshrl.u32 %v6790, 16
      %v6895 = vrot.slane %v6893, 4
      %v6896 = vor.u32 %v6895, %v6891
      %v6897 = vrot.slane %v6896, 4
      %v6899 = vshll.u32 %v6791, 16
      %v6901 = vrot.slane %v6899, 5
      %v6902 = vsel %vm515, %v6897, %v6901
      %v6904 = vshrl.u32 %v6792, 16
      %v6906 = vrot.slane %v6904, 4
      %v6907 = vshll.u32 %v6792, 16
      %v6909 = vrot.slane %v6907, 5
      %v6910 = vor.u32 %v6906, %v6909
      %v6911 = vrot.slane %v6910, 4
      %v6913 = vshll.u32 %v6793, 16
      %v6915 = vrot.slane %v6913, 5
      %v6916 = vsel %vm515, %v6911, %v6915
      %v6917 = vshrl.u32 %v6793, 16
      %v6919 = vrot.slane %v6917, 4
      %v6920 = vor.u32 %v6919, %v6915
      %v6921 = vrot.slane %v6920, 4
      %v6923 = vshll.u32 %v6794, 16
      %v6925 = vrot.slane %v6923, 5
      %v6926 = vsel %vm515, %v6921, %v6925
      %v6928 = vshrl.u32 %v6795, 16
      %v6930 = vrot.slane %v6928, 4
      %v6931 = vshll.u32 %v6795, 16
      %v6933 = vrot.slane %v6931, 5
      %v6934 = vor.u32 %v6930, %v6933
      %v6935 = vrot.slane %v6934, 4
      %v6937 = vshll.u32 %v6796, 16
      %v6939 = vrot.slane %v6937, 5
      %v6940 = vsel %vm515, %v6935, %v6939
      %v6941 = vshrl.u32 %v6796, 16
      %v6943 = vrot.slane %v6941, 4
      %v6944 = vor.u32 %v6943, %v6939
      %v6945 = vrot.slane %v6944, 4
      %v6947 = vshll.u32 %v6797, 16
      %v6949 = vrot.slane %v6947, 5
      %v6950 = vsel %vm515, %v6945, %v6949
      %v6952 = vshrl.u32 %v6798, 16
      %v6954 = vrot.slane %v6952, 4
      %v6955 = vshll.u32 %v6798, 16
      %v6957 = vrot.slane %v6955, 5
      %v6958 = vor.u32 %v6954, %v6957
      %v6959 = vrot.slane %v6958, 4
      %v6961 = vshll.u32 %v6799, 16
      %v6963 = vrot.slane %v6961, 5
      %v6964 = vsel %vm515, %v6959, %v6963
      %v6965 = vshrl.u32 %v6799, 16
      %v6967 = vrot.slane %v6965, 4
      %v6968 = vor.u32 %v6967, %v6963
      %v6969 = vrot.slane %v6968, 4
      %v6971 = vshll.u32 %v6800, 16
      %v6973 = vrot.slane %v6971, 5
      %v6974 = vsel %vm515, %v6969, %v6973
      %v6976 = vshrl.u32 %v6801, 16
      %v6978 = vrot.slane %v6976, 4
      %v6979 = vshll.u32 %v6801, 16
      %v6981 = vrot.slane %v6979, 5
      %v6982 = vor.u32 %v6978, %v6981
      %v6983 = vrot.slane %v6982, 4
      %v6985 = vshll.u32 %v6802, 16
      %v6987 = vrot.slane %v6985, 5
      %v6988 = vsel %vm515, %v6983, %v6987
      %v6989 = vshrl.u32 %v6802, 16
      %v6991 = vrot.slane %v6989, 4
      %v6992 = vor.u32 %v6991, %v6987
      %v6993 = vrot.slane %v6992, 4
      %v6995 = vshll.u32 %v6803, 16
      %v6997 = vrot.slane %v6995, 5
      %v6998 = vsel %vm515, %v6993, %v6997
      %v7000 = vshrl.u32 %v6804, 16
      %v7002 = vrot.slane %v7000, 4
      %v7003 = vshll.u32 %v6804, 16
      %v7005 = vrot.slane %v7003, 5
      %v7006 = vor.u32 %v7002, %v7005
      %v7007 = vrot.slane %v7006, 4
      %v7009 = vshll.u32 %v6805, 16
      %v7011 = vrot.slane %v7009, 5
      %v7012 = vsel %vm515, %v7007, %v7011
      %v7013 = vshrl.u32 %v6805, 16
      %v7015 = vrot.slane %v7013, 4
      %v7016 = vor.u32 %v7015, %v7011
      %v7017 = vrot.slane %v7016, 4
      %v7019 = vshll.u32 %v6806, 16
      %v7021 = vrot.slane %v7019, 5
      %v7022 = vsel %vm515, %v7017, %v7021
      %v7024 = vshrl.u32 %v6807, 16
      %v7026 = vrot.slane %v7024, 4
      %v7027 = vshll.u32 %v6807, 16
      %v7029 = vrot.slane %v7027, 5
      %v7030 = vor.u32 %v7026, %v7029
      %v7031 = vrot.slane %v7030, 4
      %v7033 = vshll.u32 %v6808, 16
      %v7035 = vrot.slane %v7033, 5
      %v7036 = vsel %vm515, %v7031, %v7035
      %v7037 = vshrl.u32 %v6808, 16
      %v7039 = vrot.slane %v7037, 4
      %v7040 = vor.u32 %v7039, %v7035
      %v7041 = vrot.slane %v7040, 4
      %v7043 = vshll.u32 %v6809, 16
      %v7045 = vrot.slane %v7043, 5
      %v7046 = vsel %vm515, %v7041, %v7045
      %v7048 = vshrl.u32 %v6810, 16
      %v7050 = vrot.slane %v7048, 4
      %v7051 = vshll.u32 %v6810, 16
      %v7053 = vrot.slane %v7051, 5
      %v7054 = vor.u32 %v7050, %v7053
      %v7055 = vrot.slane %v7054, 4
      %v7057 = vshll.u32 %v6811, 16
      %v7059 = vrot.slane %v7057, 5
      %v7060 = vsel %vm515, %v7055, %v7059
      %v7061 = vshrl.u32 %v6811, 16
      %v7063 = vrot.slane %v7061, 4
      %v7064 = vor.u32 %v7063, %v7059
      %v7065 = vrot.slane %v7064, 4
      %v7067 = vshll.u32 %v6812, 16
      %v7069 = vrot.slane %v7067, 5
      %v7070 = vsel %vm515, %v7065, %v7069
      %v7072 = vshrl.u32 %v6813, 16
      %v7074 = vrot.slane %v7072, 4
      %v7075 = vshll.u32 %v6813, 16
      %v7077 = vrot.slane %v7075, 5
      %v7078 = vor.u32 %v7074, %v7077
      %v7079 = vrot.slane %v7078, 4
      %v7081 = vshll.u32 %v6814, 16
      %v7083 = vrot.slane %v7081, 5
      %v7084 = vsel %vm515, %v7079, %v7083
      %v7085 = vshrl.u32 %v6814, 16
      %v7087 = vrot.slane %v7085, 4
      %v7088 = vor.u32 %v7087, %v7083
      %v7089 = vrot.slane %v7088, 4
      %v7091 = vshll.u32 %v6815, 16
      %v7093 = vrot.slane %v7091, 5
      %v7094 = vsel %vm515, %v7089, %v7093
      %v7096 = vshrl.u32 %v6816, 16
      %v7098 = vrot.slane %v7096, 4
      %v7099 = vshll.u32 %v6816, 16
      %v7101 = vrot.slane %v7099, 5
      %v7102 = vor.u32 %v7098, %v7101
      %v7103 = vrot.slane %v7102, 4
      %v7105 = vshll.u32 %v6817, 16
      %v7107 = vrot.slane %v7105, 5
      %v7108 = vsel %vm515, %v7103, %v7107
      %v7109 = vshrl.u32 %v6817, 16
      %v7111 = vrot.slane %v7109, 4
      %v7112 = vor.u32 %v7111, %v7107
      %v7113 = vrot.slane %v7112, 4
      %v7115 = vshll.u32 %v6818, 16
      %v7117 = vrot.slane %v7115, 5
      %v7118 = vsel %vm515, %v7113, %v7117
      %v7120 = vshrl.u32 %v6819, 16
      %v7122 = vrot.slane %v7120, 4
      %v7123 = vshll.u32 %v6819, 16
      %v7125 = vrot.slane %v7123, 5
      %v7126 = vor.u32 %v7122, %v7125
      %v7127 = vrot.slane %v7126, 4
      %v7129 = vshll.u32 %v6820, 16
      %v7131 = vrot.slane %v7129, 5
      %v7132 = vsel %vm515, %v7127, %v7131
      %v7133 = vshrl.u32 %v6820, 16
      %v7135 = vrot.slane %v7133, 4
      %v7136 = vor.u32 %v7135, %v7131
      %v7137 = vrot.slane %v7136, 4
      %v7139 = vshll.u32 %v6821, 16
      %v7141 = vrot.slane %v7139, 5
      %v7142 = vsel %vm515, %v7137, %v7141
      %v7144 = vshrl.u32 %v6822, 16
      %v7146 = vrot.slane %v7144, 4
      %v7147 = vshll.u32 %v6822, 16
      %v7149 = vrot.slane %v7147, 5
      %v7150 = vor.u32 %v7146, %v7149
      %v7151 = vrot.slane %v7150, 4
      %v7153 = vshll.u32 %v6823, 16
      %v7155 = vrot.slane %v7153, 5
      %v7156 = vsel %vm515, %v7151, %v7155
      %v7157 = vshrl.u32 %v6823, 16
      %v7159 = vrot.slane %v7157, 4
      %v7160 = vor.u32 %v7159, %v7155
      %v7161 = vrot.slane %v7160, 4
      %v7163 = vshll.u32 %v6824, 16
      %v7165 = vrot.slane %v7163, 5
      %v7166 = vsel %vm515, %v7161, %v7165
      %v7168 = vshrl.u32 %v6825, 16
      %v7170 = vrot.slane %v7168, 4
      %v7171 = vshll.u32 %v6825, 16
      %v7173 = vrot.slane %v7171, 5
      %v7174 = vor.u32 %v7170, %v7173
      %v7175 = vrot.slane %v7174, 4
      %v7177 = vshll.u32 %v6826, 16
      %v7179 = vrot.slane %v7177, 5
      %v7180 = vsel %vm515, %v7175, %v7179
      %v7181 = vshrl.u32 %v6826, 16
      %v7183 = vrot.slane %v7181, 4
      %v7184 = vor.u32 %v7183, %v7179
      %v7185 = vrot.slane %v7184, 4
      %v7187 = vshll.u32 %v6827, 16
      %v7189 = vrot.slane %v7187, 5
      %v7190 = vsel %vm515, %v7185, %v7189
      %v7192 = vshrl.u32 %v6828, 16
      %v7194 = vrot.slane %v7192, 4
      %v7195 = vshll.u32 %v6828, 16
      %v7197 = vrot.slane %v7195, 5
      %v7198 = vor.u32 %v7194, %v7197
      %v7199 = vrot.slane %v7198, 4
      %v7201 = vshll.u32 %v6829, 16
      %v7203 = vrot.slane %v7201, 5
      %v7204 = vsel %vm515, %v7199, %v7203
      %v7205 = vshrl.u32 %v6829, 16
      %v7207 = vrot.slane %v7205, 4
      %v7208 = vor.u32 %v7207, %v7203
      %v7209 = vrot.slane %v7208, 4
      %v7211 = vshll.u32 %v6830, 16
      %v7213 = vrot.slane %v7211, 5
      %v7214 = vsel %vm515, %v7209, %v7213
      %7247 = vst [vmem:[#allocation4 + $0x10] sm:$0xf] %v6844
      %7248 = vst [vmem:[#allocation4 + $0x34] sm:$0xf] %v6854
      %7249 = vst [vmem:[#allocation4 + $0x58] sm:$0xf] %v6868
      %7250 = vst [vmem:[#allocation4 + $0x7c] sm:$0xf] %v6878
      %7251 = vst [vmem:[#allocation4 + $0xa0] sm:$0xf] %v6892
      %7252 = vst [vmem:[#allocation4 + $0xc4] sm:$0xf] %v6902
      %7253 = vst [vmem:[#allocation4 + $0xe8] sm:$0xf] %v6916
      %7254 = vst [vmem:[#allocation4 + $0x10c] sm:$0xf] %v6926
      %7255 = vst [vmem:[#allocation4 + $0x130] sm:$0xf] %v6940
      %7256 = vst [vmem:[#allocation4 + $0x154] sm:$0xf] %v6950
      %7257 = vst [vmem:[#allocation4 + $0x178] sm:$0xf] %v6964
      %7258 = vst [vmem:[#allocation4 + $0x19c] sm:$0xf] %v6974
      %7259 = vst [vmem:[#allocation4 + $0x1c0] sm:$0xf] %v6988
      %7260 = vst [vmem:[#allocation4 + $0x1e4] sm:$0xf] %v6998
      %7261 = vst [vmem:[#allocation4 + $0x208] sm:$0xf] %v7012
      %7262 = vst [vmem:[#allocation4 + $0x22c] sm:$0xf] %v7022
      %7263 = vst [vmem:[#allocation4 + $0x250] sm:$0xf] %v7036
      %7264 = vst [vmem:[#allocation4 + $0x274] sm:$0xf] %v7046
      %7265 = vst [vmem:[#allocation4 + $0x298] sm:$0xf] %v7060
      %7266 = vst [vmem:[#allocation4 + $0x2bc] sm:$0xf] %v7070
      %7267 = vst [vmem:[#allocation4 + $0x2e0] sm:$0xf] %v7084
      %7268 = vst [vmem:[#allocation4 + $0x304] sm:$0xf] %v7094
      %7269 = vst [vmem:[#allocation4 + $0x328] sm:$0xf] %v7108
      %7270 = vst [vmem:[#allocation4 + $0x34c] sm:$0xf] %v7118
      %7271 = vst [vmem:[#allocation4 + $0x370] sm:$0xf] %v7132
      %7272 = vst [vmem:[#allocation4 + $0x394] sm:$0xf] %v7142
      %7273 = vst [vmem:[#allocation4 + $0x3b8] sm:$0xf] %v7156
      %7274 = vst [vmem:[#allocation4 + $0x3dc] sm:$0xf] %v7166
      %7275 = vst [vmem:[#allocation4 + $0x400] sm:$0xf] %v7180
      %7276 = vst [vmem:[#allocation4 + $0x424] sm:$0xf] %v7190
      %7277 = vst [vmem:[#allocation4 + $0x448] sm:$0xf] %v7204
      %7278 = vst [vmem:[#allocation4 + $0x46c] sm:$0xf] %v7214
      %v7279 = vld [vmem:[%s5774] sm:$0xe]
      %v7280 = vld [vmem:[%s5774 + $0x4] sm:$0xf]
      %v7281 = vld [vmem:[%s5774 + $0x8] sm:$0x1]
      %v7282 = vld [vmem:[%s5774 + $0xc] sm:$0xe]
      %v7283 = vld [vmem:[%s5774 + $0x10] sm:$0xf]
      %v7284 = vld [vmem:[%s5774 + $0x14] sm:$0x1]
      %v7285 = vld [vmem:[%s5774 + $0x18] sm:$0xe]
      %v7286 = vld [vmem:[%s5774 + $0x1c] sm:$0xf]
      %v7287 = vld [vmem:[%s5774 + $0x20] sm:$0x1]
      %v7288 = vld [vmem:[%s5774 + $0x24] sm:$0xe]
      %v7289 = vld [vmem:[%s5774 + $0x28] sm:$0xf]
      %v7290 = vld [vmem:[%s5774 + $0x2c] sm:$0x1]
      %v7291 = vld [vmem:[%s5774 + $0x30] sm:$0xe]
      %v7292 = vld [vmem:[%s5774 + $0x34] sm:$0xf]
      %v7293 = vld [vmem:[%s5774 + $0x38] sm:$0x1]
      %v7294 = vld [vmem:[%s5774 + $0x3c] sm:$0xe]
      %v7295 = vld [vmem:[%s5774 + $0x40] sm:$0xf]
      %v7296 = vld [vmem:[%s5774 + $0x44] sm:$0x1]
      %v7297 = vld [vmem:[%s5774 + $0x48] sm:$0xe]
      %v7298 = vld [vmem:[%s5774 + $0x4c] sm:$0xf]
      %v7299 = vld [vmem:[%s5774 + $0x50] sm:$0x1]
      %v7300 = vld [vmem:[%s5774 + $0x54] sm:$0xe]
      %v7301 = vld [vmem:[%s5774 + $0x58] sm:$0xf]
      %v7302 = vld [vmem:[%s5774 + $0x5c] sm:$0x1]
      %v7303 = vld [vmem:[%s5774 + $0x60] sm:$0xe]
      %v7304 = vld [vmem:[%s5774 + $0x64] sm:$0xf]
      %v7305 = vld [vmem:[%s5774 + $0x68] sm:$0x1]
      %v7306 = vld [vmem:[%s5774 + $0x6c] sm:$0xe]
      %v7307 = vld [vmem:[%s5774 + $0x70] sm:$0xf]
      %v7308 = vld [vmem:[%s5774 + $0x74] sm:$0x1]
      %v7309 = vld [vmem:[%s5774 + $0x78] sm:$0xe]
      %v7310 = vld [vmem:[%s5774 + $0x7c] sm:$0xf]
      %v7311 = vld [vmem:[%s5774 + $0x80] sm:$0x1]
      %v7312 = vld [vmem:[%s5774 + $0x84] sm:$0xe]
      %v7313 = vld [vmem:[%s5774 + $0x88] sm:$0xf]
      %v7314 = vld [vmem:[%s5774 + $0x8c] sm:$0x1]
      %v7315 = vld [vmem:[%s5774 + $0x90] sm:$0xe]
      %v7316 = vld [vmem:[%s5774 + $0x94] sm:$0xf]
      %v7317 = vld [vmem:[%s5774 + $0x98] sm:$0x1]
      %v7318 = vld [vmem:[%s5774 + $0x9c] sm:$0xe]
      %v7319 = vld [vmem:[%s5774 + $0xa0] sm:$0xf]
      %v7320 = vld [vmem:[%s5774 + $0xa4] sm:$0x1]
      %v7321 = vld [vmem:[%s5774 + $0xa8] sm:$0xe]
      %v7322 = vld [vmem:[%s5774 + $0xac] sm:$0xf]
      %v7323 = vld [vmem:[%s5774 + $0xb0] sm:$0x1]
      %v7324 = vld [vmem:[%s5774 + $0xb4] sm:$0xe]
      %v7325 = vld [vmem:[%s5774 + $0xb8] sm:$0xf]
      %v7326 = vld [vmem:[%s5774 + $0xbc] sm:$0x1]
      %v7375 = vrot.slane %v7279, 5
      %v7376 = vrot.slane %v7375, 4
      %v7377 = vrot.slane %v7280, 5
      %v7378 = vsel %vm1062, %v7376, %v7377
      %v7379 = vrot.slane %v7377, 4
      %v7380 = vrot.slane %v7281, 5
      %v7381 = vsel %vm1062, %v7379, %v7380
      %v7382 = vrot.slane %v7282, 5
      %v7383 = vrot.slane %v7382, 4
      %v7384 = vrot.slane %v7283, 5
      %v7385 = vsel %vm1062, %v7383, %v7384
      %v7386 = vrot.slane %v7384, 4
      %v7387 = vrot.slane %v7284, 5
      %v7388 = vsel %vm1062, %v7386, %v7387
      %v7389 = vrot.slane %v7285, 5
      %v7390 = vrot.slane %v7389, 4
      %v7391 = vrot.slane %v7286, 5
      %v7392 = vsel %vm1062, %v7390, %v7391
      %v7393 = vrot.slane %v7391, 4
      %v7394 = vrot.slane %v7287, 5
      %v7395 = vsel %vm1062, %v7393, %v7394
      %v7396 = vrot.slane %v7288, 5
      %v7397 = vrot.slane %v7396, 4
      %v7398 = vrot.slane %v7289, 5
      %v7399 = vsel %vm1062, %v7397, %v7398
      %v7400 = vrot.slane %v7398, 4
      %v7401 = vrot.slane %v7290, 5
      %v7402 = vsel %vm1062, %v7400, %v7401
      %v7403 = vrot.slane %v7291, 5
      %v7404 = vrot.slane %v7403, 4
      %v7405 = vrot.slane %v7292, 5
      %v7406 = vsel %vm1062, %v7404, %v7405
      %v7407 = vrot.slane %v7405, 4
      %v7408 = vrot.slane %v7293, 5
      %v7409 = vsel %vm1062, %v7407, %v7408
      %v7410 = vrot.slane %v7294, 5
      %v7411 = vrot.slane %v7410, 4
      %v7412 = vrot.slane %v7295, 5
      %v7413 = vsel %vm1062, %v7411, %v7412
      %v7414 = vrot.slane %v7412, 4
      %v7415 = vrot.slane %v7296, 5
      %v7416 = vsel %vm1062, %v7414, %v7415
      %v7417 = vrot.slane %v7297, 5
      %v7418 = vrot.slane %v7417, 4
      %v7419 = vrot.slane %v7298, 5
      %v7420 = vsel %vm1062, %v7418, %v7419
      %v7421 = vrot.slane %v7419, 4
      %v7422 = vrot.slane %v7299, 5
      %v7423 = vsel %vm1062, %v7421, %v7422
      %v7424 = vrot.slane %v7300, 5
      %v7425 = vrot.slane %v7424, 4
      %v7426 = vrot.slane %v7301, 5
      %v7427 = vsel %vm1062, %v7425, %v7426
      %v7428 = vrot.slane %v7426, 4
      %v7429 = vrot.slane %v7302, 5
      %v7430 = vsel %vm1062, %v7428, %v7429
      %v7431 = vrot.slane %v7303, 5
      %v7432 = vrot.slane %v7431, 4
      %v7433 = vrot.slane %v7304, 5
      %v7434 = vsel %vm1062, %v7432, %v7433
      %v7435 = vrot.slane %v7433, 4
      %v7436 = vrot.slane %v7305, 5
      %v7437 = vsel %vm1062, %v7435, %v7436
      %v7438 = vrot.slane %v7306, 5
      %v7439 = vrot.slane %v7438, 4
      %v7440 = vrot.slane %v7307, 5
      %v7441 = vsel %vm1062, %v7439, %v7440
      %v7442 = vrot.slane %v7440, 4
      %v7443 = vrot.slane %v7308, 5
      %v7444 = vsel %vm1062, %v7442, %v7443
      %v7445 = vrot.slane %v7309, 5
      %v7446 = vrot.slane %v7445, 4
      %v7447 = vrot.slane %v7310, 5
      %v7448 = vsel %vm1062, %v7446, %v7447
      %v7449 = vrot.slane %v7447, 4
      %v7450 = vrot.slane %v7311, 5
      %v7451 = vsel %vm1062, %v7449, %v7450
      %v7452 = vrot.slane %v7312, 5
      %v7453 = vrot.slane %v7452, 4
      %v7454 = vrot.slane %v7313, 5
      %v7455 = vsel %vm1062, %v7453, %v7454
      %v7456 = vrot.slane %v7454, 4
      %v7457 = vrot.slane %v7314, 5
      %v7458 = vsel %vm1062, %v7456, %v7457
      %v7459 = vrot.slane %v7315, 5
      %v7460 = vrot.slane %v7459, 4
      %v7461 = vrot.slane %v7316, 5
      %v7462 = vsel %vm1062, %v7460, %v7461
      %v7463 = vrot.slane %v7461, 4
      %v7464 = vrot.slane %v7317, 5
      %v7465 = vsel %vm1062, %v7463, %v7464
      %v7466 = vrot.slane %v7318, 5
      %v7467 = vrot.slane %v7466, 4
      %v7468 = vrot.slane %v7319, 5
      %v7469 = vsel %vm1062, %v7467, %v7468
      %v7470 = vrot.slane %v7468, 4
      %v7471 = vrot.slane %v7320, 5
      %v7472 = vsel %vm1062, %v7470, %v7471
      %v7473 = vrot.slane %v7321, 5
      %v7474 = vrot.slane %v7473, 4
      %v7475 = vrot.slane %v7322, 5
      %v7476 = vsel %vm1062, %v7474, %v7475
      %v7477 = vrot.slane %v7475, 4
      %v7478 = vrot.slane %v7323, 5
      %v7479 = vsel %vm1062, %v7477, %v7478
      %v7480 = vrot.slane %v7324, 5
      %v7481 = vrot.slane %v7480, 4
      %v7482 = vrot.slane %v7325, 5
      %v7483 = vsel %vm1062, %v7481, %v7482
      %v7484 = vrot.slane %v7482, 4
      %v7485 = vrot.slane %v7326, 5
      %v7486 = vsel %vm1062, %v7484, %v7485
      %7519 = vst [vmem:[#allocation4 + $0x14] sm:$0xf] %v7378
      %7520 = vst [vmem:[#allocation4 + $0x38] sm:$0xf] %v7381
      %7521 = vst [vmem:[#allocation4 + $0x5c] sm:$0xf] %v7385
      %7522 = vst [vmem:[#allocation4 + $0x80] sm:$0xf] %v7388
      %7523 = vst [vmem:[#allocation4 + $0xa4] sm:$0xf] %v7392
      %7524 = vst [vmem:[#allocation4 + $0xc8] sm:$0xf] %v7395
      %7525 = vst [vmem:[#allocation4 + $0xec] sm:$0xf] %v7399
      %7526 = vst [vmem:[#allocation4 + $0x110] sm:$0xf] %v7402
      %7527 = vst [vmem:[#allocation4 + $0x134] sm:$0xf] %v7406
      %7528 = vst [vmem:[#allocation4 + $0x158] sm:$0xf] %v7409
      %7529 = vst [vmem:[#allocation4 + $0x17c] sm:$0xf] %v7413
      %7530 = vst [vmem:[#allocation4 + $0x1a0] sm:$0xf] %v7416
      %7531 = vst [vmem:[#allocation4 + $0x1c4] sm:$0xf] %v7420
      %7532 = vst [vmem:[#allocation4 + $0x1e8] sm:$0xf] %v7423
      %7533 = vst [vmem:[#allocation4 + $0x20c] sm:$0xf] %v7427
      %7534 = vst [vmem:[#allocation4 + $0x230] sm:$0xf] %v7430
      %7535 = vst [vmem:[#allocation4 + $0x254] sm:$0xf] %v7434
      %7536 = vst [vmem:[#allocation4 + $0x278] sm:$0xf] %v7437
      %7537 = vst [vmem:[#allocation4 + $0x29c] sm:$0xf] %v7441
      %7538 = vst [vmem:[#allocation4 + $0x2c0] sm:$0xf] %v7444
      %7539 = vst [vmem:[#allocation4 + $0x2e4] sm:$0xf] %v7448
      %7540 = vst [vmem:[#allocation4 + $0x308] sm:$0xf] %v7451
      %7541 = vst [vmem:[#allocation4 + $0x32c] sm:$0xf] %v7455
      %7542 = vst [vmem:[#allocation4 + $0x350] sm:$0xf] %v7458
      %7543 = vst [vmem:[#allocation4 + $0x374] sm:$0xf] %v7462
      %7544 = vst [vmem:[#allocation4 + $0x398] sm:$0xf] %v7465
      %7545 = vst [vmem:[#allocation4 + $0x3bc] sm:$0xf] %v7469
      %7546 = vst [vmem:[#allocation4 + $0x3e0] sm:$0xf] %v7472
      %7547 = vst [vmem:[#allocation4 + $0x404] sm:$0xf] %v7476
      %7548 = vst [vmem:[#allocation4 + $0x428] sm:$0xf] %v7479
      %7549 = vst [vmem:[#allocation4 + $0x44c] sm:$0xf] %v7483
      %7550 = vst [vmem:[#allocation4 + $0x470] sm:$0xf] %v7486
      %s7551 = scalar_lea.vmem [#allocation2], 24
      %v7552 = vld [vmem:[%s7551] sm:$0xf]
      %v7553 = vld [vmem:[%s7551 + $0x4] sm:$0xf]
      %v7554 = vld [vmem:[%s7551 + $0xc] sm:$0xf]
      %v7555 = vld [vmem:[%s7551 + $0x10] sm:$0xf]
      %v7556 = vld [vmem:[%s7551 + $0x18] sm:$0xf]
      %v7557 = vld [vmem:[%s7551 + $0x1c] sm:$0xf]
      %v7558 = vld [vmem:[%s7551 + $0x24] sm:$0xf]
      %v7559 = vld [vmem:[%s7551 + $0x28] sm:$0xf]
      %v7560 = vld [vmem:[%s7551 + $0x30] sm:$0xf]
      %v7561 = vld [vmem:[%s7551 + $0x34] sm:$0xf]
      %v7562 = vld [vmem:[%s7551 + $0x3c] sm:$0xf]
      %v7563 = vld [vmem:[%s7551 + $0x40] sm:$0xf]
      %v7564 = vld [vmem:[%s7551 + $0x48] sm:$0xf]
      %v7565 = vld [vmem:[%s7551 + $0x4c] sm:$0xf]
      %v7566 = vld [vmem:[%s7551 + $0x54] sm:$0xf]
      %v7567 = vld [vmem:[%s7551 + $0x58] sm:$0xf]
      %v7568 = vld [vmem:[%s7551 + $0x60] sm:$0xf]
      %v7569 = vld [vmem:[%s7551 + $0x64] sm:$0xf]
      %v7570 = vld [vmem:[%s7551 + $0x6c] sm:$0xf]
      %v7571 = vld [vmem:[%s7551 + $0x70] sm:$0xf]
      %v7572 = vld [vmem:[%s7551 + $0x78] sm:$0xf]
      %v7573 = vld [vmem:[%s7551 + $0x7c] sm:$0xf]
      %v7574 = vld [vmem:[%s7551 + $0x84] sm:$0xf]
      %v7575 = vld [vmem:[%s7551 + $0x88] sm:$0xf]
      %v7576 = vld [vmem:[%s7551 + $0x90] sm:$0xf]
      %v7577 = vld [vmem:[%s7551 + $0x94] sm:$0xf]
      %v7578 = vld [vmem:[%s7551 + $0x9c] sm:$0xf]
      %v7579 = vld [vmem:[%s7551 + $0xa0] sm:$0xf]
      %v7580 = vld [vmem:[%s7551 + $0xa8] sm:$0xf]
      %v7581 = vld [vmem:[%s7551 + $0xac] sm:$0xf]
      %v7582 = vld [vmem:[%s7551 + $0xb4] sm:$0xf]
      %v7583 = vld [vmem:[%s7551 + $0xb8] sm:$0xf]
      %7584 = vst [vmem:[#allocation4 + $0x18] sm:$0xf] %v7552
      %7585 = vst [vmem:[#allocation4 + $0x3c] sm:$0xf] %v7553
      %7586 = vst [vmem:[#allocation4 + $0x60] sm:$0xf] %v7554
      %7587 = vst [vmem:[#allocation4 + $0x84] sm:$0xf] %v7555
      %7588 = vst [vmem:[#allocation4 + $0xa8] sm:$0xf] %v7556
      %7589 = vst [vmem:[#allocation4 + $0xcc] sm:$0xf] %v7557
      %7590 = vst [vmem:[#allocation4 + $0xf0] sm:$0xf] %v7558
      %7591 = vst [vmem:[#allocation4 + $0x114] sm:$0xf] %v7559
      %7592 = vst [vmem:[#allocation4 + $0x138] sm:$0xf] %v7560
      %7593 = vst [vmem:[#allocation4 + $0x15c] sm:$0xf] %v7561
      %7594 = vst [vmem:[#allocation4 + $0x180] sm:$0xf] %v7562
      %7595 = vst [vmem:[#allocation4 + $0x1a4] sm:$0xf] %v7563
      %7596 = vst [vmem:[#allocation4 + $0x1c8] sm:$0xf] %v7564
      %7597 = vst [vmem:[#allocation4 + $0x1ec] sm:$0xf] %v7565
      %7598 = vst [vmem:[#allocation4 + $0x210] sm:$0xf] %v7566
      %7599 = vst [vmem:[#allocation4 + $0x234] sm:$0xf] %v7567
      %7600 = vst [vmem:[#allocation4 + $0x258] sm:$0xf] %v7568
      %7601 = vst [vmem:[#allocation4 + $0x27c] sm:$0xf] %v7569
      %7602 = vst [vmem:[#allocation4 + $0x2a0] sm:$0xf] %v7570
      %7603 = vst [vmem:[#allocation4 + $0x2c4] sm:$0xf] %v7571
      %7604 = vst [vmem:[#allocation4 + $0x2e8] sm:$0xf] %v7572
      %7605 = vst [vmem:[#allocation4 + $0x30c] sm:$0xf] %v7573
      %7606 = vst [vmem:[#allocation4 + $0x330] sm:$0xf] %v7574
      %7607 = vst [vmem:[#allocation4 + $0x354] sm:$0xf] %v7575
      %7608 = vst [vmem:[#allocation4 + $0x378] sm:$0xf] %v7576
      %7609 = vst [vmem:[#allocation4 + $0x39c] sm:$0xf] %v7577
      %7610 = vst [vmem:[#allocation4 + $0x3c0] sm:$0xf] %v7578
      %7611 = vst [vmem:[#allocation4 + $0x3e4] sm:$0xf] %v7579
      %7612 = vst [vmem:[#allocation4 + $0x408] sm:$0xf] %v7580
      %7613 = vst [vmem:[#allocation4 + $0x42c] sm:$0xf] %v7581
      %7614 = vst [vmem:[#allocation4 + $0x450] sm:$0xf] %v7582
      %7615 = vst [vmem:[#allocation4 + $0x474] sm:$0xf] %v7583
      %v7616 = vld [vmem:[%s7551] sm:$0xf]
      %v7617 = vld [vmem:[%s7551 + $0x4] sm:$0xf]
      %v7618 = vld [vmem:[%s7551 + $0x8] sm:$0x1]
      %v7619 = vld [vmem:[%s7551 + $0xc] sm:$0xf]
      %v7620 = vld [vmem:[%s7551 + $0x10] sm:$0xf]
      %v7621 = vld [vmem:[%s7551 + $0x14] sm:$0x1]
      %v7622 = vld [vmem:[%s7551 + $0x18] sm:$0xf]
      %v7623 = vld [vmem:[%s7551 + $0x1c] sm:$0xf]
      %v7624 = vld [vmem:[%s7551 + $0x20] sm:$0x1]
      %v7625 = vld [vmem:[%s7551 + $0x24] sm:$0xf]
      %v7626 = vld [vmem:[%s7551 + $0x28] sm:$0xf]
      %v7627 = vld [vmem:[%s7551 + $0x2c] sm:$0x1]
      %v7628 = vld [vmem:[%s7551 + $0x30] sm:$0xf]
      %v7629 = vld [vmem:[%s7551 + $0x34] sm:$0xf]
      %v7630 = vld [vmem:[%s7551 + $0x38] sm:$0x1]
      %v7631 = vld [vmem:[%s7551 + $0x3c] sm:$0xf]
      %v7632 = vld [vmem:[%s7551 + $0x40] sm:$0xf]
      %v7633 = vld [vmem:[%s7551 + $0x44] sm:$0x1]
      %v7634 = vld [vmem:[%s7551 + $0x48] sm:$0xf]
      %v7635 = vld [vmem:[%s7551 + $0x4c] sm:$0xf]
      %v7636 = vld [vmem:[%s7551 + $0x50] sm:$0x1]
      %v7637 = vld [vmem:[%s7551 + $0x54] sm:$0xf]
      %v7638 = vld [vmem:[%s7551 + $0x58] sm:$0xf]
      %v7639 = vld [vmem:[%s7551 + $0x5c] sm:$0x1]
      %v7640 = vld [vmem:[%s7551 + $0x60] sm:$0xf]
      %v7641 = vld [vmem:[%s7551 + $0x64] sm:$0xf]
      %v7642 = vld [vmem:[%s7551 + $0x68] sm:$0x1]
      %v7643 = vld [vmem:[%s7551 + $0x6c] sm:$0xf]
      %v7644 = vld [vmem:[%s7551 + $0x70] sm:$0xf]
      %v7645 = vld [vmem:[%s7551 + $0x74] sm:$0x1]
      %v7646 = vld [vmem:[%s7551 + $0x78] sm:$0xf]
      %v7647 = vld [vmem:[%s7551 + $0x7c] sm:$0xf]
      %v7648 = vld [vmem:[%s7551 + $0x80] sm:$0x1]
      %v7649 = vld [vmem:[%s7551 + $0x84] sm:$0xf]
      %v7650 = vld [vmem:[%s7551 + $0x88] sm:$0xf]
      %v7651 = vld [vmem:[%s7551 + $0x8c] sm:$0x1]
      %v7652 = vld [vmem:[%s7551 + $0x90] sm:$0xf]
      %v7653 = vld [vmem:[%s7551 + $0x94] sm:$0xf]
      %v7654 = vld [vmem:[%s7551 + $0x98] sm:$0x1]
      %v7655 = vld [vmem:[%s7551 + $0x9c] sm:$0xf]
      %v7656 = vld [vmem:[%s7551 + $0xa0] sm:$0xf]
      %v7657 = vld [vmem:[%s7551 + $0xa4] sm:$0x1]
      %v7658 = vld [vmem:[%s7551 + $0xa8] sm:$0xf]
      %v7659 = vld [vmem:[%s7551 + $0xac] sm:$0xf]
      %v7660 = vld [vmem:[%s7551 + $0xb0] sm:$0x1]
      %v7661 = vld [vmem:[%s7551 + $0xb4] sm:$0xf]
      %v7662 = vld [vmem:[%s7551 + $0xb8] sm:$0xf]
      %v7663 = vld [vmem:[%s7551 + $0xbc] sm:$0x1]
      %v7665 = vshrl.u32 %v7616, 16
      %v7667 = vrot.slane %v7665, 4
      %v7668 = vshll.u32 %v7616, 16
      %v7670 = vrot.slane %v7668, 5
      %v7671 = vor.u32 %v7667, %v7670
      %v7672 = vrot.slane %v7671, 4
      %v7674 = vshll.u32 %v7617, 16
      %v7676 = vrot.slane %v7674, 5
      %v7677 = vsel %vm515, %v7672, %v7676
      %v7678 = vshrl.u32 %v7617, 16
      %v7680 = vrot.slane %v7678, 4
      %v7681 = vor.u32 %v7680, %v7676
      %v7682 = vrot.slane %v7681, 4
      %v7684 = vshll.u32 %v7618, 16
      %v7686 = vrot.slane %v7684, 5
      %v7687 = vsel %vm515, %v7682, %v7686
      %v7689 = vshrl.u32 %v7619, 16
      %v7691 = vrot.slane %v7689, 4
      %v7692 = vshll.u32 %v7619, 16
      %v7694 = vrot.slane %v7692, 5
      %v7695 = vor.u32 %v7691, %v7694
      %v7696 = vrot.slane %v7695, 4
      %v7698 = vshll.u32 %v7620, 16
      %v7700 = vrot.slane %v7698, 5
      %v7701 = vsel %vm515, %v7696, %v7700
      %v7702 = vshrl.u32 %v7620, 16
      %v7704 = vrot.slane %v7702, 4
      %v7705 = vor.u32 %v7704, %v7700
      %v7706 = vrot.slane %v7705, 4
      %v7708 = vshll.u32 %v7621, 16
      %v7710 = vrot.slane %v7708, 5
      %v7711 = vsel %vm515, %v7706, %v7710
      %v7713 = vshrl.u32 %v7622, 16
      %v7715 = vrot.slane %v7713, 4
      %v7716 = vshll.u32 %v7622, 16
      %v7718 = vrot.slane %v7716, 5
      %v7719 = vor.u32 %v7715, %v7718
      %v7720 = vrot.slane %v7719, 4
      %v7722 = vshll.u32 %v7623, 16
      %v7724 = vrot.slane %v7722, 5
      %v7725 = vsel %vm515, %v7720, %v7724
      %v7726 = vshrl.u32 %v7623, 16
      %v7728 = vrot.slane %v7726, 4
      %v7729 = vor.u32 %v7728, %v7724
      %v7730 = vrot.slane %v7729, 4
      %v7732 = vshll.u32 %v7624, 16
      %v7734 = vrot.slane %v7732, 5
      %v7735 = vsel %vm515, %v7730, %v7734
      %v7737 = vshrl.u32 %v7625, 16
      %v7739 = vrot.slane %v7737, 4
      %v7740 = vshll.u32 %v7625, 16
      %v7742 = vrot.slane %v7740, 5
      %v7743 = vor.u32 %v7739, %v7742
      %v7744 = vrot.slane %v7743, 4
      %v7746 = vshll.u32 %v7626, 16
      %v7748 = vrot.slane %v7746, 5
      %v7749 = vsel %vm515, %v7744, %v7748
      %v7750 = vshrl.u32 %v7626, 16
      %v7752 = vrot.slane %v7750, 4
      %v7753 = vor.u32 %v7752, %v7748
      %v7754 = vrot.slane %v7753, 4
      %v7756 = vshll.u32 %v7627, 16
      %v7758 = vrot.slane %v7756, 5
      %v7759 = vsel %vm515, %v7754, %v7758
      %v7761 = vshrl.u32 %v7628, 16
      %v7763 = vrot.slane %v7761, 4
      %v7764 = vshll.u32 %v7628, 16
      %v7766 = vrot.slane %v7764, 5
      %v7767 = vor.u32 %v7763, %v7766
      %v7768 = vrot.slane %v7767, 4
      %v7770 = vshll.u32 %v7629, 16
      %v7772 = vrot.slane %v7770, 5
      %v7773 = vsel %vm515, %v7768, %v7772
      %v7774 = vshrl.u32 %v7629, 16
      %v7776 = vrot.slane %v7774, 4
      %v7777 = vor.u32 %v7776, %v7772
      %v7778 = vrot.slane %v7777, 4
      %v7780 = vshll.u32 %v7630, 16
      %v7782 = vrot.slane %v7780, 5
      %v7783 = vsel %vm515, %v7778, %v7782
      %v7785 = vshrl.u32 %v7631, 16
      %v7787 = vrot.slane %v7785, 4
      %v7788 = vshll.u32 %v7631, 16
      %v7790 = vrot.slane %v7788, 5
      %v7791 = vor.u32 %v7787, %v7790
      %v7792 = vrot.slane %v7791, 4
      %v7794 = vshll.u32 %v7632, 16
      %v7796 = vrot.slane %v7794, 5
      %v7797 = vsel %vm515, %v7792, %v7796
      %v7798 = vshrl.u32 %v7632, 16
      %v7800 = vrot.slane %v7798, 4
      %v7801 = vor.u32 %v7800, %v7796
      %v7802 = vrot.slane %v7801, 4
      %v7804 = vshll.u32 %v7633, 16
      %v7806 = vrot.slane %v7804, 5
      %v7807 = vsel %vm515, %v7802, %v7806
      %v7809 = vshrl.u32 %v7634, 16
      %v7811 = vrot.slane %v7809, 4
      %v7812 = vshll.u32 %v7634, 16
      %v7814 = vrot.slane %v7812, 5
      %v7815 = vor.u32 %v7811, %v7814
      %v7816 = vrot.slane %v7815, 4
      %v7818 = vshll.u32 %v7635, 16
      %v7820 = vrot.slane %v7818, 5
      %v7821 = vsel %vm515, %v7816, %v7820
      %v7822 = vshrl.u32 %v7635, 16
      %v7824 = vrot.slane %v7822, 4
      %v7825 = vor.u32 %v7824, %v7820
      %v7826 = vrot.slane %v7825, 4
      %v7828 = vshll.u32 %v7636, 16
      %v7830 = vrot.slane %v7828, 5
      %v7831 = vsel %vm515, %v7826, %v7830
      %v7833 = vshrl.u32 %v7637, 16
      %v7835 = vrot.slane %v7833, 4
      %v7836 = vshll.u32 %v7637, 16
      %v7838 = vrot.slane %v7836, 5
      %v7839 = vor.u32 %v7835, %v7838
      %v7840 = vrot.slane %v7839, 4
      %v7842 = vshll.u32 %v7638, 16
      %v7844 = vrot.slane %v7842, 5
      %v7845 = vsel %vm515, %v7840, %v7844
      %v7846 = vshrl.u32 %v7638, 16
      %v7848 = vrot.slane %v7846, 4
      %v7849 = vor.u32 %v7848, %v7844
      %v7850 = vrot.slane %v7849, 4
      %v7852 = vshll.u32 %v7639, 16
      %v7854 = vrot.slane %v7852, 5
      %v7855 = vsel %vm515, %v7850, %v7854
      %v7857 = vshrl.u32 %v7640, 16
      %v7859 = vrot.slane %v7857, 4
      %v7860 = vshll.u32 %v7640, 16
      %v7862 = vrot.slane %v7860, 5
      %v7863 = vor.u32 %v7859, %v7862
      %v7864 = vrot.slane %v7863, 4
      %v7866 = vshll.u32 %v7641, 16
      %v7868 = vrot.slane %v7866, 5
      %v7869 = vsel %vm515, %v7864, %v7868
      %v7870 = vshrl.u32 %v7641, 16
      %v7872 = vrot.slane %v7870, 4
      %v7873 = vor.u32 %v7872, %v7868
      %v7874 = vrot.slane %v7873, 4
      %v7876 = vshll.u32 %v7642, 16
      %v7878 = vrot.slane %v7876, 5
      %v7879 = vsel %vm515, %v7874, %v7878
      %v7881 = vshrl.u32 %v7643, 16
      %v7883 = vrot.slane %v7881, 4
      %v7884 = vshll.u32 %v7643, 16
      %v7886 = vrot.slane %v7884, 5
      %v7887 = vor.u32 %v7883, %v7886
      %v7888 = vrot.slane %v7887, 4
      %v7890 = vshll.u32 %v7644, 16
      %v7892 = vrot.slane %v7890, 5
      %v7893 = vsel %vm515, %v7888, %v7892
      %v7894 = vshrl.u32 %v7644, 16
      %v7896 = vrot.slane %v7894, 4
      %v7897 = vor.u32 %v7896, %v7892
      %v7898 = vrot.slane %v7897, 4
      %v7900 = vshll.u32 %v7645, 16
      %v7902 = vrot.slane %v7900, 5
      %v7903 = vsel %vm515, %v7898, %v7902
      %v7905 = vshrl.u32 %v7646, 16
      %v7907 = vrot.slane %v7905, 4
      %v7908 = vshll.u32 %v7646, 16
      %v7910 = vrot.slane %v7908, 5
      %v7911 = vor.u32 %v7907, %v7910
      %v7912 = vrot.slane %v7911, 4
      %v7914 = vshll.u32 %v7647, 16
      %v7916 = vrot.slane %v7914, 5
      %v7917 = vsel %vm515, %v7912, %v7916
      %v7918 = vshrl.u32 %v7647, 16
      %v7920 = vrot.slane %v7918, 4
      %v7921 = vor.u32 %v7920, %v7916
      %v7922 = vrot.slane %v7921, 4
      %v7924 = vshll.u32 %v7648, 16
      %v7926 = vrot.slane %v7924, 5
      %v7927 = vsel %vm515, %v7922, %v7926
      %v7929 = vshrl.u32 %v7649, 16
      %v7931 = vrot.slane %v7929, 4
      %v7932 = vshll.u32 %v7649, 16
      %v7934 = vrot.slane %v7932, 5
      %v7935 = vor.u32 %v7931, %v7934
      %v7936 = vrot.slane %v7935, 4
      %v7938 = vshll.u32 %v7650, 16
      %v7940 = vrot.slane %v7938, 5
      %v7941 = vsel %vm515, %v7936, %v7940
      %v7942 = vshrl.u32 %v7650, 16
      %v7944 = vrot.slane %v7942, 4
      %v7945 = vor.u32 %v7944, %v7940
      %v7946 = vrot.slane %v7945, 4
      %v7948 = vshll.u32 %v7651, 16
      %v7950 = vrot.slane %v7948, 5
      %v7951 = vsel %vm515, %v7946, %v7950
      %v7953 = vshrl.u32 %v7652, 16
      %v7955 = vrot.slane %v7953, 4
      %v7956 = vshll.u32 %v7652, 16
      %v7958 = vrot.slane %v7956, 5
      %v7959 = vor.u32 %v7955, %v7958
      %v7960 = vrot.slane %v7959, 4
      %v7962 = vshll.u32 %v7653, 16
      %v7964 = vrot.slane %v7962, 5
      %v7965 = vsel %vm515, %v7960, %v7964
      %v7966 = vshrl.u32 %v7653, 16
      %v7968 = vrot.slane %v7966, 4
      %v7969 = vor.u32 %v7968, %v7964
      %v7970 = vrot.slane %v7969, 4
      %v7972 = vshll.u32 %v7654, 16
      %v7974 = vrot.slane %v7972, 5
      %v7975 = vsel %vm515, %v7970, %v7974
      %v7977 = vshrl.u32 %v7655, 16
      %v7979 = vrot.slane %v7977, 4
      %v7980 = vshll.u32 %v7655, 16
      %v7982 = vrot.slane %v7980, 5
      %v7983 = vor.u32 %v7979, %v7982
      %v7984 = vrot.slane %v7983, 4
      %v7986 = vshll.u32 %v7656, 16
      %v7988 = vrot.slane %v7986, 5
      %v7989 = vsel %vm515, %v7984, %v7988
      %v7990 = vshrl.u32 %v7656, 16
      %v7992 = vrot.slane %v7990, 4
      %v7993 = vor.u32 %v7992, %v7988
      %v7994 = vrot.slane %v7993, 4
      %v7996 = vshll.u32 %v7657, 16
      %v7998 = vrot.slane %v7996, 5
      %v7999 = vsel %vm515, %v7994, %v7998
      %v8001 = vshrl.u32 %v7658, 16
      %v8003 = vrot.slane %v8001, 4
      %v8004 = vshll.u32 %v7658, 16
      %v8006 = vrot.slane %v8004, 5
      %v8007 = vor.u32 %v8003, %v8006
      %v8008 = vrot.slane %v8007, 4
      %v8010 = vshll.u32 %v7659, 16
      %v8012 = vrot.slane %v8010, 5
      %v8013 = vsel %vm515, %v8008, %v8012
      %v8014 = vshrl.u32 %v7659, 16
      %v8016 = vrot.slane %v8014, 4
      %v8017 = vor.u32 %v8016, %v8012
      %v8018 = vrot.slane %v8017, 4
      %v8020 = vshll.u32 %v7660, 16
      %v8022 = vrot.slane %v8020, 5
      %v8023 = vsel %vm515, %v8018, %v8022
      %v8025 = vshrl.u32 %v7661, 16
      %v8027 = vrot.slane %v8025, 4
      %v8028 = vshll.u32 %v7661, 16
      %v8030 = vrot.slane %v8028, 5
      %v8031 = vor.u32 %v8027, %v8030
      %v8032 = vrot.slane %v8031, 4
      %v8034 = vshll.u32 %v7662, 16
      %v8036 = vrot.slane %v8034, 5
      %v8037 = vsel %vm515, %v8032, %v8036
      %v8038 = vshrl.u32 %v7662, 16
      %v8040 = vrot.slane %v8038, 4
      %v8041 = vor.u32 %v8040, %v8036
      %v8042 = vrot.slane %v8041, 4
      %v8044 = vshll.u32 %v7663, 16
      %v8046 = vrot.slane %v8044, 5
      %v8047 = vsel %vm515, %v8042, %v8046
      %8080 = vst [vmem:[#allocation4 + $0x1c] sm:$0xf] %v7677
      %8081 = vst [vmem:[#allocation4 + $0x40] sm:$0xf] %v7687
      %8082 = vst [vmem:[#allocation4 + $0x64] sm:$0xf] %v7701
      %8083 = vst [vmem:[#allocation4 + $0x88] sm:$0xf] %v7711
      %8084 = vst [vmem:[#allocation4 + $0xac] sm:$0xf] %v7725
      %8085 = vst [vmem:[#allocation4 + $0xd0] sm:$0xf] %v7735
      %8086 = vst [vmem:[#allocation4 + $0xf4] sm:$0xf] %v7749
      %8087 = vst [vmem:[#allocation4 + $0x118] sm:$0xf] %v7759
      %8088 = vst [vmem:[#allocation4 + $0x13c] sm:$0xf] %v7773
      %8089 = vst [vmem:[#allocation4 + $0x160] sm:$0xf] %v7783
      %8090 = vst [vmem:[#allocation4 + $0x184] sm:$0xf] %v7797
      %8091 = vst [vmem:[#allocation4 + $0x1a8] sm:$0xf] %v7807
      %8092 = vst [vmem:[#allocation4 + $0x1cc] sm:$0xf] %v7821
      %8093 = vst [vmem:[#allocation4 + $0x1f0] sm:$0xf] %v7831
      %8094 = vst [vmem:[#allocation4 + $0x214] sm:$0xf] %v7845
      %8095 = vst [vmem:[#allocation4 + $0x238] sm:$0xf] %v7855
      %8096 = vst [vmem:[#allocation4 + $0x25c] sm:$0xf] %v7869
      %8097 = vst [vmem:[#allocation4 + $0x280] sm:$0xf] %v7879
      %8098 = vst [vmem:[#allocation4 + $0x2a4] sm:$0xf] %v7893
      %8099 = vst [vmem:[#allocation4 + $0x2c8] sm:$0xf] %v7903
      %8100 = vst [vmem:[#allocation4 + $0x2ec] sm:$0xf] %v7917
      %8101 = vst [vmem:[#allocation4 + $0x310] sm:$0xf] %v7927
      %8102 = vst [vmem:[#allocation4 + $0x334] sm:$0xf] %v7941
      %8103 = vst [vmem:[#allocation4 + $0x358] sm:$0xf] %v7951
      %8104 = vst [vmem:[#allocation4 + $0x37c] sm:$0xf] %v7965
      %8105 = vst [vmem:[#allocation4 + $0x3a0] sm:$0xf] %v7975
      %8106 = vst [vmem:[#allocation4 + $0x3c4] sm:$0xf] %v7989
      %8107 = vst [vmem:[#allocation4 + $0x3e8] sm:$0xf] %v7999
      %8108 = vst [vmem:[#allocation4 + $0x40c] sm:$0xf] %v8013
      %8109 = vst [vmem:[#allocation4 + $0x430] sm:$0xf] %v8023
      %8110 = vst [vmem:[#allocation4 + $0x454] sm:$0xf] %v8037
      %8111 = vst [vmem:[#allocation4 + $0x478] sm:$0xf] %v8047
      %v8112 = vld [vmem:[%s7551] sm:$0xe]
      %v8113 = vld [vmem:[%s7551 + $0x4] sm:$0xf]
      %v8114 = vld [vmem:[%s7551 + $0x8] sm:$0x1]
      %v8115 = vld [vmem:[%s7551 + $0xc] sm:$0xe]
      %v8116 = vld [vmem:[%s7551 + $0x10] sm:$0xf]
      %v8117 = vld [vmem:[%s7551 + $0x14] sm:$0x1]
      %v8118 = vld [vmem:[%s7551 + $0x18] sm:$0xe]
      %v8119 = vld [vmem:[%s7551 + $0x1c] sm:$0xf]
      %v8120 = vld [vmem:[%s7551 + $0x20] sm:$0x1]
      %v8121 = vld [vmem:[%s7551 + $0x24] sm:$0xe]
      %v8122 = vld [vmem:[%s7551 + $0x28] sm:$0xf]
      %v8123 = vld [vmem:[%s7551 + $0x2c] sm:$0x1]
      %v8124 = vld [vmem:[%s7551 + $0x30] sm:$0xe]
      %v8125 = vld [vmem:[%s7551 + $0x34] sm:$0xf]
      %v8126 = vld [vmem:[%s7551 + $0x38] sm:$0x1]
      %v8127 = vld [vmem:[%s7551 + $0x3c] sm:$0xe]
      %v8128 = vld [vmem:[%s7551 + $0x40] sm:$0xf]
      %v8129 = vld [vmem:[%s7551 + $0x44] sm:$0x1]
      %v8130 = vld [vmem:[%s7551 + $0x48] sm:$0xe]
      %v8131 = vld [vmem:[%s7551 + $0x4c] sm:$0xf]
      %v8132 = vld [vmem:[%s7551 + $0x50] sm:$0x1]
      %v8133 = vld [vmem:[%s7551 + $0x54] sm:$0xe]
      %v8134 = vld [vmem:[%s7551 + $0x58] sm:$0xf]
      %v8135 = vld [vmem:[%s7551 + $0x5c] sm:$0x1]
      %v8136 = vld [vmem:[%s7551 + $0x60] sm:$0xe]
      %v8137 = vld [vmem:[%s7551 + $0x64] sm:$0xf]
      %v8138 = vld [vmem:[%s7551 + $0x68] sm:$0x1]
      %v8139 = vld [vmem:[%s7551 + $0x6c] sm:$0xe]
      %v8140 = vld [vmem:[%s7551 + $0x70] sm:$0xf]
      %v8141 = vld [vmem:[%s7551 + $0x74] sm:$0x1]
      %v8142 = vld [vmem:[%s7551 + $0x78] sm:$0xe]
      %v8143 = vld [vmem:[%s7551 + $0x7c] sm:$0xf]
      %v8144 = vld [vmem:[%s7551 + $0x80] sm:$0x1]
      %v8145 = vld [vmem:[%s7551 + $0x84] sm:$0xe]
      %v8146 = vld [vmem:[%s7551 + $0x88] sm:$0xf]
      %v8147 = vld [vmem:[%s7551 + $0x8c] sm:$0x1]
      %v8148 = vld [vmem:[%s7551 + $0x90] sm:$0xe]
      %v8149 = vld [vmem:[%s7551 + $0x94] sm:$0xf]
      %v8150 = vld [vmem:[%s7551 + $0x98] sm:$0x1]
      %v8151 = vld [vmem:[%s7551 + $0x9c] sm:$0xe]
      %v8152 = vld [vmem:[%s7551 + $0xa0] sm:$0xf]
      %v8153 = vld [vmem:[%s7551 + $0xa4] sm:$0x1]
      %v8154 = vld [vmem:[%s7551 + $0xa8] sm:$0xe]
      %v8155 = vld [vmem:[%s7551 + $0xac] sm:$0xf]
      %v8156 = vld [vmem:[%s7551 + $0xb0] sm:$0x1]
      %v8157 = vld [vmem:[%s7551 + $0xb4] sm:$0xe]
      %v8158 = vld [vmem:[%s7551 + $0xb8] sm:$0xf]
      %v8159 = vld [vmem:[%s7551 + $0xbc] sm:$0x1]
      %v8208 = vrot.slane %v8112, 5
      %v8209 = vrot.slane %v8208, 4
      %v8210 = vrot.slane %v8113, 5
      %v8211 = vsel %vm1062, %v8209, %v8210
      %v8212 = vrot.slane %v8210, 4
      %v8213 = vrot.slane %v8114, 5
      %v8214 = vsel %vm1062, %v8212, %v8213
      %v8215 = vrot.slane %v8115, 5
      %v8216 = vrot.slane %v8215, 4
      %v8217 = vrot.slane %v8116, 5
      %v8218 = vsel %vm1062, %v8216, %v8217
      %v8219 = vrot.slane %v8217, 4
      %v8220 = vrot.slane %v8117, 5
      %v8221 = vsel %vm1062, %v8219, %v8220
      %v8222 = vrot.slane %v8118, 5
      %v8223 = vrot.slane %v8222, 4
      %v8224 = vrot.slane %v8119, 5
      %v8225 = vsel %vm1062, %v8223, %v8224
      %v8226 = vrot.slane %v8224, 4
      %v8227 = vrot.slane %v8120, 5
      %v8228 = vsel %vm1062, %v8226, %v8227
      %v8229 = vrot.slane %v8121, 5
      %v8230 = vrot.slane %v8229, 4
      %v8231 = vrot.slane %v8122, 5
      %v8232 = vsel %vm1062, %v8230, %v8231
      %v8233 = vrot.slane %v8231, 4
      %v8234 = vrot.slane %v8123, 5
      %v8235 = vsel %vm1062, %v8233, %v8234
      %v8236 = vrot.slane %v8124, 5
      %v8237 = vrot.slane %v8236, 4
      %v8238 = vrot.slane %v8125, 5
      %v8239 = vsel %vm1062, %v8237, %v8238
      %v8240 = vrot.slane %v8238, 4
      %v8241 = vrot.slane %v8126, 5
      %v8242 = vsel %vm1062, %v8240, %v8241
      %v8243 = vrot.slane %v8127, 5
      %v8244 = vrot.slane %v8243, 4
      %v8245 = vrot.slane %v8128, 5
      %v8246 = vsel %vm1062, %v8244, %v8245
      %v8247 = vrot.slane %v8245, 4
      %v8248 = vrot.slane %v8129, 5
      %v8249 = vsel %vm1062, %v8247, %v8248
      %v8250 = vrot.slane %v8130, 5
      %v8251 = vrot.slane %v8250, 4
      %v8252 = vrot.slane %v8131, 5
      %v8253 = vsel %vm1062, %v8251, %v8252
      %v8254 = vrot.slane %v8252, 4
      %v8255 = vrot.slane %v8132, 5
      %v8256 = vsel %vm1062, %v8254, %v8255
      %v8257 = vrot.slane %v8133, 5
      %v8258 = vrot.slane %v8257, 4
      %v8259 = vrot.slane %v8134, 5
      %v8260 = vsel %vm1062, %v8258, %v8259
      %v8261 = vrot.slane %v8259, 4
      %v8262 = vrot.slane %v8135, 5
      %v8263 = vsel %vm1062, %v8261, %v8262
      %v8264 = vrot.slane %v8136, 5
      %v8265 = vrot.slane %v8264, 4
      %v8266 = vrot.slane %v8137, 5
      %v8267 = vsel %vm1062, %v8265, %v8266
      %v8268 = vrot.slane %v8266, 4
      %v8269 = vrot.slane %v8138, 5
      %v8270 = vsel %vm1062, %v8268, %v8269
      %v8271 = vrot.slane %v8139, 5
      %v8272 = vrot.slane %v8271, 4
      %v8273 = vrot.slane %v8140, 5
      %v8274 = vsel %vm1062, %v8272, %v8273
      %v8275 = vrot.slane %v8273, 4
      %v8276 = vrot.slane %v8141, 5
      %v8277 = vsel %vm1062, %v8275, %v8276
      %v8278 = vrot.slane %v8142, 5
      %v8279 = vrot.slane %v8278, 4
      %v8280 = vrot.slane %v8143, 5
      %v8281 = vsel %vm1062, %v8279, %v8280
      %v8282 = vrot.slane %v8280, 4
      %v8283 = vrot.slane %v8144, 5
      %v8284 = vsel %vm1062, %v8282, %v8283
      %v8285 = vrot.slane %v8145, 5
      %v8286 = vrot.slane %v8285, 4
      %v8287 = vrot.slane %v8146, 5
      %v8288 = vsel %vm1062, %v8286, %v8287
      %v8289 = vrot.slane %v8287, 4
      %v8290 = vrot.slane %v8147, 5
      %v8291 = vsel %vm1062, %v8289, %v8290
      %v8292 = vrot.slane %v8148, 5
      %v8293 = vrot.slane %v8292, 4
      %v8294 = vrot.slane %v8149, 5
      %v8295 = vsel %vm1062, %v8293, %v8294
      %v8296 = vrot.slane %v8294, 4
      %v8297 = vrot.slane %v8150, 5
      %v8298 = vsel %vm1062, %v8296, %v8297
      %v8299 = vrot.slane %v8151, 5
      %v8300 = vrot.slane %v8299, 4
      %v8301 = vrot.slane %v8152, 5
      %v8302 = vsel %vm1062, %v8300, %v8301
      %v8303 = vrot.slane %v8301, 4
      %v8304 = vrot.slane %v8153, 5
      %v8305 = vsel %vm1062, %v8303, %v8304
      %v8306 = vrot.slane %v8154, 5
      %v8307 = vrot.slane %v8306, 4
      %v8308 = vrot.slane %v8155, 5
      %v8309 = vsel %vm1062, %v8307, %v8308
      %v8310 = vrot.slane %v8308, 4
      %v8311 = vrot.slane %v8156, 5
      %v8312 = vsel %vm1062, %v8310, %v8311
      %v8313 = vrot.slane %v8157, 5
      %v8314 = vrot.slane %v8313, 4
      %v8315 = vrot.slane %v8158, 5
      %v8316 = vsel %vm1062, %v8314, %v8315
      %v8317 = vrot.slane %v8315, 4
      %v8318 = vrot.slane %v8159, 5
      %v8319 = vsel %vm1062, %v8317, %v8318
      %8352 = vst [vmem:[#allocation4 + $0x20] sm:$0xf] %v8211
      %8353 = vst [vmem:[#allocation4 + $0x44] sm:$0xf] %v8214
      %8354 = vst [vmem:[#allocation4 + $0x68] sm:$0xf] %v8218
      %8355 = vst [vmem:[#allocation4 + $0x8c] sm:$0xf] %v8221
      %8356 = vst [vmem:[#allocation4 + $0xb0] sm:$0xf] %v8225
      %8357 = vst [vmem:[#allocation4 + $0xd4] sm:$0xf] %v8228
      %8358 = vst [vmem:[#allocation4 + $0xf8] sm:$0xf] %v8232
      %8359 = vst [vmem:[#allocation4 + $0x11c] sm:$0xf] %v8235
      %8360 = vst [vmem:[#allocation4 + $0x140] sm:$0xf] %v8239
      %8361 = vst [vmem:[#allocation4 + $0x164] sm:$0xf] %v8242
      %8362 = vst [vmem:[#allocation4 + $0x188] sm:$0xf] %v8246
      %8363 = vst [vmem:[#allocation4 + $0x1ac] sm:$0xf] %v8249
      %8364 = vst [vmem:[#allocation4 + $0x1d0] sm:$0xf] %v8253
      %8365 = vst [vmem:[#allocation4 + $0x1f4] sm:$0xf] %v8256
      %8366 = vst [vmem:[#allocation4 + $0x218] sm:$0xf] %v8260
      %8367 = vst [vmem:[#allocation4 + $0x23c] sm:$0xf] %v8263
      %8368 = vst [vmem:[#allocation4 + $0x260] sm:$0xf] %v8267
      %8369 = vst [vmem:[#allocation4 + $0x284] sm:$0xf] %v8270
      %8370 = vst [vmem:[#allocation4 + $0x2a8] sm:$0xf] %v8274
      %8371 = vst [vmem:[#allocation4 + $0x2cc] sm:$0xf] %v8277
      %8372 = vst [vmem:[#allocation4 + $0x2f0] sm:$0xf] %v8281
      %8373 = vst [vmem:[#allocation4 + $0x314] sm:$0xf] %v8284
      %8374 = vst [vmem:[#allocation4 + $0x338] sm:$0xf] %v8288
      %8375 = vst [vmem:[#allocation4 + $0x35c] sm:$0xf] %v8291
      %8376 = vst [vmem:[#allocation4 + $0x380] sm:$0xf] %v8295
      %8377 = vst [vmem:[#allocation4 + $0x3a4] sm:$0xf] %v8298
      %8378 = vst [vmem:[#allocation4 + $0x3c8] sm:$0xf] %v8302
      %8379 = vst [vmem:[#allocation4 + $0x3ec] sm:$0xf] %v8305
      %8380 = vst [vmem:[#allocation4 + $0x410] sm:$0xf] %v8309
      %8381 = vst [vmem:[#allocation4 + $0x434] sm:$0xf] %v8312
      %8382 = vst [vmem:[#allocation4 + $0x458] sm:$0xf] %v8316
      %8383 = vst [vmem:[#allocation4 + $0x47c] sm:$0xf] %v8319
      %v8384 = vld [vmem:[#allocation4] sm:$0xff]
      %v8385 = vld [vmem:[#allocation4 + $0x8] sm:$0xff]
      %v8386 = vld [vmem:[#allocation4 + $0x10] sm:$0xff]
      %v8387 = vld [vmem:[#allocation4 + $0x18] sm:$0xff]
      %v8388 = vld [vmem:[#allocation4 + $0x20] sm:$0xf]
      %v8389 = vld [vmem:[#allocation4 + $0x24] sm:$0xff]
      %v8390 = vld [vmem:[#allocation4 + $0x2c] sm:$0xff]
      %v8391 = vld [vmem:[#allocation4 + $0x34] sm:$0xff]
      %v8392 = vld [vmem:[#allocation4 + $0x3c] sm:$0xff]
      %v8393 = vld [vmem:[#allocation4 + $0x44] sm:$0xf]
      %v8394 = vld [vmem:[#allocation4 + $0x48] sm:$0xff]
      %v8395 = vld [vmem:[#allocation4 + $0x50] sm:$0xff]
      %v8396 = vld [vmem:[#allocation4 + $0x58] sm:$0xff]
      %v8397 = vld [vmem:[#allocation4 + $0x60] sm:$0xff]
      %v8398 = vld [vmem:[#allocation4 + $0x68] sm:$0xf]
      %v8399 = vld [vmem:[#allocation4 + $0x6c] sm:$0xff]
      %v8400 = vld [vmem:[#allocation4 + $0x74] sm:$0xff]
      %v8401 = vld [vmem:[#allocation4 + $0x7c] sm:$0xff]
      %v8402 = vld [vmem:[#allocation4 + $0x84] sm:$0xff]
      %v8403 = vld [vmem:[#allocation4 + $0x8c] sm:$0xf]
      %v8404 = vld [vmem:[#allocation4 + $0x90] sm:$0xff]
      %v8405 = vld [vmem:[#allocation4 + $0x98] sm:$0xff]
      %v8406 = vld [vmem:[#allocation4 + $0xa0] sm:$0xff]
      %v8407 = vld [vmem:[#allocation4 + $0xa8] sm:$0xff]
      %v8408 = vld [vmem:[#allocation4 + $0xb0] sm:$0xf]
      %v8409 = vld [vmem:[#allocation4 + $0xb4] sm:$0xff]
      %v8410 = vld [vmem:[#allocation4 + $0xbc] sm:$0xff]
      %v8411 = vld [vmem:[#allocation4 + $0xc4] sm:$0xff]
      %v8412 = vld [vmem:[#allocation4 + $0xcc] sm:$0xff]
      %v8413 = vld [vmem:[#allocation4 + $0xd4] sm:$0xf]
      %v8414 = vld [vmem:[#allocation4 + $0xd8] sm:$0xff]
      %v8415 = vld [vmem:[#allocation4 + $0xe0] sm:$0xff]
      %v8416 = vld [vmem:[#allocation4 + $0xe8] sm:$0xff]
      %v8417 = vld [vmem:[#allocation4 + $0xf0] sm:$0xff]
      %v8418 = vld [vmem:[#allocation4 + $0xf8] sm:$0xf]
      %v8419 = vld [vmem:[#allocation4 + $0xfc] sm:$0xff]
      %v8420 = vld [vmem:[#allocation4 + $0x104] sm:$0xff]
      %v8421 = vld [vmem:[#allocation4 + $0x10c] sm:$0xff]
      %v8422 = vld [vmem:[#allocation4 + $0x114] sm:$0xff]
      %v8423 = vld [vmem:[#allocation4 + $0x11c] sm:$0xf]
      %v8424 = vld [vmem:[#allocation4 + $0x120] sm:$0xff]
      %v8425 = vld [vmem:[#allocation4 + $0x128] sm:$0xff]
      %v8426 = vld [vmem:[#allocation4 + $0x130] sm:$0xff]
      %v8427 = vld [vmem:[#allocation4 + $0x138] sm:$0xff]
      %v8428 = vld [vmem:[#allocation4 + $0x140] sm:$0xf]
      %v8429 = vld [vmem:[#allocation4 + $0x144] sm:$0xff]
      %v8430 = vld [vmem:[#allocation4 + $0x14c] sm:$0xff]
      %v8431 = vld [vmem:[#allocation4 + $0x154] sm:$0xff]
      %v8432 = vld [vmem:[#allocation4 + $0x15c] sm:$0xff]
      %v8433 = vld [vmem:[#allocation4 + $0x164] sm:$0xf]
      %v8434 = vld [vmem:[#allocation4 + $0x168] sm:$0xff]
      %v8435 = vld [vmem:[#allocation4 + $0x170] sm:$0xff]
      %v8436 = vld [vmem:[#allocation4 + $0x178] sm:$0xff]
      %v8437 = vld [vmem:[#allocation4 + $0x180] sm:$0xff]
      %v8438 = vld [vmem:[#allocation4 + $0x188] sm:$0xf]
      %v8439 = vld [vmem:[#allocation4 + $0x18c] sm:$0xff]
      %v8440 = vld [vmem:[#allocation4 + $0x194] sm:$0xff]
      %v8441 = vld [vmem:[#allocation4 + $0x19c] sm:$0xff]
      %v8442 = vld [vmem:[#allocation4 + $0x1a4] sm:$0xff]
      %v8443 = vld [vmem:[#allocation4 + $0x1ac] sm:$0xf]
      %v8444 = vld [vmem:[#allocation4 + $0x1b0] sm:$0xff]
      %v8445 = vld [vmem:[#allocation4 + $0x1b8] sm:$0xff]
      %v8446 = vld [vmem:[#allocation4 + $0x1c0] sm:$0xff]
      %v8447 = vld [vmem:[#allocation4 + $0x1c8] sm:$0xff]
      %v8448 = vld [vmem:[#allocation4 + $0x1d0] sm:$0xf]
      %v8449 = vld [vmem:[#allocation4 + $0x1d4] sm:$0xff]
      %v8450 = vld [vmem:[#allocation4 + $0x1dc] sm:$0xff]
      %v8451 = vld [vmem:[#allocation4 + $0x1e4] sm:$0xff]
      %v8452 = vld [vmem:[#allocation4 + $0x1ec] sm:$0xff]
      %v8453 = vld [vmem:[#allocation4 + $0x1f4] sm:$0xf]
      %v8454 = vld [vmem:[#allocation4 + $0x1f8] sm:$0xff]
      %v8455 = vld [vmem:[#allocation4 + $0x200] sm:$0xff]
      %v8456 = vld [vmem:[#allocation4 + $0x208] sm:$0xff]
      %v8457 = vld [vmem:[#allocation4 + $0x210] sm:$0xff]
      %v8458 = vld [vmem:[#allocation4 + $0x218] sm:$0xf]
      %v8459 = vld [vmem:[#allocation4 + $0x21c] sm:$0xff]
      %v8460 = vld [vmem:[#allocation4 + $0x224] sm:$0xff]
      %v8461 = vld [vmem:[#allocation4 + $0x22c] sm:$0xff]
      %v8462 = vld [vmem:[#allocation4 + $0x234] sm:$0xff]
      %v8463 = vld [vmem:[#allocation4 + $0x23c] sm:$0xf]
      %v8464 = vld [vmem:[#allocation4 + $0x240] sm:$0xff]
      %v8465 = vld [vmem:[#allocation4 + $0x248] sm:$0xff]
      %v8466 = vld [vmem:[#allocation4 + $0x250] sm:$0xff]
      %v8467 = vld [vmem:[#allocation4 + $0x258] sm:$0xff]
      %v8468 = vld [vmem:[#allocation4 + $0x260] sm:$0xf]
      %v8469 = vld [vmem:[#allocation4 + $0x264] sm:$0xff]
      %v8470 = vld [vmem:[#allocation4 + $0x26c] sm:$0xff]
      %v8471 = vld [vmem:[#allocation4 + $0x274] sm:$0xff]
      %v8472 = vld [vmem:[#allocation4 + $0x27c] sm:$0xff]
      %v8473 = vld [vmem:[#allocation4 + $0x284] sm:$0xf]
      %v8474 = vld [vmem:[#allocation4 + $0x288] sm:$0xff]
      %v8475 = vld [vmem:[#allocation4 + $0x290] sm:$0xff]
      %v8476 = vld [vmem:[#allocation4 + $0x298] sm:$0xff]
      %v8477 = vld [vmem:[#allocation4 + $0x2a0] sm:$0xff]
      %v8478 = vld [vmem:[#allocation4 + $0x2a8] sm:$0xf]
      %v8479 = vld [vmem:[#allocation4 + $0x2ac] sm:$0xff]
      %v8480 = vld [vmem:[#allocation4 + $0x2b4] sm:$0xff]
      %v8481 = vld [vmem:[#allocation4 + $0x2bc] sm:$0xff]
      %v8482 = vld [vmem:[#allocation4 + $0x2c4] sm:$0xff]
      %v8483 = vld [vmem:[#allocation4 + $0x2cc] sm:$0xf]
      %v8484 = vld [vmem:[#allocation4 + $0x2d0] sm:$0xff]
      %v8485 = vld [vmem:[#allocation4 + $0x2d8] sm:$0xff]
      %v8486 = vld [vmem:[#allocation4 + $0x2e0] sm:$0xff]
      %v8487 = vld [vmem:[#allocation4 + $0x2e8] sm:$0xff]
      %v8488 = vld [vmem:[#allocation4 + $0x2f0] sm:$0xf]
      %v8489 = vld [vmem:[#allocation4 + $0x2f4] sm:$0xff]
      %v8490 = vld [vmem:[#allocation4 + $0x2fc] sm:$0xff]
      %v8491 = vld [vmem:[#allocation4 + $0x304] sm:$0xff]
      %v8492 = vld [vmem:[#allocation4 + $0x30c] sm:$0xff]
      %v8493 = vld [vmem:[#allocation4 + $0x314] sm:$0xf]
      %v8494 = vld [vmem:[#allocation4 + $0x318] sm:$0xff]
      %v8495 = vld [vmem:[#allocation4 + $0x320] sm:$0xff]
      %v8496 = vld [vmem:[#allocation4 + $0x328] sm:$0xff]
      %v8497 = vld [vmem:[#allocation4 + $0x330] sm:$0xff]
      %v8498 = vld [vmem:[#allocation4 + $0x338] sm:$0xf]
      %v8499 = vld [vmem:[#allocation4 + $0x33c] sm:$0xff]
      %v8500 = vld [vmem:[#allocation4 + $0x344] sm:$0xff]
      %v8501 = vld [vmem:[#allocation4 + $0x34c] sm:$0xff]
      %v8502 = vld [vmem:[#allocation4 + $0x354] sm:$0xff]
      %v8503 = vld [vmem:[#allocation4 + $0x35c] sm:$0xf]
      %v8504 = vld [vmem:[#allocation4 + $0x360] sm:$0xff]
      %v8505 = vld [vmem:[#allocation4 + $0x368] sm:$0xff]
      %v8506 = vld [vmem:[#allocation4 + $0x370] sm:$0xff]
      %v8507 = vld [vmem:[#allocation4 + $0x378] sm:$0xff]
      %v8508 = vld [vmem:[#allocation4 + $0x380] sm:$0xf]
      %v8509 = vld [vmem:[#allocation4 + $0x384] sm:$0xff]
      %v8510 = vld [vmem:[#allocation4 + $0x38c] sm:$0xff]
      %v8511 = vld [vmem:[#allocation4 + $0x394] sm:$0xff]
      %v8512 = vld [vmem:[#allocation4 + $0x39c] sm:$0xff]
      %v8513 = vld [vmem:[#allocation4 + $0x3a4] sm:$0xf]
      %v8514 = vld [vmem:[#allocation4 + $0x3a8] sm:$0xff]
      %v8515 = vld [vmem:[#allocation4 + $0x3b0] sm:$0xff]
      %v8516 = vld [vmem:[#allocation4 + $0x3b8] sm:$0xff]
      %v8517 = vld [vmem:[#allocation4 + $0x3c0] sm:$0xff]
      %v8518 = vld [vmem:[#allocation4 + $0x3c8] sm:$0xf]
      %v8519 = vld [vmem:[#allocation4 + $0x3cc] sm:$0xff]
      %v8520 = vld [vmem:[#allocation4 + $0x3d4] sm:$0xff]
      %v8521 = vld [vmem:[#allocation4 + $0x3dc] sm:$0xff]
      %v8522 = vld [vmem:[#allocation4 + $0x3e4] sm:$0xff]
      %v8523 = vld [vmem:[#allocation4 + $0x3ec] sm:$0xf]
      %v8524 = vld [vmem:[#allocation4 + $0x3f0] sm:$0xff]
      %v8525 = vld [vmem:[#allocation4 + $0x3f8] sm:$0xff]
      %v8526 = vld [vmem:[#allocation4 + $0x400] sm:$0xff]
      %v8527 = vld [vmem:[#allocation4 + $0x408] sm:$0xff]
      %v8528 = vld [vmem:[#allocation4 + $0x410] sm:$0xf]
      %v8529 = vld [vmem:[#allocation4 + $0x414] sm:$0xff]
      %v8530 = vld [vmem:[#allocation4 + $0x41c] sm:$0xff]
      %v8531 = vld [vmem:[#allocation4 + $0x424] sm:$0xff]
      %v8532 = vld [vmem:[#allocation4 + $0x42c] sm:$0xff]
      %v8533 = vld [vmem:[#allocation4 + $0x434] sm:$0xf]
      %v8534 = vld [vmem:[#allocation4 + $0x438] sm:$0xff]
      %v8535 = vld [vmem:[#allocation4 + $0x440] sm:$0xff]
      %v8536 = vld [vmem:[#allocation4 + $0x448] sm:$0xff]
      %v8537 = vld [vmem:[#allocation4 + $0x450] sm:$0xff]
      %v8538 = vld [vmem:[#allocation4 + $0x458] sm:$0xf]
      %v8539 = vld [vmem:[#allocation4 + $0x45c] sm:$0xff]
      %v8540 = vld [vmem:[#allocation4 + $0x464] sm:$0xff]
      %v8541 = vld [vmem:[#allocation4 + $0x46c] sm:$0xff]
      %v8542 = vld [vmem:[#allocation4 + $0x474] sm:$0xff]
      %v8543 = vld [vmem:[#allocation4 + $0x47c] sm:$0xf]
      %v8544 = vld [vmem:[%s4] sm:$0xf]
      %v8545 = vld [vmem:[%s4 + $0x4] sm:$0xf]
      %v8546 = vld [vmem:[%s4 + $0x8] sm:$0xf]
      %v8547 = vld [vmem:[%s4 + $0xc] sm:$0xf]
      %v8548 = vld [vmem:[%s4 + $0x10] sm:$0xf]
      %v8549 = vld [vmem:[%s4 + $0x14] sm:$0xf]
      %v8550 = vld [vmem:[%s4 + $0x18] sm:$0xf]
      %v8551 = vld [vmem:[%s4 + $0x1c] sm:$0xf]
      %v8552 = vld [vmem:[%s4 + $0x20] sm:$0xf]
      %v8553 = vld [vmem:[%s4 + $0x24] sm:$0xf]
      %v8554 = vld [vmem:[%s4 + $0x28] sm:$0xf]
      %v8555 = vld [vmem:[%s4 + $0x2c] sm:$0xf]
      %v8556 = vld [vmem:[%s4 + $0x30] sm:$0xf]
      %v8557 = vld [vmem:[%s4 + $0x34] sm:$0xf]
      %v8558 = vld [vmem:[%s4 + $0x38] sm:$0xf]
      %v8559 = vld [vmem:[%s4 + $0x3c] sm:$0xf]
      %v8560 = vld [vmem:[%s4 + $0x40] sm:$0xf]
      %v8561 = vld [vmem:[%s4 + $0x44] sm:$0xf]
      %v8562 = vld [vmem:[%s4 + $0x48] sm:$0xf]
      %v8563 = vld [vmem:[%s4 + $0x4c] sm:$0xf]
      %v8564 = vld [vmem:[%s4 + $0x50] sm:$0xf]
      %v8565 = vld [vmem:[%s4 + $0x54] sm:$0xf]
      %v8566 = vld [vmem:[%s4 + $0x58] sm:$0xf]
      %v8567 = vld [vmem:[%s4 + $0x5c] sm:$0xf]
      %v8568 = vld [vmem:[%s4 + $0x60] sm:$0xf]
      %v8569 = vld [vmem:[%s4 + $0x64] sm:$0xf]
      %v8570 = vld [vmem:[%s4 + $0x68] sm:$0xf]
      %v8571 = vld [vmem:[%s4 + $0x6c] sm:$0xf]
      %v8572 = vld [vmem:[%s4 + $0x70] sm:$0xf]
      %v8573 = vld [vmem:[%s4 + $0x74] sm:$0xf]
      %v8574 = vld [vmem:[%s4 + $0x78] sm:$0xf]
      %v8575 = vld [vmem:[%s4 + $0x7c] sm:$0xf]
      %v8576 = vld [vmem:[%s4 + $0x80] sm:$0xf]
      %v8577 = vld [vmem:[%s4 + $0x84] sm:$0xf]
      %v8578 = vld [vmem:[%s4 + $0x88] sm:$0xf]
      %v8579 = vld [vmem:[%s4 + $0x8c] sm:$0xf]
      %v8580 = vld [vmem:[%s4 + $0x90] sm:$0xf]
      %v8581 = vld [vmem:[%s4 + $0x94] sm:$0xf]
      %v8582 = vld [vmem:[%s4 + $0x98] sm:$0xf]
      %v8583 = vld [vmem:[%s4 + $0x9c] sm:$0xf]
      %v8584 = vld [vmem:[%s4 + $0xa0] sm:$0xf]
      %v8585 = vld [vmem:[%s4 + $0xa4] sm:$0xf]
      %v8586 = vld [vmem:[%s4 + $0xa8] sm:$0xf]
      %v8587 = vld [vmem:[%s4 + $0xac] sm:$0xf]
      %v8588 = vld [vmem:[%s4 + $0xb0] sm:$0xf]
      %v8589 = vld [vmem:[%s4 + $0xb4] sm:$0xf]
      %v8590 = vld [vmem:[%s4 + $0xb8] sm:$0xf]
      %v8591 = vld [vmem:[%s4 + $0xbc] sm:$0xf]
      %v8592 = vld [vmem:[%s4 + $0xc0] sm:$0xf]
      %v8593 = vld [vmem:[%s4 + $0xc4] sm:$0xf]
      %v8594 = vld [vmem:[%s4 + $0xc8] sm:$0xf]
      %v8595 = vld [vmem:[%s4 + $0xcc] sm:$0xf]
      %v8596 = vld [vmem:[%s4 + $0xd0] sm:$0xf]
      %v8597 = vld [vmem:[%s4 + $0xd4] sm:$0xf]
      %v8598 = vld [vmem:[%s4 + $0xd8] sm:$0xf]
      %v8599 = vld [vmem:[%s4 + $0xdc] sm:$0xf]
      %v8600 = vld [vmem:[%s4 + $0xe0] sm:$0xf]
      %v8601 = vld [vmem:[%s4 + $0xe4] sm:$0xf]
      %v8602 = vld [vmem:[%s4 + $0xe8] sm:$0xf]
      %v8603 = vld [vmem:[%s4 + $0xec] sm:$0xf]
      %v8604 = vld [vmem:[%s4 + $0xf0] sm:$0xf]
      %v8605 = vld [vmem:[%s4 + $0xf4] sm:$0xf]
      %v8606 = vld [vmem:[%s4 + $0xf8] sm:$0xf]
      %v8607 = vld [vmem:[%s4 + $0xfc] sm:$0xf]
      %v8608 = vld [vmem:[%s4 + $0x100] sm:$0xf]
      %v8609 = vld [vmem:[%s4 + $0x104] sm:$0xf]
      %v8610 = vld [vmem:[%s4 + $0x108] sm:$0xf]
      %v8611 = vld [vmem:[%s4 + $0x10c] sm:$0xf]
      %v8612 = vld [vmem:[%s4 + $0x110] sm:$0xf]
      %v8613 = vld [vmem:[%s4 + $0x114] sm:$0xf]
      %v8614 = vld [vmem:[%s4 + $0x118] sm:$0xf]
      %v8615 = vld [vmem:[%s4 + $0x11c] sm:$0xf]
      %v8616 = vld [vmem:[%s4 + $0x120] sm:$0xf]
      %v8617 = vld [vmem:[%s4 + $0x124] sm:$0xf]
      %v8618 = vld [vmem:[%s4 + $0x128] sm:$0xf]
      %v8619 = vld [vmem:[%s4 + $0x12c] sm:$0xf]
      %v8620 = vld [vmem:[%s4 + $0x130] sm:$0xf]
      %v8621 = vld [vmem:[%s4 + $0x134] sm:$0xf]
      %v8622 = vld [vmem:[%s4 + $0x138] sm:$0xf]
      %v8623 = vld [vmem:[%s4 + $0x13c] sm:$0xf]
      %v8624 = vld [vmem:[%s4 + $0x140] sm:$0xf]
      %v8625 = vld [vmem:[%s4 + $0x144] sm:$0xf]
      %v8626 = vld [vmem:[%s4 + $0x148] sm:$0xf]
      %v8627 = vld [vmem:[%s4 + $0x14c] sm:$0xf]
      %v8628 = vld [vmem:[%s4 + $0x150] sm:$0xf]
      %v8629 = vld [vmem:[%s4 + $0x154] sm:$0xf]
      %v8630 = vld [vmem:[%s4 + $0x158] sm:$0xf]
      %v8631 = vld [vmem:[%s4 + $0x15c] sm:$0xf]
      %v8632 = vld [vmem:[%s4 + $0x160] sm:$0xf]
      %v8633 = vld [vmem:[%s4 + $0x164] sm:$0xf]
      %v8634 = vld [vmem:[%s4 + $0x168] sm:$0xf]
      %v8635 = vld [vmem:[%s4 + $0x16c] sm:$0xf]
      %v8636 = vld [vmem:[%s4 + $0x170] sm:$0xf]
      %v8637 = vld [vmem:[%s4 + $0x174] sm:$0xf]
      %v8638 = vld [vmem:[%s4 + $0x178] sm:$0xf]
      %v8639 = vld [vmem:[%s4 + $0x17c] sm:$0xf]
      %v8640 = vld [vmem:[%s4 + $0x180] sm:$0xf]
      %v8641 = vld [vmem:[%s4 + $0x184] sm:$0xf]
      %v8642 = vld [vmem:[%s4 + $0x188] sm:$0xf]
      %v8643 = vld [vmem:[%s4 + $0x18c] sm:$0xf]
      %v8644 = vld [vmem:[%s4 + $0x190] sm:$0xf]
      %v8645 = vld [vmem:[%s4 + $0x194] sm:$0xf]
      %v8646 = vld [vmem:[%s4 + $0x198] sm:$0xf]
      %v8647 = vld [vmem:[%s4 + $0x19c] sm:$0xf]
      %v8648 = vld [vmem:[%s4 + $0x1a0] sm:$0xf]
      %v8649 = vld [vmem:[%s4 + $0x1a4] sm:$0xf]
      %v8650 = vld [vmem:[%s4 + $0x1a8] sm:$0xf]
      %v8651 = vld [vmem:[%s4 + $0x1ac] sm:$0xf]
      %v8652 = vld [vmem:[%s4 + $0x1b0] sm:$0xf]
      %v8653 = vld [vmem:[%s4 + $0x1b4] sm:$0xf]
      %v8654 = vld [vmem:[%s4 + $0x1b8] sm:$0xf]
      %v8655 = vld [vmem:[%s4 + $0x1bc] sm:$0xf]
      %v8656 = vld [vmem:[%s4 + $0x1c0] sm:$0xf]
      %v8657 = vld [vmem:[%s4 + $0x1c4] sm:$0xf]
      %v8658 = vld [vmem:[%s4 + $0x1c8] sm:$0xf]
      %v8659 = vld [vmem:[%s4 + $0x1cc] sm:$0xf]
      %v8660 = vld [vmem:[%s4 + $0x1d0] sm:$0xf]
      %v8661 = vld [vmem:[%s4 + $0x1d4] sm:$0xf]
      %v8662 = vld [vmem:[%s4 + $0x1d8] sm:$0xf]
      %v8663 = vld [vmem:[%s4 + $0x1dc] sm:$0xf]
      %v8664 = vld [vmem:[%s4 + $0x1e0] sm:$0xf]
      %v8665 = vld [vmem:[%s4 + $0x1e4] sm:$0xf]
      %v8666 = vld [vmem:[%s4 + $0x1e8] sm:$0xf]
      %v8667 = vld [vmem:[%s4 + $0x1ec] sm:$0xf]
      %v8668 = vld [vmem:[%s4 + $0x1f0] sm:$0xf]
      %v8669 = vld [vmem:[%s4 + $0x1f4] sm:$0xf]
      %v8670 = vld [vmem:[%s4 + $0x1f8] sm:$0xf]
      %v8671 = vld [vmem:[%s4 + $0x1fc] sm:$0xf]
      %v8672 = vld [vmem:[%s4 + $0x200] sm:$0xf]
      %v8673 = vld [vmem:[%s4 + $0x204] sm:$0xf]
      %v8674 = vld [vmem:[%s4 + $0x208] sm:$0xf]
      %v8675 = vld [vmem:[%s4 + $0x20c] sm:$0xf]
      %v8676 = vld [vmem:[%s4 + $0x210] sm:$0xf]
      %v8677 = vld [vmem:[%s4 + $0x214] sm:$0xf]
      %v8678 = vld [vmem:[%s4 + $0x218] sm:$0xf]
      %v8679 = vld [vmem:[%s4 + $0x21c] sm:$0xf]
      %v8680 = vld [vmem:[%s4 + $0x220] sm:$0xf]
      %v8681 = vld [vmem:[%s4 + $0x224] sm:$0xf]
      %v8682 = vld [vmem:[%s4 + $0x228] sm:$0xf]
      %v8683 = vld [vmem:[%s4 + $0x22c] sm:$0xf]
      %v8684 = vld [vmem:[%s4 + $0x230] sm:$0xf]
      %v8685 = vld [vmem:[%s4 + $0x234] sm:$0xf]
      %v8686 = vld [vmem:[%s4 + $0x238] sm:$0xf]
      %v8687 = vld [vmem:[%s4 + $0x23c] sm:$0xf]
      %v8848 = vunpack.c.l.b16 %v8384
      %v8849 = vunpack.c.h.b16 %v8384
      %v8850 = vunpack.c.l.b16 %v8385
      %v8851 = vunpack.c.h.b16 %v8385
      %v8852 = vunpack.c.l.b16 %v8386
      %v8853 = vunpack.c.h.b16 %v8386
      %v8854 = vunpack.c.l.b16 %v8387
      %v8855 = vunpack.c.h.b16 %v8387
      %v8856 = vunpack.c.l.b16 %v8388
      %v8857 = vunpack.c.l.b16 %v8389
      %v8858 = vunpack.c.h.b16 %v8389
      %v8859 = vunpack.c.l.b16 %v8390
      %v8860 = vunpack.c.h.b16 %v8390
      %v8861 = vunpack.c.l.b16 %v8391
      %v8862 = vunpack.c.h.b16 %v8391
      %v8863 = vunpack.c.l.b16 %v8392
      %v8864 = vunpack.c.h.b16 %v8392
      %v8865 = vunpack.c.l.b16 %v8393
      %v8866 = vunpack.c.l.b16 %v8394
      %v8867 = vunpack.c.h.b16 %v8394
      %v8868 = vunpack.c.l.b16 %v8395
      %v8869 = vunpack.c.h.b16 %v8395
      %v8870 = vunpack.c.l.b16 %v8396
      %v8871 = vunpack.c.h.b16 %v8396
      %v8872 = vunpack.c.l.b16 %v8397
      %v8873 = vunpack.c.h.b16 %v8397
      %v8874 = vunpack.c.l.b16 %v8398
      %v8875 = vunpack.c.l.b16 %v8399
      %v8876 = vunpack.c.h.b16 %v8399
      %v8877 = vunpack.c.l.b16 %v8400
      %v8878 = vunpack.c.h.b16 %v8400
      %v8879 = vunpack.c.l.b16 %v8401
      %v8880 = vunpack.c.h.b16 %v8401
      %v8881 = vunpack.c.l.b16 %v8402
      %v8882 = vunpack.c.h.b16 %v8402
      %v8883 = vunpack.c.l.b16 %v8403
      %v8884 = vunpack.c.l.b16 %v8404
      %v8885 = vunpack.c.h.b16 %v8404
      %v8886 = vunpack.c.l.b16 %v8405
      %v8887 = vunpack.c.h.b16 %v8405
      %v8888 = vunpack.c.l.b16 %v8406
      %v8889 = vunpack.c.h.b16 %v8406
      %v8890 = vunpack.c.l.b16 %v8407
      %v8891 = vunpack.c.h.b16 %v8407
      %v8892 = vunpack.c.l.b16 %v8408
      %v8893 = vunpack.c.l.b16 %v8409
      %v8894 = vunpack.c.h.b16 %v8409
      %v8895 = vunpack.c.l.b16 %v8410
      %v8896 = vunpack.c.h.b16 %v8410
      %v8897 = vunpack.c.l.b16 %v8411
      %v8898 = vunpack.c.h.b16 %v8411
      %v8899 = vunpack.c.l.b16 %v8412
      %v8900 = vunpack.c.h.b16 %v8412
      %v8901 = vunpack.c.l.b16 %v8413
      %v8902 = vunpack.c.l.b16 %v8414
      %v8903 = vunpack.c.h.b16 %v8414
      %v8904 = vunpack.c.l.b16 %v8415
      %v8905 = vunpack.c.h.b16 %v8415
      %v8906 = vunpack.c.l.b16 %v8416
      %v8907 = vunpack.c.h.b16 %v8416
      %v8908 = vunpack.c.l.b16 %v8417
      %v8909 = vunpack.c.h.b16 %v8417
      %v8910 = vunpack.c.l.b16 %v8418
      %v8911 = vunpack.c.l.b16 %v8419
      %v8912 = vunpack.c.h.b16 %v8419
      %v8913 = vunpack.c.l.b16 %v8420
      %v8914 = vunpack.c.h.b16 %v8420
      %v8915 = vunpack.c.l.b16 %v8421
      %v8916 = vunpack.c.h.b16 %v8421
      %v8917 = vunpack.c.l.b16 %v8422
      %v8918 = vunpack.c.h.b16 %v8422
      %v8919 = vunpack.c.l.b16 %v8423
      %v8920 = vunpack.c.l.b16 %v8424
      %v8921 = vunpack.c.h.b16 %v8424
      %v8922 = vunpack.c.l.b16 %v8425
      %v8923 = vunpack.c.h.b16 %v8425
      %v8924 = vunpack.c.l.b16 %v8426
      %v8925 = vunpack.c.h.b16 %v8426
      %v8926 = vunpack.c.l.b16 %v8427
      %v8927 = vunpack.c.h.b16 %v8427
      %v8928 = vunpack.c.l.b16 %v8428
      %v8929 = vunpack.c.l.b16 %v8429
      %v8930 = vunpack.c.h.b16 %v8429
      %v8931 = vunpack.c.l.b16 %v8430
      %v8932 = vunpack.c.h.b16 %v8430
      %v8933 = vunpack.c.l.b16 %v8431
      %v8934 = vunpack.c.h.b16 %v8431
      %v8935 = vunpack.c.l.b16 %v8432
      %v8936 = vunpack.c.h.b16 %v8432
      %v8937 = vunpack.c.l.b16 %v8433
      %v8938 = vunpack.c.l.b16 %v8434
      %v8939 = vunpack.c.h.b16 %v8434
      %v8940 = vunpack.c.l.b16 %v8435
      %v8941 = vunpack.c.h.b16 %v8435
      %v8942 = vunpack.c.l.b16 %v8436
      %v8943 = vunpack.c.h.b16 %v8436
      %v8944 = vunpack.c.l.b16 %v8437
      %v8945 = vunpack.c.h.b16 %v8437
      %v8946 = vunpack.c.l.b16 %v8438
      %v8947 = vunpack.c.l.b16 %v8439
      %v8948 = vunpack.c.h.b16 %v8439
      %v8949 = vunpack.c.l.b16 %v8440
      %v8950 = vunpack.c.h.b16 %v8440
      %v8951 = vunpack.c.l.b16 %v8441
      %v8952 = vunpack.c.h.b16 %v8441
      %v8953 = vunpack.c.l.b16 %v8442
      %v8954 = vunpack.c.h.b16 %v8442
      %v8955 = vunpack.c.l.b16 %v8443
      %v8956 = vunpack.c.l.b16 %v8444
      %v8957 = vunpack.c.h.b16 %v8444
      %v8958 = vunpack.c.l.b16 %v8445
      %v8959 = vunpack.c.h.b16 %v8445
      %v8960 = vunpack.c.l.b16 %v8446
      %v8961 = vunpack.c.h.b16 %v8446
      %v8962 = vunpack.c.l.b16 %v8447
      %v8963 = vunpack.c.h.b16 %v8447
      %v8964 = vunpack.c.l.b16 %v8448
      %v8965 = vunpack.c.l.b16 %v8449
      %v8966 = vunpack.c.h.b16 %v8449
      %v8967 = vunpack.c.l.b16 %v8450
      %v8968 = vunpack.c.h.b16 %v8450
      %v8969 = vunpack.c.l.b16 %v8451
      %v8970 = vunpack.c.h.b16 %v8451
      %v8971 = vunpack.c.l.b16 %v8452
      %v8972 = vunpack.c.h.b16 %v8452
      %v8973 = vunpack.c.l.b16 %v8453
      %v8974 = vunpack.c.l.b16 %v8454
      %v8975 = vunpack.c.h.b16 %v8454
      %v8976 = vunpack.c.l.b16 %v8455
      %v8977 = vunpack.c.h.b16 %v8455
      %v8978 = vunpack.c.l.b16 %v8456
      %v8979 = vunpack.c.h.b16 %v8456
      %v8980 = vunpack.c.l.b16 %v8457
      %v8981 = vunpack.c.h.b16 %v8457
      %v8982 = vunpack.c.l.b16 %v8458
      %v8983 = vunpack.c.l.b16 %v8459
      %v8984 = vunpack.c.h.b16 %v8459
      %v8985 = vunpack.c.l.b16 %v8460
      %v8986 = vunpack.c.h.b16 %v8460
      %v8987 = vunpack.c.l.b16 %v8461
      %v8988 = vunpack.c.h.b16 %v8461
      %v8989 = vunpack.c.l.b16 %v8462
      %v8990 = vunpack.c.h.b16 %v8462
      %v8991 = vunpack.c.l.b16 %v8463
      %v8992 = vunpack.c.l.b16 %v8464
      %v8993 = vunpack.c.h.b16 %v8464
      %v8994 = vunpack.c.l.b16 %v8465
      %v8995 = vunpack.c.h.b16 %v8465
      %v8996 = vunpack.c.l.b16 %v8466
      %v8997 = vunpack.c.h.b16 %v8466
      %v8998 = vunpack.c.l.b16 %v8467
      %v8999 = vunpack.c.h.b16 %v8467
      %v9000 = vunpack.c.l.b16 %v8468
      %v9001 = vunpack.c.l.b16 %v8469
      %v9002 = vunpack.c.h.b16 %v8469
      %v9003 = vunpack.c.l.b16 %v8470
      %v9004 = vunpack.c.h.b16 %v8470
      %v9005 = vunpack.c.l.b16 %v8471
      %v9006 = vunpack.c.h.b16 %v8471
      %v9007 = vunpack.c.l.b16 %v8472
      %v9008 = vunpack.c.h.b16 %v8472
      %v9009 = vunpack.c.l.b16 %v8473
      %v9010 = vunpack.c.l.b16 %v8474
      %v9011 = vunpack.c.h.b16 %v8474
      %v9012 = vunpack.c.l.b16 %v8475
      %v9013 = vunpack.c.h.b16 %v8475
      %v9014 = vunpack.c.l.b16 %v8476
      %v9015 = vunpack.c.h.b16 %v8476
      %v9016 = vunpack.c.l.b16 %v8477
      %v9017 = vunpack.c.h.b16 %v8477
      %v9018 = vunpack.c.l.b16 %v8478
      %v9019 = vunpack.c.l.b16 %v8479
      %v9020 = vunpack.c.h.b16 %v8479
      %v9021 = vunpack.c.l.b16 %v8480
      %v9022 = vunpack.c.h.b16 %v8480
      %v9023 = vunpack.c.l.b16 %v8481
      %v9024 = vunpack.c.h.b16 %v8481
      %v9025 = vunpack.c.l.b16 %v8482
      %v9026 = vunpack.c.h.b16 %v8482
      %v9027 = vunpack.c.l.b16 %v8483
      %v9028 = vunpack.c.l.b16 %v8484
      %v9029 = vunpack.c.h.b16 %v8484
      %v9030 = vunpack.c.l.b16 %v8485
      %v9031 = vunpack.c.h.b16 %v8485
      %v9032 = vunpack.c.l.b16 %v8486
      %v9033 = vunpack.c.h.b16 %v8486
      %v9034 = vunpack.c.l.b16 %v8487
      %v9035 = vunpack.c.h.b16 %v8487
      %v9036 = vunpack.c.l.b16 %v8488
      %v9037 = vunpack.c.l.b16 %v8489
      %v9038 = vunpack.c.h.b16 %v8489
      %v9039 = vunpack.c.l.b16 %v8490
      %v9040 = vunpack.c.h.b16 %v8490
      %v9041 = vunpack.c.l.b16 %v8491
      %v9042 = vunpack.c.h.b16 %v8491
      %v9043 = vunpack.c.l.b16 %v8492
      %v9044 = vunpack.c.h.b16 %v8492
      %v9045 = vunpack.c.l.b16 %v8493
      %v9046 = vunpack.c.l.b16 %v8494
      %v9047 = vunpack.c.h.b16 %v8494
      %v9048 = vunpack.c.l.b16 %v8495
      %v9049 = vunpack.c.h.b16 %v8495
      %v9050 = vunpack.c.l.b16 %v8496
      %v9051 = vunpack.c.h.b16 %v8496
      %v9052 = vunpack.c.l.b16 %v8497
      %v9053 = vunpack.c.h.b16 %v8497
      %v9054 = vunpack.c.l.b16 %v8498
      %v9055 = vunpack.c.l.b16 %v8499
      %v9056 = vunpack.c.h.b16 %v8499
      %v9057 = vunpack.c.l.b16 %v8500
      %v9058 = vunpack.c.h.b16 %v8500
      %v9059 = vunpack.c.l.b16 %v8501
      %v9060 = vunpack.c.h.b16 %v8501
      %v9061 = vunpack.c.l.b16 %v8502
      %v9062 = vunpack.c.h.b16 %v8502
      %v9063 = vunpack.c.l.b16 %v8503
      %v9064 = vunpack.c.l.b16 %v8504
      %v9065 = vunpack.c.h.b16 %v8504
      %v9066 = vunpack.c.l.b16 %v8505
      %v9067 = vunpack.c.h.b16 %v8505
      %v9068 = vunpack.c.l.b16 %v8506
      %v9069 = vunpack.c.h.b16 %v8506
      %v9070 = vunpack.c.l.b16 %v8507
      %v9071 = vunpack.c.h.b16 %v8507
      %v9072 = vunpack.c.l.b16 %v8508
      %v9073 = vunpack.c.l.b16 %v8509
      %v9074 = vunpack.c.h.b16 %v8509
      %v9075 = vunpack.c.l.b16 %v8510
      %v9076 = vunpack.c.h.b16 %v8510
      %v9077 = vunpack.c.l.b16 %v8511
      %v9078 = vunpack.c.h.b16 %v8511
      %v9079 = vunpack.c.l.b16 %v8512
      %v9080 = vunpack.c.h.b16 %v8512
      %v9081 = vunpack.c.l.b16 %v8513
      %v9082 = vunpack.c.l.b16 %v8514
      %v9083 = vunpack.c.h.b16 %v8514
      %v9084 = vunpack.c.l.b16 %v8515
      %v9085 = vunpack.c.h.b16 %v8515
      %v9086 = vunpack.c.l.b16 %v8516
      %v9087 = vunpack.c.h.b16 %v8516
      %v9088 = vunpack.c.l.b16 %v8517
      %v9089 = vunpack.c.h.b16 %v8517
      %v9090 = vunpack.c.l.b16 %v8518
      %v9091 = vunpack.c.l.b16 %v8519
      %v9092 = vunpack.c.h.b16 %v8519
      %v9093 = vunpack.c.l.b16 %v8520
      %v9094 = vunpack.c.h.b16 %v8520
      %v9095 = vunpack.c.l.b16 %v8521
      %v9096 = vunpack.c.h.b16 %v8521
      %v9097 = vunpack.c.l.b16 %v8522
      %v9098 = vunpack.c.h.b16 %v8522
      %v9099 = vunpack.c.l.b16 %v8523
      %v9100 = vunpack.c.l.b16 %v8524
      %v9101 = vunpack.c.h.b16 %v8524
      %v9102 = vunpack.c.l.b16 %v8525
      %v9103 = vunpack.c.h.b16 %v8525
      %v9104 = vunpack.c.l.b16 %v8526
      %v9105 = vunpack.c.h.b16 %v8526
      %v9106 = vunpack.c.l.b16 %v8527
      %v9107 = vunpack.c.h.b16 %v8527
      %v9108 = vunpack.c.l.b16 %v8528
      %v9109 = vunpack.c.l.b16 %v8529
      %v9110 = vunpack.c.h.b16 %v8529
      %v9111 = vunpack.c.l.b16 %v8530
      %v9112 = vunpack.c.h.b16 %v8530
      %v9113 = vunpack.c.l.b16 %v8531
      %v9114 = vunpack.c.h.b16 %v8531
      %v9115 = vunpack.c.l.b16 %v8532
      %v9116 = vunpack.c.h.b16 %v8532
      %v9117 = vunpack.c.l.b16 %v8533
      %v9118 = vunpack.c.l.b16 %v8534
      %v9119 = vunpack.c.h.b16 %v8534
      %v9120 = vunpack.c.l.b16 %v8535
      %v9121 = vunpack.c.h.b16 %v8535
      %v9122 = vunpack.c.l.b16 %v8536
      %v9123 = vunpack.c.h.b16 %v8536
      %v9124 = vunpack.c.l.b16 %v8537
      %v9125 = vunpack.c.h.b16 %v8537
      %v9126 = vunpack.c.l.b16 %v8538
      %v9127 = vunpack.c.l.b16 %v8539
      %v9128 = vunpack.c.h.b16 %v8539
      %v9129 = vunpack.c.l.b16 %v8540
      %v9130 = vunpack.c.h.b16 %v8540
      %v9131 = vunpack.c.l.b16 %v8541
      %v9132 = vunpack.c.h.b16 %v8541
      %v9133 = vunpack.c.l.b16 %v8542
      %v9134 = vunpack.c.h.b16 %v8542
      %v9135 = vunpack.c.l.b16 %v8543
      %v9136 = vpack.c.b16 %v8857, %v8848
      %v9137 = vpack.c.b16 %v8858, %v8849
      %v9138 = vpack.c.b16 %v8859, %v8850
      %v9139 = vpack.c.b16 %v8860, %v8851
      %v9140 = vpack.c.b16 %v8861, %v8852
      %v9141 = vpack.c.b16 %v8862, %v8853
      %v9142 = vpack.c.b16 %v8863, %v8854
      %v9143 = vpack.c.b16 %v8864, %v8855
      %v9144 = vpack.c.b16 %v8865, %v8856
      %v9145 = vpack.c.b16 %v8875, %v8866
      %v9146 = vpack.c.b16 %v8876, %v8867
      %v9147 = vpack.c.b16 %v8877, %v8868
      %v9148 = vpack.c.b16 %v8878, %v8869
      %v9149 = vpack.c.b16 %v8879, %v8870
      %v9150 = vpack.c.b16 %v8880, %v8871
      %v9151 = vpack.c.b16 %v8881, %v8872
      %v9152 = vpack.c.b16 %v8882, %v8873
      %v9153 = vpack.c.b16 %v8883, %v8874
      %v9154 = vpack.c.b16 %v8893, %v8884
      %v9155 = vpack.c.b16 %v8894, %v8885
      %v9156 = vpack.c.b16 %v8895, %v8886
      %v9157 = vpack.c.b16 %v8896, %v8887
      %v9158 = vpack.c.b16 %v8897, %v8888
      %v9159 = vpack.c.b16 %v8898, %v8889
      %v9160 = vpack.c.b16 %v8899, %v8890
      %v9161 = vpack.c.b16 %v8900, %v8891
      %v9162 = vpack.c.b16 %v8901, %v8892
      %v9163 = vpack.c.b16 %v8911, %v8902
      %v9164 = vpack.c.b16 %v8912, %v8903
      %v9165 = vpack.c.b16 %v8913, %v8904
      %v9166 = vpack.c.b16 %v8914, %v8905
      %v9167 = vpack.c.b16 %v8915, %v8906
      %v9168 = vpack.c.b16 %v8916, %v8907
      %v9169 = vpack.c.b16 %v8917, %v8908
      %v9170 = vpack.c.b16 %v8918, %v8909
      %v9171 = vpack.c.b16 %v8919, %v8910
      %v9172 = vpack.c.b16 %v8929, %v8920
      %v9173 = vpack.c.b16 %v8930, %v8921
      %v9174 = vpack.c.b16 %v8931, %v8922
      %v9175 = vpack.c.b16 %v8932, %v8923
      %v9176 = vpack.c.b16 %v8933, %v8924
      %v9177 = vpack.c.b16 %v8934, %v8925
      %v9178 = vpack.c.b16 %v8935, %v8926
      %v9179 = vpack.c.b16 %v8936, %v8927
      %v9180 = vpack.c.b16 %v8937, %v8928
      %v9181 = vpack.c.b16 %v8947, %v8938
      %v9182 = vpack.c.b16 %v8948, %v8939
      %v9183 = vpack.c.b16 %v8949, %v8940
      %v9184 = vpack.c.b16 %v8950, %v8941
      %v9185 = vpack.c.b16 %v8951, %v8942
      %v9186 = vpack.c.b16 %v8952, %v8943
      %v9187 = vpack.c.b16 %v8953, %v8944
      %v9188 = vpack.c.b16 %v8954, %v8945
      %v9189 = vpack.c.b16 %v8955, %v8946
      %v9190 = vpack.c.b16 %v8965, %v8956
      %v9191 = vpack.c.b16 %v8966, %v8957
      %v9192 = vpack.c.b16 %v8967, %v8958
      %v9193 = vpack.c.b16 %v8968, %v8959
      %v9194 = vpack.c.b16 %v8969, %v8960
      %v9195 = vpack.c.b16 %v8970, %v8961
      %v9196 = vpack.c.b16 %v8971, %v8962
      %v9197 = vpack.c.b16 %v8972, %v8963
      %v9198 = vpack.c.b16 %v8973, %v8964
      %v9199 = vpack.c.b16 %v8983, %v8974
      %v9200 = vpack.c.b16 %v8984, %v8975
      %v9201 = vpack.c.b16 %v8985, %v8976
      %v9202 = vpack.c.b16 %v8986, %v8977
      %v9203 = vpack.c.b16 %v8987, %v8978
      %v9204 = vpack.c.b16 %v8988, %v8979
      %v9205 = vpack.c.b16 %v8989, %v8980
      %v9206 = vpack.c.b16 %v8990, %v8981
      %v9207 = vpack.c.b16 %v8991, %v8982
      %v9208 = vpack.c.b16 %v9001, %v8992
      %v9209 = vpack.c.b16 %v9002, %v8993
      %v9210 = vpack.c.b16 %v9003, %v8994
      %v9211 = vpack.c.b16 %v9004, %v8995
      %v9212 = vpack.c.b16 %v9005, %v8996
      %v9213 = vpack.c.b16 %v9006, %v8997
      %v9214 = vpack.c.b16 %v9007, %v8998
      %v9215 = vpack.c.b16 %v9008, %v8999
      %v9216 = vpack.c.b16 %v9009, %v9000
      %v9217 = vpack.c.b16 %v9019, %v9010
      %v9218 = vpack.c.b16 %v9020, %v9011
      %v9219 = vpack.c.b16 %v9021, %v9012
      %v9220 = vpack.c.b16 %v9022, %v9013
      %v9221 = vpack.c.b16 %v9023, %v9014
      %v9222 = vpack.c.b16 %v9024, %v9015
      %v9223 = vpack.c.b16 %v9025, %v9016
      %v9224 = vpack.c.b16 %v9026, %v9017
      %v9225 = vpack.c.b16 %v9027, %v9018
      %v9226 = vpack.c.b16 %v9037, %v9028
      %v9227 = vpack.c.b16 %v9038, %v9029
      %v9228 = vpack.c.b16 %v9039, %v9030
      %v9229 = vpack.c.b16 %v9040, %v9031
      %v9230 = vpack.c.b16 %v9041, %v9032
      %v9231 = vpack.c.b16 %v9042, %v9033
      %v9232 = vpack.c.b16 %v9043, %v9034
      %v9233 = vpack.c.b16 %v9044, %v9035
      %v9234 = vpack.c.b16 %v9045, %v9036
      %v9235 = vpack.c.b16 %v9055, %v9046
      %v9236 = vpack.c.b16 %v9056, %v9047
      %v9237 = vpack.c.b16 %v9057, %v9048
      %v9238 = vpack.c.b16 %v9058, %v9049
      %v9239 = vpack.c.b16 %v9059, %v9050
      %v9240 = vpack.c.b16 %v9060, %v9051
      %v9241 = vpack.c.b16 %v9061, %v9052
      %v9242 = vpack.c.b16 %v9062, %v9053
      %v9243 = vpack.c.b16 %v9063, %v9054
      %v9244 = vpack.c.b16 %v9073, %v9064
      %v9245 = vpack.c.b16 %v9074, %v9065
      %v9246 = vpack.c.b16 %v9075, %v9066
      %v9247 = vpack.c.b16 %v9076, %v9067
      %v9248 = vpack.c.b16 %v9077, %v9068
      %v9249 = vpack.c.b16 %v9078, %v9069
      %v9250 = vpack.c.b16 %v9079, %v9070
      %v9251 = vpack.c.b16 %v9080, %v9071
      %v9252 = vpack.c.b16 %v9081, %v9072
      %v9253 = vpack.c.b16 %v9091, %v9082
      %v9254 = vpack.c.b16 %v9092, %v9083
      %v9255 = vpack.c.b16 %v9093, %v9084
      %v9256 = vpack.c.b16 %v9094, %v9085
      %v9257 = vpack.c.b16 %v9095, %v9086
      %v9258 = vpack.c.b16 %v9096, %v9087
      %v9259 = vpack.c.b16 %v9097, %v9088
      %v9260 = vpack.c.b16 %v9098, %v9089
      %v9261 = vpack.c.b16 %v9099, %v9090
      %v9262 = vpack.c.b16 %v9109, %v9100
      %v9263 = vpack.c.b16 %v9110, %v9101
      %v9264 = vpack.c.b16 %v9111, %v9102
      %v9265 = vpack.c.b16 %v9112, %v9103
      %v9266 = vpack.c.b16 %v9113, %v9104
      %v9267 = vpack.c.b16 %v9114, %v9105
      %v9268 = vpack.c.b16 %v9115, %v9106
      %v9269 = vpack.c.b16 %v9116, %v9107
      %v9270 = vpack.c.b16 %v9117, %v9108
      %v9271 = vpack.c.b16 %v9127, %v9118
      %v9272 = vpack.c.b16 %v9128, %v9119
      %v9273 = vpack.c.b16 %v9129, %v9120
      %v9274 = vpack.c.b16 %v9130, %v9121
      %v9275 = vpack.c.b16 %v9131, %v9122
      %v9276 = vpack.c.b16 %v9132, %v9123
      %v9277 = vpack.c.b16 %v9133, %v9124
      %v9278 = vpack.c.b16 %v9134, %v9125
      %v9279 = vpack.c.b16 %v9135, %v9126
      %v9568 = vunpack.c.l.b16 %v8544
      %v9569 = vunpack.c.l.b16 %v8545
      %v9570 = vunpack.c.l.b16 %v8546
      %v9571 = vunpack.c.l.b16 %v8547
      %v9572 = vunpack.c.l.b16 %v8548
      %v9573 = vunpack.c.l.b16 %v8549
      %v9574 = vunpack.c.l.b16 %v8550
      %v9575 = vunpack.c.l.b16 %v8551
      %v9576 = vunpack.c.l.b16 %v8552
      %v9577 = vunpack.c.l.b16 %v8553
      %v9578 = vunpack.c.l.b16 %v8554
      %v9579 = vunpack.c.l.b16 %v8555
      %v9580 = vunpack.c.l.b16 %v8556
      %v9581 = vunpack.c.l.b16 %v8557
      %v9582 = vunpack.c.l.b16 %v8558
      %v9583 = vunpack.c.l.b16 %v8559
      %v9584 = vunpack.c.l.b16 %v8560
      %v9585 = vunpack.c.l.b16 %v8561
      %v9586 = vunpack.c.l.b16 %v8562
      %v9587 = vunpack.c.l.b16 %v8563
      %v9588 = vunpack.c.l.b16 %v8564
      %v9589 = vunpack.c.l.b16 %v8565
      %v9590 = vunpack.c.l.b16 %v8566
      %v9591 = vunpack.c.l.b16 %v8567
      %v9592 = vunpack.c.l.b16 %v8568
      %v9593 = vunpack.c.l.b16 %v8569
      %v9594 = vunpack.c.l.b16 %v8570
      %v9595 = vunpack.c.l.b16 %v8571
      %v9596 = vunpack.c.l.b16 %v8572
      %v9597 = vunpack.c.l.b16 %v8573
      %v9598 = vunpack.c.l.b16 %v8574
      %v9599 = vunpack.c.l.b16 %v8575
      %v9600 = vunpack.c.l.b16 %v8576
      %v9601 = vunpack.c.l.b16 %v8577
      %v9602 = vunpack.c.l.b16 %v8578
      %v9603 = vunpack.c.l.b16 %v8579
      %v9604 = vunpack.c.l.b16 %v8580
      %v9605 = vunpack.c.l.b16 %v8581
      %v9606 = vunpack.c.l.b16 %v8582
      %v9607 = vunpack.c.l.b16 %v8583
      %v9608 = vunpack.c.l.b16 %v8584
      %v9609 = vunpack.c.l.b16 %v8585
      %v9610 = vunpack.c.l.b16 %v8586
      %v9611 = vunpack.c.l.b16 %v8587
      %v9612 = vunpack.c.l.b16 %v8588
      %v9613 = vunpack.c.l.b16 %v8589
      %v9614 = vunpack.c.l.b16 %v8590
      %v9615 = vunpack.c.l.b16 %v8591
      %v9616 = vunpack.c.l.b16 %v8592
      %v9617 = vunpack.c.l.b16 %v8593
      %v9618 = vunpack.c.l.b16 %v8594
      %v9619 = vunpack.c.l.b16 %v8595
      %v9620 = vunpack.c.l.b16 %v8596
      %v9621 = vunpack.c.l.b16 %v8597
      %v9622 = vunpack.c.l.b16 %v8598
      %v9623 = vunpack.c.l.b16 %v8599
      %v9624 = vunpack.c.l.b16 %v8600
      %v9625 = vunpack.c.l.b16 %v8601
      %v9626 = vunpack.c.l.b16 %v8602
      %v9627 = vunpack.c.l.b16 %v8603
      %v9628 = vunpack.c.l.b16 %v8604
      %v9629 = vunpack.c.l.b16 %v8605
      %v9630 = vunpack.c.l.b16 %v8606
      %v9631 = vunpack.c.l.b16 %v8607
      %v9632 = vunpack.c.l.b16 %v8608
      %v9633 = vunpack.c.l.b16 %v8609
      %v9634 = vunpack.c.l.b16 %v8610
      %v9635 = vunpack.c.l.b16 %v8611
      %v9636 = vunpack.c.l.b16 %v8612
      %v9637 = vunpack.c.l.b16 %v8613
      %v9638 = vunpack.c.l.b16 %v8614
      %v9639 = vunpack.c.l.b16 %v8615
      %v9640 = vunpack.c.l.b16 %v8616
      %v9641 = vunpack.c.l.b16 %v8617
      %v9642 = vunpack.c.l.b16 %v8618
      %v9643 = vunpack.c.l.b16 %v8619
      %v9644 = vunpack.c.l.b16 %v8620
      %v9645 = vunpack.c.l.b16 %v8621
      %v9646 = vunpack.c.l.b16 %v8622
      %v9647 = vunpack.c.l.b16 %v8623
      %v9648 = vunpack.c.l.b16 %v8624
      %v9649 = vunpack.c.l.b16 %v8625
      %v9650 = vunpack.c.l.b16 %v8626
      %v9651 = vunpack.c.l.b16 %v8627
      %v9652 = vunpack.c.l.b16 %v8628
      %v9653 = vunpack.c.l.b16 %v8629
      %v9654 = vunpack.c.l.b16 %v8630
      %v9655 = vunpack.c.l.b16 %v8631
      %v9656 = vunpack.c.l.b16 %v8632
      %v9657 = vunpack.c.l.b16 %v8633
      %v9658 = vunpack.c.l.b16 %v8634
      %v9659 = vunpack.c.l.b16 %v8635
      %v9660 = vunpack.c.l.b16 %v8636
      %v9661 = vunpack.c.l.b16 %v8637
      %v9662 = vunpack.c.l.b16 %v8638
      %v9663 = vunpack.c.l.b16 %v8639
      %v9664 = vunpack.c.l.b16 %v8640
      %v9665 = vunpack.c.l.b16 %v8641
      %v9666 = vunpack.c.l.b16 %v8642
      %v9667 = vunpack.c.l.b16 %v8643
      %v9668 = vunpack.c.l.b16 %v8644
      %v9669 = vunpack.c.l.b16 %v8645
      %v9670 = vunpack.c.l.b16 %v8646
      %v9671 = vunpack.c.l.b16 %v8647
      %v9672 = vunpack.c.l.b16 %v8648
      %v9673 = vunpack.c.l.b16 %v8649
      %v9674 = vunpack.c.l.b16 %v8650
      %v9675 = vunpack.c.l.b16 %v8651
      %v9676 = vunpack.c.l.b16 %v8652
      %v9677 = vunpack.c.l.b16 %v8653
      %v9678 = vunpack.c.l.b16 %v8654
      %v9679 = vunpack.c.l.b16 %v8655
      %v9680 = vunpack.c.l.b16 %v8656
      %v9681 = vunpack.c.l.b16 %v8657
      %v9682 = vunpack.c.l.b16 %v8658
      %v9683 = vunpack.c.l.b16 %v8659
      %v9684 = vunpack.c.l.b16 %v8660
      %v9685 = vunpack.c.l.b16 %v8661
      %v9686 = vunpack.c.l.b16 %v8662
      %v9687 = vunpack.c.l.b16 %v8663
      %v9688 = vunpack.c.l.b16 %v8664
      %v9689 = vunpack.c.l.b16 %v8665
      %v9690 = vunpack.c.l.b16 %v8666
      %v9691 = vunpack.c.l.b16 %v8667
      %v9692 = vunpack.c.l.b16 %v8668
      %v9693 = vunpack.c.l.b16 %v8669
      %v9694 = vunpack.c.l.b16 %v8670
      %v9695 = vunpack.c.l.b16 %v8671
      %v9696 = vunpack.c.l.b16 %v8672
      %v9697 = vunpack.c.l.b16 %v8673
      %v9698 = vunpack.c.l.b16 %v8674
      %v9699 = vunpack.c.l.b16 %v8675
      %v9700 = vunpack.c.l.b16 %v8676
      %v9701 = vunpack.c.l.b16 %v8677
      %v9702 = vunpack.c.l.b16 %v8678
      %v9703 = vunpack.c.l.b16 %v8679
      %v9704 = vunpack.c.l.b16 %v8680
      %v9705 = vunpack.c.l.b16 %v8681
      %v9706 = vunpack.c.l.b16 %v8682
      %v9707 = vunpack.c.l.b16 %v8683
      %v9708 = vunpack.c.l.b16 %v8684
      %v9709 = vunpack.c.l.b16 %v8685
      %v9710 = vunpack.c.l.b16 %v8686
      %v9711 = vunpack.c.l.b16 %v8687
      %v9712 = vpack.c.b16 %v9569, %v9568
      %v9713 = vpack.c.b16 %v9571, %v9570
      %v9714 = vpack.c.b16 %v9573, %v9572
      %v9715 = vpack.c.b16 %v9575, %v9574
      %v9716 = vpack.c.b16 %v9577, %v9576
      %v9717 = vpack.c.b16 %v9579, %v9578
      %v9718 = vpack.c.b16 %v9581, %v9580
      %v9719 = vpack.c.b16 %v9583, %v9582
      %v9720 = vpack.c.b16 %v9585, %v9584
      %v9721 = vpack.c.b16 %v9587, %v9586
      %v9722 = vpack.c.b16 %v9589, %v9588
      %v9723 = vpack.c.b16 %v9591, %v9590
      %v9724 = vpack.c.b16 %v9593, %v9592
      %v9725 = vpack.c.b16 %v9595, %v9594
      %v9726 = vpack.c.b16 %v9597, %v9596
      %v9727 = vpack.c.b16 %v9599, %v9598
      %v9728 = vpack.c.b16 %v9601, %v9600
      %v9729 = vpack.c.b16 %v9603, %v9602
      %v9730 = vpack.c.b16 %v9605, %v9604
      %v9731 = vpack.c.b16 %v9607, %v9606
      %v9732 = vpack.c.b16 %v9609, %v9608
      %v9733 = vpack.c.b16 %v9611, %v9610
      %v9734 = vpack.c.b16 %v9613, %v9612
      %v9735 = vpack.c.b16 %v9615, %v9614
      %v9736 = vpack.c.b16 %v9617, %v9616
      %v9737 = vpack.c.b16 %v9619, %v9618
      %v9738 = vpack.c.b16 %v9621, %v9620
      %v9739 = vpack.c.b16 %v9623, %v9622
      %v9740 = vpack.c.b16 %v9625, %v9624
      %v9741 = vpack.c.b16 %v9627, %v9626
      %v9742 = vpack.c.b16 %v9629, %v9628
      %v9743 = vpack.c.b16 %v9631, %v9630
      %v9744 = vpack.c.b16 %v9633, %v9632
      %v9745 = vpack.c.b16 %v9635, %v9634
      %v9746 = vpack.c.b16 %v9637, %v9636
      %v9747 = vpack.c.b16 %v9639, %v9638
      %v9748 = vpack.c.b16 %v9641, %v9640
      %v9749 = vpack.c.b16 %v9643, %v9642
      %v9750 = vpack.c.b16 %v9645, %v9644
      %v9751 = vpack.c.b16 %v9647, %v9646
      %v9752 = vpack.c.b16 %v9649, %v9648
      %v9753 = vpack.c.b16 %v9651, %v9650
      %v9754 = vpack.c.b16 %v9653, %v9652
      %v9755 = vpack.c.b16 %v9655, %v9654
      %v9756 = vpack.c.b16 %v9657, %v9656
      %v9757 = vpack.c.b16 %v9659, %v9658
      %v9758 = vpack.c.b16 %v9661, %v9660
      %v9759 = vpack.c.b16 %v9663, %v9662
      %v9760 = vpack.c.b16 %v9665, %v9664
      %v9761 = vpack.c.b16 %v9667, %v9666
      %v9762 = vpack.c.b16 %v9669, %v9668
      %v9763 = vpack.c.b16 %v9671, %v9670
      %v9764 = vpack.c.b16 %v9673, %v9672
      %v9765 = vpack.c.b16 %v9675, %v9674
      %v9766 = vpack.c.b16 %v9677, %v9676
      %v9767 = vpack.c.b16 %v9679, %v9678
      %v9768 = vpack.c.b16 %v9681, %v9680
      %v9769 = vpack.c.b16 %v9683, %v9682
      %v9770 = vpack.c.b16 %v9685, %v9684
      %v9771 = vpack.c.b16 %v9687, %v9686
      %v9772 = vpack.c.b16 %v9689, %v9688
      %v9773 = vpack.c.b16 %v9691, %v9690
      %v9774 = vpack.c.b16 %v9693, %v9692
      %v9775 = vpack.c.b16 %v9695, %v9694
      %v9776 = vpack.c.b16 %v9697, %v9696
      %v9777 = vpack.c.b16 %v9699, %v9698
      %v9778 = vpack.c.b16 %v9701, %v9700
      %v9779 = vpack.c.b16 %v9703, %v9702
      %v9780 = vpack.c.b16 %v9705, %v9704
      %v9781 = vpack.c.b16 %v9707, %v9706
      %v9782 = vpack.c.b16 %v9709, %v9708
      %v9783 = vpack.c.b16 %v9711, %v9710
      %9856 = vmatprep.subr.bf16.mxu0 0
      %9857 = vmatpush1.bf16.msra.mxu0 %v9719
      %9858 = vmatprep.subr.bf16.mxu0 0
      %9859 = vmatpush1.bf16.msra.mxu0 %v9718
      %9860 = vmatprep.subr.bf16.mxu0 0
      %9861 = vmatpush1.bf16.msra.mxu0 %v9717
      %9862 = vmatprep.subr.bf16.mxu0 0
      %9863 = vmatpush1.bf16.msra.mxu0 %v9716
      %9864 = vmatprep.subr.bf16.mxu0 0
      %9865 = vmatpush1.bf16.msra.mxu0 %v9715
      %9866 = vmatprep.subr.bf16.mxu0 0
      %9867 = vmatpush1.bf16.msra.mxu0 %v9714
      %9868 = vmatprep.subr.bf16.mxu0 0
      %9869 = vmatpush1.bf16.msra.mxu0 %v9713
      %9870 = vmatprep.subr.bf16.mxu0 0
      %9871 = vmatpush1.bf16.msra.mxu0 %v9712
      %9872 = vmatprep.subr.bf16.mxu0 0
      %9873 = vmatpush2.bf16.msra.mxu0 %v9727
      %9874 = vmatprep.subr.bf16.mxu0 0
      %9875 = vmatpush2.bf16.msra.mxu0 %v9726
      %9876 = vmatprep.subr.bf16.mxu0 0
      %9877 = vmatpush2.bf16.msra.mxu0 %v9725
      %9878 = vmatprep.subr.bf16.mxu0 0
      %9879 = vmatpush2.bf16.msra.mxu0 %v9724
      %9880 = vmatprep.subr.bf16.mxu0 0
      %9881 = vmatpush2.bf16.msra.mxu0 %v9723
      %9882 = vmatprep.subr.bf16.mxu0 0
      %9883 = vmatpush2.bf16.msra.mxu0 %v9722
      %9884 = vmatprep.subr.bf16.mxu0 0
      %9885 = vmatpush2.bf16.msra.mxu0 %v9721
      %9886 = vmatprep.subr.bf16.mxu0 0
      %9887 = vmatpush2.bf16.msra.mxu0 %v9720
      %9888 = vmatprep.mubr.bf16.mxu0 %v9137
      %9889 = vmatmul.mubr.bf16.gmra.mxu0 %v9136
      %v9890 = vpop.f32.mrf.mxu0
      %v9891 = vadd.f32 0.0, %v9890
      %v9892 = vpop.f32.mrf.mxu0
      %v9893 = vpop.f32.mrf.mxu0
      %v9894 = vadd.f32 0.0, %v9893
      %v9895 = vpop.f32.mrf.mxu0
      %9896 = vmatprep.mubr.bf16.mxu0 %v9146
      %9897 = vmatmul.mubr.bf16.gmra.mxu0 %v9145
      %v9898 = vpop.f32.mrf.mxu0
      %v9899 = vadd.f32 0.0, %v9898
      %v9900 = vpop.f32.mrf.mxu0
      %v9901 = vpop.f32.mrf.mxu0
      %v9902 = vadd.f32 0.0, %v9901
      %v9903 = vpop.f32.mrf.mxu0
      %9904 = vmatprep.mubr.bf16.mxu0 %v9155
      %9905 = vmatmul.mubr.bf16.gmra.mxu0 %v9154
      %v9906 = vpop.f32.mrf.mxu0
      %v9907 = vadd.f32 0.0, %v9906
      %v9908 = vpop.f32.mrf.mxu0
      %v9909 = vpop.f32.mrf.mxu0
      %v9910 = vadd.f32 0.0, %v9909
      %v9911 = vpop.f32.mrf.mxu0
      %9912 = vmatprep.mubr.bf16.mxu0 %v9164
      %9913 = vmatmul.mubr.bf16.gmra.mxu0 %v9163
      %v9914 = vpop.f32.mrf.mxu0
      %v9915 = vadd.f32 0.0, %v9914
      %v9916 = vpop.f32.mrf.mxu0
      %v9917 = vpop.f32.mrf.mxu0
      %v9918 = vadd.f32 0.0, %v9917
      %v9919 = vpop.f32.mrf.mxu0
      %9920 = vmatprep.mubr.bf16.mxu0 %v9173
      %9921 = vmatmul.mubr.bf16.gmra.mxu0 %v9172
      %v9922 = vpop.f32.mrf.mxu0
      %v9923 = vadd.f32 0.0, %v9922
      %v9924 = vpop.f32.mrf.mxu0
      %v9925 = vpop.f32.mrf.mxu0
      %v9926 = vadd.f32 0.0, %v9925
      %v9927 = vpop.f32.mrf.mxu0
      %9928 = vmatprep.mubr.bf16.mxu0 %v9182
      %9929 = vmatmul.mubr.bf16.gmra.mxu0 %v9181
      %v9930 = vpop.f32.mrf.mxu0
      %v9931 = vadd.f32 0.0, %v9930
      %v9932 = vpop.f32.mrf.mxu0
      %v9933 = vpop.f32.mrf.mxu0
      %v9934 = vadd.f32 0.0, %v9933
      %v9935 = vpop.f32.mrf.mxu0
      %9936 = vmatprep.mubr.bf16.mxu0 %v9191
      %9937 = vmatmul.mubr.bf16.gmra.mxu0 %v9190
      %v9938 = vpop.f32.mrf.mxu0
      %v9939 = vadd.f32 0.0, %v9938
      %v9940 = vpop.f32.mrf.mxu0
      %v9941 = vpop.f32.mrf.mxu0
      %v9942 = vadd.f32 0.0, %v9941
      %v9943 = vpop.f32.mrf.mxu0
      %9944 = vmatprep.mubr.bf16.mxu0 %v9200
      %9945 = vmatmul.mubr.bf16.gmra.mxu0 %v9199
      %v9946 = vpop.f32.mrf.mxu0
      %v9947 = vadd.f32 0.0, %v9946
      %v9948 = vpop.f32.mrf.mxu0
      %v9949 = vpop.f32.mrf.mxu0
      %v9950 = vadd.f32 0.0, %v9949
      %v9951 = vpop.f32.mrf.mxu0
      %9952 = vmatprep.mubr.bf16.mxu0 %v9209
      %9953 = vmatmul.mubr.bf16.gmra.mxu0 %v9208
      %v9954 = vpop.f32.mrf.mxu0
      %v9955 = vadd.f32 0.0, %v9954
      %v9956 = vpop.f32.mrf.mxu0
      %v9957 = vpop.f32.mrf.mxu0
      %v9958 = vadd.f32 0.0, %v9957
      %v9959 = vpop.f32.mrf.mxu0
      %9960 = vmatprep.mubr.bf16.mxu0 %v9218
      %9961 = vmatmul.mubr.bf16.gmra.mxu0 %v9217
      %v9962 = vpop.f32.mrf.mxu0
      %v9963 = vadd.f32 0.0, %v9962
      %v9964 = vpop.f32.mrf.mxu0
      %v9965 = vpop.f32.mrf.mxu0
      %v9966 = vadd.f32 0.0, %v9965
      %v9967 = vpop.f32.mrf.mxu0
      %9968 = vmatprep.mubr.bf16.mxu0 %v9227
      %9969 = vmatmul.mubr.bf16.gmra.mxu0 %v9226
      %v9970 = vpop.f32.mrf.mxu0
      %v9971 = vadd.f32 0.0, %v9970
      %v9972 = vpop.f32.mrf.mxu0
      %v9973 = vpop.f32.mrf.mxu0
      %v9974 = vadd.f32 0.0, %v9973
      %v9975 = vpop.f32.mrf.mxu0
      %9976 = vmatprep.mubr.bf16.mxu0 %v9236
      %9977 = vmatmul.mubr.bf16.gmra.mxu0 %v9235
      %v9978 = vpop.f32.mrf.mxu0
      %v9979 = vadd.f32 0.0, %v9978
      %v9980 = vpop.f32.mrf.mxu0
      %v9981 = vpop.f32.mrf.mxu0
      %v9982 = vadd.f32 0.0, %v9981
      %v9983 = vpop.f32.mrf.mxu0
      %9984 = vmatprep.mubr.bf16.mxu0 %v9245
      %9985 = vmatmul.mubr.bf16.gmra.mxu0 %v9244
      %v9986 = vpop.f32.mrf.mxu0
      %v9987 = vadd.f32 0.0, %v9986
      %v9988 = vpop.f32.mrf.mxu0
      %v9989 = vpop.f32.mrf.mxu0
      %v9990 = vadd.f32 0.0, %v9989
      %v9991 = vpop.f32.mrf.mxu0
      %9992 = vmatprep.mubr.bf16.mxu0 %v9254
      %9993 = vmatmul.mubr.bf16.gmra.mxu0 %v9253
      %v9994 = vpop.f32.mrf.mxu0
      %v9995 = vadd.f32 0.0, %v9994
      %v9996 = vpop.f32.mrf.mxu0
      %v9997 = vpop.f32.mrf.mxu0
      %v9998 = vadd.f32 0.0, %v9997
      %v9999 = vpop.f32.mrf.mxu0
      %10000 = vmatprep.mubr.bf16.mxu0 %v9263
      %10001 = vmatmul.mubr.bf16.gmra.mxu0 %v9262
      %v10002 = vpop.f32.mrf.mxu0
      %v10003 = vadd.f32 0.0, %v10002
      %v10004 = vpop.f32.mrf.mxu0
      %v10005 = vpop.f32.mrf.mxu0
      %v10006 = vadd.f32 0.0, %v10005
      %v10007 = vpop.f32.mrf.mxu0
      %10008 = vmatprep.mubr.bf16.mxu0 %v9272
      %10009 = vmatmul.mubr.bf16.gmra.mxu0 %v9271
      %v10010 = vpop.f32.mrf.mxu0
      %v10011 = vadd.f32 0.0, %v10010
      %v10012 = vpop.f32.mrf.mxu0
      %v10013 = vpop.f32.mrf.mxu0
      %v10014 = vadd.f32 0.0, %v10013
      %v10015 = vpop.f32.mrf.mxu0
      %10016 = vdwg.mxu0
      %10017 = vmatprep.subr.bf16.mxu0 0
      %10018 = vmatpush1.bf16.msra.mxu0 %v9735
      %10019 = vmatprep.subr.bf16.mxu0 0
      %10020 = vmatpush1.bf16.msra.mxu0 %v9734
      %10021 = vmatprep.subr.bf16.mxu0 0
      %10022 = vmatpush1.bf16.msra.mxu0 %v9733
      %10023 = vmatprep.subr.bf16.mxu0 0
      %10024 = vmatpush1.bf16.msra.mxu0 %v9732
      %10025 = vmatprep.subr.bf16.mxu0 0
      %10026 = vmatpush1.bf16.msra.mxu0 %v9731
      %10027 = vmatprep.subr.bf16.mxu0 0
      %10028 = vmatpush1.bf16.msra.mxu0 %v9730
      %10029 = vmatprep.subr.bf16.mxu0 0
      %10030 = vmatpush1.bf16.msra.mxu0 %v9729
      %10031 = vmatprep.subr.bf16.mxu0 0
      %10032 = vmatpush1.bf16.msra.mxu0 %v9728
      %10033 = vmatprep.subr.bf16.mxu0 0
      %10034 = vmatpush2.bf16.msra.mxu0 %v9743
      %10035 = vmatprep.subr.bf16.mxu0 0
      %10036 = vmatpush2.bf16.msra.mxu0 %v9742
      %10037 = vmatprep.subr.bf16.mxu0 0
      %10038 = vmatpush2.bf16.msra.mxu0 %v9741
      %10039 = vmatprep.subr.bf16.mxu0 0
      %10040 = vmatpush2.bf16.msra.mxu0 %v9740
      %10041 = vmatprep.subr.bf16.mxu0 0
      %10042 = vmatpush2.bf16.msra.mxu0 %v9739
      %10043 = vmatprep.subr.bf16.mxu0 0
      %10044 = vmatpush2.bf16.msra.mxu0 %v9738
      %10045 = vmatprep.subr.bf16.mxu0 0
      %10046 = vmatpush2.bf16.msra.mxu0 %v9737
      %10047 = vmatprep.subr.bf16.mxu0 0
      %10048 = vmatpush2.bf16.msra.mxu0 %v9736
      %10049 = vmatprep.mubr.bf16.mxu0 %v9139
      %10050 = vmatmul.mubr.bf16.gmra.mxu0 %v9138
      %v10051 = vpop.f32.mrf.mxu0
      %v10052 = vadd.f32 %v9891, %v10051
      %v10053 = vpop.f32.mrf.mxu0
      %v10054 = vpop.f32.mrf.mxu0
      %v10055 = vadd.f32 %v9894, %v10054
      %v10056 = vpop.f32.mrf.mxu0
      %10057 = vmatprep.mubr.bf16.mxu0 %v9148
      %10058 = vmatmul.mubr.bf16.gmra.mxu0 %v9147
      %v10059 = vpop.f32.mrf.mxu0
      %v10060 = vadd.f32 %v9899, %v10059
      %v10061 = vpop.f32.mrf.mxu0
      %v10062 = vpop.f32.mrf.mxu0
      %v10063 = vadd.f32 %v9902, %v10062
      %v10064 = vpop.f32.mrf.mxu0
      %10065 = vmatprep.mubr.bf16.mxu0 %v9157
      %10066 = vmatmul.mubr.bf16.gmra.mxu0 %v9156
      %v10067 = vpop.f32.mrf.mxu0
      %v10068 = vadd.f32 %v9907, %v10067
      %v10069 = vpop.f32.mrf.mxu0
      %v10070 = vpop.f32.mrf.mxu0
      %v10071 = vadd.f32 %v9910, %v10070
      %v10072 = vpop.f32.mrf.mxu0
      %10073 = vmatprep.mubr.bf16.mxu0 %v9166
      %10074 = vmatmul.mubr.bf16.gmra.mxu0 %v9165
      %v10075 = vpop.f32.mrf.mxu0
      %v10076 = vadd.f32 %v9915, %v10075
      %v10077 = vpop.f32.mrf.mxu0
      %v10078 = vpop.f32.mrf.mxu0
      %v10079 = vadd.f32 %v9918, %v10078
      %v10080 = vpop.f32.mrf.mxu0
      %10081 = vmatprep.mubr.bf16.mxu0 %v9175
      %10082 = vmatmul.mubr.bf16.gmra.mxu0 %v9174
      %v10083 = vpop.f32.mrf.mxu0
      %v10084 = vadd.f32 %v9923, %v10083
      %v10085 = vpop.f32.mrf.mxu0
      %v10086 = vpop.f32.mrf.mxu0
      %v10087 = vadd.f32 %v9926, %v10086
      %v10088 = vpop.f32.mrf.mxu0
      %10089 = vmatprep.mubr.bf16.mxu0 %v9184
      %10090 = vmatmul.mubr.bf16.gmra.mxu0 %v9183
      %v10091 = vpop.f32.mrf.mxu0
      %v10092 = vadd.f32 %v9931, %v10091
      %v10093 = vpop.f32.mrf.mxu0
      %v10094 = vpop.f32.mrf.mxu0
      %v10095 = vadd.f32 %v9934, %v10094
      %v10096 = vpop.f32.mrf.mxu0
      %10097 = vmatprep.mubr.bf16.mxu0 %v9193
      %10098 = vmatmul.mubr.bf16.gmra.mxu0 %v9192
      %v10099 = vpop.f32.mrf.mxu0
      %v10100 = vadd.f32 %v9939, %v10099
      %v10101 = vpop.f32.mrf.mxu0
      %v10102 = vpop.f32.mrf.mxu0
      %v10103 = vadd.f32 %v9942, %v10102
      %v10104 = vpop.f32.mrf.mxu0
      %10105 = vmatprep.mubr.bf16.mxu0 %v9202
      %10106 = vmatmul.mubr.bf16.gmra.mxu0 %v9201
      %v10107 = vpop.f32.mrf.mxu0
      %v10108 = vadd.f32 %v9947, %v10107
      %v10109 = vpop.f32.mrf.mxu0
      %v10110 = vpop.f32.mrf.mxu0
      %v10111 = vadd.f32 %v9950, %v10110
      %v10112 = vpop.f32.mrf.mxu0
      %10113 = vmatprep.mubr.bf16.mxu0 %v9211
      %10114 = vmatmul.mubr.bf16.gmra.mxu0 %v9210
      %v10115 = vpop.f32.mrf.mxu0
      %v10116 = vadd.f32 %v9955, %v10115
      %v10117 = vpop.f32.mrf.mxu0
      %v10118 = vpop.f32.mrf.mxu0
      %v10119 = vadd.f32 %v9958, %v10118
      %v10120 = vpop.f32.mrf.mxu0
      %10121 = vmatprep.mubr.bf16.mxu0 %v9220
      %10122 = vmatmul.mubr.bf16.gmra.mxu0 %v9219
      %v10123 = vpop.f32.mrf.mxu0
      %v10124 = vadd.f32 %v9963, %v10123
      %v10125 = vpop.f32.mrf.mxu0
      %v10126 = vpop.f32.mrf.mxu0
      %v10127 = vadd.f32 %v9966, %v10126
      %v10128 = vpop.f32.mrf.mxu0
      %10129 = vmatprep.mubr.bf16.mxu0 %v9229
      %10130 = vmatmul.mubr.bf16.gmra.mxu0 %v9228
      %v10131 = vpop.f32.mrf.mxu0
      %v10132 = vadd.f32 %v9971, %v10131
      %v10133 = vpop.f32.mrf.mxu0
      %v10134 = vpop.f32.mrf.mxu0
      %v10135 = vadd.f32 %v9974, %v10134
      %v10136 = vpop.f32.mrf.mxu0
      %10137 = vmatprep.mubr.bf16.mxu0 %v9238
      %10138 = vmatmul.mubr.bf16.gmra.mxu0 %v9237
      %v10139 = vpop.f32.mrf.mxu0
      %v10140 = vadd.f32 %v9979, %v10139
      %v10141 = vpop.f32.mrf.mxu0
      %v10142 = vpop.f32.mrf.mxu0
      %v10143 = vadd.f32 %v9982, %v10142
      %v10144 = vpop.f32.mrf.mxu0
      %10145 = vmatprep.mubr.bf16.mxu0 %v9247
      %10146 = vmatmul.mubr.bf16.gmra.mxu0 %v9246
      %v10147 = vpop.f32.mrf.mxu0
      %v10148 = vadd.f32 %v9987, %v10147
      %v10149 = vpop.f32.mrf.mxu0
      %v10150 = vpop.f32.mrf.mxu0
      %v10151 = vadd.f32 %v9990, %v10150
      %v10152 = vpop.f32.mrf.mxu0
      %10153 = vmatprep.mubr.bf16.mxu0 %v9256
      %10154 = vmatmul.mubr.bf16.gmra.mxu0 %v9255
      %v10155 = vpop.f32.mrf.mxu0
      %v10156 = vadd.f32 %v9995, %v10155
      %v10157 = vpop.f32.mrf.mxu0
      %v10158 = vpop.f32.mrf.mxu0
      %v10159 = vadd.f32 %v9998, %v10158
      %v10160 = vpop.f32.mrf.mxu0
      %10161 = vmatprep.mubr.bf16.mxu0 %v9265
      %10162 = vmatmul.mubr.bf16.gmra.mxu0 %v9264
      %v10163 = vpop.f32.mrf.mxu0
      %v10164 = vadd.f32 %v10003, %v10163
      %v10165 = vpop.f32.mrf.mxu0
      %v10166 = vpop.f32.mrf.mxu0
      %v10167 = vadd.f32 %v10006, %v10166
      %v10168 = vpop.f32.mrf.mxu0
      %10169 = vmatprep.mubr.bf16.mxu0 %v9274
      %10170 = vmatmul.mubr.bf16.gmra.mxu0 %v9273
      %v10171 = vpop.f32.mrf.mxu0
      %v10172 = vadd.f32 %v10011, %v10171
      %v10173 = vpop.f32.mrf.mxu0
      %v10174 = vpop.f32.mrf.mxu0
      %v10175 = vadd.f32 %v10014, %v10174
      %v10176 = vpop.f32.mrf.mxu0
      %10177 = vdwg.mxu0
      %10178 = vmatprep.subr.bf16.mxu0 0
      %10179 = vmatpush1.bf16.msra.mxu0 %v9751
      %10180 = vmatprep.subr.bf16.mxu0 0
      %10181 = vmatpush1.bf16.msra.mxu0 %v9750
      %10182 = vmatprep.subr.bf16.mxu0 0
      %10183 = vmatpush1.bf16.msra.mxu0 %v9749
      %10184 = vmatprep.subr.bf16.mxu0 0
      %10185 = vmatpush1.bf16.msra.mxu0 %v9748
      %10186 = vmatprep.subr.bf16.mxu0 0
      %10187 = vmatpush1.bf16.msra.mxu0 %v9747
      %10188 = vmatprep.subr.bf16.mxu0 0
      %10189 = vmatpush1.bf16.msra.mxu0 %v9746
      %10190 = vmatprep.subr.bf16.mxu0 0
      %10191 = vmatpush1.bf16.msra.mxu0 %v9745
      %10192 = vmatprep.subr.bf16.mxu0 0
      %10193 = vmatpush1.bf16.msra.mxu0 %v9744
      %10194 = vmatprep.subr.bf16.mxu0 0
      %10195 = vmatpush2.bf16.msra.mxu0 %v9759
      %10196 = vmatprep.subr.bf16.mxu0 0
      %10197 = vmatpush2.bf16.msra.mxu0 %v9758
      %10198 = vmatprep.subr.bf16.mxu0 0
      %10199 = vmatpush2.bf16.msra.mxu0 %v9757
      %10200 = vmatprep.subr.bf16.mxu0 0
      %10201 = vmatpush2.bf16.msra.mxu0 %v9756
      %10202 = vmatprep.subr.bf16.mxu0 0
      %10203 = vmatpush2.bf16.msra.mxu0 %v9755
      %10204 = vmatprep.subr.bf16.mxu0 0
      %10205 = vmatpush2.bf16.msra.mxu0 %v9754
      %10206 = vmatprep.subr.bf16.mxu0 0
      %10207 = vmatpush2.bf16.msra.mxu0 %v9753
      %10208 = vmatprep.subr.bf16.mxu0 0
      %10209 = vmatpush2.bf16.msra.mxu0 %v9752
      %10210 = vmatprep.mubr.bf16.mxu0 %v9141
      %10211 = vmatmul.mubr.bf16.gmra.mxu0 %v9140
      %v10212 = vpop.f32.mrf.mxu0
      %v10213 = vadd.f32 %v10052, %v10212
      %v10214 = vpop.f32.mrf.mxu0
      %v10215 = vpop.f32.mrf.mxu0
      %v10216 = vadd.f32 %v10055, %v10215
      %v10217 = vpop.f32.mrf.mxu0
      %10218 = vmatprep.mubr.bf16.mxu0 %v9150
      %10219 = vmatmul.mubr.bf16.gmra.mxu0 %v9149
      %v10220 = vpop.f32.mrf.mxu0
      %v10221 = vadd.f32 %v10060, %v10220
      %v10222 = vpop.f32.mrf.mxu0
      %v10223 = vpop.f32.mrf.mxu0
      %v10224 = vadd.f32 %v10063, %v10223
      %v10225 = vpop.f32.mrf.mxu0
      %10226 = vmatprep.mubr.bf16.mxu0 %v9159
      %10227 = vmatmul.mubr.bf16.gmra.mxu0 %v9158
      %v10228 = vpop.f32.mrf.mxu0
      %v10229 = vadd.f32 %v10068, %v10228
      %v10230 = vpop.f32.mrf.mxu0
      %v10231 = vpop.f32.mrf.mxu0
      %v10232 = vadd.f32 %v10071, %v10231
      %v10233 = vpop.f32.mrf.mxu0
      %10234 = vmatprep.mubr.bf16.mxu0 %v9168
      %10235 = vmatmul.mubr.bf16.gmra.mxu0 %v9167
      %v10236 = vpop.f32.mrf.mxu0
      %v10237 = vadd.f32 %v10076, %v10236
      %v10238 = vpop.f32.mrf.mxu0
      %v10239 = vpop.f32.mrf.mxu0
      %v10240 = vadd.f32 %v10079, %v10239
      %v10241 = vpop.f32.mrf.mxu0
      %10242 = vmatprep.mubr.bf16.mxu0 %v9177
      %10243 = vmatmul.mubr.bf16.gmra.mxu0 %v9176
      %v10244 = vpop.f32.mrf.mxu0
      %v10245 = vadd.f32 %v10084, %v10244
      %v10246 = vpop.f32.mrf.mxu0
      %v10247 = vpop.f32.mrf.mxu0
      %v10248 = vadd.f32 %v10087, %v10247
      %v10249 = vpop.f32.mrf.mxu0
      %10250 = vmatprep.mubr.bf16.mxu0 %v9186
      %10251 = vmatmul.mubr.bf16.gmra.mxu0 %v9185
      %v10252 = vpop.f32.mrf.mxu0
      %v10253 = vadd.f32 %v10092, %v10252
      %v10254 = vpop.f32.mrf.mxu0
      %v10255 = vpop.f32.mrf.mxu0
      %v10256 = vadd.f32 %v10095, %v10255
      %v10257 = vpop.f32.mrf.mxu0
      %10258 = vmatprep.mubr.bf16.mxu0 %v9195
      %10259 = vmatmul.mubr.bf16.gmra.mxu0 %v9194
      %v10260 = vpop.f32.mrf.mxu0
      %v10261 = vadd.f32 %v10100, %v10260
      %v10262 = vpop.f32.mrf.mxu0
      %v10263 = vpop.f32.mrf.mxu0
      %v10264 = vadd.f32 %v10103, %v10263
      %v10265 = vpop.f32.mrf.mxu0
      %10266 = vmatprep.mubr.bf16.mxu0 %v9204
      %10267 = vmatmul.mubr.bf16.gmra.mxu0 %v9203
      %v10268 = vpop.f32.mrf.mxu0
      %v10269 = vadd.f32 %v10108, %v10268
      %v10270 = vpop.f32.mrf.mxu0
      %v10271 = vpop.f32.mrf.mxu0
      %v10272 = vadd.f32 %v10111, %v10271
      %v10273 = vpop.f32.mrf.mxu0
      %10274 = vmatprep.mubr.bf16.mxu0 %v9213
      %10275 = vmatmul.mubr.bf16.gmra.mxu0 %v9212
      %v10276 = vpop.f32.mrf.mxu0
      %v10277 = vadd.f32 %v10116, %v10276
      %v10278 = vpop.f32.mrf.mxu0
      %v10279 = vpop.f32.mrf.mxu0
      %v10280 = vadd.f32 %v10119, %v10279
      %v10281 = vpop.f32.mrf.mxu0
      %10282 = vmatprep.mubr.bf16.mxu0 %v9222
      %10283 = vmatmul.mubr.bf16.gmra.mxu0 %v9221
      %v10284 = vpop.f32.mrf.mxu0
      %v10285 = vadd.f32 %v10124, %v10284
      %v10286 = vpop.f32.mrf.mxu0
      %v10287 = vpop.f32.mrf.mxu0
      %v10288 = vadd.f32 %v10127, %v10287
      %v10289 = vpop.f32.mrf.mxu0
      %10290 = vmatprep.mubr.bf16.mxu0 %v9231
      %10291 = vmatmul.mubr.bf16.gmra.mxu0 %v9230
      %v10292 = vpop.f32.mrf.mxu0
      %v10293 = vadd.f32 %v10132, %v10292
      %v10294 = vpop.f32.mrf.mxu0
      %v10295 = vpop.f32.mrf.mxu0
      %v10296 = vadd.f32 %v10135, %v10295
      %v10297 = vpop.f32.mrf.mxu0
      %10298 = vmatprep.mubr.bf16.mxu0 %v9240
      %10299 = vmatmul.mubr.bf16.gmra.mxu0 %v9239
      %v10300 = vpop.f32.mrf.mxu0
      %v10301 = vadd.f32 %v10140, %v10300
      %v10302 = vpop.f32.mrf.mxu0
      %v10303 = vpop.f32.mrf.mxu0
      %v10304 = vadd.f32 %v10143, %v10303
      %v10305 = vpop.f32.mrf.mxu0
      %10306 = vmatprep.mubr.bf16.mxu0 %v9249
      %10307 = vmatmul.mubr.bf16.gmra.mxu0 %v9248
      %v10308 = vpop.f32.mrf.mxu0
      %v10309 = vadd.f32 %v10148, %v10308
      %v10310 = vpop.f32.mrf.mxu0
      %v10311 = vpop.f32.mrf.mxu0
      %v10312 = vadd.f32 %v10151, %v10311
      %v10313 = vpop.f32.mrf.mxu0
      %10314 = vmatprep.mubr.bf16.mxu0 %v9258
      %10315 = vmatmul.mubr.bf16.gmra.mxu0 %v9257
      %v10316 = vpop.f32.mrf.mxu0
      %v10317 = vadd.f32 %v10156, %v10316
      %v10318 = vpop.f32.mrf.mxu0
      %v10319 = vpop.f32.mrf.mxu0
      %v10320 = vadd.f32 %v10159, %v10319
      %v10321 = vpop.f32.mrf.mxu0
      %10322 = vmatprep.mubr.bf16.mxu0 %v9267
      %10323 = vmatmul.mubr.bf16.gmra.mxu0 %v9266
      %v10324 = vpop.f32.mrf.mxu0
      %v10325 = vadd.f32 %v10164, %v10324
      %v10326 = vpop.f32.mrf.mxu0
      %v10327 = vpop.f32.mrf.mxu0
      %v10328 = vadd.f32 %v10167, %v10327
      %v10329 = vpop.f32.mrf.mxu0
      %10330 = vmatprep.mubr.bf16.mxu0 %v9276
      %10331 = vmatmul.mubr.bf16.gmra.mxu0 %v9275
      %v10332 = vpop.f32.mrf.mxu0
      %v10333 = vadd.f32 %v10172, %v10332
      %v10334 = vpop.f32.mrf.mxu0
      %v10335 = vpop.f32.mrf.mxu0
      %v10336 = vadd.f32 %v10175, %v10335
      %v10337 = vpop.f32.mrf.mxu0
      %10338 = vdwg.mxu0
      %10339 = vmatprep.subr.bf16.mxu0 0
      %10340 = vmatpush1.bf16.msra.mxu0 %v9767
      %10341 = vmatprep.subr.bf16.mxu0 0
      %10342 = vmatpush1.bf16.msra.mxu0 %v9766
      %10343 = vmatprep.subr.bf16.mxu0 0
      %10344 = vmatpush1.bf16.msra.mxu0 %v9765
      %10345 = vmatprep.subr.bf16.mxu0 0
      %10346 = vmatpush1.bf16.msra.mxu0 %v9764
      %10347 = vmatprep.subr.bf16.mxu0 0
      %10348 = vmatpush1.bf16.msra.mxu0 %v9763
      %10349 = vmatprep.subr.bf16.mxu0 0
      %10350 = vmatpush1.bf16.msra.mxu0 %v9762
      %10351 = vmatprep.subr.bf16.mxu0 0
      %10352 = vmatpush1.bf16.msra.mxu0 %v9761
      %10353 = vmatprep.subr.bf16.mxu0 0
      %10354 = vmatpush1.bf16.msra.mxu0 %v9760
      %10355 = vmatprep.subr.bf16.mxu0 0
      %10356 = vmatpush2.bf16.msra.mxu0 %v9775
      %10357 = vmatprep.subr.bf16.mxu0 0
      %10358 = vmatpush2.bf16.msra.mxu0 %v9774
      %10359 = vmatprep.subr.bf16.mxu0 0
      %10360 = vmatpush2.bf16.msra.mxu0 %v9773
      %10361 = vmatprep.subr.bf16.mxu0 0
      %10362 = vmatpush2.bf16.msra.mxu0 %v9772
      %10363 = vmatprep.subr.bf16.mxu0 0
      %10364 = vmatpush2.bf16.msra.mxu0 %v9771
      %10365 = vmatprep.subr.bf16.mxu0 0
      %10366 = vmatpush2.bf16.msra.mxu0 %v9770
      %10367 = vmatprep.subr.bf16.mxu0 0
      %10368 = vmatpush2.bf16.msra.mxu0 %v9769
      %10369 = vmatprep.subr.bf16.mxu0 0
      %10370 = vmatpush2.bf16.msra.mxu0 %v9768
      %10371 = vmatprep.mubr.bf16.mxu0 %v9143
      %10372 = vmatmul.mubr.bf16.gmra.mxu0 %v9142
      %v10373 = vpop.f32.mrf.mxu0
      %v10374 = vadd.f32 %v10213, %v10373
      %v10375 = vpop.f32.mrf.mxu0
      %v10376 = vpop.f32.mrf.mxu0
      %v10377 = vadd.f32 %v10216, %v10376
      %v10378 = vpop.f32.mrf.mxu0
      %10379 = vmatprep.mubr.bf16.mxu0 %v9152
      %10380 = vmatmul.mubr.bf16.gmra.mxu0 %v9151
      %v10381 = vpop.f32.mrf.mxu0
      %v10382 = vadd.f32 %v10221, %v10381
      %v10383 = vpop.f32.mrf.mxu0
      %v10384 = vpop.f32.mrf.mxu0
      %v10385 = vadd.f32 %v10224, %v10384
      %v10386 = vpop.f32.mrf.mxu0
      %10387 = vmatprep.mubr.bf16.mxu0 %v9161
      %10388 = vmatmul.mubr.bf16.gmra.mxu0 %v9160
      %v10389 = vpop.f32.mrf.mxu0
      %v10390 = vadd.f32 %v10229, %v10389
      %v10391 = vpop.f32.mrf.mxu0
      %v10392 = vpop.f32.mrf.mxu0
      %v10393 = vadd.f32 %v10232, %v10392
      %v10394 = vpop.f32.mrf.mxu0
      %10395 = vmatprep.mubr.bf16.mxu0 %v9170
      %10396 = vmatmul.mubr.bf16.gmra.mxu0 %v9169
      %v10397 = vpop.f32.mrf.mxu0
      %v10398 = vadd.f32 %v10237, %v10397
      %v10399 = vpop.f32.mrf.mxu0
      %v10400 = vpop.f32.mrf.mxu0
      %v10401 = vadd.f32 %v10240, %v10400
      %v10402 = vpop.f32.mrf.mxu0
      %10403 = vmatprep.mubr.bf16.mxu0 %v9179
      %10404 = vmatmul.mubr.bf16.gmra.mxu0 %v9178
      %v10405 = vpop.f32.mrf.mxu0
      %v10406 = vadd.f32 %v10245, %v10405
      %v10407 = vpop.f32.mrf.mxu0
      %v10408 = vpop.f32.mrf.mxu0
      %v10409 = vadd.f32 %v10248, %v10408
      %v10410 = vpop.f32.mrf.mxu0
      %10411 = vmatprep.mubr.bf16.mxu0 %v9188
      %10412 = vmatmul.mubr.bf16.gmra.mxu0 %v9187
      %v10413 = vpop.f32.mrf.mxu0
      %v10414 = vadd.f32 %v10253, %v10413
      %v10415 = vpop.f32.mrf.mxu0
      %v10416 = vpop.f32.mrf.mxu0
      %v10417 = vadd.f32 %v10256, %v10416
      %v10418 = vpop.f32.mrf.mxu0
      %10419 = vmatprep.mubr.bf16.mxu0 %v9197
      %10420 = vmatmul.mubr.bf16.gmra.mxu0 %v9196
      %v10421 = vpop.f32.mrf.mxu0
      %v10422 = vadd.f32 %v10261, %v10421
      %v10423 = vpop.f32.mrf.mxu0
      %v10424 = vpop.f32.mrf.mxu0
      %v10425 = vadd.f32 %v10264, %v10424
      %v10426 = vpop.f32.mrf.mxu0
      %10427 = vmatprep.mubr.bf16.mxu0 %v9206
      %10428 = vmatmul.mubr.bf16.gmra.mxu0 %v9205
      %v10429 = vpop.f32.mrf.mxu0
      %v10430 = vadd.f32 %v10269, %v10429
      %v10431 = vpop.f32.mrf.mxu0
      %v10432 = vpop.f32.mrf.mxu0
      %v10433 = vadd.f32 %v10272, %v10432
      %v10434 = vpop.f32.mrf.mxu0
      %10435 = vmatprep.mubr.bf16.mxu0 %v9215
      %10436 = vmatmul.mubr.bf16.gmra.mxu0 %v9214
      %v10437 = vpop.f32.mrf.mxu0
      %v10438 = vadd.f32 %v10277, %v10437
      %v10439 = vpop.f32.mrf.mxu0
      %v10440 = vpop.f32.mrf.mxu0
      %v10441 = vadd.f32 %v10280, %v10440
      %v10442 = vpop.f32.mrf.mxu0
      %10443 = vmatprep.mubr.bf16.mxu0 %v9224
      %10444 = vmatmul.mubr.bf16.gmra.mxu0 %v9223
      %v10445 = vpop.f32.mrf.mxu0
      %v10446 = vadd.f32 %v10285, %v10445
      %v10447 = vpop.f32.mrf.mxu0
      %v10448 = vpop.f32.mrf.mxu0
      %v10449 = vadd.f32 %v10288, %v10448
      %v10450 = vpop.f32.mrf.mxu0
      %10451 = vmatprep.mubr.bf16.mxu0 %v9233
      %10452 = vmatmul.mubr.bf16.gmra.mxu0 %v9232
      %v10453 = vpop.f32.mrf.mxu0
      %v10454 = vadd.f32 %v10293, %v10453
      %v10455 = vpop.f32.mrf.mxu0
      %v10456 = vpop.f32.mrf.mxu0
      %v10457 = vadd.f32 %v10296, %v10456
      %v10458 = vpop.f32.mrf.mxu0
      %10459 = vmatprep.mubr.bf16.mxu0 %v9242
      %10460 = vmatmul.mubr.bf16.gmra.mxu0 %v9241
      %v10461 = vpop.f32.mrf.mxu0
      %v10462 = vadd.f32 %v10301, %v10461
      %v10463 = vpop.f32.mrf.mxu0
      %v10464 = vpop.f32.mrf.mxu0
      %v10465 = vadd.f32 %v10304, %v10464
      %v10466 = vpop.f32.mrf.mxu0
      %10467 = vmatprep.mubr.bf16.mxu0 %v9251
      %10468 = vmatmul.mubr.bf16.gmra.mxu0 %v9250
      %v10469 = vpop.f32.mrf.mxu0
      %v10470 = vadd.f32 %v10309, %v10469
      %v10471 = vpop.f32.mrf.mxu0
      %v10472 = vpop.f32.mrf.mxu0
      %v10473 = vadd.f32 %v10312, %v10472
      %v10474 = vpop.f32.mrf.mxu0
      %10475 = vmatprep.mubr.bf16.mxu0 %v9260
      %10476 = vmatmul.mubr.bf16.gmra.mxu0 %v9259
      %v10477 = vpop.f32.mrf.mxu0
      %v10478 = vadd.f32 %v10317, %v10477
      %v10479 = vpop.f32.mrf.mxu0
      %v10480 = vpop.f32.mrf.mxu0
      %v10481 = vadd.f32 %v10320, %v10480
      %v10482 = vpop.f32.mrf.mxu0
      %10483 = vmatprep.mubr.bf16.mxu0 %v9269
      %10484 = vmatmul.mubr.bf16.gmra.mxu0 %v9268
      %v10485 = vpop.f32.mrf.mxu0
      %v10486 = vadd.f32 %v10325, %v10485
      %v10487 = vpop.f32.mrf.mxu0
      %v10488 = vpop.f32.mrf.mxu0
      %v10489 = vadd.f32 %v10328, %v10488
      %v10490 = vpop.f32.mrf.mxu0
      %10491 = vmatprep.mubr.bf16.mxu0 %v9278
      %10492 = vmatmul.mubr.bf16.gmra.mxu0 %v9277
      %v10493 = vpop.f32.mrf.mxu0
      %v10494 = vadd.f32 %v10333, %v10493
      %v10495 = vpop.f32.mrf.mxu0
      %v10496 = vpop.f32.mrf.mxu0
      %v10497 = vadd.f32 %v10336, %v10496
      %v10498 = vpop.f32.mrf.mxu0
      %10499 = vdwg.mxu0
      %10500 = vmatprep.subr.bf16.mxu0 0
      %10501 = vmatpush1.bf16.msra.mxu0 %v9783
      %10502 = vmatprep.subr.bf16.mxu0 0
      %10503 = vmatpush1.bf16.msra.mxu0 %v9782
      %10504 = vmatprep.subr.bf16.mxu0 0
      %10505 = vmatpush1.bf16.msra.mxu0 %v9781
      %10506 = vmatprep.subr.bf16.mxu0 0
      %10507 = vmatpush1.bf16.msra.mxu0 %v9780
      %10508 = vmatprep.subr.bf16.mxu0 0
      %10509 = vmatpush1.bf16.msra.mxu0 %v9779
      %10510 = vmatprep.subr.bf16.mxu0 0
      %10511 = vmatpush1.bf16.msra.mxu0 %v9778
      %10512 = vmatprep.subr.bf16.mxu0 0
      %10513 = vmatpush1.bf16.msra.mxu0 %v9777
      %10514 = vmatprep.subr.bf16.mxu0 0
      %10515 = vmatpush1.bf16.msra.mxu0 %v9776
      %10516 = vmatprep.subr.bf16.mxu0 0
      %10517 = vmatpush2.bf16.msra.mxu0 0
      %10518 = vmatprep.subr.bf16.mxu0 0
      %10519 = vmatpush2.bf16.msra.mxu0 0
      %10520 = vmatprep.subr.bf16.mxu0 0
      %10521 = vmatpush2.bf16.msra.mxu0 0
      %10522 = vmatprep.subr.bf16.mxu0 0
      %10523 = vmatpush2.bf16.msra.mxu0 0
      %10524 = vmatprep.subr.bf16.mxu0 0
      %10525 = vmatpush2.bf16.msra.mxu0 0
      %10526 = vmatprep.subr.bf16.mxu0 0
      %10527 = vmatpush2.bf16.msra.mxu0 0
      %10528 = vmatprep.subr.bf16.mxu0 0
      %10529 = vmatpush2.bf16.msra.mxu0 0
      %10530 = vmatprep.subr.bf16.mxu0 0
      %10531 = vmatpush2.bf16.msra.mxu0 0
      %10532 = vmatprep.mubr.bf16.mxu0 0
      %10533 = vmatmul.mubr.bf16.gmra.mxu0 %v9144
      %v10534 = vpop.f32.mrf.mxu0
      %v10535 = vadd.f32 %v10374, %v10534
      %v10536 = vpop.f32.mrf.mxu0
      %v10537 = vpop.f32.mrf.mxu0
      %v10538 = vadd.f32 %v10377, %v10537
      %v10539 = vpop.f32.mrf.mxu0
      %10540 = vmatprep.mubr.bf16.mxu0 0
      %10541 = vmatmul.mubr.bf16.gmra.mxu0 %v9153
      %v10542 = vpop.f32.mrf.mxu0
      %v10543 = vadd.f32 %v10382, %v10542
      %v10544 = vpop.f32.mrf.mxu0
      %v10545 = vpop.f32.mrf.mxu0
      %v10546 = vadd.f32 %v10385, %v10545
      %v10547 = vpop.f32.mrf.mxu0
      %10548 = vmatprep.mubr.bf16.mxu0 0
      %10549 = vmatmul.mubr.bf16.gmra.mxu0 %v9162
      %v10550 = vpop.f32.mrf.mxu0
      %v10551 = vadd.f32 %v10390, %v10550
      %v10552 = vpop.f32.mrf.mxu0
      %v10553 = vpop.f32.mrf.mxu0
      %v10554 = vadd.f32 %v10393, %v10553
      %v10555 = vpop.f32.mrf.mxu0
      %10556 = vmatprep.mubr.bf16.mxu0 0
      %10557 = vmatmul.mubr.bf16.gmra.mxu0 %v9171
      %v10558 = vpop.f32.mrf.mxu0
      %v10559 = vadd.f32 %v10398, %v10558
      %v10560 = vpop.f32.mrf.mxu0
      %v10561 = vpop.f32.mrf.mxu0
      %v10562 = vadd.f32 %v10401, %v10561
      %v10563 = vpop.f32.mrf.mxu0
      %10564 = vmatprep.mubr.bf16.mxu0 0
      %10565 = vmatmul.mubr.bf16.gmra.mxu0 %v9180
      %v10566 = vpop.f32.mrf.mxu0
      %v10567 = vadd.f32 %v10406, %v10566
      %v10568 = vpop.f32.mrf.mxu0
      %v10569 = vpop.f32.mrf.mxu0
      %v10570 = vadd.f32 %v10409, %v10569
      %v10571 = vpop.f32.mrf.mxu0
      %10572 = vmatprep.mubr.bf16.mxu0 0
      %10573 = vmatmul.mubr.bf16.gmra.mxu0 %v9189
      %v10574 = vpop.f32.mrf.mxu0
      %v10575 = vadd.f32 %v10414, %v10574
      %v10576 = vpop.f32.mrf.mxu0
      %v10577 = vpop.f32.mrf.mxu0
      %v10578 = vadd.f32 %v10417, %v10577
      %v10579 = vpop.f32.mrf.mxu0
      %10580 = vmatprep.mubr.bf16.mxu0 0
      %10581 = vmatmul.mubr.bf16.gmra.mxu0 %v9198
      %v10582 = vpop.f32.mrf.mxu0
      %v10583 = vadd.f32 %v10422, %v10582
      %v10584 = vpop.f32.mrf.mxu0
      %v10585 = vpop.f32.mrf.mxu0
      %v10586 = vadd.f32 %v10425, %v10585
      %v10587 = vpop.f32.mrf.mxu0
      %10588 = vmatprep.mubr.bf16.mxu0 0
      %10589 = vmatmul.mubr.bf16.gmra.mxu0 %v9207
      %v10590 = vpop.f32.mrf.mxu0
      %v10591 = vadd.f32 %v10430, %v10590
      %v10592 = vpop.f32.mrf.mxu0
      %v10593 = vpop.f32.mrf.mxu0
      %v10594 = vadd.f32 %v10433, %v10593
      %v10595 = vpop.f32.mrf.mxu0
      %10596 = vmatprep.mubr.bf16.mxu0 0
      %10597 = vmatmul.mubr.bf16.gmra.mxu0 %v9216
      %v10598 = vpop.f32.mrf.mxu0
      %v10599 = vadd.f32 %v10438, %v10598
      %v10600 = vpop.f32.mrf.mxu0
      %v10601 = vpop.f32.mrf.mxu0
      %v10602 = vadd.f32 %v10441, %v10601
      %v10603 = vpop.f32.mrf.mxu0
      %10604 = vmatprep.mubr.bf16.mxu0 0
      %10605 = vmatmul.mubr.bf16.gmra.mxu0 %v9225
      %v10606 = vpop.f32.mrf.mxu0
      %v10607 = vadd.f32 %v10446, %v10606
      %v10608 = vpop.f32.mrf.mxu0
      %v10609 = vpop.f32.mrf.mxu0
      %v10610 = vadd.f32 %v10449, %v10609
      %v10611 = vpop.f32.mrf.mxu0
      %10612 = vmatprep.mubr.bf16.mxu0 0
      %10613 = vmatmul.mubr.bf16.gmra.mxu0 %v9234
      %v10614 = vpop.f32.mrf.mxu0
      %v10615 = vadd.f32 %v10454, %v10614
      %v10616 = vpop.f32.mrf.mxu0
      %v10617 = vpop.f32.mrf.mxu0
      %v10618 = vadd.f32 %v10457, %v10617
      %v10619 = vpop.f32.mrf.mxu0
      %10620 = vmatprep.mubr.bf16.mxu0 0
      %10621 = vmatmul.mubr.bf16.gmra.mxu0 %v9243
      %v10622 = vpop.f32.mrf.mxu0
      %v10623 = vadd.f32 %v10462, %v10622
      %v10624 = vpop.f32.mrf.mxu0
      %v10625 = vpop.f32.mrf.mxu0
      %v10626 = vadd.f32 %v10465, %v10625
      %v10627 = vpop.f32.mrf.mxu0
      %10628 = vmatprep.mubr.bf16.mxu0 0
      %10629 = vmatmul.mubr.bf16.gmra.mxu0 %v9252
      %v10630 = vpop.f32.mrf.mxu0
      %v10631 = vadd.f32 %v10470, %v10630
      %v10632 = vpop.f32.mrf.mxu0
      %v10633 = vpop.f32.mrf.mxu0
      %v10634 = vadd.f32 %v10473, %v10633
      %v10635 = vpop.f32.mrf.mxu0
      %10636 = vmatprep.mubr.bf16.mxu0 0
      %10637 = vmatmul.mubr.bf16.gmra.mxu0 %v9261
      %v10638 = vpop.f32.mrf.mxu0
      %v10639 = vadd.f32 %v10478, %v10638
      %v10640 = vpop.f32.mrf.mxu0
      %v10641 = vpop.f32.mrf.mxu0
      %v10642 = vadd.f32 %v10481, %v10641
      %v10643 = vpop.f32.mrf.mxu0
      %10644 = vmatprep.mubr.bf16.mxu0 0
      %10645 = vmatmul.mubr.bf16.gmra.mxu0 %v9270
      %v10646 = vpop.f32.mrf.mxu0
      %v10647 = vadd.f32 %v10486, %v10646
      %v10648 = vpop.f32.mrf.mxu0
      %v10649 = vpop.f32.mrf.mxu0
      %v10650 = vadd.f32 %v10489, %v10649
      %v10651 = vpop.f32.mrf.mxu0
      %10652 = vmatprep.mubr.bf16.mxu0 0
      %10653 = vmatmul.mubr.bf16.gmra.mxu0 %v9279
      %v10654 = vpop.f32.mrf.mxu0
      %v10655 = vadd.f32 %v10494, %v10654
      %v10656 = vpop.f32.mrf.mxu0
      %v10657 = vpop.f32.mrf.mxu0
      %v10658 = vadd.f32 %v10497, %v10657
      %v10659 = vpop.f32.mrf.mxu0
      %10660 = vdwg.mxu0
      %v10661 = vld [vmem:[%s5] sm:$0x1]
      %v10663 = vlaneseq
      %v10664 = vshrl.u32 %v10663, 7
      %v10665 = vsub.s32 0, %v10664
      %v10666 = vrot.slane %v10661, %v10665
      %v10668 = vmul.f32 %v10535, %v10666
      %v10669 = vmul.f32 %v10538, %v10666
      %v10670 = vmul.f32 %v10543, %v10666
      %v10671 = vmul.f32 %v10546, %v10666
      %v10672 = vmul.f32 %v10551, %v10666
      %v10673 = vmul.f32 %v10554, %v10666
      %v10674 = vmul.f32 %v10559, %v10666
      %v10675 = vmul.f32 %v10562, %v10666
      %v10676 = vmul.f32 %v10567, %v10666
      %v10677 = vmul.f32 %v10570, %v10666
      %v10678 = vmul.f32 %v10575, %v10666
      %v10679 = vmul.f32 %v10578, %v10666
      %v10680 = vmul.f32 %v10583, %v10666
      %v10681 = vmul.f32 %v10586, %v10666
      %v10682 = vmul.f32 %v10591, %v10666
      %v10683 = vmul.f32 %v10594, %v10666
      %v10684 = vmul.f32 %v10599, %v10666
      %v10685 = vmul.f32 %v10602, %v10666
      %v10686 = vmul.f32 %v10607, %v10666
      %v10687 = vmul.f32 %v10610, %v10666
      %v10688 = vmul.f32 %v10615, %v10666
      %v10689 = vmul.f32 %v10618, %v10666
      %v10690 = vmul.f32 %v10623, %v10666
      %v10691 = vmul.f32 %v10626, %v10666
      %v10692 = vmul.f32 %v10631, %v10666
      %v10693 = vmul.f32 %v10634, %v10666
      %v10694 = vmul.f32 %v10639, %v10666
      %v10695 = vmul.f32 %v10642, %v10666
      %v10696 = vmul.f32 %v10647, %v10666
      %v10697 = vmul.f32 %v10650, %v10666
      %v10698 = vmul.f32 %v10655, %v10666
      %v10699 = vmul.f32 %v10658, %v10666
      %v10700 = vld [vmem:[%s6] sm:$0x1]
      %v10702 = vlaneseq
      %v10703 = vshrl.u32 %v10702, 7
      %v10704 = vsub.s32 0, %v10703
      %v10705 = vrot.slane %v10700, %v10704
      %v10707 = vadd.f32 %v10668, %v10705
      %v10708 = vadd.f32 %v10669, %v10705
      %v10709 = vadd.f32 %v10670, %v10705
      %v10710 = vadd.f32 %v10671, %v10705
      %v10711 = vadd.f32 %v10672, %v10705
      %v10712 = vadd.f32 %v10673, %v10705
      %v10713 = vadd.f32 %v10674, %v10705
      %v10714 = vadd.f32 %v10675, %v10705
      %v10715 = vadd.f32 %v10676, %v10705
      %v10716 = vadd.f32 %v10677, %v10705
      %v10717 = vadd.f32 %v10678, %v10705
      %v10718 = vadd.f32 %v10679, %v10705
      %v10719 = vadd.f32 %v10680, %v10705
      %v10720 = vadd.f32 %v10681, %v10705
      %v10721 = vadd.f32 %v10682, %v10705
      %v10722 = vadd.f32 %v10683, %v10705
      %v10723 = vadd.f32 %v10684, %v10705
      %v10724 = vadd.f32 %v10685, %v10705
      %v10725 = vadd.f32 %v10686, %v10705
      %v10726 = vadd.f32 %v10687, %v10705
      %v10727 = vadd.f32 %v10688, %v10705
      %v10728 = vadd.f32 %v10689, %v10705
      %v10729 = vadd.f32 %v10690, %v10705
      %v10730 = vadd.f32 %v10691, %v10705
      %v10731 = vadd.f32 %v10692, %v10705
      %v10732 = vadd.f32 %v10693, %v10705
      %v10733 = vadd.f32 %v10694, %v10705
      %v10734 = vadd.f32 %v10695, %v10705
      %v10735 = vadd.f32 %v10696, %v10705
      %v10736 = vadd.f32 %v10697, %v10705
      %v10737 = vadd.f32 %v10698, %v10705
      %v10738 = vadd.f32 %v10699, %v10705
      %vm10739 = vcmp.ge.f32.partialorder %v10707, 0.0
      %vm10740 = vcmp.ge.f32.partialorder %v10708, 0.0
      %vm10741 = vcmp.ge.f32.partialorder %v10709, 0.0
      %vm10742 = vcmp.ge.f32.partialorder %v10710, 0.0
      %vm10743 = vcmp.ge.f32.partialorder %v10711, 0.0
      %vm10744 = vcmp.ge.f32.partialorder %v10712, 0.0
      %vm10745 = vcmp.ge.f32.partialorder %v10713, 0.0
      %vm10746 = vcmp.ge.f32.partialorder %v10714, 0.0
      %vm10747 = vcmp.ge.f32.partialorder %v10715, 0.0
      %vm10748 = vcmp.ge.f32.partialorder %v10716, 0.0
      %vm10749 = vcmp.ge.f32.partialorder %v10717, 0.0
      %vm10750 = vcmp.ge.f32.partialorder %v10718, 0.0
      %vm10751 = vcmp.ge.f32.partialorder %v10719, 0.0
      %vm10752 = vcmp.ge.f32.partialorder %v10720, 0.0
      %vm10753 = vcmp.ge.f32.partialorder %v10721, 0.0
      %vm10754 = vcmp.ge.f32.partialorder %v10722, 0.0
      %vm10755 = vcmp.ge.f32.partialorder %v10723, 0.0
      %vm10756 = vcmp.ge.f32.partialorder %v10724, 0.0
      %vm10757 = vcmp.ge.f32.partialorder %v10725, 0.0
      %vm10758 = vcmp.ge.f32.partialorder %v10726, 0.0
      %vm10759 = vcmp.ge.f32.partialorder %v10727, 0.0
      %vm10760 = vcmp.ge.f32.partialorder %v10728, 0.0
      %vm10761 = vcmp.ge.f32.partialorder %v10729, 0.0
      %vm10762 = vcmp.ge.f32.partialorder %v10730, 0.0
      %vm10763 = vcmp.ge.f32.partialorder %v10731, 0.0
      %vm10764 = vcmp.ge.f32.partialorder %v10732, 0.0
      %vm10765 = vcmp.ge.f32.partialorder %v10733, 0.0
      %vm10766 = vcmp.ge.f32.partialorder %v10734, 0.0
      %vm10767 = vcmp.ge.f32.partialorder %v10735, 0.0
      %vm10768 = vcmp.ge.f32.partialorder %v10736, 0.0
      %vm10769 = vcmp.ge.f32.partialorder %v10737, 0.0
      %vm10770 = vcmp.ge.f32.partialorder %v10738, 0.0
      %v10771 = vmul.f32 %v10707, 0.01
      %v10772 = vmul.f32 %v10708, 0.01
      %v10773 = vmul.f32 %v10709, 0.01
      %v10774 = vmul.f32 %v10710, 0.01
      %v10775 = vmul.f32 %v10711, 0.01
      %v10776 = vmul.f32 %v10712, 0.01
      %v10777 = vmul.f32 %v10713, 0.01
      %v10778 = vmul.f32 %v10714, 0.01
      %v10779 = vmul.f32 %v10715, 0.01
      %v10780 = vmul.f32 %v10716, 0.01
      %v10781 = vmul.f32 %v10717, 0.01
      %v10782 = vmul.f32 %v10718, 0.01
      %v10783 = vmul.f32 %v10719, 0.01
      %v10784 = vmul.f32 %v10720, 0.01
      %v10785 = vmul.f32 %v10721, 0.01
      %v10786 = vmul.f32 %v10722, 0.01
      %v10787 = vmul.f32 %v10723, 0.01
      %v10788 = vmul.f32 %v10724, 0.01
      %v10789 = vmul.f32 %v10725, 0.01
      %v10790 = vmul.f32 %v10726, 0.01
      %v10791 = vmul.f32 %v10727, 0.01
      %v10792 = vmul.f32 %v10728, 0.01
      %v10793 = vmul.f32 %v10729, 0.01
      %v10794 = vmul.f32 %v10730, 0.01
      %v10795 = vmul.f32 %v10731, 0.01
      %v10796 = vmul.f32 %v10732, 0.01
      %v10797 = vmul.f32 %v10733, 0.01
      %v10798 = vmul.f32 %v10734, 0.01
      %v10799 = vmul.f32 %v10735, 0.01
      %v10800 = vmul.f32 %v10736, 0.01
      %v10801 = vmul.f32 %v10737, 0.01
      %v10802 = vmul.f32 %v10738, 0.01
      %v10803 = vsel %vm10739, %v10707, %v10771
      %v10804 = vsel %vm10740, %v10708, %v10772
      %v10805 = vsel %vm10741, %v10709, %v10773
      %v10806 = vsel %vm10742, %v10710, %v10774
      %v10807 = vsel %vm10743, %v10711, %v10775
      %v10808 = vsel %vm10744, %v10712, %v10776
      %v10809 = vsel %vm10745, %v10713, %v10777
      %v10810 = vsel %vm10746, %v10714, %v10778
      %v10811 = vsel %vm10747, %v10715, %v10779
      %v10812 = vsel %vm10748, %v10716, %v10780
      %v10813 = vsel %vm10749, %v10717, %v10781
      %v10814 = vsel %vm10750, %v10718, %v10782
      %v10815 = vsel %vm10751, %v10719, %v10783
      %v10816 = vsel %vm10752, %v10720, %v10784
      %v10817 = vsel %vm10753, %v10721, %v10785
      %v10818 = vsel %vm10754, %v10722, %v10786
      %v10819 = vsel %vm10755, %v10723, %v10787
      %v10820 = vsel %vm10756, %v10724, %v10788
      %v10821 = vsel %vm10757, %v10725, %v10789
      %v10822 = vsel %vm10758, %v10726, %v10790
      %v10823 = vsel %vm10759, %v10727, %v10791
      %v10824 = vsel %vm10760, %v10728, %v10792
      %v10825 = vsel %vm10761, %v10729, %v10793
      %v10826 = vsel %vm10762, %v10730, %v10794
      %v10827 = vsel %vm10763, %v10731, %v10795
      %v10828 = vsel %vm10764, %v10732, %v10796
      %v10829 = vsel %vm10765, %v10733, %v10797
      %v10830 = vsel %vm10766, %v10734, %v10798
      %v10831 = vsel %vm10767, %v10735, %v10799
      %v10832 = vsel %vm10768, %v10736, %v10800
      %v10833 = vsel %vm10769, %v10737, %v10801
      %v10834 = vsel %vm10770, %v10738, %v10802
      %v10835 = vpack.c.bf16 %v10804, %v10803
      %v10836 = vpack.c.bf16 %v10806, %v10805
      %v10837 = vpack.c.bf16 %v10808, %v10807
      %v10838 = vpack.c.bf16 %v10810, %v10809
      %v10839 = vpack.c.bf16 %v10812, %v10811
      %v10840 = vpack.c.bf16 %v10814, %v10813
      %v10841 = vpack.c.bf16 %v10816, %v10815
      %v10842 = vpack.c.bf16 %v10818, %v10817
      %v10843 = vpack.c.bf16 %v10820, %v10819
      %v10844 = vpack.c.bf16 %v10822, %v10821
      %v10845 = vpack.c.bf16 %v10824, %v10823
      %v10846 = vpack.c.bf16 %v10826, %v10825
      %v10847 = vpack.c.bf16 %v10828, %v10827
      %v10848 = vpack.c.bf16 %v10830, %v10829
      %v10849 = vpack.c.bf16 %v10832, %v10831
      %v10850 = vpack.c.bf16 %v10834, %v10833
      %v10867 = vunpack.c.l.b16 %v10835
      %v10868 = vunpack.c.h.b16 %v10835
      %v10869 = vunpack.c.l.b16 %v10836
      %v10870 = vunpack.c.h.b16 %v10836
      %v10871 = vunpack.c.l.b16 %v10837
      %v10872 = vunpack.c.h.b16 %v10837
      %v10873 = vunpack.c.l.b16 %v10838
      %v10874 = vunpack.c.h.b16 %v10838
      %v10875 = vunpack.c.l.b16 %v10839
      %v10876 = vunpack.c.h.b16 %v10839
      %v10877 = vunpack.c.l.b16 %v10840
      %v10878 = vunpack.c.h.b16 %v10840
      %v10879 = vunpack.c.l.b16 %v10841
      %v10880 = vunpack.c.h.b16 %v10841
      %v10881 = vunpack.c.l.b16 %v10842
      %v10882 = vunpack.c.h.b16 %v10842
      %v10883 = vunpack.c.l.b16 %v10843
      %v10884 = vunpack.c.h.b16 %v10843
      %v10885 = vunpack.c.l.b16 %v10844
      %v10886 = vunpack.c.h.b16 %v10844
      %v10887 = vunpack.c.l.b16 %v10845
      %v10888 = vunpack.c.h.b16 %v10845
      %v10889 = vunpack.c.l.b16 %v10846
      %v10890 = vunpack.c.h.b16 %v10846
      %v10891 = vunpack.c.l.b16 %v10847
      %v10892 = vunpack.c.h.b16 %v10847
      %v10893 = vunpack.c.l.b16 %v10848
      %v10894 = vunpack.c.h.b16 %v10848
      %v10895 = vunpack.c.l.b16 %v10849
      %v10896 = vunpack.c.h.b16 %v10849
      %v10897 = vunpack.c.l.b16 %v10850
      %v10898 = vunpack.c.h.b16 %v10850
      %v10899 = vpack.c.b16 %v10867, %v10867
      %v10900 = vpack.c.b16 %v10868, %v10868
      %v10901 = vpack.c.b16 %v10869, %v10869
      %v10902 = vpack.c.b16 %v10870, %v10870
      %v10903 = vpack.c.b16 %v10871, %v10871
      %v10904 = vpack.c.b16 %v10872, %v10872
      %v10905 = vpack.c.b16 %v10873, %v10873
      %v10906 = vpack.c.b16 %v10874, %v10874
      %v10907 = vpack.c.b16 %v10875, %v10875
      %v10908 = vpack.c.b16 %v10876, %v10876
      %v10909 = vpack.c.b16 %v10877, %v10877
      %v10910 = vpack.c.b16 %v10878, %v10878
      %v10911 = vpack.c.b16 %v10879, %v10879
      %v10912 = vpack.c.b16 %v10880, %v10880
      %v10913 = vpack.c.b16 %v10881, %v10881
      %v10914 = vpack.c.b16 %v10882, %v10882
      %v10915 = vpack.c.b16 %v10883, %v10883
      %v10916 = vpack.c.b16 %v10884, %v10884
      %v10917 = vpack.c.b16 %v10885, %v10885
      %v10918 = vpack.c.b16 %v10886, %v10886
      %v10919 = vpack.c.b16 %v10887, %v10887
      %v10920 = vpack.c.b16 %v10888, %v10888
      %v10921 = vpack.c.b16 %v10889, %v10889
      %v10922 = vpack.c.b16 %v10890, %v10890
      %v10923 = vpack.c.b16 %v10891, %v10891
      %v10924 = vpack.c.b16 %v10892, %v10892
      %v10925 = vpack.c.b16 %v10893, %v10893
      %v10926 = vpack.c.b16 %v10894, %v10894
      %v10927 = vpack.c.b16 %v10895, %v10895
      %v10928 = vpack.c.b16 %v10896, %v10896
      %v10929 = vpack.c.b16 %v10897, %v10897
      %v10930 = vpack.c.b16 %v10898, %v10898
      %10963 = vst [vmem:[%s278] sm:$0xf] %v10899
      %10964 = vst [vmem:[%s278 + $0x4] sm:$0xf] %v10900
      %10965 = vst [vmem:[%s278 + $0x8] sm:$0xf] %v10901
      %10966 = vst [vmem:[%s278 + $0xc] sm:$0xf] %v10902
      %10967 = vst [vmem:[%s278 + $0x10] sm:$0xf] %v10903
      %10968 = vst [vmem:[%s278 + $0x14] sm:$0xf] %v10904
      %10969 = vst [vmem:[%s278 + $0x18] sm:$0xf] %v10905
      %10970 = vst [vmem:[%s278 + $0x1c] sm:$0xf] %v10906
      %10971 = vst [vmem:[%s278 + $0x20] sm:$0xf] %v10907
      %10972 = vst [vmem:[%s278 + $0x24] sm:$0xf] %v10908
      %10973 = vst [vmem:[%s278 + $0x28] sm:$0xf] %v10909
      %10974 = vst [vmem:[%s278 + $0x2c] sm:$0xf] %v10910
      %10975 = vst [vmem:[%s278 + $0x30] sm:$0xf] %v10911
      %10976 = vst [vmem:[%s278 + $0x34] sm:$0xf] %v10912
      %10977 = vst [vmem:[%s278 + $0x38] sm:$0xf] %v10913
      %10978 = vst [vmem:[%s278 + $0x3c] sm:$0xf] %v10914
      %10979 = vst [vmem:[%s278 + $0x40] sm:$0xf] %v10915
      %10980 = vst [vmem:[%s278 + $0x44] sm:$0xf] %v10916
      %10981 = vst [vmem:[%s278 + $0x48] sm:$0xf] %v10917
      %10982 = vst [vmem:[%s278 + $0x4c] sm:$0xf] %v10918
      %10983 = vst [vmem:[%s278 + $0x50] sm:$0xf] %v10919
      %10984 = vst [vmem:[%s278 + $0x54] sm:$0xf] %v10920
      %10985 = vst [vmem:[%s278 + $0x58] sm:$0xf] %v10921
      %10986 = vst [vmem:[%s278 + $0x5c] sm:$0xf] %v10922
      %10987 = vst [vmem:[%s278 + $0x60] sm:$0xf] %v10923
      %10988 = vst [vmem:[%s278 + $0x64] sm:$0xf] %v10924
      %10989 = vst [vmem:[%s278 + $0x68] sm:$0xf] %v10925
      %10990 = vst [vmem:[%s278 + $0x6c] sm:$0xf] %v10926
      %10991 = vst [vmem:[%s278 + $0x70] sm:$0xf] %v10927
      %10992 = vst [vmem:[%s278 + $0x74] sm:$0xf] %v10928
      %10993 = vst [vmem:[%s278 + $0x78] sm:$0xf] %v10929
      %10994 = vst [vmem:[%s278 + $0x7c] sm:$0xf] %v10930
      %p10995 = scmp.lt.s32.totalorder %s18, 1
      %s10996 = scalar_select %p10995, %s18, 1
      %s10997 = smul.addr %s10996, 32
      %s10998 = smul.addr %s10997, 4
      %s10999 = scalar_lea.vmem %s7, %s10998
      // Predicated region
      $region49: #{_lambda_.1} parent=47 // pred_check
        %p11000 = pneg %p188
      $region50: #{_lambda_.1} parent=47 // pred_check_branch
        %11002 = sbr.rel (%p11000) target = $region52
      $region51: #{_lambda_.1} parent=47 // pred_region
        _
      $region52: #{_lambda_.1} parent=47 // pred_fallthru
        _
    $region48: #{_lambda_.1} parent=5 // pred_fallthru
      _
    %p11003 = scmp.le.s32.totalorder 2, %s13
    // Predicated region
    $region53: #{_lambda_.1} parent=5 // pred_check
      %p11004 = pneg %p11003
    $region54: #{_lambda_.1} parent=5 // pred_check_branch
      %11006 = sbr.rel (%p11004) target = $region56
    $region55: #{_lambda_.1} parent=5 // pred_region
      %s11007 = ssub.s32 %s13, 2
      // Predicated region
      $region57: #{_lambda_.1} parent=55 // pred_check
        %p11008 = pneg %p194
      $region58: #{_lambda_.1} parent=55 // pred_check_branch
        %11010 = sbr.rel (%p11008) target = $region60
      $region59: #{_lambda_.1} parent=55 // pred_region
        %p11011 = scmp.lt.s32.totalorder %s19, 1
        %s11012 = scalar_select %p11011, %s19, 1
        %s11013 = smul.addr %s11012, 32
        %s11014 = smul.addr %s11013, 4
        %s11015 = scalar_lea.vmem %s7, %s11014
      $region60: #{_lambda_.1} parent=55 // pred_fallthru
        _
    $region56: #{_lambda_.1} parent=5 // pred_fallthru
      _
  $region6: #{_lambda_.1} parent=0 // loop_footer
    %s17 = sadd.s32 1, %s13
  $region7: #{_lambda_.1} parent=0 // loop_footer_branch
    %12 = sbr.rel target = $region3
  $region8: #{_lambda_.1} parent=0 // loop_exit
    _

</llo_original>
